<compile_context>
chip_gen: v7x
topology: tpu7x:2x2x1
jax: 0.10.0
libtpu: 0.0.40
codegen_flags: <defaults>
</compile_context>

<pallas_src>
import math

import jax
import jax.numpy as jnp
from jax.experimental import pallas as pl
from jax.experimental.pallas import tpu as pltpu

INV_SQRT2 = 1.0 / math.sqrt(2.0)
EPS = 1e-5
PROJ_W = 128                      # lane-dense padded width of the fused projection
BRANCHES = ("F0", "N", "EMA")


# ----------------------------------------------------------------------------
# in-kernel helpers (channels-last)
# ----------------------------------------------------------------------------
def _leaky(y):
    return jnp.where(y >= 0.0, y, 0.2 * y)


def _adain_leaky_seq(x, gam, bet):
    """x: (B,T,C). InstanceNorm over T (per sample/channel) -> affine -> LeakyReLU."""
    mu = jnp.mean(x, axis=1, keepdims=True)
    xc = x - mu
    var = jnp.mean(xc * xc, axis=1, keepdims=True)
    return _leaky((1.0 + gam) * (xc * jax.lax.rsqrt(var + EPS)) + bet)


def _adain_leaky_st(s, gam, bet):
    """s: (2,B,T,C) even/odd streams of a length-2T sequence; stats over (stream,T)."""
    mu = jnp.mean(jnp.mean(s, axis=2, keepdims=True), axis=0, keepdims=True)
    sc = s - mu
    var = jnp.mean(jnp.mean(sc * sc, axis=2, keepdims=True), axis=0, keepdims=True)
    return _leaky((1.0 + gam) * (sc * jax.lax.rsqrt(var + EPS)) + bet)


def _conv3_seq(x, w_ref, b):
    """Conv1d(k=3,pad=1) on (B,T,Cin): three shifted bf16 matmuls (no im2col)."""
    B_, T_, Cin = x.shape
    Cout = w_ref.shape[2]
    z = jnp.zeros_like(x[:, :1])
    xm = jnp.concatenate([z, x[:, :-1]], axis=1)          # x[t-1]
    xp = jnp.concatenate([x[:, 1:], z], axis=1)           # x[t+1]

    def mm(a, k):
        return jnp.dot(a.reshape(B_ * T_, Cin).astype(jnp.bfloat16), w_ref[k],
                       preferred_element_type=jnp.float32)

    return (mm(xm, 0) + mm(x, 1) + mm(xp, 2) + b).reshape(B_, T_, Cout)


def _conv3_st(s, w_ref, b):
    """Conv1d(k=3,pad=1) on the interleaved 2T sequence held as (2,B,T,Cin) streams."""
    _, B_, T_, Cin = s.shape
    Cout = w_ref.shape[2]
    se, so = s[0], s[1]
    z = jnp.zeros_like(se[:, :1])
    so_prev = jnp.concatenate([z, so[:, :-1]], axis=1)     # odd[t-1]
    se_next = jnp.concatenate([se[:, 1:], z], axis=1)      # even[t+1]
    pm1 = jnp.stack([so_prev, se], axis=0)                 # interleaved x[j-1]
    pp1 = jnp.stack([so, se_next], axis=0)                 # interleaved x[j+1]

    def mm(a, k):
        return jnp.dot(a.reshape(2 * B_ * T_, Cin).astype(jnp.bfloat16), w_ref[k],
                       preferred_element_type=jnp.float32)

    return (mm(pm1, 0) + mm(s, 1) + mm(pp1, 2) + b).reshape(2, B_, T_, Cout)


def _conv1x1_st(s, w_ref):
    _, B_, T_, Cin = s.shape
    Cout = w_ref.shape[1]
    out = jnp.dot(s.reshape(2 * B_ * T_, Cin).astype(jnp.bfloat16), w_ref[...],
                  preferred_element_type=jnp.float32)
    return out.reshape(2, B_, T_, Cout)


# ----------------------------------------------------------------------------
# kernel 1: shared AdainResBlk1d + ALL AdaIN style Linears (one fused matmul)
# ----------------------------------------------------------------------------
def _shared_kernel(x_ref, sty_ref, wsty_ref, bsty_ref,
                   w1_ref, cb1_ref, w2_ref, cb2_ref, o_ref, gbbr_ref):
    B_, T_, C = x_ref.shape
    gb = (jnp.dot(sty_ref[...].astype(jnp.bfloat16), wsty_ref[...],
                  preferred_element_type=jnp.float32) + bsty_ref[...])
    gbbr_ref[...] = gb[:, 4 * C:]                          # per-branch gamma/betas
    g1 = gb[:, 0:C][:, None, :]
    b1 = gb[:, C:2 * C][:, None, :]
    g2 = gb[:, 2 * C:3 * C][:, None, :]
    b2 = gb[:, 3 * C:4 * C][:, None, :]
    x = x_ref[...]
    xa = _adain_leaky_seq(x, g1, b1)
    r = _conv3_seq(xa, w1_ref, cb1_ref[...])
    ra = _adain_leaky_seq(r, g2, b2)
    res = _conv3_seq(ra, w2_ref, cb2_ref[...])
    o_ref[...] = (res + x) * INV_SQRT2


# ----------------------------------------------------------------------------
# kernel 2: one full branch trunk per grid step (stage0 upsample + stage1 + stage2)
# ----------------------------------------------------------------------------
def _branch_kernel(x_ref, gb_ref, wt_ref, bt_ref,
                   w01_ref, cb01_ref, w02_ref, cb02_ref,
                   w11_ref, cb11_ref, w12_ref, cb12_ref, sc1_ref,
                   w21_ref, cb21_ref, w22_ref, cb22_ref, sc2_ref,
                   o_ref):
    B_, T_, C = x_ref.shape
    C2 = sc1_ref.shape[1]
    C4 = sc2_ref.shape[1]
    gb = gb_ref[...]

    def col(a, b_):
        return gb[:, a:b_]

    g0a, b0a = col(0, C), col(C, 2 * C)
    g0b, b0b = col(2 * C, 3 * C), col(3 * C, 4 * C)
    g1a, b1a = col(4 * C, 5 * C), col(5 * C, 6 * C)
    o6 = 6 * C
    g1b, b1b = col(o6, o6 + C2), col(o6 + C2, o6 + 2 * C2)
    g2a, b2a = col(o6 + 2 * C2, o6 + 3 * C2), col(o6 + 3 * C2, o6 + 4 * C2)
    o10 = o6 + 4 * C2
    g2b, b2b = col(o10, o10 + C4), col(o10 + C4, o10 + 2 * C4)

    x = x_ref[...]

    # -- stage 0: AdaIN -> LeakyReLU -> depthwise ConvTranspose1d x2 (as even/odd
    #    streams) -> conv1 -> AdaIN -> LeakyReLU -> conv2 -> (+nearest-up x)/sqrt2
    xa = _adain_leaky_seq(x, g0a[:, None, :], b0a[:, None, :])
    wt = wt_ref[...]                                       # (3,1,C) depthwise taps
    bt = bt_ref[...]                                       # (1,C)
    z = jnp.zeros_like(xa[:, :1])
    xa_nx = jnp.concatenate([xa[:, 1:], z], axis=1)        # x[t+1]
    y_e = xa * wt[1] + bt                                  # out[2t]
    y_o = xa * wt[2] + xa_nx * wt[0] + bt                  # out[2t+1]
    y = jnp.stack([y_e, y_o], axis=0)                      # (2,B,T,C)
    r = _conv3_st(y, w01_ref, cb01_ref[...])
    r = _adain_leaky_st(r, g0b[None, :, None, :], b0b[None, :, None, :])
    r = _conv3_st(r, w02_ref, cb02_ref[...])
    y0 = (r + x[None]) * INV_SQRT2                         # nearest-up shortcut = x

    # -- stage 1: C -> C/2, learned 1x1 shortcut
    xa = _adain_leaky_st(y0, g1a[None, :, None, :], b1a[None, :, None, :])
    r = _conv3_st(xa, w11_ref, cb11_ref[...])
    r = _adain_leaky_st(r, g1b[None, :, None, :], b1b[None, :, None, :])
    r = _conv3_st(r, w12_ref, cb12_ref[...])
    y1 = (r + _conv1x1_st(y0, sc1_ref)) * INV_SQRT2

    # -- stage 2: C/2 -> C/4, learned 1x1 shortcut
    xa = _adain_leaky_st(y1, g2a[None, :, None, :], b2a[None, :, None, :])
    r = _conv3_st(xa, w21_ref, cb21_ref[...])
    r = _adain_leaky_st(r, g2b[None, :, None, :], b2b[None, :, None, :])
    r = _conv3_st(r, w22_ref, cb22_ref[...])
    y2 = (r + _conv1x1_st(y1, sc2_ref)) * INV_SQRT2        # (2,B,T,C4)

    o_ref[...] = y2.reshape(2 * B_, T_, C4)


# ----------------------------------------------------------------------------
# kernel 3: all 6 (branch, direction) LSTM recurrences + fused output projection
# ----------------------------------------------------------------------------
def _lstm_proj_kernel(xseq_ref, wihf_ref, wihb_ref, bihf_ref, bihb_ref,
                      whhf_ref, whhb_ref, wproj_ref, bproj_ref, o_ref,
                      xgf_scr, xgb_scr, hf_scr, hb_scr):
    T2, B_, H3 = xseq_ref.shape                            # H3 = 3 * hidden

    # input-gate pre-activations for all units (one matmul per direction group)
    x2d = xseq_ref[...].astype(jnp.bfloat16).reshape(T2 * B_, H3)
    xgf_scr[...] = (jnp.dot(x2d, wihf_ref[...], preferred_element_type=jnp.float32)
                    + bihf_ref[...]).reshape(T2, B_, 4 * H3)
    xgb_scr[...] = (jnp.dot(x2d, wihb_ref[...], preferred_element_type=jnp.float32)
                    + bihb_ref[...]).reshape(T2, B_, 4 * H3)
    whh_f = whhf_ref[...]
    whh_b = whhb_ref[...]

    def step(t, carry):
        h_f, c_f, h_b, c_b = carry
        tb = T2 - 1 - t
        gf = xgf_scr[t] + jnp.dot(h_f.astype(jnp.bfloat16), whh_f,
                                  preferred_element_type=jnp.float32)
        gb = xgb_scr[tb] + jnp.dot(h_b.astype(jnp.bfloat16), whh_b,
                                   preferred_element_type=jnp.float32)
        i_f = jax.nn.sigmoid(gf[:, 0:H3])
        f_f = jax.nn.sigmoid(gf[:, H3:2 * H3])
        g_f = jnp.tanh(gf[:, 2 * H3:3 * H3])
        o_f = jax.nn.sigmoid(gf[:, 3 * H3:4 * H3])
        i_b = jax.nn.sigmoid(gb[:, 0:H3])
        f_b = jax.nn.sigmoid(gb[:, H3:2 * H3])
        g_b = jnp.tanh(gb[:, 2 * H3:3 * H3])
        o_b = jax.nn.sigmoid(gb[:, 3 * H3:4 * H3])
        c_f = f_f * c_f + i_f * g_f
        c_b = f_b * c_b + i_b * g_b
        h_f = o_f * jnp.tanh(c_f)
        h_b = o_b * jnp.tanh(c_b)
        hf_scr[t] = h_f
        hb_scr[tb] = h_b
        return (h_f, c_f, h_b, c_b)

    z = jnp.zeros((B_, H3), jnp.float32)
    jax.lax.fori_loop(0, T2, step, (z, z, z, z))

    # fused, lane-padded (F0 | N | EMA) 1x1 projections as one matmul epilogue
    h_all = jnp.concatenate([hf_scr[...], hb_scr[...]], axis=2)      # (T2,B,2*H3)
    proj = (jnp.dot(h_all.astype(jnp.bfloat16).reshape(T2 * B_, 2 * H3),
                    wproj_ref[...], preferred_element_type=jnp.float32)
            + bproj_ref[...])
    o_ref[...] = proj.reshape(T2, B_, bproj_ref.shape[1])


# ----------------------------------------------------------------------------
# parameters (deterministic synthetic init, PyTorch tensor conventions)
# ----------------------------------------------------------------------------
def build_params(key, d_hid=64, style_dim=256):
    assert style_dim == 256 and d_hid % 4 == 0   # forward hard-codes style[:,256:512]
    d2, d4 = d_hid // 2, d_hid // 4
    kit = iter(jax.random.split(key, 256))

    def rnd(shape, scale=0.1):
        return scale * jax.random.normal(next(kit), shape, dtype=jnp.float32)

    def adain_block(dim_in, dim_out, s_width, upsample):
        p = {
            "fc1_w": rnd((2 * dim_in, s_width)), "fc1_b": rnd((2 * dim_in,)),
            "fc2_w": rnd((2 * dim_out, s_width)), "fc2_b": rnd((2 * dim_out,)),
            "conv1_w": rnd((dim_out, dim_in, 3)), "conv1_b": rnd((dim_out,)),
            "conv2_w": rnd((dim_out, dim_out, 3)), "conv2_b": rnd((dim_out,)),
        }
        if dim_in != dim_out:
            p["conv1x1_w"] = rnd((dim_out, dim_in, 1))
        if upsample:
            p["pool_w"] = rnd((dim_in, 1, 3))
            p["pool_b"] = rnd((dim_in,))
        return p

    def lstm(h):
        return {
            "w_ih_f": rnd((4 * h, h)), "w_hh_f": rnd((4 * h, h)),
            "b_ih_f": rnd((4 * h,)), "b_hh_f": rnd((4 * h,)),
            "w_ih_b": rnd((4 * h, h)), "w_hh_b": rnd((4 * h, h)),
            "b_ih_b": rnd((4 * h,)), "b_hh_b": rnd((4 * h,)),
        }

    params = {"shared": adain_block(d_hid, d_hid, 2 * style_dim, False)}
    style_w = {"F0": style_dim // 4, "N": style_dim // 4, "EMA": style_dim // 2}
    for br in BRANCHES:
        params[br] = [
            adain_block(d_hid, d_hid, 2 * style_dim, True),
            adain_block(d_hid, d2, style_w[br], False),
            adain_block(d2, d4, style_w[br], False),
        ]
        params[br + "_LSTM"] = lstm(d4)
    params["F0_proj"] = {"w": rnd((1, d2, 1)), "b": rnd((1,))}
    params["N_proj"] = {"w": rnd((1, d2, 1)), "b": rnd((1,))}
    params["EMA_proj"] = {"w": rnd((10, d2, 1)), "b": rnd((10,))}
    return params


def prepare(p, d_hid):
    """Build device-layout weights (channels-last, bf16 MXU operands, f32 bias)."""
    C = d_hid
    C2, C4 = C // 2, C // 4
    H = C4
    per_branch = 6 * C + 4 * C2 + 2 * C4
    GB_W = ((per_branch + 127) // 128) * 128      # lane-aligned per-branch gb block
    total = 4 * C + 3 * GB_W

    # one (512 -> total) matrix covering ALL 20 AdaIN style Linears
    W = jnp.zeros((512, total), jnp.float32)
    bvec = jnp.zeros((total,), jnp.float32)

    def place(W, bvec, col, fw, fb, row_off):
        nf = fw.shape[0] // 2
        sw = fw.shape[1]
        W = W.at[row_off:row_off + sw, col:col + nf].set(fw[:nf].T)
        W = W.at[row_off:row_off + sw, col + nf:col + 2 * nf].set(fw[nf:].T)
        bvec = bvec.at[col:col + nf].set(fb[:nf])
        bvec = bvec.at[col + nf:col + 2 * nf].set(fb[nf:])
        return W, bvec

    W, bvec = place(W, bvec, 0, p["shared"]["fc1_w"], p["shared"]["fc1_b"], 0)
    W, bvec = place(W, bvec, 2 * C, p["shared"]["fc2_w"], p["shared"]["fc2_b"], 0)
    sty_off = {"F0": 384, "N": 448, "EMA": 256}
    for gi, br in enumerate(BRANCHES):
        base = 4 * C + gi * GB_W
        b0, b1, b2 = p[br]
        W, bvec = place(W, bvec, base, b0["fc1_w"], b0["fc1_b"], 0)
        W, bvec = place(W, bvec, base + 2 * C, b0["fc2_w"], b0["fc2_b"], 0)
        off = sty_off[br]
        W, bvec = place(W, bvec, base + 4 * C, b1["fc1_w"], b1["fc1_b"], off)
        W, bvec = place(W, bvec, base + 6 * C, b1["fc2_w"], b1["fc2_b"], off)
        W, bvec = place(W, bvec, base + 6 * C + 2 * C2, b2["fc1_w"], b2["fc1_b"], off)
        W, bvec = place(W, bvec, base + 6 * C + 4 * C2, b2["fc2_w"], b2["fc2_b"], off)

    def cw(w):  # (Cout,Cin,K) -> (K,Cin,Cout) bf16
        return jnp.transpose(w, (2, 1, 0)).astype(jnp.bfloat16)

    def cb(b):
        return b[None, :].astype(jnp.float32)

    def stack_stage(i):
        blks = [p[br][i] for br in BRANCHES]
        d = {
            "w1": jnp.stack([cw(b["conv1_w"]) for b in blks]),
            "b1": jnp.stack([cb(b["conv1_b"]) for b in blks]),
            "w2": jnp.stack([cw(b["conv2_w"]) for b in blks]),
            "b2": jnp.stack([cb(b["conv2_b"]) for b in blks]),
        }
        if "conv1x1_w" in blks[0]:
            d["sc"] = jnp.stack(
                [b["conv1x1_w"][:, :, 0].T.astype(jnp.bfloat16) for b in blks])
        return d

    st0, st1, st2 = stack_stage(0), stack_stage(1), stack_stage(2)
    wt = jnp.stack([jnp.transpose(p[br][0]["pool_w"], (2, 1, 0)) for br in BRANCHES])
    bt = jnp.stack([p[br][0]["pool_b"][None, :] for br in BRANCHES])

    # fused BiLSTM weights: unit order [F0, N, EMA] per direction, gate-major cols
    Wih_f = jnp.zeros((3 * H, 12 * H), jnp.float32)
    Wih_b = jnp.zeros((3 * H, 12 * H), jnp.float32)
    Whh_f = jnp.zeros((3 * H, 12 * H), jnp.float32)
    Whh_b = jnp.zeros((3 * H, 12 * H), jnp.float32)
    bih_f = jnp.zeros((12 * H,), jnp.float32)
    bih_b = jnp.zeros((12 * H,), jnp.float32)
    for gi, br in enumerate(BRANCHES):
        l = p[br + "_LSTM"]
        rows = slice(gi * H, (gi + 1) * H)
        for k in range(4):
            cols = slice(k * 3 * H + gi * H, k * 3 * H + (gi + 1) * H)
            gr = slice(k * H, (k + 1) * H)
            Wih_f = Wih_f.at[rows, cols].set(l["w_ih_f"][gr, :].T)
            Whh_f = Whh_f.at[rows, cols].set(l["w_hh_f"][gr, :].T)
            bih_f = bih_f.at[cols].set(l["b_ih_f"][gr] + l["b_hh_f"][gr])
            Wih_b = Wih_b.at[rows, cols].set(l["w_ih_b"][gr, :].T)
            Whh_b = Whh_b.at[rows, cols].set(l["w_hh_b"][gr, :].T)
            bih_b = bih_b.at[cols].set(l["b_ih_b"][gr] + l["b_hh_b"][gr])

    # fused, lane-padded output projections (cols: F0->0, N->1, EMA->2:12)
    Wproj = jnp.zeros((6 * H, PROJ_W), jnp.float32)
    bproj = jnp.zeros((PROJ_W,), jnp.float32)
    colrng = {"F0": (0, 1), "N": (1, 2), "EMA": (2, 12)}
    for gi, br in enumerate(BRANCHES):
        w = p[br + "_proj"]["w"][:, :, 0]                  # (out, 2H) = [fwd | bwd]
        c0, c1 = colrng[br]
        Wproj = Wproj.at[gi * H:(gi + 1) * H, c0:c1].set(w[:, :H].T)
        Wproj = Wproj.at[3 * H + gi * H:3 * H + (gi + 1) * H, c0:c1].set(w[:, H:].T)
        bproj = bproj.at[c0:c1].set(p[br + "_proj"]["b"])

    return {
        "GB_W": GB_W, "H": H,
        "wsty": W.astype(jnp.bfloat16), "bsty": bvec[None, :].astype(jnp.float32),
        "sh_w1": cw(p["shared"]["conv1_w"]), "sh_cb1": cb(p["shared"]["conv1_b"]),
        "sh_w2": cw(p["shared"]["conv2_w"]), "sh_cb2": cb(p["shared"]["conv2_b"]),
        "wt": wt.astype(jnp.float32), "bt": bt.astype(jnp.float32),
        "st0": st0, "st1": st1, "st2": st2,
        "wih_f": Wih_f.astype(jnp.bfloat16), "wih_b": Wih_b.astype(jnp.bfloat16),
        "bih_f": bih_f[None, :], "bih_b": bih_b[None, :],
        "whh_f": Whh_f.astype(jnp.bfloat16), "whh_b": Whh_b.astype(jnp.bfloat16),
        "wproj": Wproj.astype(jnp.bfloat16), "bproj": bproj[None, :],
    }


# ----------------------------------------------------------------------------
# forward pass (matches ArtsPredictor.forward semantics, eval mode)
# ----------------------------------------------------------------------------
def _full(shape):
    n = len(shape)
    return pl.BlockSpec(shape, lambda *_: (0,) * n)


def arts_predictor(prep, a_ens, style):
    """a_ens: (B, d_hid, T) NCL;  style: (B, 512).  Returns (F0, N, EMA) in NCL."""
    B, C, T = a_ens.shape
    C2, C4 = C // 2, C // 4
    T2 = 2 * T
    H3 = 3 * C4
    GB_W = prep["GB_W"]
    x = jnp.transpose(a_ens, (0, 2, 1))                    # channels-last (B,T,C)

    # 1) shared AdainResBlk1d + all AdaIN style Linears (one fused matmul)
    x_sh, gbbr = pl.pallas_call(
        _shared_kernel,
        out_shape=(jax.ShapeDtypeStruct((B, T, C), jnp.float32),
                   jax.ShapeDtypeStruct((B, 3 * GB_W), jnp.float32)),
    )(x, style, prep["wsty"], prep["bsty"],
      prep["sh_w1"], prep["sh_cb1"], prep["sh_w2"], prep["sh_cb2"])

    # 2) full branch trunks (stage0 x2-upsample + stage1 + stage2), grid=(3,)
    st0, st1, st2 = prep["st0"], prep["st1"], prep["st2"]
    y2 = pl.pallas_call(
        _branch_kernel,
        out_shape=jax.ShapeDtypeStruct((3, 2 * B, T, C4), jnp.float32),
        grid=(3,),
        in_specs=[
            pl.BlockSpec((B, T, C), lambda g: (0, 0, 0)),
            pl.BlockSpec((B, GB_W), lambda g: (0, g)),
            pl.BlockSpec((None, 3, 1, C), lambda g: (g, 0, 0, 0)),
            pl.BlockSpec((None, 1, C), lambda g: (g, 0, 0)),
            pl.BlockSpec((None, 3, C, C), lambda g: (g, 0, 0, 0)),
            pl.BlockSpec((None, 1, C), lambda g: (g, 0, 0)),
            pl.BlockSpec((None, 3, C, C), lambda g: (g, 0, 0, 0)),
            pl.BlockSpec((None, 1, C), lambda g: (g, 0, 0)),
            pl.BlockSpec((None, 3, C, C2), lambda g: (g, 0, 0, 0)),
            pl.BlockSpec((None, 1, C2), lambda g: (g, 0, 0)),
            pl.BlockSpec((None, 3, C2, C2), lambda g: (g, 0, 0, 0)),
            pl.BlockSpec((None, 1, C2), lambda g: (g, 0, 0)),
            pl.BlockSpec((None, C, C2), lambda g: (g, 0, 0)),
            pl.BlockSpec((None, 3, C2, C4), lambda g: (g, 0, 0, 0)),
            pl.BlockSpec((None, 1, C4), lambda g: (g, 0, 0)),
            pl.BlockSpec((None, 3, C4, C4), lambda g: (g, 0, 0, 0)),
            pl.BlockSpec((None, 1, C4), lambda g: (g, 0, 0)),
            pl.BlockSpec((None, C2, C4), lambda g: (g, 0, 0)),
        ],
        out_specs=pl.BlockSpec((None, 2 * B, T, C4), lambda g: (g, 0, 0, 0)),
        compiler_params=pltpu.CompilerParams(dimension_semantics=("parallel",)),
    )(x_sh, gbbr, prep["wt"], prep["bt"],
      st0["w1"], st0["b1"], st0["w2"], st0["b2"],
      st1["w1"], st1["b1"], st1["w2"], st1["b2"], st1["sc"],
      st2["w1"], st2["b1"], st2["w2"], st2["b2"], st2["sc"])

    # interleave even/odd streams and concat branch features -> (2T, B, 3*C4)
    xseq = jnp.transpose(y2.reshape(3, 2, B, T, C4),
                         (3, 1, 2, 0, 4)).reshape(T2, B, H3)

    # 3) all 6 bidirectional LSTM recurrences + fused output projection
    proj = pl.pallas_call(
        _lstm_proj_kernel,
        out_shape=jax.ShapeDtypeStruct((T2, B, PROJ_W), jnp.float32),
        grid=(1,),
        in_specs=[
            _full((T2, B, H3)),
            _full((H3, 4 * H3)), _full((H3, 4 * H3)),
            _full((1, 4 * H3)), _full((1, 4 * H3)),
            _full((H3, 4 * H3)), _full((H3, 4 * H3)),
            _full((2 * H3, PROJ_W)), _full((1, PROJ_W)),
        ],
        out_specs=_full((T2, B, PROJ_W)),
        scratch_shapes=[
            pltpu.VMEM((T2, B, 4 * H3), jnp.float32),
            pltpu.VMEM((T2, B, 4 * H3), jnp.float32),
            pltpu.VMEM((T2, B, H3), jnp.float32),
            pltpu.VMEM((T2, B, H3), jnp.float32),
        ],
        compiler_params=pltpu.CompilerParams(dimension_semantics=("arbitrary",)),
    )(xseq, prep["wih_f"], prep["wih_b"], prep["bih_f"], prep["bih_b"],
      prep["whh_f"], prep["whh_b"], prep["wproj"], prep["bproj"])

    pr = jnp.transpose(proj[:, :, :12], (1, 2, 0))          # (B, 12, 2T)
    return pr[:, 0:1, :], pr[:, 1:2, :], pr[:, 2:12, :]


# ----------------------------------------------------------------------------
if __name__ == "__main__":
    d_hid, style_dim = 64, 256            # style slicing hard-codes 256/384/448/512
    B, T = 2, 16

    key = jax.random.PRNGKey(0)
    kp, ka, ks = jax.random.split(key, 3)
    params = build_params(kp, d_hid=d_hid, style_dim=style_dim)
    prep = prepare(params, d_hid)

    a_ens = jax.random.normal(ka, (B, d_hid, T), jnp.float32)          # (B, d_hid, T)
    style = jax.random.normal(ks, (B, 2 * style_dim), jnp.float32)     # (B, 512)

    fwd = jax.jit(lambda a, s: arts_predictor(prep, a, s))
    f0, n_out, ema = fwd(a_ens, style)
    jax.block_until_ready((f0, n_out, ema))

    assert f0.shape == (B, 1, 2 * T), f0.shape
    assert n_out.shape == (B, 1, 2 * T), n_out.shape
    assert ema.shape == (B, 10, 2 * T), ema.shape
    assert bool(jnp.all(jnp.isfinite(f0)))
    assert bool(jnp.all(jnp.isfinite(n_out)))
    assert bool(jnp.all(jnp.isfinite(ema)))
    print("KERNEL_OK")
</pallas_src>

<mosaic_0001>
module attributes {stable_mosaic.version = 11 : i64} {
  func.func @_shared_kernel(%arg0: memref<2x16x64xf32, #tpu.memory_space<vmem>>, %arg1: memref<2x512xf32, #tpu.memory_space<vmem>>, %arg2: memref<512x2176xbf16, #tpu.memory_space<vmem>>, %arg3: memref<1x2176xf32, #tpu.memory_space<vmem>>, %arg4: memref<3x64x64xbf16, #tpu.memory_space<vmem>>, %arg5: memref<1x64xf32, #tpu.memory_space<vmem>>, %arg6: memref<3x64x64xbf16, #tpu.memory_space<vmem>>, %arg7: memref<1x64xf32, #tpu.memory_space<vmem>>, %arg8: memref<2x16x64xf32, #tpu.memory_space<vmem>>, %arg9: memref<2x1920xf32, #tpu.memory_space<vmem>>) attributes {dimension_semantics = [], scalar_prefetch = 0 : i64, scratch_operands = 0 : i64, tpu.core_type = #tpu.core_type<tc>} {
    %c0 = arith.constant 0 : index
    %c0_0 = arith.constant 0 : index
    %0 = vector.load %arg1[%c0, %c0_0] : memref<2x512xf32, #tpu.memory_space<vmem>>, vector<2x512xf32>
    %1 = arith.truncf %0 : vector<2x512xf32> to vector<2x512xbf16>
    %c0_1 = arith.constant 0 : index
    %c0_2 = arith.constant 0 : index
    %2 = vector.load %arg2[%c0_1, %c0_2] : memref<512x2176xbf16, #tpu.memory_space<vmem>>, vector<512x2176xbf16>
    %cst = arith.constant dense<0.000000e+00> : vector<2x2176xf32>
    %3 = tpu.matmul %1, %2, %cst {dimension_numbers = #tpu.dot_dimension_numbers<[1], [0], [0], [1], [0, 0, 1, 1], [], []>} : vector<2x512xbf16>, vector<512x2176xbf16>, vector<2x2176xf32> -> vector<2x2176xf32>
    %c0_3 = arith.constant 0 : index
    %c0_4 = arith.constant 0 : index
    %4 = vector.load %arg3[%c0_3, %c0_4] : memref<1x2176xf32, #tpu.memory_space<vmem>>, vector<1x2176xf32>
    %5 = vector.broadcast %4 : vector<1x2176xf32> to vector<2x2176xf32>
    %6 = arith.addf %3, %5 : vector<2x2176xf32>
    %7 = vector.extract_strided_slice %6 {offsets = [0, 256], sizes = [2, 1920], strides = [1, 1]} : vector<2x2176xf32> to vector<2x1920xf32>
    %c0_5 = arith.constant 0 : index
    %c0_6 = arith.constant 0 : index
    %8 = vector.load %arg9[%c0_5, %c0_6] : memref<2x1920xf32, #tpu.memory_space<vmem>>, vector<2x1920xf32>
    tpu.vector_store %arg9[%c0_5, %c0_6], %7 {strides = array<i32>} : memref<2x1920xf32, #tpu.memory_space<vmem>>, vector<2x1920xf32>,
    %9 = vector.extract_strided_slice %6 {offsets = [0, 0], sizes = [2, 64], strides = [1, 1]} : vector<2x2176xf32> to vector<2x64xf32>
    %10 = vector.shape_cast %9 : vector<2x64xf32> to vector<2x1x64xf32>
    %11 = vector.extract_strided_slice %6 {offsets = [0, 64], sizes = [2, 64], strides = [1, 1]} : vector<2x2176xf32> to vector<2x64xf32>
    %12 = vector.shape_cast %11 : vector<2x64xf32> to vector<2x1x64xf32>
    %13 = vector.extract_strided_slice %6 {offsets = [0, 128], sizes = [2, 64], strides = [1, 1]} : vector<2x2176xf32> to vector<2x64xf32>
    %14 = vector.shape_cast %13 : vector<2x64xf32> to vector<2x1x64xf32>
    %15 = vector.extract_strided_slice %6 {offsets = [0, 192], sizes = [2, 64], strides = [1, 1]} : vector<2x2176xf32> to vector<2x64xf32>
    %16 = vector.shape_cast %15 : vector<2x64xf32> to vector<2x1x64xf32>
    %c0_7 = arith.constant 0 : index
    %c0_8 = arith.constant 0 : index
    %c0_9 = arith.constant 0 : index
    %17 = vector.load %arg0[%c0_7, %c0_8, %c0_9] : memref<2x16x64xf32, #tpu.memory_space<vmem>>, vector<2x16x64xf32>
    %cst_10 = arith.constant dense<0.000000e+00> : vector<2x64xf32>
    %18 = vector.multi_reduction <add>, %17, %cst_10 [1] : vector<2x16x64xf32> to vector<2x64xf32>
    %19 = vector.shape_cast %18 : vector<2x64xf32> to vector<2x1x64xf32>
    %cst_11 = arith.constant 1.600000e+01 : f32
    %20 = vector.broadcast %cst_11 : f32 to vector<2x1x64xf32>
    %21 = arith.divf %19, %20 : vector<2x1x64xf32>
    %22 = vector.broadcast %21 : vector<2x1x64xf32> to vector<2x16x64xf32>
    %23 = arith.subf %17, %22 : vector<2x16x64xf32>
    %24 = arith.mulf %23, %23 : vector<2x16x64xf32>
    %cst_12 = arith.constant dense<0.000000e+00> : vector<2x64xf32>
    %25 = vector.multi_reduction <add>, %24, %cst_12 [1] : vector<2x16x64xf32> to vector<2x64xf32>
    %26 = vector.shape_cast %25 : vector<2x64xf32> to vector<2x1x64xf32>
    %cst_13 = arith.constant 1.600000e+01 : f32
    %27 = vector.broadcast %cst_13 : f32 to vector<2x1x64xf32>
    %28 = arith.divf %26, %27 : vector<2x1x64xf32>
    %cst_14 = arith.constant 1.000000e+00 : f32
    %29 = vector.broadcast %cst_14 : f32 to vector<2x1x64xf32>
    %30 = arith.addf %29, %10 : vector<2x1x64xf32>
    %cst_15 = arith.constant 9.99999974E-6 : f32
    %31 = vector.broadcast %cst_15 : f32 to vector<2x1x64xf32>
    %32 = arith.addf %28, %31 : vector<2x1x64xf32>
    %33 = math.rsqrt %32 : vector<2x1x64xf32>
    %34 = vector.broadcast %33 : vector<2x1x64xf32> to vector<2x16x64xf32>
    %35 = arith.mulf %23, %34 : vector<2x16x64xf32>
    %36 = vector.broadcast %30 : vector<2x1x64xf32> to vector<2x16x64xf32>
    %37 = arith.mulf %36, %35 : vector<2x16x64xf32>
    %38 = vector.broadcast %12 : vector<2x1x64xf32> to vector<2x16x64xf32>
    %39 = arith.addf %37, %38 : vector<2x16x64xf32>
    %cst_16 = arith.constant 0.000000e+00 : f32
    %40 = vector.broadcast %cst_16 : f32 to vector<2x16x64xf32>
    %41 = arith.cmpf oge, %39, %40 : vector<2x16x64xf32>
    %cst_17 = arith.constant 2.000000e-01 : f32
    %42 = vector.broadcast %cst_17 : f32 to vector<2x16x64xf32>
    %43 = arith.mulf %42, %39 : vector<2x16x64xf32>
    %44 = arith.select %41, %39, %43 : vector<2x16x64xi1>, vector<2x16x64xf32>
    %c0_18 = arith.constant 0 : index
    %c0_19 = arith.constant 0 : index
    %45 = vector.load %arg5[%c0_18, %c0_19] : memref<1x64xf32, #tpu.memory_space<vmem>>, vector<1x64xf32>
    %cst_20 = arith.constant 0.000000e+00 : f32
    %46 = vector.broadcast %cst_20 : f32 to vector<2x1x64xf32>
    %47 = vector.extract_strided_slice %44 {offsets = [0, 0, 0], sizes = [2, 15, 64], strides = [1, 1, 1]} : vector<2x16x64xf32> to vector<2x15x64xf32>
    %48 = tpu.concatenate %46, %47 in 1 : vector<2x1x64xf32>, vector<2x15x64xf32> -> vector<2x16x64xf32>
    %49 = vector.extract_strided_slice %44 {offsets = [0, 1, 0], sizes = [2, 15, 64], strides = [1, 1, 1]} : vector<2x16x64xf32> to vector<2x15x64xf32>
    %50 = tpu.concatenate %49, %46 in 1 : vector<2x15x64xf32>, vector<2x1x64xf32> -> vector<2x16x64xf32>
    %51 = vector.shape_cast %48 : vector<2x16x64xf32> to vector<32x64xf32>
    %52 = arith.truncf %51 : vector<32x64xf32> to vector<32x64xbf16>
    %c0_21 = arith.constant 0 : index
    %c0_22 = arith.constant 0 : index
    %c0_23 = arith.constant 0 : index
    %53 = vector.load %arg4[%c0_21, %c0_22, %c0_23] : memref<3x64x64xbf16, #tpu.memory_space<vmem>>, vector<1x64x64xbf16>
    %54 = vector.shape_cast %53 : vector<1x64x64xbf16> to vector<64x64xbf16>
    %cst_24 = arith.constant dense<0.000000e+00> : vector<32x64xf32>
    %55 = tpu.matmul %52, %54, %cst_24 {dimension_numbers = #tpu.dot_dimension_numbers<[1], [0], [0], [1], [0, 0, 1, 1], [], []>} : vector<32x64xbf16>, vector<64x64xbf16>, vector<32x64xf32> -> vector<32x64xf32>
    %56 = vector.shape_cast %44 : vector<2x16x64xf32> to vector<32x64xf32>
    %57 = arith.truncf %56 : vector<32x64xf32> to vector<32x64xbf16>
    %c1 = arith.constant 1 : index
    %c0_25 = arith.constant 0 : index
    %c0_26 = arith.constant 0 : index
    %58 = vector.load %arg4[%c1, %c0_25, %c0_26] : memref<3x64x64xbf16, #tpu.memory_space<vmem>>, vector<1x64x64xbf16>
    %59 = vector.shape_cast %58 : vector<1x64x64xbf16> to vector<64x64xbf16>
    %cst_27 = arith.constant dense<0.000000e+00> : vector<32x64xf32>
    %60 = tpu.matmul %57, %59, %cst_27 {dimension_numbers = #tpu.dot_dimension_numbers<[1], [0], [0], [1], [0, 0, 1, 1], [], []>} : vector<32x64xbf16>, vector<64x64xbf16>, vector<32x64xf32> -> vector<32x64xf32>
    %61 = arith.addf %55, %60 : vector<32x64xf32>
    %62 = vector.shape_cast %50 : vector<2x16x64xf32> to vector<32x64xf32>
    %63 = arith.truncf %62 : vector<32x64xf32> to vector<32x64xbf16>
    %c2 = arith.constant 2 : index
    %c0_28 = arith.constant 0 : index
    %c0_29 = arith.constant 0 : index
    %64 = vector.load %arg4[%c2, %c0_28, %c0_29] : memref<3x64x64xbf16, #tpu.memory_space<vmem>>, vector<1x64x64xbf16>
    %65 = vector.shape_cast %64 : vector<1x64x64xbf16> to vector<64x64xbf16>
    %cst_30 = arith.constant dense<0.000000e+00> : vector<32x64xf32>
    %66 = tpu.matmul %63, %65, %cst_30 {dimension_numbers = #tpu.dot_dimension_numbers<[1], [0], [0], [1], [0, 0, 1, 1], [], []>} : vector<32x64xbf16>, vector<64x64xbf16>, vector<32x64xf32> -> vector<32x64xf32>
    %67 = arith.addf %61, %66 : vector<32x64xf32>
    %68 = vector.broadcast %45 : vector<1x64xf32> to vector<32x64xf32>
    %69 = arith.addf %67, %68 : vector<32x64xf32>
    %70 = vector.shape_cast %69 : vector<32x64xf32> to vector<2x16x64xf32>
    %cst_31 = arith.constant dense<0.000000e+00> : vector<2x64xf32>
    %71 = vector.multi_reduction <add>, %70, %cst_31 [1] : vector<2x16x64xf32> to vector<2x64xf32>
    %72 = vector.shape_cast %71 : vector<2x64xf32> to vector<2x1x64xf32>
    %cst_32 = arith.constant 1.600000e+01 : f32
    %73 = vector.broadcast %cst_32 : f32 to vector<2x1x64xf32>
    %74 = arith.divf %72, %73 : vector<2x1x64xf32>
    %75 = vector.broadcast %74 : vector<2x1x64xf32> to vector<2x16x64xf32>
    %76 = arith.subf %70, %75 : vector<2x16x64xf32>
    %77 = arith.mulf %76, %76 : vector<2x16x64xf32>
    %cst_33 = arith.constant dense<0.000000e+00> : vector<2x64xf32>
    %78 = vector.multi_reduction <add>, %77, %cst_33 [1] : vector<2x16x64xf32> to vector<2x64xf32>
    %79 = vector.shape_cast %78 : vector<2x64xf32> to vector<2x1x64xf32>
    %cst_34 = arith.constant 1.600000e+01 : f32
    %80 = vector.broadcast %cst_34 : f32 to vector<2x1x64xf32>
    %81 = arith.divf %79, %80 : vector<2x1x64xf32>
    %cst_35 = arith.constant 1.000000e+00 : f32
    %82 = vector.broadcast %cst_35 : f32 to vector<2x1x64xf32>
    %83 = arith.addf %82, %14 : vector<2x1x64xf32>
    %cst_36 = arith.constant 9.99999974E-6 : f32
    %84 = vector.broadcast %cst_36 : f32 to vector<2x1x64xf32>
    %85 = arith.addf %81, %84 : vector<2x1x64xf32>
    %86 = math.rsqrt %85 : vector<2x1x64xf32>
    %87 = vector.broadcast %86 : vector<2x1x64xf32> to vector<2x16x64xf32>
    %88 = arith.mulf %76, %87 : vector<2x16x64xf32>
    %89 = vector.broadcast %83 : vector<2x1x64xf32> to vector<2x16x64xf32>
    %90 = arith.mulf %89, %88 : vector<2x16x64xf32>
    %91 = vector.broadcast %16 : vector<2x1x64xf32> to vector<2x16x64xf32>
    %92 = arith.addf %90, %91 : vector<2x16x64xf32>
    %cst_37 = arith.constant 0.000000e+00 : f32
    %93 = vector.broadcast %cst_37 : f32 to vector<2x16x64xf32>
    %94 = arith.cmpf oge, %92, %93 : vector<2x16x64xf32>
    %cst_38 = arith.constant 2.000000e-01 : f32
    %95 = vector.broadcast %cst_38 : f32 to vector<2x16x64xf32>
    %96 = arith.mulf %95, %92 : vector<2x16x64xf32>
    %97 = arith.select %94, %92, %96 : vector<2x16x64xi1>, vector<2x16x64xf32>
    %c0_39 = arith.constant 0 : index
    %c0_40 = arith.constant 0 : index
    %98 = vector.load %arg7[%c0_39, %c0_40] : memref<1x64xf32, #tpu.memory_space<vmem>>, vector<1x64xf32>
    %cst_41 = arith.constant 0.000000e+00 : f32
    %99 = vector.broadcast %cst_41 : f32 to vector<2x1x64xf32>
    %100 = vector.extract_strided_slice %97 {offsets = [0, 0, 0], sizes = [2, 15, 64], strides = [1, 1, 1]} : vector<2x16x64xf32> to vector<2x15x64xf32>
    %101 = tpu.concatenate %99, %100 in 1 : vector<2x1x64xf32>, vector<2x15x64xf32> -> vector<2x16x64xf32>
    %102 = vector.extract_strided_slice %97 {offsets = [0, 1, 0], sizes = [2, 15, 64], strides = [1, 1, 1]} : vector<2x16x64xf32> to vector<2x15x64xf32>
    %103 = tpu.concatenate %102, %99 in 1 : vector<2x15x64xf32>, vector<2x1x64xf32> -> vector<2x16x64xf32>
    %104 = vector.shape_cast %101 : vector<2x16x64xf32> to vector<32x64xf32>
    %105 = arith.truncf %104 : vector<32x64xf32> to vector<32x64xbf16>
    %c0_42 = arith.constant 0 : index
    %c0_43 = arith.constant 0 : index
    %c0_44 = arith.constant 0 : index
    %106 = vector.load %arg6[%c0_42, %c0_43, %c0_44] : memref<3x64x64xbf16, #tpu.memory_space<vmem>>, vector<1x64x64xbf16>
    %107 = vector.shape_cast %106 : vector<1x64x64xbf16> to vector<64x64xbf16>
    %cst_45 = arith.constant dense<0.000000e+00> : vector<32x64xf32>
    %108 = tpu.matmul %105, %107, %cst_45 {dimension_numbers = #tpu.dot_dimension_numbers<[1], [0], [0], [1], [0, 0, 1, 1], [], []>} : vector<32x64xbf16>, vector<64x64xbf16>, vector<32x64xf32> -> vector<32x64xf32>
    %109 = vector.shape_cast %97 : vector<2x16x64xf32> to vector<32x64xf32>
    %110 = arith.truncf %109 : vector<32x64xf32> to vector<32x64xbf16>
    %c1_46 = arith.constant 1 : index
    %c0_47 = arith.constant 0 : index
    %c0_48 = arith.constant 0 : index
    %111 = vector.load %arg6[%c1_46, %c0_47, %c0_48] : memref<3x64x64xbf16, #tpu.memory_space<vmem>>, vector<1x64x64xbf16>
    %112 = vector.shape_cast %111 : vector<1x64x64xbf16> to vector<64x64xbf16>
    %cst_49 = arith.constant dense<0.000000e+00> : vector<32x64xf32>
    %113 = tpu.matmul %110, %112, %cst_49 {dimension_numbers = #tpu.dot_dimension_numbers<[1], [0], [0], [1], [0, 0, 1, 1], [], []>} : vector<32x64xbf16>, vector<64x64xbf16>, vector<32x64xf32> -> vector<32x64xf32>
    %114 = arith.addf %108, %113 : vector<32x64xf32>
    %115 = vector.shape_cast %103 : vector<2x16x64xf32> to vector<32x64xf32>
    %116 = arith.truncf %115 : vector<32x64xf32> to vector<32x64xbf16>
    %c2_50 = arith.constant 2 : index
    %c0_51 = arith.constant 0 : index
    %c0_52 = arith.constant 0 : index
    %117 = vector.load %arg6[%c2_50, %c0_51, %c0_52] : memref<3x64x64xbf16, #tpu.memory_space<vmem>>, vector<1x64x64xbf16>
    %118 = vector.shape_cast %117 : vector<1x64x64xbf16> to vector<64x64xbf16>
    %cst_53 = arith.constant dense<0.000000e+00> : vector<32x64xf32>
    %119 = tpu.matmul %116, %118, %cst_53 {dimension_numbers = #tpu.dot_dimension_numbers<[1], [0], [0], [1], [0, 0, 1, 1], [], []>} : vector<32x64xbf16>, vector<64x64xbf16>, vector<32x64xf32> -> vector<32x64xf32>
    %120 = arith.addf %114, %119 : vector<32x64xf32>
    %121 = vector.broadcast %98 : vector<1x64xf32> to vector<32x64xf32>
    %122 = arith.addf %120, %121 : vector<32x64xf32>
    %123 = vector.shape_cast %122 : vector<32x64xf32> to vector<2x16x64xf32>
    %124 = arith.addf %123, %17 : vector<2x16x64xf32>
    %cst_54 = arith.constant 0.707106769 : f32
    %125 = vector.broadcast %cst_54 : f32 to vector<2x16x64xf32>
    %126 = arith.mulf %124, %125 : vector<2x16x64xf32>
    %c0_55 = arith.constant 0 : index
    %c0_56 = arith.constant 0 : index
    %c0_57 = arith.constant 0 : index
    %127 = vector.load %arg8[%c0_55, %c0_56, %c0_57] : memref<2x16x64xf32, #tpu.memory_space<vmem>>, vector<2x16x64xf32>
    tpu.vector_store %arg8[%c0_55, %c0_56, %c0_57], %126 {strides = array<i32>} : memref<2x16x64xf32, #tpu.memory_space<vmem>>, vector<2x16x64xf32>,
    return
  }
}

module attributes {stable_mosaic.version = 11 : i64} {
  func.func @_branch_kernel(%arg0: i32, %arg1: memref<2x16x64xf32, #tpu.memory_space<vmem>>, %arg2: memref<2x640xf32, #tpu.memory_space<vmem>>, %arg3: memref<1x3x1x64xf32, #tpu.memory_space<vmem>>, %arg4: memref<1x1x64xf32, #tpu.memory_space<vmem>>, %arg5: memref<1x3x64x64xbf16, #tpu.memory_space<vmem>>, %arg6: memref<1x1x64xf32, #tpu.memory_space<vmem>>, %arg7: memref<1x3x64x64xbf16, #tpu.memory_space<vmem>>, %arg8: memref<1x1x64xf32, #tpu.memory_space<vmem>>, %arg9: memref<1x3x64x32xbf16, #tpu.memory_space<vmem>>, %arg10: memref<1x1x32xf32, #tpu.memory_space<vmem>>, %arg11: memref<1x3x32x32xbf16, #tpu.memory_space<vmem>>, %arg12: memref<1x1x32xf32, #tpu.memory_space<vmem>>, %arg13: memref<1x64x32xbf16, #tpu.memory_space<vmem>>, %arg14: memref<1x3x32x16xbf16, #tpu.memory_space<vmem>>, %arg15: memref<1x1x16xf32, #tpu.memory_space<vmem>>, %arg16: memref<1x3x16x16xbf16, #tpu.memory_space<vmem>>, %arg17: memref<1x1x16xf32, #tpu.memory_space<vmem>>, %arg18: memref<1x32x16xbf16, #tpu.memory_space<vmem>>, %arg19: memref<1x4x16x16xf32, #tpu.memory_space<vmem>>) attributes {dimension_semantics = [#tpu.dimension_semantics<parallel>], iteration_bounds = array<i64: 3>, scalar_prefetch = 0 : i64, scratch_operands = 0 : i64, tpu.core_type = #tpu.core_type<tc>, window_params = [{pipeline_mode = #tpu.pipeline_mode<synchronous>, transform_indices = @transform_0, window_bounds = array<i64: 2, 16, 64>}, {transform_indices = @transform_1, window_bounds = array<i64: 2, 640>}, {transform_indices = @transform_2, window_bounds = array<i64: 1, 3, 1, 64>}, {transform_indices = @transform_3, window_bounds = array<i64: 1, 1, 64>}, {transform_indices = @transform_4, window_bounds = array<i64: 1, 3, 64, 64>}, {transform_indices = @transform_5, window_bounds = array<i64: 1, 1, 64>}, {transform_indices = @transform_6, window_bounds = array<i64: 1, 3, 64, 64>}, {transform_indices = @transform_7, window_bounds = array<i64: 1, 1, 64>}, {transform_indices = @transform_8, window_bounds = array<i64: 1, 3, 64, 32>}, {transform_indices = @transform_9, window_bounds = array<i64: 1, 1, 32>}, {transform_indices = @transform_10, window_bounds = array<i64: 1, 3, 32, 32>}, {transform_indices = @transform_11, window_bounds = array<i64: 1, 1, 32>}, {transform_indices = @transform_12, window_bounds = array<i64: 1, 64, 32>}, {transform_indices = @transform_13, window_bounds = array<i64: 1, 3, 32, 16>}, {transform_indices = @transform_14, window_bounds = array<i64: 1, 1, 16>}, {transform_indices = @transform_15, window_bounds = array<i64: 1, 3, 16, 16>}, {transform_indices = @transform_16, window_bounds = array<i64: 1, 1, 16>}, {transform_indices = @transform_17, window_bounds = array<i64: 1, 32, 16>}, {transform_indices = @transform_18, window_bounds = array<i64: 1, 4, 16, 16>}]} {
    %c0 = arith.constant 0 : index
    %c0_0 = arith.constant 0 : index
    %0 = vector.load %arg2[%c0, %c0_0] : memref<2x640xf32, #tpu.memory_space<vmem>>, vector<2x640xf32>
    %1 = vector.extract_strided_slice %0 {offsets = [0, 0], sizes = [2, 64], strides = [1, 1]} : vector<2x640xf32> to vector<2x64xf32>
    %2 = vector.extract_strided_slice %0 {offsets = [0, 64], sizes = [2, 64], strides = [1, 1]} : vector<2x640xf32> to vector<2x64xf32>
    %3 = vector.extract_strided_slice %0 {offsets = [0, 128], sizes = [2, 64], strides = [1, 1]} : vector<2x640xf32> to vector<2x64xf32>
    %4 = vector.extract_strided_slice %0 {offsets = [0, 192], sizes = [2, 64], strides = [1, 1]} : vector<2x640xf32> to vector<2x64xf32>
    %5 = vector.extract_strided_slice %0 {offsets = [0, 256], sizes = [2, 64], strides = [1, 1]} : vector<2x640xf32> to vector<2x64xf32>
    %6 = vector.extract_strided_slice %0 {offsets = [0, 320], sizes = [2, 64], strides = [1, 1]} : vector<2x640xf32> to vector<2x64xf32>
    %7 = vector.extract_strided_slice %0 {offsets = [0, 384], sizes = [2, 32], strides = [1, 1]} : vector<2x640xf32> to vector<2x32xf32>
    %8 = vector.extract_strided_slice %0 {offsets = [0, 416], sizes = [2, 32], strides = [1, 1]} : vector<2x640xf32> to vector<2x32xf32>
    %9 = vector.extract_strided_slice %0 {offsets = [0, 448], sizes = [2, 32], strides = [1, 1]} : vector<2x640xf32> to vector<2x32xf32>
    %10 = vector.extract_strided_slice %0 {offsets = [0, 480], sizes = [2, 32], strides = [1, 1]} : vector<2x640xf32> to vector<2x32xf32>
    %11 = vector.extract_strided_slice %0 {offsets = [0, 512], sizes = [2, 16], strides = [1, 1]} : vector<2x640xf32> to vector<2x16xf32>
    %12 = vector.extract_strided_slice %0 {offsets = [0, 528], sizes = [2, 16], strides = [1, 1]} : vector<2x640xf32> to vector<2x16xf32>
    %c0_1 = arith.constant 0 : index
    %c0_2 = arith.constant 0 : index
    %c0_3 = arith.constant 0 : index
    %13 = vector.load %arg1[%c0_1, %c0_2, %c0_3] : memref<2x16x64xf32, #tpu.memory_space<vmem>>, vector<2x16x64xf32>
    %14 = vector.shape_cast %1 : vector<2x64xf32> to vector<2x1x64xf32>
    %15 = vector.shape_cast %2 : vector<2x64xf32> to vector<2x1x64xf32>
    %cst = arith.constant dense<0.000000e+00> : vector<2x64xf32>
    %16 = vector.multi_reduction <add>, %13, %cst [1] : vector<2x16x64xf32> to vector<2x64xf32>
    %17 = vector.shape_cast %16 : vector<2x64xf32> to vector<2x1x64xf32>
    %cst_4 = arith.constant 1.600000e+01 : f32
    %18 = vector.broadcast %cst_4 : f32 to vector<2x1x64xf32>
    %19 = arith.divf %17, %18 : vector<2x1x64xf32>
    %20 = vector.broadcast %19 : vector<2x1x64xf32> to vector<2x16x64xf32>
    %21 = arith.subf %13, %20 : vector<2x16x64xf32>
    %22 = arith.mulf %21, %21 : vector<2x16x64xf32>
    %cst_5 = arith.constant dense<0.000000e+00> : vector<2x64xf32>
    %23 = vector.multi_reduction <add>, %22, %cst_5 [1] : vector<2x16x64xf32> to vector<2x64xf32>
    %24 = vector.shape_cast %23 : vector<2x64xf32> to vector<2x1x64xf32>
    %cst_6 = arith.constant 1.600000e+01 : f32
    %25 = vector.broadcast %cst_6 : f32 to vector<2x1x64xf32>
    %26 = arith.divf %24, %25 : vector<2x1x64xf32>
    %cst_7 = arith.constant 1.000000e+00 : f32
    %27 = vector.broadcast %cst_7 : f32 to vector<2x1x64xf32>
    %28 = arith.addf %27, %14 : vector<2x1x64xf32>
    %cst_8 = arith.constant 9.99999974E-6 : f32
    %29 = vector.broadcast %cst_8 : f32 to vector<2x1x64xf32>
    %30 = arith.addf %26, %29 : vector<2x1x64xf32>
    %31 = math.rsqrt %30 : vector<2x1x64xf32>
    %32 = vector.broadcast %31 : vector<2x1x64xf32> to vector<2x16x64xf32>
    %33 = arith.mulf %21, %32 : vector<2x16x64xf32>
    %34 = vector.broadcast %28 : vector<2x1x64xf32> to vector<2x16x64xf32>
    %35 = arith.mulf %34, %33 : vector<2x16x64xf32>
    %36 = vector.broadcast %15 : vector<2x1x64xf32> to vector<2x16x64xf32>
    %37 = arith.addf %35, %36 : vector<2x16x64xf32>
    %cst_9 = arith.constant 0.000000e+00 : f32
    %38 = vector.broadcast %cst_9 : f32 to vector<2x16x64xf32>
    %39 = arith.cmpf oge, %37, %38 : vector<2x16x64xf32>
    %cst_10 = arith.constant 2.000000e-01 : f32
    %40 = vector.broadcast %cst_10 : f32 to vector<2x16x64xf32>
    %41 = arith.mulf %40, %37 : vector<2x16x64xf32>
    %42 = arith.select %39, %37, %41 : vector<2x16x64xi1>, vector<2x16x64xf32>
    %c0_11 = arith.constant 0 : index
    %c0_12 = arith.constant 0 : index
    %c0_13 = arith.constant 0 : index
    %c0_14 = arith.constant 0 : index
    %43 = vector.load %arg3[%c0_11, %c0_12, %c0_13, %c0_14] : memref<1x3x1x64xf32, #tpu.memory_space<vmem>>, vector<1x3x1x64xf32>
    %44 = vector.shape_cast %43 : vector<1x3x1x64xf32> to vector<3x1x64xf32>
    %c0_15 = arith.constant 0 : index
    %c0_16 = arith.constant 0 : index
    %c0_17 = arith.constant 0 : index
    %45 = vector.load %arg4[%c0_15, %c0_16, %c0_17] : memref<1x1x64xf32, #tpu.memory_space<vmem>>, vector<1x1x64xf32>
    %46 = vector.shape_cast %45 : vector<1x1x64xf32> to vector<1x64xf32>
    %cst_18 = arith.constant 0.000000e+00 : f32
    %47 = vector.broadcast %cst_18 : f32 to vector<2x1x64xf32>
    %48 = vector.extract_strided_slice %42 {offsets = [0, 1, 0], sizes = [2, 15, 64], strides = [1, 1, 1]} : vector<2x16x64xf32> to vector<2x15x64xf32>
    %49 = tpu.concatenate %48, %47 in 1 : vector<2x15x64xf32>, vector<2x1x64xf32> -> vector<2x16x64xf32>
    %50 = vector.extract_strided_slice %44 {offsets = [1, 0, 0], sizes = [1, 1, 64], strides = [1, 1, 1]} : vector<3x1x64xf32> to vector<1x1x64xf32>
    %51 = vector.shape_cast %50 : vector<1x1x64xf32> to vector<1x64xf32>
    %52 = vector.shape_cast %51 : vector<1x64xf32> to vector<1x1x64xf32>
    %53 = vector.broadcast %52 : vector<1x1x64xf32> to vector<2x16x64xf32>
    %54 = arith.mulf %42, %53 : vector<2x16x64xf32>
    %55 = vector.shape_cast %46 : vector<1x64xf32> to vector<1x1x64xf32>
    %56 = vector.broadcast %55 : vector<1x1x64xf32> to vector<2x16x64xf32>
    %57 = arith.addf %54, %56 : vector<2x16x64xf32>
    %58 = vector.extract_strided_slice %44 {offsets = [2, 0, 0], sizes = [1, 1, 64], strides = [1, 1, 1]} : vector<3x1x64xf32> to vector<1x1x64xf32>
    %59 = vector.shape_cast %58 : vector<1x1x64xf32> to vector<1x64xf32>
    %60 = vector.shape_cast %59 : vector<1x64xf32> to vector<1x1x64xf32>
    %61 = vector.broadcast %60 : vector<1x1x64xf32> to vector<2x16x64xf32>
    %62 = arith.mulf %42, %61 : vector<2x16x64xf32>
    %63 = vector.extract_strided_slice %44 {offsets = [0, 0, 0], sizes = [1, 1, 64], strides = [1, 1, 1]} : vector<3x1x64xf32> to vector<1x1x64xf32>
    %64 = vector.shape_cast %63 : vector<1x1x64xf32> to vector<1x64xf32>
    %65 = vector.shape_cast %64 : vector<1x64xf32> to vector<1x1x64xf32>
    %66 = vector.broadcast %65 : vector<1x1x64xf32> to vector<2x16x64xf32>
    %67 = arith.mulf %49, %66 : vector<2x16x64xf32>
    %68 = arith.addf %62, %67 : vector<2x16x64xf32>
    %69 = vector.shape_cast %46 : vector<1x64xf32> to vector<1x1x64xf32>
    %70 = vector.broadcast %69 : vector<1x1x64xf32> to vector<2x16x64xf32>
    %71 = arith.addf %68, %70 : vector<2x16x64xf32>
    %72 = vector.shape_cast %57 : vector<2x16x64xf32> to vector<1x2x16x64xf32>
    %73 = vector.shape_cast %71 : vector<2x16x64xf32> to vector<1x2x16x64xf32>
    %74 = tpu.concatenate %72, %73 in 0 : vector<1x2x16x64xf32>, vector<1x2x16x64xf32> -> vector<2x2x16x64xf32>
    %c0_19 = arith.constant 0 : index
    %c0_20 = arith.constant 0 : index
    %c0_21 = arith.constant 0 : index
    %75 = vector.load %arg6[%c0_19, %c0_20, %c0_21] : memref<1x1x64xf32, #tpu.memory_space<vmem>>, vector<1x1x64xf32>
    %76 = vector.shape_cast %75 : vector<1x1x64xf32> to vector<1x64xf32>
    %77 = vector.extract_strided_slice %74 {offsets = [0, 0, 0, 0], sizes = [1, 2, 16, 64], strides = [1, 1, 1, 1]} : vector<2x2x16x64xf32> to vector<1x2x16x64xf32>
    %78 = vector.shape_cast %77 : vector<1x2x16x64xf32> to vector<2x16x64xf32>
    %79 = vector.extract_strided_slice %74 {offsets = [1, 0, 0, 0], sizes = [1, 2, 16, 64], strides = [1, 1, 1, 1]} : vector<2x2x16x64xf32> to vector<1x2x16x64xf32>
    %80 = vector.shape_cast %79 : vector<1x2x16x64xf32> to vector<2x16x64xf32>
    %cst_22 = arith.constant 0.000000e+00 : f32
    %81 = vector.broadcast %cst_22 : f32 to vector<2x1x64xf32>
    %82 = vector.extract_strided_slice %80 {offsets = [0, 0, 0], sizes = [2, 15, 64], strides = [1, 1, 1]} : vector<2x16x64xf32> to vector<2x15x64xf32>
    %83 = tpu.concatenate %81, %82 in 1 : vector<2x1x64xf32>, vector<2x15x64xf32> -> vector<2x16x64xf32>
    %84 = vector.extract_strided_slice %78 {offsets = [0, 1, 0], sizes = [2, 15, 64], strides = [1, 1, 1]} : vector<2x16x64xf32> to vector<2x15x64xf32>
    %85 = tpu.concatenate %84, %81 in 1 : vector<2x15x64xf32>, vector<2x1x64xf32> -> vector<2x16x64xf32>
    %86 = vector.shape_cast %83 : vector<2x16x64xf32> to vector<1x2x16x64xf32>
    %87 = vector.shape_cast %78 : vector<2x16x64xf32> to vector<1x2x16x64xf32>
    %88 = tpu.concatenate %86, %87 in 0 : vector<1x2x16x64xf32>, vector<1x2x16x64xf32> -> vector<2x2x16x64xf32>
    %89 = vector.shape_cast %80 : vector<2x16x64xf32> to vector<1x2x16x64xf32>
    %90 = vector.shape_cast %85 : vector<2x16x64xf32> to vector<1x2x16x64xf32>
    %91 = tpu.concatenate %89, %90 in 0 : vector<1x2x16x64xf32>, vector<1x2x16x64xf32> -> vector<2x2x16x64xf32>
    %92 = vector.shape_cast %88 : vector<2x2x16x64xf32> to vector<64x64xf32>
    %93 = arith.truncf %92 : vector<64x64xf32> to vector<64x64xbf16>
    %c0_23 = arith.constant 0 : index
    %c0_24 = arith.constant 0 : index
    %c0_25 = arith.constant 0 : index
    %c0_26 = arith.constant 0 : index
    %94 = vector.load %arg5[%c0_23, %c0_24, %c0_25, %c0_26] : memref<1x3x64x64xbf16, #tpu.memory_space<vmem>>, vector<1x1x64x64xbf16>
    %95 = vector.shape_cast %94 : vector<1x1x64x64xbf16> to vector<64x64xbf16>
    %cst_27 = arith.constant dense<0.000000e+00> : vector<64x64xf32>
    %96 = tpu.matmul %93, %95, %cst_27 {dimension_numbers = #tpu.dot_dimension_numbers<[1], [0], [0], [1], [0, 0, 1, 1], [], []>} : vector<64x64xbf16>, vector<64x64xbf16>, vector<64x64xf32> -> vector<64x64xf32>
    %97 = vector.shape_cast %74 : vector<2x2x16x64xf32> to vector<64x64xf32>
    %98 = arith.truncf %97 : vector<64x64xf32> to vector<64x64xbf16>
    %c0_28 = arith.constant 0 : index
    %c1 = arith.constant 1 : index
    %c0_29 = arith.constant 0 : index
    %c0_30 = arith.constant 0 : index
    %99 = vector.load %arg5[%c0_28, %c1, %c0_29, %c0_30] : memref<1x3x64x64xbf16, #tpu.memory_space<vmem>>, vector<1x1x64x64xbf16>
    %100 = vector.shape_cast %99 : vector<1x1x64x64xbf16> to vector<64x64xbf16>
    %cst_31 = arith.constant dense<0.000000e+00> : vector<64x64xf32>
    %101 = tpu.matmul %98, %100, %cst_31 {dimension_numbers = #tpu.dot_dimension_numbers<[1], [0], [0], [1], [0, 0, 1, 1], [], []>} : vector<64x64xbf16>, vector<64x64xbf16>, vector<64x64xf32> -> vector<64x64xf32>
    %102 = arith.addf %96, %101 : vector<64x64xf32>
    %103 = vector.shape_cast %91 : vector<2x2x16x64xf32> to vector<64x64xf32>
    %104 = arith.truncf %103 : vector<64x64xf32> to vector<64x64xbf16>
    %c0_32 = arith.constant 0 : index
    %c2 = arith.constant 2 : index
    %c0_33 = arith.constant 0 : index
    %c0_34 = arith.constant 0 : index
    %105 = vector.load %arg5[%c0_32, %c2, %c0_33, %c0_34] : memref<1x3x64x64xbf16, #tpu.memory_space<vmem>>, vector<1x1x64x64xbf16>
    %106 = vector.shape_cast %105 : vector<1x1x64x64xbf16> to vector<64x64xbf16>
    %cst_35 = arith.constant dense<0.000000e+00> : vector<64x64xf32>
    %107 = tpu.matmul %104, %106, %cst_35 {dimension_numbers = #tpu.dot_dimension_numbers<[1], [0], [0], [1], [0, 0, 1, 1], [], []>} : vector<64x64xbf16>, vector<64x64xbf16>, vector<64x64xf32> -> vector<64x64xf32>
    %108 = arith.addf %102, %107 : vector<64x64xf32>
    %109 = vector.broadcast %76 : vector<1x64xf32> to vector<64x64xf32>
    %110 = arith.addf %108, %109 : vector<64x64xf32>
    %111 = vector.shape_cast %110 : vector<64x64xf32> to vector<2x2x16x64xf32>
    %112 = vector.shape_cast %3 : vector<2x64xf32> to vector<1x2x1x64xf32>
    %113 = vector.shape_cast %4 : vector<2x64xf32> to vector<1x2x1x64xf32>
    %cst_36 = arith.constant dense<0.000000e+00> : vector<2x2x64xf32>
    %114 = vector.multi_reduction <add>, %111, %cst_36 [2] : vector<2x2x16x64xf32> to vector<2x2x64xf32>
    %115 = vector.shape_cast %114 : vector<2x2x64xf32> to vector<2x2x1x64xf32>
    %cst_37 = arith.constant 1.600000e+01 : f32
    %116 = vector.broadcast %cst_37 : f32 to vector<2x2x1x64xf32>
    %117 = arith.divf %115, %116 : vector<2x2x1x64xf32>
    %cst_38 = arith.constant dense<0.000000e+00> : vector<2x1x64xf32>
    %118 = vector.multi_reduction <add>, %117, %cst_38 [0] : vector<2x2x1x64xf32> to vector<2x1x64xf32>
    %119 = vector.shape_cast %118 : vector<2x1x64xf32> to vector<1x2x1x64xf32>
    %cst_39 = arith.constant 2.000000e+00 : f32
    %120 = vector.broadcast %cst_39 : f32 to vector<1x2x1x64xf32>
    %121 = arith.divf %119, %120 : vector<1x2x1x64xf32>
    %122 = vector.broadcast %121 : vector<1x2x1x64xf32> to vector<2x2x16x64xf32>
    %123 = arith.subf %111, %122 : vector<2x2x16x64xf32>
    %124 = arith.mulf %123, %123 : vector<2x2x16x64xf32>
    %cst_40 = arith.constant dense<0.000000e+00> : vector<2x2x64xf32>
    %125 = vector.multi_reduction <add>, %124, %cst_40 [2] : vector<2x2x16x64xf32> to vector<2x2x64xf32>
    %126 = vector.shape_cast %125 : vector<2x2x64xf32> to vector<2x2x1x64xf32>
    %cst_41 = arith.constant 1.600000e+01 : f32
    %127 = vector.broadcast %cst_41 : f32 to vector<2x2x1x64xf32>
    %128 = arith.divf %126, %127 : vector<2x2x1x64xf32>
    %cst_42 = arith.constant dense<0.000000e+00> : vector<2x1x64xf32>
    %129 = vector.multi_reduction <add>, %128, %cst_42 [0] : vector<2x2x1x64xf32> to vector<2x1x64xf32>
    %130 = vector.shape_cast %129 : vector<2x1x64xf32> to vector<1x2x1x64xf32>
    %cst_43 = arith.constant 2.000000e+00 : f32
    %131 = vector.broadcast %cst_43 : f32 to vector<1x2x1x64xf32>
    %132 = arith.divf %130, %131 : vector<1x2x1x64xf32>
    %cst_44 = arith.constant 1.000000e+00 : f32
    %133 = vector.broadcast %cst_44 : f32 to vector<1x2x1x64xf32>
    %134 = arith.addf %133, %112 : vector<1x2x1x64xf32>
    %cst_45 = arith.constant 9.99999974E-6 : f32
    %135 = vector.broadcast %cst_45 : f32 to vector<1x2x1x64xf32>
    %136 = arith.addf %132, %135 : vector<1x2x1x64xf32>
    %137 = math.rsqrt %136 : vector<1x2x1x64xf32>
    %138 = vector.broadcast %137 : vector<1x2x1x64xf32> to vector<2x2x16x64xf32>
    %139 = arith.mulf %123, %138 : vector<2x2x16x64xf32>
    %140 = vector.broadcast %134 : vector<1x2x1x64xf32> to vector<2x2x16x64xf32>
    %141 = arith.mulf %140, %139 : vector<2x2x16x64xf32>
    %142 = vector.broadcast %113 : vector<1x2x1x64xf32> to vector<2x2x16x64xf32>
    %143 = arith.addf %141, %142 : vector<2x2x16x64xf32>
    %cst_46 = arith.constant 0.000000e+00 : f32
    %144 = vector.broadcast %cst_46 : f32 to vector<2x2x16x64xf32>
    %145 = arith.cmpf oge, %143, %144 : vector<2x2x16x64xf32>
    %cst_47 = arith.constant 2.000000e-01 : f32
    %146 = vector.broadcast %cst_47 : f32 to vector<2x2x16x64xf32>
    %147 = arith.mulf %146, %143 : vector<2x2x16x64xf32>
    %148 = arith.select %145, %143, %147 : vector<2x2x16x64xi1>, vector<2x2x16x64xf32>
    %c0_48 = arith.constant 0 : index
    %c0_49 = arith.constant 0 : index
    %c0_50 = arith.constant 0 : index
    %149 = vector.load %arg8[%c0_48, %c0_49, %c0_50] : memref<1x1x64xf32, #tpu.memory_space<vmem>>, vector<1x1x64xf32>
    %150 = vector.shape_cast %149 : vector<1x1x64xf32> to vector<1x64xf32>
    %151 = vector.extract_strided_slice %148 {offsets = [0, 0, 0, 0], sizes = [1, 2, 16, 64], strides = [1, 1, 1, 1]} : vector<2x2x16x64xf32> to vector<1x2x16x64xf32>
    %152 = vector.shape_cast %151 : vector<1x2x16x64xf32> to vector<2x16x64xf32>
    %153 = vector.extract_strided_slice %148 {offsets = [1, 0, 0, 0], sizes = [1, 2, 16, 64], strides = [1, 1, 1, 1]} : vector<2x2x16x64xf32> to vector<1x2x16x64xf32>
    %154 = vector.shape_cast %153 : vector<1x2x16x64xf32> to vector<2x16x64xf32>
    %cst_51 = arith.constant 0.000000e+00 : f32
    %155 = vector.broadcast %cst_51 : f32 to vector<2x1x64xf32>
    %156 = vector.extract_strided_slice %154 {offsets = [0, 0, 0], sizes = [2, 15, 64], strides = [1, 1, 1]} : vector<2x16x64xf32> to vector<2x15x64xf32>
    %157 = tpu.concatenate %155, %156 in 1 : vector<2x1x64xf32>, vector<2x15x64xf32> -> vector<2x16x64xf32>
    %158 = vector.extract_strided_slice %152 {offsets = [0, 1, 0], sizes = [2, 15, 64], strides = [1, 1, 1]} : vector<2x16x64xf32> to vector<2x15x64xf32>
    %159 = tpu.concatenate %158, %155 in 1 : vector<2x15x64xf32>, vector<2x1x64xf32> -> vector<2x16x64xf32>
    %160 = vector.shape_cast %157 : vector<2x16x64xf32> to vector<1x2x16x64xf32>
    %161 = vector.shape_cast %152 : vector<2x16x64xf32> to vector<1x2x16x64xf32>
    %162 = tpu.concatenate %160, %161 in 0 : vector<1x2x16x64xf32>, vector<1x2x16x64xf32> -> vector<2x2x16x64xf32>
    %163 = vector.shape_cast %154 : vector<2x16x64xf32> to vector<1x2x16x64xf32>
    %164 = vector.shape_cast %159 : vector<2x16x64xf32> to vector<1x2x16x64xf32>
    %165 = tpu.concatenate %163, %164 in 0 : vector<1x2x16x64xf32>, vector<1x2x16x64xf32> -> vector<2x2x16x64xf32>
    %166 = vector.shape_cast %162 : vector<2x2x16x64xf32> to vector<64x64xf32>
    %167 = arith.truncf %166 : vector<64x64xf32> to vector<64x64xbf16>
    %c0_52 = arith.constant 0 : index
    %c0_53 = arith.constant 0 : index
    %c0_54 = arith.constant 0 : index
    %c0_55 = arith.constant 0 : index
    %168 = vector.load %arg7[%c0_52, %c0_53, %c0_54, %c0_55] : memref<1x3x64x64xbf16, #tpu.memory_space<vmem>>, vector<1x1x64x64xbf16>
    %169 = vector.shape_cast %168 : vector<1x1x64x64xbf16> to vector<64x64xbf16>
    %cst_56 = arith.constant dense<0.000000e+00> : vector<64x64xf32>
    %170 = tpu.matmul %167, %169, %cst_56 {dimension_numbers = #tpu.dot_dimension_numbers<[1], [0], [0], [1], [0, 0, 1, 1], [], []>} : vector<64x64xbf16>, vector<64x64xbf16>, vector<64x64xf32> -> vector<64x64xf32>
    %171 = vector.shape_cast %148 : vector<2x2x16x64xf32> to vector<64x64xf32>
    %172 = arith.truncf %171 : vector<64x64xf32> to vector<64x64xbf16>
    %c0_57 = arith.constant 0 : index
    %c1_58 = arith.constant 1 : index
    %c0_59 = arith.constant 0 : index
    %c0_60 = arith.constant 0 : index
    %173 = vector.load %arg7[%c0_57, %c1_58, %c0_59, %c0_60] : memref<1x3x64x64xbf16, #tpu.memory_space<vmem>>, vector<1x1x64x64xbf16>
    %174 = vector.shape_cast %173 : vector<1x1x64x64xbf16> to vector<64x64xbf16>
    %cst_61 = arith.constant dense<0.000000e+00> : vector<64x64xf32>
    %175 = tpu.matmul %172, %174, %cst_61 {dimension_numbers = #tpu.dot_dimension_numbers<[1], [0], [0], [1], [0, 0, 1, 1], [], []>} : vector<64x64xbf16>, vector<64x64xbf16>, vector<64x64xf32> -> vector<64x64xf32>
    %176 = arith.addf %170, %175 : vector<64x64xf32>
    %177 = vector.shape_cast %165 : vector<2x2x16x64xf32> to vector<64x64xf32>
    %178 = arith.truncf %177 : vector<64x64xf32> to vector<64x64xbf16>
    %c0_62 = arith.constant 0 : index
    %c2_63 = arith.constant 2 : index
    %c0_64 = arith.constant 0 : index
    %c0_65 = arith.constant 0 : index
    %179 = vector.load %arg7[%c0_62, %c2_63, %c0_64, %c0_65] : memref<1x3x64x64xbf16, #tpu.memory_space<vmem>>, vector<1x1x64x64xbf16>
    %180 = vector.shape_cast %179 : vector<1x1x64x64xbf16> to vector<64x64xbf16>
    %cst_66 = arith.constant dense<0.000000e+00> : vector<64x64xf32>
    %181 = tpu.matmul %178, %180, %cst_66 {dimension_numbers = #tpu.dot_dimension_numbers<[1], [0], [0], [1], [0, 0, 1, 1], [], []>} : vector<64x64xbf16>, vector<64x64xbf16>, vector<64x64xf32> -> vector<64x64xf32>
    %182 = arith.addf %176, %181 : vector<64x64xf32>
    %183 = vector.broadcast %150 : vector<1x64xf32> to vector<64x64xf32>
    %184 = arith.addf %182, %183 : vector<64x64xf32>
    %185 = vector.shape_cast %184 : vector<64x64xf32> to vector<2x2x16x64xf32>
    %186 = vector.shape_cast %13 : vector<2x16x64xf32> to vector<1x2x16x64xf32>
    %187 = vector.broadcast %186 : vector<1x2x16x64xf32> to vector<2x2x16x64xf32>
    %188 = arith.addf %185, %187 : vector<2x2x16x64xf32>
    %cst_67 = arith.constant 0.707106769 : f32
    %189 = vector.broadcast %cst_67 : f32 to vector<2x2x16x64xf32>
    %190 = arith.mulf %188, %189 : vector<2x2x16x64xf32>
    %191 = vector.shape_cast %5 : vector<2x64xf32> to vector<1x2x1x64xf32>
    %192 = vector.shape_cast %6 : vector<2x64xf32> to vector<1x2x1x64xf32>
    %cst_68 = arith.constant dense<0.000000e+00> : vector<2x2x64xf32>
    %193 = vector.multi_reduction <add>, %190, %cst_68 [2] : vector<2x2x16x64xf32> to vector<2x2x64xf32>
    %194 = vector.shape_cast %193 : vector<2x2x64xf32> to vector<2x2x1x64xf32>
    %cst_69 = arith.constant 1.600000e+01 : f32
    %195 = vector.broadcast %cst_69 : f32 to vector<2x2x1x64xf32>
    %196 = arith.divf %194, %195 : vector<2x2x1x64xf32>
    %cst_70 = arith.constant dense<0.000000e+00> : vector<2x1x64xf32>
    %197 = vector.multi_reduction <add>, %196, %cst_70 [0] : vector<2x2x1x64xf32> to vector<2x1x64xf32>
    %198 = vector.shape_cast %197 : vector<2x1x64xf32> to vector<1x2x1x64xf32>
    %cst_71 = arith.constant 2.000000e+00 : f32
    %199 = vector.broadcast %cst_71 : f32 to vector<1x2x1x64xf32>
    %200 = arith.divf %198, %199 : vector<1x2x1x64xf32>
    %201 = vector.broadcast %200 : vector<1x2x1x64xf32> to vector<2x2x16x64xf32>
    %202 = arith.subf %190, %201 : vector<2x2x16x64xf32>
    %203 = arith.mulf %202, %202 : vector<2x2x16x64xf32>
    %cst_72 = arith.constant dense<0.000000e+00> : vector<2x2x64xf32>
    %204 = vector.multi_reduction <add>, %203, %cst_72 [2] : vector<2x2x16x64xf32> to vector<2x2x64xf32>
    %205 = vector.shape_cast %204 : vector<2x2x64xf32> to vector<2x2x1x64xf32>
    %cst_73 = arith.constant 1.600000e+01 : f32
    %206 = vector.broadcast %cst_73 : f32 to vector<2x2x1x64xf32>
    %207 = arith.divf %205, %206 : vector<2x2x1x64xf32>
    %cst_74 = arith.constant dense<0.000000e+00> : vector<2x1x64xf32>
    %208 = vector.multi_reduction <add>, %207, %cst_74 [0] : vector<2x2x1x64xf32> to vector<2x1x64xf32>
    %209 = vector.shape_cast %208 : vector<2x1x64xf32> to vector<1x2x1x64xf32>
    %cst_75 = arith.constant 2.000000e+00 : f32
    %210 = vector.broadcast %cst_75 : f32 to vector<1x2x1x64xf32>
    %211 = arith.divf %209, %210 : vector<1x2x1x64xf32>
    %cst_76 = arith.constant 1.000000e+00 : f32
    %212 = vector.broadcast %cst_76 : f32 to vector<1x2x1x64xf32>
    %213 = arith.addf %212, %191 : vector<1x2x1x64xf32>
    %cst_77 = arith.constant 9.99999974E-6 : f32
    %214 = vector.broadcast %cst_77 : f32 to vector<1x2x1x64xf32>
    %215 = arith.addf %211, %214 : vector<1x2x1x64xf32>
    %216 = math.rsqrt %215 : vector<1x2x1x64xf32>
    %217 = vector.broadcast %216 : vector<1x2x1x64xf32> to vector<2x2x16x64xf32>
    %218 = arith.mulf %202, %217 : vector<2x2x16x64xf32>
    %219 = vector.broadcast %213 : vector<1x2x1x64xf32> to vector<2x2x16x64xf32>
    %220 = arith.mulf %219, %218 : vector<2x2x16x64xf32>
    %221 = vector.broadcast %192 : vector<1x2x1x64xf32> to vector<2x2x16x64xf32>
    %222 = arith.addf %220, %221 : vector<2x2x16x64xf32>
    %cst_78 = arith.constant 0.000000e+00 : f32
    %223 = vector.broadcast %cst_78 : f32 to vector<2x2x16x64xf32>
    %224 = arith.cmpf oge, %222, %223 : vector<2x2x16x64xf32>
    %cst_79 = arith.constant 2.000000e-01 : f32
    %225 = vector.broadcast %cst_79 : f32 to vector<2x2x16x64xf32>
    %226 = arith.mulf %225, %222 : vector<2x2x16x64xf32>
    %227 = arith.select %224, %222, %226 : vector<2x2x16x64xi1>, vector<2x2x16x64xf32>
    %c0_80 = arith.constant 0 : index
    %c0_81 = arith.constant 0 : index
    %c0_82 = arith.constant 0 : index
    %228 = vector.load %arg10[%c0_80, %c0_81, %c0_82] : memref<1x1x32xf32, #tpu.memory_space<vmem>>, vector<1x1x32xf32>
    %229 = vector.shape_cast %228 : vector<1x1x32xf32> to vector<1x32xf32>
    %230 = vector.extract_strided_slice %227 {offsets = [0, 0, 0, 0], sizes = [1, 2, 16, 64], strides = [1, 1, 1, 1]} : vector<2x2x16x64xf32> to vector<1x2x16x64xf32>
    %231 = vector.shape_cast %230 : vector<1x2x16x64xf32> to vector<2x16x64xf32>
    %232 = vector.extract_strided_slice %227 {offsets = [1, 0, 0, 0], sizes = [1, 2, 16, 64], strides = [1, 1, 1, 1]} : vector<2x2x16x64xf32> to vector<1x2x16x64xf32>
    %233 = vector.shape_cast %232 : vector<1x2x16x64xf32> to vector<2x16x64xf32>
    %cst_83 = arith.constant 0.000000e+00 : f32
    %234 = vector.broadcast %cst_83 : f32 to vector<2x1x64xf32>
    %235 = vector.extract_strided_slice %233 {offsets = [0, 0, 0], sizes = [2, 15, 64], strides = [1, 1, 1]} : vector<2x16x64xf32> to vector<2x15x64xf32>
    %236 = tpu.concatenate %234, %235 in 1 : vector<2x1x64xf32>, vector<2x15x64xf32> -> vector<2x16x64xf32>
    %237 = vector.extract_strided_slice %231 {offsets = [0, 1, 0], sizes = [2, 15, 64], strides = [1, 1, 1]} : vector<2x16x64xf32> to vector<2x15x64xf32>
    %238 = tpu.concatenate %237, %234 in 1 : vector<2x15x64xf32>, vector<2x1x64xf32> -> vector<2x16x64xf32>
    %239 = vector.shape_cast %236 : vector<2x16x64xf32> to vector<1x2x16x64xf32>
    %240 = vector.shape_cast %231 : vector<2x16x64xf32> to vector<1x2x16x64xf32>
    %241 = tpu.concatenate %239, %240 in 0 : vector<1x2x16x64xf32>, vector<1x2x16x64xf32> -> vector<2x2x16x64xf32>
    %242 = vector.shape_cast %233 : vector<2x16x64xf32> to vector<1x2x16x64xf32>
    %243 = vector.shape_cast %238 : vector<2x16x64xf32> to vector<1x2x16x64xf32>
    %244 = tpu.concatenate %242, %243 in 0 : vector<1x2x16x64xf32>, vector<1x2x16x64xf32> -> vector<2x2x16x64xf32>
    %245 = vector.shape_cast %241 : vector<2x2x16x64xf32> to vector<64x64xf32>
    %246 = arith.truncf %245 : vector<64x64xf32> to vector<64x64xbf16>
    %c0_84 = arith.constant 0 : index
    %c0_85 = arith.constant 0 : index
    %c0_86 = arith.constant 0 : index
    %c0_87 = arith.constant 0 : index
    %247 = vector.load %arg9[%c0_84, %c0_85, %c0_86, %c0_87] : memref<1x3x64x32xbf16, #tpu.memory_space<vmem>>, vector<1x1x64x32xbf16>
    %248 = vector.shape_cast %247 : vector<1x1x64x32xbf16> to vector<64x32xbf16>
    %cst_88 = arith.constant dense<0.000000e+00> : vector<64x32xf32>
    %249 = tpu.matmul %246, %248, %cst_88 {dimension_numbers = #tpu.dot_dimension_numbers<[1], [0], [0], [1], [0, 0, 1, 1], [], []>} : vector<64x64xbf16>, vector<64x32xbf16>, vector<64x32xf32> -> vector<64x32xf32>
    %250 = vector.shape_cast %227 : vector<2x2x16x64xf32> to vector<64x64xf32>
    %251 = arith.truncf %250 : vector<64x64xf32> to vector<64x64xbf16>
    %c0_89 = arith.constant 0 : index
    %c1_90 = arith.constant 1 : index
    %c0_91 = arith.constant 0 : index
    %c0_92 = arith.constant 0 : index
    %252 = vector.load %arg9[%c0_89, %c1_90, %c0_91, %c0_92] : memref<1x3x64x32xbf16, #tpu.memory_space<vmem>>, vector<1x1x64x32xbf16>
    %253 = vector.shape_cast %252 : vector<1x1x64x32xbf16> to vector<64x32xbf16>
    %cst_93 = arith.constant dense<0.000000e+00> : vector<64x32xf32>
    %254 = tpu.matmul %251, %253, %cst_93 {dimension_numbers = #tpu.dot_dimension_numbers<[1], [0], [0], [1], [0, 0, 1, 1], [], []>} : vector<64x64xbf16>, vector<64x32xbf16>, vector<64x32xf32> -> vector<64x32xf32>
    %255 = arith.addf %249, %254 : vector<64x32xf32>
    %256 = vector.shape_cast %244 : vector<2x2x16x64xf32> to vector<64x64xf32>
    %257 = arith.truncf %256 : vector<64x64xf32> to vector<64x64xbf16>
    %c0_94 = arith.constant 0 : index
    %c2_95 = arith.constant 2 : index
    %c0_96 = arith.constant 0 : index
    %c0_97 = arith.constant 0 : index
    %258 = vector.load %arg9[%c0_94, %c2_95, %c0_96, %c0_97] : memref<1x3x64x32xbf16, #tpu.memory_space<vmem>>, vector<1x1x64x32xbf16>
    %259 = vector.shape_cast %258 : vector<1x1x64x32xbf16> to vector<64x32xbf16>
    %cst_98 = arith.constant dense<0.000000e+00> : vector<64x32xf32>
    %260 = tpu.matmul %257, %259, %cst_98 {dimension_numbers = #tpu.dot_dimension_numbers<[1], [0], [0], [1], [0, 0, 1, 1], [], []>} : vector<64x64xbf16>, vector<64x32xbf16>, vector<64x32xf32> -> vector<64x32xf32>
    %261 = arith.addf %255, %260 : vector<64x32xf32>
    %262 = vector.broadcast %229 : vector<1x32xf32> to vector<64x32xf32>
    %263 = arith.addf %261, %262 : vector<64x32xf32>
    %264 = vector.shape_cast %263 : vector<64x32xf32> to vector<2x2x16x32xf32>
    %265 = vector.shape_cast %7 : vector<2x32xf32> to vector<1x2x1x32xf32>
    %266 = vector.shape_cast %8 : vector<2x32xf32> to vector<1x2x1x32xf32>
    %cst_99 = arith.constant dense<0.000000e+00> : vector<2x2x32xf32>
    %267 = vector.multi_reduction <add>, %264, %cst_99 [2] : vector<2x2x16x32xf32> to vector<2x2x32xf32>
    %268 = vector.shape_cast %267 : vector<2x2x32xf32> to vector<2x2x1x32xf32>
    %cst_100 = arith.constant 1.600000e+01 : f32
    %269 = vector.broadcast %cst_100 : f32 to vector<2x2x1x32xf32>
    %270 = arith.divf %268, %269 : vector<2x2x1x32xf32>
    %cst_101 = arith.constant dense<0.000000e+00> : vector<2x1x32xf32>
    %271 = vector.multi_reduction <add>, %270, %cst_101 [0] : vector<2x2x1x32xf32> to vector<2x1x32xf32>
    %272 = vector.shape_cast %271 : vector<2x1x32xf32> to vector<1x2x1x32xf32>
    %cst_102 = arith.constant 2.000000e+00 : f32
    %273 = vector.broadcast %cst_102 : f32 to vector<1x2x1x32xf32>
    %274 = arith.divf %272, %273 : vector<1x2x1x32xf32>
    %275 = vector.broadcast %274 : vector<1x2x1x32xf32> to vector<2x2x16x32xf32>
    %276 = arith.subf %264, %275 : vector<2x2x16x32xf32>
    %277 = arith.mulf %276, %276 : vector<2x2x16x32xf32>
    %cst_103 = arith.constant dense<0.000000e+00> : vector<2x2x32xf32>
    %278 = vector.multi_reduction <add>, %277, %cst_103 [2] : vector<2x2x16x32xf32> to vector<2x2x32xf32>
    %279 = vector.shape_cast %278 : vector<2x2x32xf32> to vector<2x2x1x32xf32>
    %cst_104 = arith.constant 1.600000e+01 : f32
    %280 = vector.broadcast %cst_104 : f32 to vector<2x2x1x32xf32>
    %281 = arith.divf %279, %280 : vector<2x2x1x32xf32>
    %cst_105 = arith.constant dense<0.000000e+00> : vector<2x1x32xf32>
    %282 = vector.multi_reduction <add>, %281, %cst_105 [0] : vector<2x2x1x32xf32> to vector<2x1x32xf32>
    %283 = vector.shape_cast %282 : vector<2x1x32xf32> to vector<1x2x1x32xf32>
    %cst_106 = arith.constant 2.000000e+00 : f32
    %284 = vector.broadcast %cst_106 : f32 to vector<1x2x1x32xf32>
    %285 = arith.divf %283, %284 : vector<1x2x1x32xf32>
    %cst_107 = arith.constant 1.000000e+00 : f32
    %286 = vector.broadcast %cst_107 : f32 to vector<1x2x1x32xf32>
    %287 = arith.addf %286, %265 : vector<1x2x1x32xf32>
    %cst_108 = arith.constant 9.99999974E-6 : f32
    %288 = vector.broadcast %cst_108 : f32 to vector<1x2x1x32xf32>
    %289 = arith.addf %285, %288 : vector<1x2x1x32xf32>
    %290 = math.rsqrt %289 : vector<1x2x1x32xf32>
    %291 = vector.broadcast %290 : vector<1x2x1x32xf32> to vector<2x2x16x32xf32>
    %292 = arith.mulf %276, %291 : vector<2x2x16x32xf32>
    %293 = vector.broadcast %287 : vector<1x2x1x32xf32> to vector<2x2x16x32xf32>
    %294 = arith.mulf %293, %292 : vector<2x2x16x32xf32>
    %295 = vector.broadcast %266 : vector<1x2x1x32xf32> to vector<2x2x16x32xf32>
    %296 = arith.addf %294, %295 : vector<2x2x16x32xf32>
    %cst_109 = arith.constant 0.000000e+00 : f32
    %297 = vector.broadcast %cst_109 : f32 to vector<2x2x16x32xf32>
    %298 = arith.cmpf oge, %296, %297 : vector<2x2x16x32xf32>
    %cst_110 = arith.constant 2.000000e-01 : f32
    %299 = vector.broadcast %cst_110 : f32 to vector<2x2x16x32xf32>
    %300 = arith.mulf %299, %296 : vector<2x2x16x32xf32>
    %301 = arith.select %298, %296, %300 : vector<2x2x16x32xi1>, vector<2x2x16x32xf32>
    %c0_111 = arith.constant 0 : index
    %c0_112 = arith.constant 0 : index
    %c0_113 = arith.constant 0 : index
    %302 = vector.load %arg12[%c0_111, %c0_112, %c0_113] : memref<1x1x32xf32, #tpu.memory_space<vmem>>, vector<1x1x32xf32>
    %303 = vector.shape_cast %302 : vector<1x1x32xf32> to vector<1x32xf32>
    %304 = vector.extract_strided_slice %301 {offsets = [0, 0, 0, 0], sizes = [1, 2, 16, 32], strides = [1, 1, 1, 1]} : vector<2x2x16x32xf32> to vector<1x2x16x32xf32>
    %305 = vector.shape_cast %304 : vector<1x2x16x32xf32> to vector<2x16x32xf32>
    %306 = vector.extract_strided_slice %301 {offsets = [1, 0, 0, 0], sizes = [1, 2, 16, 32], strides = [1, 1, 1, 1]} : vector<2x2x16x32xf32> to vector<1x2x16x32xf32>
    %307 = vector.shape_cast %306 : vector<1x2x16x32xf32> to vector<2x16x32xf32>
    %cst_114 = arith.constant 0.000000e+00 : f32
    %308 = vector.broadcast %cst_114 : f32 to vector<2x1x32xf32>
    %309 = vector.extract_strided_slice %307 {offsets = [0, 0, 0], sizes = [2, 15, 32], strides = [1, 1, 1]} : vector<2x16x32xf32> to vector<2x15x32xf32>
    %310 = tpu.concatenate %308, %309 in 1 : vector<2x1x32xf32>, vector<2x15x32xf32> -> vector<2x16x32xf32>
    %311 = vector.extract_strided_slice %305 {offsets = [0, 1, 0], sizes = [2, 15, 32], strides = [1, 1, 1]} : vector<2x16x32xf32> to vector<2x15x32xf32>
    %312 = tpu.concatenate %311, %308 in 1 : vector<2x15x32xf32>, vector<2x1x32xf32> -> vector<2x16x32xf32>
    %313 = vector.shape_cast %310 : vector<2x16x32xf32> to vector<1x2x16x32xf32>
    %314 = vector.shape_cast %305 : vector<2x16x32xf32> to vector<1x2x16x32xf32>
    %315 = tpu.concatenate %313, %314 in 0 : vector<1x2x16x32xf32>, vector<1x2x16x32xf32> -> vector<2x2x16x32xf32>
    %316 = vector.shape_cast %307 : vector<2x16x32xf32> to vector<1x2x16x32xf32>
    %317 = vector.shape_cast %312 : vector<2x16x32xf32> to vector<1x2x16x32xf32>
    %318 = tpu.concatenate %316, %317 in 0 : vector<1x2x16x32xf32>, vector<1x2x16x32xf32> -> vector<2x2x16x32xf32>
    %319 = vector.shape_cast %315 : vector<2x2x16x32xf32> to vector<64x32xf32>
    %320 = arith.truncf %319 : vector<64x32xf32> to vector<64x32xbf16>
    %c0_115 = arith.constant 0 : index
    %c0_116 = arith.constant 0 : index
    %c0_117 = arith.constant 0 : index
    %c0_118 = arith.constant 0 : index
    %321 = vector.load %arg11[%c0_115, %c0_116, %c0_117, %c0_118] : memref<1x3x32x32xbf16, #tpu.memory_space<vmem>>, vector<1x1x32x32xbf16>
    %322 = vector.shape_cast %321 : vector<1x1x32x32xbf16> to vector<32x32xbf16>
    %cst_119 = arith.constant dense<0.000000e+00> : vector<64x32xf32>
    %323 = tpu.matmul %320, %322, %cst_119 {dimension_numbers = #tpu.dot_dimension_numbers<[1], [0], [0], [1], [0, 0, 1, 1], [], []>} : vector<64x32xbf16>, vector<32x32xbf16>, vector<64x32xf32> -> vector<64x32xf32>
    %324 = vector.shape_cast %301 : vector<2x2x16x32xf32> to vector<64x32xf32>
    %325 = arith.truncf %324 : vector<64x32xf32> to vector<64x32xbf16>
    %c0_120 = arith.constant 0 : index
    %c1_121 = arith.constant 1 : index
    %c0_122 = arith.constant 0 : index
    %c0_123 = arith.constant 0 : index
    %326 = vector.load %arg11[%c0_120, %c1_121, %c0_122, %c0_123] : memref<1x3x32x32xbf16, #tpu.memory_space<vmem>>, vector<1x1x32x32xbf16>
    %327 = vector.shape_cast %326 : vector<1x1x32x32xbf16> to vector<32x32xbf16>
    %cst_124 = arith.constant dense<0.000000e+00> : vector<64x32xf32>
    %328 = tpu.matmul %325, %327, %cst_124 {dimension_numbers = #tpu.dot_dimension_numbers<[1], [0], [0], [1], [0, 0, 1, 1], [], []>} : vector<64x32xbf16>, vector<32x32xbf16>, vector<64x32xf32> -> vector<64x32xf32>
    %329 = arith.addf %323, %328 : vector<64x32xf32>
    %330 = vector.shape_cast %318 : vector<2x2x16x32xf32> to vector<64x32xf32>
    %331 = arith.truncf %330 : vector<64x32xf32> to vector<64x32xbf16>
    %c0_125 = arith.constant 0 : index
    %c2_126 = arith.constant 2 : index
    %c0_127 = arith.constant 0 : index
    %c0_128 = arith.constant 0 : index
    %332 = vector.load %arg11[%c0_125, %c2_126, %c0_127, %c0_128] : memref<1x3x32x32xbf16, #tpu.memory_space<vmem>>, vector<1x1x32x32xbf16>
    %333 = vector.shape_cast %332 : vector<1x1x32x32xbf16> to vector<32x32xbf16>
    %cst_129 = arith.constant dense<0.000000e+00> : vector<64x32xf32>
    %334 = tpu.matmul %331, %333, %cst_129 {dimension_numbers = #tpu.dot_dimension_numbers<[1], [0], [0], [1], [0, 0, 1, 1], [], []>} : vector<64x32xbf16>, vector<32x32xbf16>, vector<64x32xf32> -> vector<64x32xf32>
    %335 = arith.addf %329, %334 : vector<64x32xf32>
    %336 = vector.broadcast %303 : vector<1x32xf32> to vector<64x32xf32>
    %337 = arith.addf %335, %336 : vector<64x32xf32>
    %338 = vector.shape_cast %337 : vector<64x32xf32> to vector<2x2x16x32xf32>
    %339 = vector.shape_cast %190 : vector<2x2x16x64xf32> to vector<64x64xf32>
    %340 = arith.truncf %339 : vector<64x64xf32> to vector<64x64xbf16>
    %c0_130 = arith.constant 0 : index
    %c0_131 = arith.constant 0 : index
    %c0_132 = arith.constant 0 : index
    %341 = vector.load %arg13[%c0_130, %c0_131, %c0_132] : memref<1x64x32xbf16, #tpu.memory_space<vmem>>, vector<1x64x32xbf16>
    %342 = vector.shape_cast %341 : vector<1x64x32xbf16> to vector<64x32xbf16>
    %cst_133 = arith.constant dense<0.000000e+00> : vector<64x32xf32>
    %343 = tpu.matmul %340, %342, %cst_133 {dimension_numbers = #tpu.dot_dimension_numbers<[1], [0], [0], [1], [0, 0, 1, 1], [], []>} : vector<64x64xbf16>, vector<64x32xbf16>, vector<64x32xf32> -> vector<64x32xf32>
    %344 = vector.shape_cast %343 : vector<64x32xf32> to vector<2x2x16x32xf32>
    %345 = arith.addf %338, %344 : vector<2x2x16x32xf32>
    %cst_134 = arith.constant 0.707106769 : f32
    %346 = vector.broadcast %cst_134 : f32 to vector<2x2x16x32xf32>
    %347 = arith.mulf %345, %346 : vector<2x2x16x32xf32>
    %348 = vector.shape_cast %9 : vector<2x32xf32> to vector<1x2x1x32xf32>
    %349 = vector.shape_cast %10 : vector<2x32xf32> to vector<1x2x1x32xf32>
    %cst_135 = arith.constant dense<0.000000e+00> : vector<2x2x32xf32>
    %350 = vector.multi_reduction <add>, %347, %cst_135 [2] : vector<2x2x16x32xf32> to vector<2x2x32xf32>
    %351 = vector.shape_cast %350 : vector<2x2x32xf32> to vector<2x2x1x32xf32>
    %cst_136 = arith.constant 1.600000e+01 : f32
    %352 = vector.broadcast %cst_136 : f32 to vector<2x2x1x32xf32>
    %353 = arith.divf %351, %352 : vector<2x2x1x32xf32>
    %cst_137 = arith.constant dense<0.000000e+00> : vector<2x1x32xf32>
    %354 = vector.multi_reduction <add>, %353, %cst_137 [0] : vector<2x2x1x32xf32> to vector<2x1x32xf32>
    %355 = vector.shape_cast %354 : vector<2x1x32xf32> to vector<1x2x1x32xf32>
    %cst_138 = arith.constant 2.000000e+00 : f32
    %356 = vector.broadcast %cst_138 : f32 to vector<1x2x1x32xf32>
    %357 = arith.divf %355, %356 : vector<1x2x1x32xf32>
    %358 = vector.broadcast %357 : vector<1x2x1x32xf32> to vector<2x2x16x32xf32>
    %359 = arith.subf %347, %358 : vector<2x2x16x32xf32>
    %360 = arith.mulf %359, %359 : vector<2x2x16x32xf32>
    %cst_139 = arith.constant dense<0.000000e+00> : vector<2x2x32xf32>
    %361 = vector.multi_reduction <add>, %360, %cst_139 [2] : vector<2x2x16x32xf32> to vector<2x2x32xf32>
    %362 = vector.shape_cast %361 : vector<2x2x32xf32> to vector<2x2x1x32xf32>
    %cst_140 = arith.constant 1.600000e+01 : f32
    %363 = vector.broadcast %cst_140 : f32 to vector<2x2x1x32xf32>
    %364 = arith.divf %362, %363 : vector<2x2x1x32xf32>
    %cst_141 = arith.constant dense<0.000000e+00> : vector<2x1x32xf32>
    %365 = vector.multi_reduction <add>, %364, %cst_141 [0] : vector<2x2x1x32xf32> to vector<2x1x32xf32>
    %366 = vector.shape_cast %365 : vector<2x1x32xf32> to vector<1x2x1x32xf32>
    %cst_142 = arith.constant 2.000000e+00 : f32
    %367 = vector.broadcast %cst_142 : f32 to vector<1x2x1x32xf32>
    %368 = arith.divf %366, %367 : vector<1x2x1x32xf32>
    %cst_143 = arith.constant 1.000000e+00 : f32
    %369 = vector.broadcast %cst_143 : f32 to vector<1x2x1x32xf32>
    %370 = arith.addf %369, %348 : vector<1x2x1x32xf32>
    %cst_144 = arith.constant 9.99999974E-6 : f32
    %371 = vector.broadcast %cst_144 : f32 to vector<1x2x1x32xf32>
    %372 = arith.addf %368, %371 : vector<1x2x1x32xf32>
    %373 = math.rsqrt %372 : vector<1x2x1x32xf32>
    %374 = vector.broadcast %373 : vector<1x2x1x32xf32> to vector<2x2x16x32xf32>
    %375 = arith.mulf %359, %374 : vector<2x2x16x32xf32>
    %376 = vector.broadcast %370 : vector<1x2x1x32xf32> to vector<2x2x16x32xf32>
    %377 = arith.mulf %376, %375 : vector<2x2x16x32xf32>
    %378 = vector.broadcast %349 : vector<1x2x1x32xf32> to vector<2x2x16x32xf32>
    %379 = arith.addf %377, %378 : vector<2x2x16x32xf32>
    %cst_145 = arith.constant 0.000000e+00 : f32
    %380 = vector.broadcast %cst_145 : f32 to vector<2x2x16x32xf32>
    %381 = arith.cmpf oge, %379, %380 : vector<2x2x16x32xf32>
    %cst_146 = arith.constant 2.000000e-01 : f32
    %382 = vector.broadcast %cst_146 : f32 to vector<2x2x16x32xf32>
    %383 = arith.mulf %382, %379 : vector<2x2x16x32xf32>
    %384 = arith.select %381, %379, %383 : vector<2x2x16x32xi1>, vector<2x2x16x32xf32>
    %c0_147 = arith.constant 0 : index
    %c0_148 = arith.constant 0 : index
    %c0_149 = arith.constant 0 : index
    %385 = vector.load %arg15[%c0_147, %c0_148, %c0_149] : memref<1x1x16xf32, #tpu.memory_space<vmem>>, vector<1x1x16xf32>
    %386 = vector.shape_cast %385 : vector<1x1x16xf32> to vector<1x16xf32>
    %387 = vector.extract_strided_slice %384 {offsets = [0, 0, 0, 0], sizes = [1, 2, 16, 32], strides = [1, 1, 1, 1]} : vector<2x2x16x32xf32> to vector<1x2x16x32xf32>
    %388 = vector.shape_cast %387 : vector<1x2x16x32xf32> to vector<2x16x32xf32>
    %389 = vector.extract_strided_slice %384 {offsets = [1, 0, 0, 0], sizes = [1, 2, 16, 32], strides = [1, 1, 1, 1]} : vector<2x2x16x32xf32> to vector<1x2x16x32xf32>
    %390 = vector.shape_cast %389 : vector<1x2x16x32xf32> to vector<2x16x32xf32>
    %cst_150 = arith.constant 0.000000e+00 : f32
    %391 = vector.broadcast %cst_150 : f32 to vector<2x1x32xf32>
    %392 = vector.extract_strided_slice %390 {offsets = [0, 0, 0], sizes = [2, 15, 32], strides = [1, 1, 1]} : vector<2x16x32xf32> to vector<2x15x32xf32>
    %393 = tpu.concatenate %391, %392 in 1 : vector<2x1x32xf32>, vector<2x15x32xf32> -> vector<2x16x32xf32>
    %394 = vector.extract_strided_slice %388 {offsets = [0, 1, 0], sizes = [2, 15, 32], strides = [1, 1, 1]} : vector<2x16x32xf32> to vector<2x15x32xf32>
    %395 = tpu.concatenate %394, %391 in 1 : vector<2x15x32xf32>, vector<2x1x32xf32> -> vector<2x16x32xf32>
    %396 = vector.shape_cast %393 : vector<2x16x32xf32> to vector<1x2x16x32xf32>
    %397 = vector.shape_cast %388 : vector<2x16x32xf32> to vector<1x2x16x32xf32>
    %398 = tpu.concatenate %396, %397 in 0 : vector<1x2x16x32xf32>, vector<1x2x16x32xf32> -> vector<2x2x16x32xf32>
    %399 = vector.shape_cast %390 : vector<2x16x32xf32> to vector<1x2x16x32xf32>
    %400 = vector.shape_cast %395 : vector<2x16x32xf32> to vector<1x2x16x32xf32>
    %401 = tpu.concatenate %399, %400 in 0 : vector<1x2x16x32xf32>, vector<1x2x16x32xf32> -> vector<2x2x16x32xf32>
    %402 = vector.shape_cast %398 : vector<2x2x16x32xf32> to vector<64x32xf32>
    %403 = arith.truncf %402 : vector<64x32xf32> to vector<64x32xbf16>
    %c0_151 = arith.constant 0 : index
    %c0_152 = arith.constant 0 : index
    %c0_153 = arith.constant 0 : index
    %c0_154 = arith.constant 0 : index
    %404 = vector.load %arg14[%c0_151, %c0_152, %c0_153, %c0_154] : memref<1x3x32x16xbf16, #tpu.memory_space<vmem>>, vector<1x1x32x16xbf16>
    %405 = vector.shape_cast %404 : vector<1x1x32x16xbf16> to vector<32x16xbf16>
    %cst_155 = arith.constant dense<0.000000e+00> : vector<64x16xf32>
    %406 = tpu.matmul %403, %405, %cst_155 {dimension_numbers = #tpu.dot_dimension_numbers<[1], [0], [0], [1], [0, 0, 1, 1], [], []>} : vector<64x32xbf16>, vector<32x16xbf16>, vector<64x16xf32> -> vector<64x16xf32>
    %407 = vector.shape_cast %384 : vector<2x2x16x32xf32> to vector<64x32xf32>
    %408 = arith.truncf %407 : vector<64x32xf32> to vector<64x32xbf16>
    %c0_156 = arith.constant 0 : index
    %c1_157 = arith.constant 1 : index
    %c0_158 = arith.constant 0 : index
    %c0_159 = arith.constant 0 : index
    %409 = vector.load %arg14[%c0_156, %c1_157, %c0_158, %c0_159] : memref<1x3x32x16xbf16, #tpu.memory_space<vmem>>, vector<1x1x32x16xbf16>
    %410 = vector.shape_cast %409 : vector<1x1x32x16xbf16> to vector<32x16xbf16>
    %cst_160 = arith.constant dense<0.000000e+00> : vector<64x16xf32>
    %411 = tpu.matmul %408, %410, %cst_160 {dimension_numbers = #tpu.dot_dimension_numbers<[1], [0], [0], [1], [0, 0, 1, 1], [], []>} : vector<64x32xbf16>, vector<32x16xbf16>, vector<64x16xf32> -> vector<64x16xf32>
    %412 = arith.addf %406, %411 : vector<64x16xf32>
    %413 = vector.shape_cast %401 : vector<2x2x16x32xf32> to vector<64x32xf32>
    %414 = arith.truncf %413 : vector<64x32xf32> to vector<64x32xbf16>
    %c0_161 = arith.constant 0 : index
    %c2_162 = arith.constant 2 : index
    %c0_163 = arith.constant 0 : index
    %c0_164 = arith.constant 0 : index
    %415 = vector.load %arg14[%c0_161, %c2_162, %c0_163, %c0_164] : memref<1x3x32x16xbf16, #tpu.memory_space<vmem>>, vector<1x1x32x16xbf16>
    %416 = vector.shape_cast %415 : vector<1x1x32x16xbf16> to vector<32x16xbf16>
    %cst_165 = arith.constant dense<0.000000e+00> : vector<64x16xf32>
    %417 = tpu.matmul %414, %416, %cst_165 {dimension_numbers = #tpu.dot_dimension_numbers<[1], [0], [0], [1], [0, 0, 1, 1], [], []>} : vector<64x32xbf16>, vector<32x16xbf16>, vector<64x16xf32> -> vector<64x16xf32>
    %418 = arith.addf %412, %417 : vector<64x16xf32>
    %419 = vector.broadcast %386 : vector<1x16xf32> to vector<64x16xf32>
    %420 = arith.addf %418, %419 : vector<64x16xf32>
    %421 = vector.shape_cast %420 : vector<64x16xf32> to vector<2x2x16x16xf32>
    %422 = vector.shape_cast %11 : vector<2x16xf32> to vector<1x2x1x16xf32>
    %423 = vector.shape_cast %12 : vector<2x16xf32> to vector<1x2x1x16xf32>
    %cst_166 = arith.constant dense<0.000000e+00> : vector<2x2x16xf32>
    %424 = vector.multi_reduction <add>, %421, %cst_166 [2] : vector<2x2x16x16xf32> to vector<2x2x16xf32>
    %425 = vector.shape_cast %424 : vector<2x2x16xf32> to vector<2x2x1x16xf32>
    %cst_167 = arith.constant 1.600000e+01 : f32
    %426 = vector.broadcast %cst_167 : f32 to vector<2x2x1x16xf32>
    %427 = arith.divf %425, %426 : vector<2x2x1x16xf32>
    %cst_168 = arith.constant dense<0.000000e+00> : vector<2x1x16xf32>
    %428 = vector.multi_reduction <add>, %427, %cst_168 [0] : vector<2x2x1x16xf32> to vector<2x1x16xf32>
    %429 = vector.shape_cast %428 : vector<2x1x16xf32> to vector<1x2x1x16xf32>
    %cst_169 = arith.constant 2.000000e+00 : f32
    %430 = vector.broadcast %cst_169 : f32 to vector<1x2x1x16xf32>
    %431 = arith.divf %429, %430 : vector<1x2x1x16xf32>
    %432 = vector.broadcast %431 : vector<1x2x1x16xf32> to vector<2x2x16x16xf32>
    %433 = arith.subf %421, %432 : vector<2x2x16x16xf32>
    %434 = arith.mulf %433, %433 : vector<2x2x16x16xf32>
    %cst_170 = arith.constant dense<0.000000e+00> : vector<2x2x16xf32>
    %435 = vector.multi_reduction <add>, %434, %cst_170 [2] : vector<2x2x16x16xf32> to vector<2x2x16xf32>
    %436 = vector.shape_cast %435 : vector<2x2x16xf32> to vector<2x2x1x16xf32>
    %cst_171 = arith.constant 1.600000e+01 : f32
    %437 = vector.broadcast %cst_171 : f32 to vector<2x2x1x16xf32>
    %438 = arith.divf %436, %437 : vector<2x2x1x16xf32>
    %cst_172 = arith.constant dense<0.000000e+00> : vector<2x1x16xf32>
    %439 = vector.multi_reduction <add>, %438, %cst_172 [0] : vector<2x2x1x16xf32> to vector<2x1x16xf32>
    %440 = vector.shape_cast %439 : vector<2x1x16xf32> to vector<1x2x1x16xf32>
    %cst_173 = arith.constant 2.000000e+00 : f32
    %441 = vector.broadcast %cst_173 : f32 to vector<1x2x1x16xf32>
    %442 = arith.divf %440, %441 : vector<1x2x1x16xf32>
    %cst_174 = arith.constant 1.000000e+00 : f32
    %443 = vector.broadcast %cst_174 : f32 to vector<1x2x1x16xf32>
    %444 = arith.addf %443, %422 : vector<1x2x1x16xf32>
    %cst_175 = arith.constant 9.99999974E-6 : f32
    %445 = vector.broadcast %cst_175 : f32 to vector<1x2x1x16xf32>
    %446 = arith.addf %442, %445 : vector<1x2x1x16xf32>
    %447 = math.rsqrt %446 : vector<1x2x1x16xf32>
    %448 = vector.broadcast %447 : vector<1x2x1x16xf32> to vector<2x2x16x16xf32>
    %449 = arith.mulf %433, %448 : vector<2x2x16x16xf32>
    %450 = vector.broadcast %444 : vector<1x2x1x16xf32> to vector<2x2x16x16xf32>
    %451 = arith.mulf %450, %449 : vector<2x2x16x16xf32>
    %452 = vector.broadcast %423 : vector<1x2x1x16xf32> to vector<2x2x16x16xf32>
    %453 = arith.addf %451, %452 : vector<2x2x16x16xf32>
    %cst_176 = arith.constant 0.000000e+00 : f32
    %454 = vector.broadcast %cst_176 : f32 to vector<2x2x16x16xf32>
    %455 = arith.cmpf oge, %453, %454 : vector<2x2x16x16xf32>
    %cst_177 = arith.constant 2.000000e-01 : f32
    %456 = vector.broadcast %cst_177 : f32 to vector<2x2x16x16xf32>
    %457 = arith.mulf %456, %453 : vector<2x2x16x16xf32>
    %458 = arith.select %455, %453, %457 : vector<2x2x16x16xi1>, vector<2x2x16x16xf32>
    %c0_178 = arith.constant 0 : index
    %c0_179 = arith.constant 0 : index
    %c0_180 = arith.constant 0 : index
    %459 = vector.load %arg17[%c0_178, %c0_179, %c0_180] : memref<1x1x16xf32, #tpu.memory_space<vmem>>, vector<1x1x16xf32>
    %460 = vector.shape_cast %459 : vector<1x1x16xf32> to vector<1x16xf32>
    %461 = vector.extract_strided_slice %458 {offsets = [0, 0, 0, 0], sizes = [1, 2, 16, 16], strides = [1, 1, 1, 1]} : vector<2x2x16x16xf32> to vector<1x2x16x16xf32>
    %462 = vector.shape_cast %461 : vector<1x2x16x16xf32> to vector<2x16x16xf32>
    %463 = vector.extract_strided_slice %458 {offsets = [1, 0, 0, 0], sizes = [1, 2, 16, 16], strides = [1, 1, 1, 1]} : vector<2x2x16x16xf32> to vector<1x2x16x16xf32>
    %464 = vector.shape_cast %463 : vector<1x2x16x16xf32> to vector<2x16x16xf32>
    %cst_181 = arith.constant 0.000000e+00 : f32
    %465 = vector.broadcast %cst_181 : f32 to vector<2x1x16xf32>
    %466 = vector.extract_strided_slice %464 {offsets = [0, 0, 0], sizes = [2, 15, 16], strides = [1, 1, 1]} : vector<2x16x16xf32> to vector<2x15x16xf32>
    %467 = tpu.concatenate %465, %466 in 1 : vector<2x1x16xf32>, vector<2x15x16xf32> -> vector<2x16x16xf32>
    %468 = vector.extract_strided_slice %462 {offsets = [0, 1, 0], sizes = [2, 15, 16], strides = [1, 1, 1]} : vector<2x16x16xf32> to vector<2x15x16xf32>
    %469 = tpu.concatenate %468, %465 in 1 : vector<2x15x16xf32>, vector<2x1x16xf32> -> vector<2x16x16xf32>
    %470 = vector.shape_cast %467 : vector<2x16x16xf32> to vector<1x2x16x16xf32>
    %471 = vector.shape_cast %462 : vector<2x16x16xf32> to vector<1x2x16x16xf32>
    %472 = tpu.concatenate %470, %471 in 0 : vector<1x2x16x16xf32>, vector<1x2x16x16xf32> -> vector<2x2x16x16xf32>
    %473 = vector.shape_cast %464 : vector<2x16x16xf32> to vector<1x2x16x16xf32>
    %474 = vector.shape_cast %469 : vector<2x16x16xf32> to vector<1x2x16x16xf32>
    %475 = tpu.concatenate %473, %474 in 0 : vector<1x2x16x16xf32>, vector<1x2x16x16xf32> -> vector<2x2x16x16xf32>
    %476 = vector.shape_cast %472 : vector<2x2x16x16xf32> to vector<64x16xf32>
    %477 = arith.truncf %476 : vector<64x16xf32> to vector<64x16xbf16>
    %c0_182 = arith.constant 0 : index
    %c0_183 = arith.constant 0 : index
    %c0_184 = arith.constant 0 : index
    %c0_185 = arith.constant 0 : index
    %478 = vector.load %arg16[%c0_182, %c0_183, %c0_184, %c0_185] : memref<1x3x16x16xbf16, #tpu.memory_space<vmem>>, vector<1x1x16x16xbf16>
    %479 = vector.shape_cast %478 : vector<1x1x16x16xbf16> to vector<16x16xbf16>
    %cst_186 = arith.constant dense<0.000000e+00> : vector<64x16xf32>
    %480 = tpu.matmul %477, %479, %cst_186 {dimension_numbers = #tpu.dot_dimension_numbers<[1], [0], [0], [1], [0, 0, 1, 1], [], []>} : vector<64x16xbf16>, vector<16x16xbf16>, vector<64x16xf32> -> vector<64x16xf32>
    %481 = vector.shape_cast %458 : vector<2x2x16x16xf32> to vector<64x16xf32>
    %482 = arith.truncf %481 : vector<64x16xf32> to vector<64x16xbf16>
    %c0_187 = arith.constant 0 : index
    %c1_188 = arith.constant 1 : index
    %c0_189 = arith.constant 0 : index
    %c0_190 = arith.constant 0 : index
    %483 = vector.load %arg16[%c0_187, %c1_188, %c0_189, %c0_190] : memref<1x3x16x16xbf16, #tpu.memory_space<vmem>>, vector<1x1x16x16xbf16>
    %484 = vector.shape_cast %483 : vector<1x1x16x16xbf16> to vector<16x16xbf16>
    %cst_191 = arith.constant dense<0.000000e+00> : vector<64x16xf32>
    %485 = tpu.matmul %482, %484, %cst_191 {dimension_numbers = #tpu.dot_dimension_numbers<[1], [0], [0], [1], [0, 0, 1, 1], [], []>} : vector<64x16xbf16>, vector<16x16xbf16>, vector<64x16xf32> -> vector<64x16xf32>
    %486 = arith.addf %480, %485 : vector<64x16xf32>
    %487 = vector.shape_cast %475 : vector<2x2x16x16xf32> to vector<64x16xf32>
    %488 = arith.truncf %487 : vector<64x16xf32> to vector<64x16xbf16>
    %c0_192 = arith.constant 0 : index
    %c2_193 = arith.constant 2 : index
    %c0_194 = arith.constant 0 : index
    %c0_195 = arith.constant 0 : index
    %489 = vector.load %arg16[%c0_192, %c2_193, %c0_194, %c0_195] : memref<1x3x16x16xbf16, #tpu.memory_space<vmem>>, vector<1x1x16x16xbf16>
    %490 = vector.shape_cast %489 : vector<1x1x16x16xbf16> to vector<16x16xbf16>
    %cst_196 = arith.constant dense<0.000000e+00> : vector<64x16xf32>
    %491 = tpu.matmul %488, %490, %cst_196 {dimension_numbers = #tpu.dot_dimension_numbers<[1], [0], [0], [1], [0, 0, 1, 1], [], []>} : vector<64x16xbf16>, vector<16x16xbf16>, vector<64x16xf32> -> vector<64x16xf32>
    %492 = arith.addf %486, %491 : vector<64x16xf32>
    %493 = vector.broadcast %460 : vector<1x16xf32> to vector<64x16xf32>
    %494 = arith.addf %492, %493 : vector<64x16xf32>
    %495 = vector.shape_cast %494 : vector<64x16xf32> to vector<2x2x16x16xf32>
    %496 = vector.shape_cast %347 : vector<2x2x16x32xf32> to vector<64x32xf32>
    %497 = arith.truncf %496 : vector<64x32xf32> to vector<64x32xbf16>
    %c0_197 = arith.constant 0 : index
    %c0_198 = arith.constant 0 : index
    %c0_199 = arith.constant 0 : index
    %498 = vector.load %arg18[%c0_197, %c0_198, %c0_199] : memref<1x32x16xbf16, #tpu.memory_space<vmem>>, vector<1x32x16xbf16>
    %499 = vector.shape_cast %498 : vector<1x32x16xbf16> to vector<32x16xbf16>
    %cst_200 = arith.constant dense<0.000000e+00> : vector<64x16xf32>
    %500 = tpu.matmul %497, %499, %cst_200 {dimension_numbers = #tpu.dot_dimension_numbers<[1], [0], [0], [1], [0, 0, 1, 1], [], []>} : vector<64x32xbf16>, vector<32x16xbf16>, vector<64x16xf32> -> vector<64x16xf32>
    %501 = vector.shape_cast %500 : vector<64x16xf32> to vector<2x2x16x16xf32>
    %502 = arith.addf %495, %501 : vector<2x2x16x16xf32>
    %cst_201 = arith.constant 0.707106769 : f32
    %503 = vector.broadcast %cst_201 : f32 to vector<2x2x16x16xf32>
    %504 = arith.mulf %502, %503 : vector<2x2x16x16xf32>
    %505 = vector.shape_cast %504 : vector<2x2x16x16xf32> to vector<4x16x16xf32>
    %c0_202 = arith.constant 0 : index
    %c0_203 = arith.constant 0 : index
    %c0_204 = arith.constant 0 : index
    %c0_205 = arith.constant 0 : index
    %506 = vector.load %arg19[%c0_202, %c0_203, %c0_204, %c0_205] : memref<1x4x16x16xf32, #tpu.memory_space<vmem>>, vector<1x4x16x16xf32>
    %507 = vector.shape_cast %506 : vector<1x4x16x16xf32> to vector<4x16x16xf32>
    %508 = vector.shape_cast %505 : vector<4x16x16xf32> to vector<1x4x16x16xf32>
    tpu.vector_store %arg19[%c0_202, %c0_203, %c0_204, %c0_205], %508 {strides = array<i32>} : memref<1x4x16x16xf32, #tpu.memory_space<vmem>>, vector<1x4x16x16xf32>,
    return
  }
  func.func @transform_0(%arg0: i32) -> (i32, i32, i32) {
    %c0_i32 = arith.constant 0 : i32
    %c0_i32_0 = arith.constant 0 : i32
    %c0_i32_1 = arith.constant 0 : i32
    %c0_i32_2 = arith.constant 0 : i32
    return %c0_i32, %c0_i32_0, %c0_i32_1 : i32, i32, i32
  }
  func.func @transform_1(%arg0: i32) -> (i32, i32) {
    %c0_i32 = arith.constant 0 : i32
    %c0_i32_0 = arith.constant 0 : i32
    return %c0_i32, %arg0 : i32, i32
  }
  func.func @transform_2(%arg0: i32) -> (i32, i32, i32, i32) {
    %c0_i32 = arith.constant 0 : i32
    %c0_i32_0 = arith.constant 0 : i32
    %c0_i32_1 = arith.constant 0 : i32
    %c0_i32_2 = arith.constant 0 : i32
    return %arg0, %c0_i32, %c0_i32_0, %c0_i32_1 : i32, i32, i32, i32
  }
  func.func @transform_3(%arg0: i32) -> (i32, i32, i32) {
    %c0_i32 = arith.constant 0 : i32
    %c0_i32_0 = arith.constant 0 : i32
    %c0_i32_1 = arith.constant 0 : i32
    return %arg0, %c0_i32, %c0_i32_0 : i32, i32, i32
  }
  func.func @transform_4(%arg0: i32) -> (i32, i32, i32, i32) {
    %c0_i32 = arith.constant 0 : i32
    %c0_i32_0 = arith.constant 0 : i32
    %c0_i32_1 = arith.constant 0 : i32
    %c0_i32_2 = arith.constant 0 : i32
    return %arg0, %c0_i32, %c0_i32_0, %c0_i32_1 : i32, i32, i32, i32
  }
  func.func @transform_5(%arg0: i32) -> (i32, i32, i32) {
    %c0_i32 = arith.constant 0 : i32
    %c0_i32_0 = arith.constant 0 : i32
    %c0_i32_1 = arith.constant 0 : i32
    return %arg0, %c0_i32, %c0_i32_0 : i32, i32, i32
  }
  func.func @transform_6(%arg0: i32) -> (i32, i32, i32, i32) {
    %c0_i32 = arith.constant 0 : i32
    %c0_i32_0 = arith.constant 0 : i32
    %c0_i32_1 = arith.constant 0 : i32
    %c0_i32_2 = arith.constant 0 : i32
    return %arg0, %c0_i32, %c0_i32_0, %c0_i32_1 : i32, i32, i32, i32
  }
  func.func @transform_7(%arg0: i32) -> (i32, i32, i32) {
    %c0_i32 = arith.constant 0 : i32
    %c0_i32_0 = arith.constant 0 : i32
    %c0_i32_1 = arith.constant 0 : i32
    return %arg0, %c0_i32, %c0_i32_0 : i32, i32, i32
  }
  func.func @transform_8(%arg0: i32) -> (i32, i32, i32, i32) {
    %c0_i32 = arith.constant 0 : i32
    %c0_i32_0 = arith.constant 0 : i32
    %c0_i32_1 = arith.constant 0 : i32
    %c0_i32_2 = arith.constant 0 : i32
    return %arg0, %c0_i32, %c0_i32_0, %c0_i32_1 : i32, i32, i32, i32
  }
  func.func @transform_9(%arg0: i32) -> (i32, i32, i32) {
    %c0_i32 = arith.constant 0 : i32
    %c0_i32_0 = arith.constant 0 : i32
    %c0_i32_1 = arith.constant 0 : i32
    return %arg0, %c0_i32, %c0_i32_0 : i32, i32, i32
  }
  func.func @transform_10(%arg0: i32) -> (i32, i32, i32, i32) {
    %c0_i32 = arith.constant 0 : i32
    %c0_i32_0 = arith.constant 0 : i32
    %c0_i32_1 = arith.constant 0 : i32
    %c0_i32_2 = arith.constant 0 : i32
    return %arg0, %c0_i32, %c0_i32_0, %c0_i32_1 : i32, i32, i32, i32
  }
  func.func @transform_11(%arg0: i32) -> (i32, i32, i32) {
    %c0_i32 = arith.constant 0 : i32
    %c0_i32_0 = arith.constant 0 : i32
    %c0_i32_1 = arith.constant 0 : i32
    return %arg0, %c0_i32, %c0_i32_0 : i32, i32, i32
  }
  func.func @transform_12(%arg0: i32) -> (i32, i32, i32) {
    %c0_i32 = arith.constant 0 : i32
    %c0_i32_0 = arith.constant 0 : i32
    %c0_i32_1 = arith.constant 0 : i32
    return %arg0, %c0_i32, %c0_i32_0 : i32, i32, i32
  }
  func.func @transform_13(%arg0: i32) -> (i32, i32, i32, i32) {
    %c0_i32 = arith.constant 0 : i32
    %c0_i32_0 = arith.constant 0 : i32
    %c0_i32_1 = arith.constant 0 : i32
    %c0_i32_2 = arith.constant 0 : i32
    return %arg0, %c0_i32, %c0_i32_0, %c0_i32_1 : i32, i32, i32, i32
  }
  func.func @transform_14(%arg0: i32) -> (i32, i32, i32) {
    %c0_i32 = arith.constant 0 : i32
    %c0_i32_0 = arith.constant 0 : i32
    %c0_i32_1 = arith.constant 0 : i32
    return %arg0, %c0_i32, %c0_i32_0 : i32, i32, i32
  }
  func.func @transform_15(%arg0: i32) -> (i32, i32, i32, i32) {
    %c0_i32 = arith.constant 0 : i32
    %c0_i32_0 = arith.constant 0 : i32
    %c0_i32_1 = arith.constant 0 : i32
    %c0_i32_2 = arith.constant 0 : i32
    return %arg0, %c0_i32, %c0_i32_0, %c0_i32_1 : i32, i32, i32, i32
  }
  func.func @transform_16(%arg0: i32) -> (i32, i32, i32) {
    %c0_i32 = arith.constant 0 : i32
    %c0_i32_0 = arith.constant 0 : i32
    %c0_i32_1 = arith.constant 0 : i32
    return %arg0, %c0_i32, %c0_i32_0 : i32, i32, i32
  }
  func.func @transform_17(%arg0: i32) -> (i32, i32, i32) {
    %c0_i32 = arith.constant 0 : i32
    %c0_i32_0 = arith.constant 0 : i32
    %c0_i32_1 = arith.constant 0 : i32
    return %arg0, %c0_i32, %c0_i32_0 : i32, i32, i32
  }
  func.func @transform_18(%arg0: i32) -> (i32, i32, i32, i32) {
    %c0_i32 = arith.constant 0 : i32
    %c0_i32_0 = arith.constant 0 : i32
    %c0_i32_1 = arith.constant 0 : i32
    %c0_i32_2 = arith.constant 0 : i32
    return %arg0, %c0_i32, %c0_i32_0, %c0_i32_1 : i32, i32, i32, i32
  }
}

module attributes {stable_mosaic.version = 11 : i64} {
  func.func @_lstm_proj_kernel(%arg0: i32, %arg1: memref<32x2x48xf32, #tpu.memory_space<vmem>>, %arg2: memref<48x192xbf16, #tpu.memory_space<vmem>>, %arg3: memref<48x192xbf16, #tpu.memory_space<vmem>>, %arg4: memref<1x192xf32, #tpu.memory_space<vmem>>, %arg5: memref<1x192xf32, #tpu.memory_space<vmem>>, %arg6: memref<48x192xbf16, #tpu.memory_space<vmem>>, %arg7: memref<48x192xbf16, #tpu.memory_space<vmem>>, %arg8: memref<96x128xbf16, #tpu.memory_space<vmem>>, %arg9: memref<1x128xf32, #tpu.memory_space<vmem>>, %arg10: memref<32x2x128xf32, #tpu.memory_space<vmem>>, %arg11: memref<32x2x192xf32, #tpu.memory_space<vmem>>, %arg12: memref<32x2x192xf32, #tpu.memory_space<vmem>>, %arg13: memref<32x2x48xf32, #tpu.memory_space<vmem>>, %arg14: memref<32x2x48xf32, #tpu.memory_space<vmem>>) attributes {dimension_semantics = [#tpu.dimension_semantics<arbitrary>], iteration_bounds = array<i64: 1>, scalar_prefetch = 0 : i64, scratch_operands = 4 : i64, tpu.core_type = #tpu.core_type<tc>, window_params = [{pipeline_mode = #tpu.pipeline_mode<synchronous>, transform_indices = @transform_0, window_bounds = array<i64: 32, 2, 48>}, {pipeline_mode = #tpu.pipeline_mode<synchronous>, transform_indices = @transform_1, window_bounds = array<i64: 48, 192>}, {pipeline_mode = #tpu.pipeline_mode<synchronous>, transform_indices = @transform_2, window_bounds = array<i64: 48, 192>}, {pipeline_mode = #tpu.pipeline_mode<synchronous>, transform_indices = @transform_3, window_bounds = array<i64: 1, 192>}, {pipeline_mode = #tpu.pipeline_mode<synchronous>, transform_indices = @transform_4, window_bounds = array<i64: 1, 192>}, {pipeline_mode = #tpu.pipeline_mode<synchronous>, transform_indices = @transform_5, window_bounds = array<i64: 48, 192>}, {pipeline_mode = #tpu.pipeline_mode<synchronous>, transform_indices = @transform_6, window_bounds = array<i64: 48, 192>}, {pipeline_mode = #tpu.pipeline_mode<synchronous>, transform_indices = @transform_7, window_bounds = array<i64: 96, 128>}, {pipeline_mode = #tpu.pipeline_mode<synchronous>, transform_indices = @transform_8, window_bounds = array<i64: 1, 128>}, {pipeline_mode = #tpu.pipeline_mode<synchronous>, transform_indices = @transform_9, window_bounds = array<i64: 32, 2, 128>}]} {
    %c0 = arith.constant 0 : index
    %c0_0 = arith.constant 0 : index
    %c0_1 = arith.constant 0 : index
    %0 = vector.load %arg1[%c0, %c0_0, %c0_1] : memref<32x2x48xf32, #tpu.memory_space<vmem>>, vector<32x2x48xf32>
    %1 = arith.truncf %0 : vector<32x2x48xf32> to vector<32x2x48xbf16>
    %2 = vector.shape_cast %1 : vector<32x2x48xbf16> to vector<64x48xbf16>
    %c0_2 = arith.constant 0 : index
    %c0_3 = arith.constant 0 : index
    %3 = vector.load %arg2[%c0_2, %c0_3] : memref<48x192xbf16, #tpu.memory_space<vmem>>, vector<48x192xbf16>
    %cst = arith.constant dense<0.000000e+00> : vector<64x192xf32>
    %4 = tpu.matmul %2, %3, %cst {dimension_numbers = #tpu.dot_dimension_numbers<[1], [0], [0], [1], [0, 0, 1, 1], [], []>} : vector<64x48xbf16>, vector<48x192xbf16>, vector<64x192xf32> -> vector<64x192xf32>
    %c0_4 = arith.constant 0 : index
    %c0_5 = arith.constant 0 : index
    %5 = vector.load %arg4[%c0_4, %c0_5] : memref<1x192xf32, #tpu.memory_space<vmem>>, vector<1x192xf32>
    %6 = vector.broadcast %5 : vector<1x192xf32> to vector<64x192xf32>
    %7 = arith.addf %4, %6 : vector<64x192xf32>
    %8 = vector.shape_cast %7 : vector<64x192xf32> to vector<32x2x192xf32>
    %c0_6 = arith.constant 0 : index
    %c0_7 = arith.constant 0 : index
    %c0_8 = arith.constant 0 : index
    %9 = vector.load %arg11[%c0_6, %c0_7, %c0_8] : memref<32x2x192xf32, #tpu.memory_space<vmem>>, vector<32x2x192xf32>
    tpu.vector_store %arg11[%c0_6, %c0_7, %c0_8], %8 {strides = array<i32>} : memref<32x2x192xf32, #tpu.memory_space<vmem>>, vector<32x2x192xf32>,
    %c0_9 = arith.constant 0 : index
    %c0_10 = arith.constant 0 : index
    %10 = vector.load %arg3[%c0_9, %c0_10] : memref<48x192xbf16, #tpu.memory_space<vmem>>, vector<48x192xbf16>
    %cst_11 = arith.constant dense<0.000000e+00> : vector<64x192xf32>
    %11 = tpu.matmul %2, %10, %cst_11 {dimension_numbers = #tpu.dot_dimension_numbers<[1], [0], [0], [1], [0, 0, 1, 1], [], []>} : vector<64x48xbf16>, vector<48x192xbf16>, vector<64x192xf32> -> vector<64x192xf32>
    %c0_12 = arith.constant 0 : index
    %c0_13 = arith.constant 0 : index
    %12 = vector.load %arg5[%c0_12, %c0_13] : memref<1x192xf32, #tpu.memory_space<vmem>>, vector<1x192xf32>
    %13 = vector.broadcast %12 : vector<1x192xf32> to vector<64x192xf32>
    %14 = arith.addf %11, %13 : vector<64x192xf32>
    %15 = vector.shape_cast %14 : vector<64x192xf32> to vector<32x2x192xf32>
    %c0_14 = arith.constant 0 : index
    %c0_15 = arith.constant 0 : index
    %c0_16 = arith.constant 0 : index
    %16 = vector.load %arg12[%c0_14, %c0_15, %c0_16] : memref<32x2x192xf32, #tpu.memory_space<vmem>>, vector<32x2x192xf32>
    tpu.vector_store %arg12[%c0_14, %c0_15, %c0_16], %15 {strides = array<i32>} : memref<32x2x192xf32, #tpu.memory_space<vmem>>, vector<32x2x192xf32>,
    %c0_17 = arith.constant 0 : index
    %c0_18 = arith.constant 0 : index
    %17 = vector.load %arg6[%c0_17, %c0_18] : memref<48x192xbf16, #tpu.memory_space<vmem>>, vector<48x192xbf16>
    %c0_19 = arith.constant 0 : index
    %c0_20 = arith.constant 0 : index
    %18 = vector.load %arg7[%c0_19, %c0_20] : memref<48x192xbf16, #tpu.memory_space<vmem>>, vector<48x192xbf16>
    %cst_21 = arith.constant 0.000000e+00 : f32
    %19 = vector.broadcast %cst_21 : f32 to vector<2x48xf32>
    %c0_i32 = arith.constant 0 : i32
    %c32_i32 = arith.constant 32 : i32
    %20 = arith.addi %c0_i32, %c32_i32 : i32
    %c1_i32 = arith.constant 1 : i32
    %21:4 = scf.for %arg15 = %c0_i32 to %20 step %c1_i32 iter_args(%arg16 = %19, %arg17 = %19, %arg18 = %19, %arg19 = %19) -> (vector<2x48xf32>, vector<2x48xf32>, vector<2x48xf32>, vector<2x48xf32>)  : i32 {
      %c31_i32 = arith.constant 31 : i32
      %34 = arith.subi %c31_i32, %arg15 : i32
      %35 = arith.index_cast %arg15 : i32 to index
      %c0_37 = arith.constant 0 : index
      %c0_38 = arith.constant 0 : index
      %36 = vector.load %arg11[%35, %c0_37, %c0_38] : memref<32x2x192xf32, #tpu.memory_space<vmem>>, vector<1x2x192xf32>
      %37 = vector.shape_cast %36 : vector<1x2x192xf32> to vector<2x192xf32>
      %38 = arith.truncf %arg16 : vector<2x48xf32> to vector<2x48xbf16>
      %cst_39 = arith.constant dense<0.000000e+00> : vector<2x192xf32>
      %39 = tpu.matmul %38, %17, %cst_39 {dimension_numbers = #tpu.dot_dimension_numbers<[1], [0], [0], [1], [0, 0, 1, 1], [], []>} : vector<2x48xbf16>, vector<48x192xbf16>, vector<2x192xf32> -> vector<2x192xf32>
      %40 = arith.addf %37, %39 : vector<2x192xf32>
      %41 = arith.index_cast %34 : i32 to index
      %c0_40 = arith.constant 0 : index
      %c0_41 = arith.constant 0 : index
      %42 = vector.load %arg12[%41, %c0_40, %c0_41] : memref<32x2x192xf32, #tpu.memory_space<vmem>>, vector<1x2x192xf32>
      %43 = vector.shape_cast %42 : vector<1x2x192xf32> to vector<2x192xf32>
      %44 = arith.truncf %arg18 : vector<2x48xf32> to vector<2x48xbf16>
      %cst_42 = arith.constant dense<0.000000e+00> : vector<2x192xf32>
      %45 = tpu.matmul %44, %18, %cst_42 {dimension_numbers = #tpu.dot_dimension_numbers<[1], [0], [0], [1], [0, 0, 1, 1], [], []>} : vector<2x48xbf16>, vector<48x192xbf16>, vector<2x192xf32> -> vector<2x192xf32>
      %46 = arith.addf %43, %45 : vector<2x192xf32>
      %47 = vector.extract_strided_slice %40 {offsets = [0, 0], sizes = [2, 48], strides = [1, 1]} : vector<2x192xf32> to vector<2x48xf32>
      %48 = arith.negf %47 : vector<2x48xf32>
      %49 = math.exp %48 : vector<2x48xf32>
      %cst_43 = arith.constant 1.000000e+00 : f32
      %50 = vector.broadcast %cst_43 : f32 to vector<2x48xf32>
      %51 = arith.addf %50, %49 : vector<2x48xf32>
      %52 = arith.divf %50, %51 : vector<2x48xf32>
      %53 = vector.extract_strided_slice %40 {offsets = [0, 48], sizes = [2, 48], strides = [1, 1]} : vector<2x192xf32> to vector<2x48xf32>
      %54 = arith.negf %53 : vector<2x48xf32>
      %55 = math.exp %54 : vector<2x48xf32>
      %cst_44 = arith.constant 1.000000e+00 : f32
      %56 = vector.broadcast %cst_44 : f32 to vector<2x48xf32>
      %57 = arith.addf %56, %55 : vector<2x48xf32>
      %58 = arith.divf %56, %57 : vector<2x48xf32>
      %59 = vector.extract_strided_slice %40 {offsets = [0, 96], sizes = [2, 48], strides = [1, 1]} : vector<2x192xf32> to vector<2x48xf32>
      %60 = math.tanh %59 : vector<2x48xf32>
      %61 = vector.extract_strided_slice %40 {offsets = [0, 144], sizes = [2, 48], strides = [1, 1]} : vector<2x192xf32> to vector<2x48xf32>
      %62 = arith.negf %61 : vector<2x48xf32>
      %63 = math.exp %62 : vector<2x48xf32>
      %cst_45 = arith.constant 1.000000e+00 : f32
      %64 = vector.broadcast %cst_45 : f32 to vector<2x48xf32>
      %65 = arith.addf %64, %63 : vector<2x48xf32>
      %66 = arith.divf %64, %65 : vector<2x48xf32>
      %67 = vector.extract_strided_slice %46 {offsets = [0, 0], sizes = [2, 48], strides = [1, 1]} : vector<2x192xf32> to vector<2x48xf32>
      %68 = arith.negf %67 : vector<2x48xf32>
      %69 = math.exp %68 : vector<2x48xf32>
      %cst_46 = arith.constant 1.000000e+00 : f32
      %70 = vector.broadcast %cst_46 : f32 to vector<2x48xf32>
      %71 = arith.addf %70, %69 : vector<2x48xf32>
      %72 = arith.divf %70, %71 : vector<2x48xf32>
      %73 = vector.extract_strided_slice %46 {offsets = [0, 48], sizes = [2, 48], strides = [1, 1]} : vector<2x192xf32> to vector<2x48xf32>
      %74 = arith.negf %73 : vector<2x48xf32>
      %75 = math.exp %74 : vector<2x48xf32>
      %cst_47 = arith.constant 1.000000e+00 : f32
      %76 = vector.broadcast %cst_47 : f32 to vector<2x48xf32>
      %77 = arith.addf %76, %75 : vector<2x48xf32>
      %78 = arith.divf %76, %77 : vector<2x48xf32>
      %79 = vector.extract_strided_slice %46 {offsets = [0, 96], sizes = [2, 48], strides = [1, 1]} : vector<2x192xf32> to vector<2x48xf32>
      %80 = math.tanh %79 : vector<2x48xf32>
      %81 = vector.extract_strided_slice %46 {offsets = [0, 144], sizes = [2, 48], strides = [1, 1]} : vector<2x192xf32> to vector<2x48xf32>
      %82 = arith.negf %81 : vector<2x48xf32>
      %83 = math.exp %82 : vector<2x48xf32>
      %cst_48 = arith.constant 1.000000e+00 : f32
      %84 = vector.broadcast %cst_48 : f32 to vector<2x48xf32>
      %85 = arith.addf %84, %83 : vector<2x48xf32>
      %86 = arith.divf %84, %85 : vector<2x48xf32>
      %87 = arith.mulf %58, %arg17 : vector<2x48xf32>
      %88 = arith.mulf %52, %60 : vector<2x48xf32>
      %89 = arith.addf %87, %88 : vector<2x48xf32>
      %90 = arith.mulf %78, %arg19 : vector<2x48xf32>
      %91 = arith.mulf %72, %80 : vector<2x48xf32>
      %92 = arith.addf %90, %91 : vector<2x48xf32>
      %93 = math.tanh %89 : vector<2x48xf32>
      %94 = arith.mulf %66, %93 : vector<2x48xf32>
      %95 = math.tanh %92 : vector<2x48xf32>
      %96 = arith.mulf %86, %95 : vector<2x48xf32>
      %97 = arith.index_cast %arg15 : i32 to index
      %c0_49 = arith.constant 0 : index
      %c0_50 = arith.constant 0 : index
      %98 = vector.load %arg13[%97, %c0_49, %c0_50] : memref<32x2x48xf32, #tpu.memory_space<vmem>>, vector<1x2x48xf32>
      %99 = vector.shape_cast %98 : vector<1x2x48xf32> to vector<2x48xf32>
      %100 = vector.shape_cast %94 : vector<2x48xf32> to vector<1x2x48xf32>
      tpu.vector_store %arg13[%97, %c0_49, %c0_50], %100 {strides = array<i32>} : memref<32x2x48xf32, #tpu.memory_space<vmem>>, vector<1x2x48xf32>,
      %101 = arith.index_cast %34 : i32 to index
      %c0_51 = arith.constant 0 : index
      %c0_52 = arith.constant 0 : index
      %102 = vector.load %arg14[%101, %c0_51, %c0_52] : memref<32x2x48xf32, #tpu.memory_space<vmem>>, vector<1x2x48xf32>
      %103 = vector.shape_cast %102 : vector<1x2x48xf32> to vector<2x48xf32>
      %104 = vector.shape_cast %96 : vector<2x48xf32> to vector<1x2x48xf32>
      tpu.vector_store %arg14[%101, %c0_51, %c0_52], %104 {strides = array<i32>} : memref<32x2x48xf32, #tpu.memory_space<vmem>>, vector<1x2x48xf32>,
      scf.yield %94, %89, %96, %92 : vector<2x48xf32>, vector<2x48xf32>, vector<2x48xf32>, vector<2x48xf32>
    }
    %c32_i32_22 = arith.constant 32 : i32
    %c0_23 = arith.constant 0 : index
    %c0_24 = arith.constant 0 : index
    %c0_25 = arith.constant 0 : index
    %22 = vector.load %arg13[%c0_23, %c0_24, %c0_25] : memref<32x2x48xf32, #tpu.memory_space<vmem>>, vector<32x2x48xf32>
    %c0_26 = arith.constant 0 : index
    %c0_27 = arith.constant 0 : index
    %c0_28 = arith.constant 0 : index
    %23 = vector.load %arg14[%c0_26, %c0_27, %c0_28] : memref<32x2x48xf32, #tpu.memory_space<vmem>>, vector<32x2x48xf32>
    %24 = tpu.concatenate %22, %23 in 2 : vector<32x2x48xf32>, vector<32x2x48xf32> -> vector<32x2x96xf32>
    %25 = arith.truncf %24 : vector<32x2x96xf32> to vector<32x2x96xbf16>
    %26 = vector.shape_cast %25 : vector<32x2x96xbf16> to vector<64x96xbf16>
    %c0_29 = arith.constant 0 : index
    %c0_30 = arith.constant 0 : index
    %27 = vector.load %arg8[%c0_29, %c0_30] : memref<96x128xbf16, #tpu.memory_space<vmem>>, vector<96x128xbf16>
    %cst_31 = arith.constant dense<0.000000e+00> : vector<64x128xf32>
    %28 = tpu.matmul %26, %27, %cst_31 {dimension_numbers = #tpu.dot_dimension_numbers<[1], [0], [0], [1], [0, 0, 1, 1], [], []>} : vector<64x96xbf16>, vector<96x128xbf16>, vector<64x128xf32> -> vector<64x128xf32>
    %c0_32 = arith.constant 0 : index
    %c0_33 = arith.constant 0 : index
    %29 = vector.load %arg9[%c0_32, %c0_33] : memref<1x128xf32, #tpu.memory_space<vmem>>, vector<1x128xf32>
    %30 = vector.broadcast %29 : vector<1x128xf32> to vector<64x128xf32>
    %31 = arith.addf %28, %30 : vector<64x128xf32>
    %32 = vector.shape_cast %31 : vector<64x128xf32> to vector<32x2x128xf32>
    %c0_34 = arith.constant 0 : index
    %c0_35 = arith.constant 0 : index
    %c0_36 = arith.constant 0 : index
    %33 = vector.load %arg10[%c0_34, %c0_35, %c0_36] : memref<32x2x128xf32, #tpu.memory_space<vmem>>, vector<32x2x128xf32>
    tpu.vector_store %arg10[%c0_34, %c0_35, %c0_36], %32 {strides = array<i32>} : memref<32x2x128xf32, #tpu.memory_space<vmem>>, vector<32x2x128xf32>,
    return
  }
  func.func @transform_0(%arg0: i32) -> (i32, i32, i32) {
    %c0_i32 = arith.constant 0 : i32
    %c0_i32_0 = arith.constant 0 : i32
    %c0_i32_1 = arith.constant 0 : i32
    %c0_i32_2 = arith.constant 0 : i32
    return %c0_i32, %c0_i32_0, %c0_i32_1 : i32, i32, i32
  }
  func.func @transform_1(%arg0: i32) -> (i32, i32) {
    %c0_i32 = arith.constant 0 : i32
    %c0_i32_0 = arith.constant 0 : i32
    %c0_i32_1 = arith.constant 0 : i32
    return %c0_i32, %c0_i32_0 : i32, i32
  }
  func.func @transform_2(%arg0: i32) -> (i32, i32) {
    %c0_i32 = arith.constant 0 : i32
    %c0_i32_0 = arith.constant 0 : i32
    %c0_i32_1 = arith.constant 0 : i32
    return %c0_i32, %c0_i32_0 : i32, i32
  }
  func.func @transform_3(%arg0: i32) -> (i32, i32) {
    %c0_i32 = arith.constant 0 : i32
    %c0_i32_0 = arith.constant 0 : i32
    %c0_i32_1 = arith.constant 0 : i32
    return %c0_i32, %c0_i32_0 : i32, i32
  }
  func.func @transform_4(%arg0: i32) -> (i32, i32) {
    %c0_i32 = arith.constant 0 : i32
    %c0_i32_0 = arith.constant 0 : i32
    %c0_i32_1 = arith.constant 0 : i32
    return %c0_i32, %c0_i32_0 : i32, i32
  }
  func.func @transform_5(%arg0: i32) -> (i32, i32) {
    %c0_i32 = arith.constant 0 : i32
    %c0_i32_0 = arith.constant 0 : i32
    %c0_i32_1 = arith.constant 0 : i32
    return %c0_i32, %c0_i32_0 : i32, i32
  }
  func.func @transform_6(%arg0: i32) -> (i32, i32) {
    %c0_i32 = arith.constant 0 : i32
    %c0_i32_0 = arith.constant 0 : i32
    %c0_i32_1 = arith.constant 0 : i32
    return %c0_i32, %c0_i32_0 : i32, i32
  }
  func.func @transform_7(%arg0: i32) -> (i32, i32) {
    %c0_i32 = arith.constant 0 : i32
    %c0_i32_0 = arith.constant 0 : i32
    %c0_i32_1 = arith.constant 0 : i32
    return %c0_i32, %c0_i32_0 : i32, i32
  }
  func.func @transform_8(%arg0: i32) -> (i32, i32) {
    %c0_i32 = arith.constant 0 : i32
    %c0_i32_0 = arith.constant 0 : i32
    %c0_i32_1 = arith.constant 0 : i32
    return %c0_i32, %c0_i32_0 : i32, i32
  }
  func.func @transform_9(%arg0: i32) -> (i32, i32, i32) {
    %c0_i32 = arith.constant 0 : i32
    %c0_i32_0 = arith.constant 0 : i32
    %c0_i32_1 = arith.constant 0 : i32
    %c0_i32_2 = arith.constant 0 : i32
    return %c0_i32, %c0_i32_0, %c0_i32_1 : i32, i32, i32
  }
}

</mosaic_0001>

<llo_original>
// kernel: _lambda_.4
$region0: #{_lambda_.4}
  #allocation0 [shape = 'u32[]', space=smem, size = 0x4, offset = 0x4, fixed_abs, tag = 'smem constant byte address 0x4 - core index']
  #allocation1 [shape = 'u32[144,128]{1,0:T(1,128)}', space=vmem, size = 0x12000, scoped, tag = 'internal scratch']
  %s0 = inlined_call_operand.vmem [shape: f32[2,16,64], index: 0, kind: input, shape index: {}]
  %s1 = inlined_call_operand.vmem [shape: f32[2,1920], index: 1, kind: input, shape index: {}]
  %s2 = inlined_call_operand.vmem [shape: f32[3,3,1,64], index: 2, kind: input, shape index: {}]
  %s3 = inlined_call_operand.vmem [shape: f32[3,1,64], index: 3, kind: input, shape index: {}]
  %s4 = inlined_call_operand.vmem [shape: bf16[3,3,64,64], index: 4, kind: input, shape index: {}]
  %s5 = inlined_call_operand.vmem [shape: f32[3,1,64], index: 5, kind: input, shape index: {}]
  %s6 = inlined_call_operand.vmem [shape: bf16[3,3,64,64], index: 6, kind: input, shape index: {}]
  %s7 = inlined_call_operand.vmem [shape: f32[3,1,64], index: 7, kind: input, shape index: {}]
  %s8 = inlined_call_operand.vmem [shape: bf16[3,3,64,32], index: 8, kind: input, shape index: {}]
  %s9 = inlined_call_operand.vmem [shape: f32[3,1,32], index: 9, kind: input, shape index: {}]
  %s10 = inlined_call_operand.vmem [shape: bf16[3,3,32,32], index: 10, kind: input, shape index: {}]
  %s11 = inlined_call_operand.vmem [shape: f32[3,1,32], index: 11, kind: input, shape index: {}]
  %s12 = inlined_call_operand.vmem [shape: bf16[3,64,32], index: 12, kind: input, shape index: {}]
  %s13 = inlined_call_operand.vmem [shape: bf16[3,3,32,16], index: 13, kind: input, shape index: {}]
  %s14 = inlined_call_operand.vmem [shape: f32[3,1,16], index: 14, kind: input, shape index: {}]
  %s15 = inlined_call_operand.vmem [shape: bf16[3,3,16,16], index: 15, kind: input, shape index: {}]
  %s16 = inlined_call_operand.vmem [shape: f32[3,1,16], index: 16, kind: input, shape index: {}]
  %s17 = inlined_call_operand.vmem [shape: bf16[3,32,16], index: 17, kind: input, shape index: {}]
  %s18 = inlined_call_operand.vmem [shape: f32[3,4,16,16], index: 18, kind: output, shape index: {}]
  %s19 = sld [smem:[#allocation0]]
  $region105: #{_lambda_.4} parent=0
    _
  %s21 = ssub.s32 1, %s19
  %s22 = scalar_select 0, %s21, %s19
  loop: start=0, step=1, limit=5
  $region2: #{_lambda_.4} parent=0 // loop_pre_header
    _
  $region3: #{_lambda_.4} parent=0 // loop_header
    %s24 = sphi 0, %s28
    %p25 = scmp.ge.s32.totalorder %s24, 5
    %s32 = sphi 0, %s32
    %s34 = sphi 0, %s32
    %s35 = sphi 0, %s34
    %s49 = sphi 0, %s35
    %s55 = sphi 0, %s57
    %s58 = sphi 0, %s55
    %s59 = sphi 0, %s58
    %s75 = sphi 0, %s59
    %s81 = sphi 0, %s83
    %s84 = sphi 0, %s81
    %s85 = sphi 0, %s84
    %s101 = sphi 0, %s85
    %s107 = sphi 0, %s109
    %s110 = sphi 0, %s107
    %s111 = sphi 0, %s110
    %s127 = sphi 0, %s111
    %s133 = sphi 0, %s135
    %s136 = sphi 0, %s133
    %s137 = sphi 0, %s136
    %s153 = sphi 0, %s137
    %s159 = sphi 0, %s161
    %s162 = sphi 0, %s159
    %s163 = sphi 0, %s162
    %s179 = sphi 0, %s163
    %s185 = sphi 0, %s187
    %s188 = sphi 0, %s185
    %s189 = sphi 0, %s188
    %s205 = sphi 0, %s189
    %s211 = sphi 0, %s213
    %s214 = sphi 0, %s211
    %s215 = sphi 0, %s214
    %s231 = sphi 0, %s215
    %s237 = sphi 0, %s239
    %s240 = sphi 0, %s237
    %s241 = sphi 0, %s240
    %s257 = sphi 0, %s241
    %s263 = sphi 0, %s265
    %s266 = sphi 0, %s263
    %s267 = sphi 0, %s266
    %s283 = sphi 0, %s267
    %s289 = sphi 0, %s291
    %s292 = sphi 0, %s289
    %s293 = sphi 0, %s292
    %s309 = sphi 0, %s293
    %s315 = sphi 0, %s317
    %s318 = sphi 0, %s315
    %s319 = sphi 0, %s318
    %s335 = sphi 0, %s319
    %s341 = sphi 0, %s343
    %s344 = sphi 0, %s341
    %s345 = sphi 0, %s344
    %s361 = sphi 0, %s345
    %s367 = sphi 0, %s369
    %s370 = sphi 0, %s367
    %s371 = sphi 0, %s370
    %s387 = sphi 0, %s371
    %s393 = sphi 0, %s395
    %s396 = sphi 0, %s393
    %s397 = sphi 0, %s396
    %s413 = sphi 0, %s397
    %s419 = sphi 0, %s421
    %s422 = sphi 0, %s419
    %s423 = sphi 0, %s422
    %s439 = sphi 0, %s423
    %s445 = sphi 0, %s447
    %s448 = sphi 0, %s445
    %s449 = sphi 0, %s448
    %s465 = sphi 0, %s449
    %s471 = sphi 0, %s473
    %s474 = sphi 0, %s471
    %s475 = sphi 0, %s474
    %s491 = sphi 0, %s475
    %s497 = sphi 0, %s499
    %s500 = sphi 0, %s497
    %s501 = sphi 0, %s500
    %s517 = sphi 0, %s501
  $region4: #{_lambda_.4} parent=0 // loop_header_branch
    %27 = sbr.rel (%p25) target = $region8
  $region5: #{_lambda_.4} parent=0 // loop_body
    %s29 = ssub.s32 %s24, 1
    %s30 = ssub.s32 %s24, 2
    %s31 = sadd.s32 %s24, 1
    %s33 = sadd.s32 %s32, 1
    %p36 = scmp.eq.s32.totalorder %s24, 2
    %p37 = scmp.ne.s32.totalorder %s32, %s34
    %p38 = scmp.eq.s32.totalorder %s24, 0
    %p39 = por %p37, %p38
    %p40 = scmp.ne.s32.totalorder %s32, %s34
    %p41 = scmp.eq.s32.totalorder %s29, 2
    %p42 = por %p40, %p41
    %p43 = scmp.ne.s32.totalorder %s34, %s35
    %p44 = scmp.eq.s32.totalorder %s29, 0
    %p45 = por %p43, %p44
    %p46 = scmp.ne.s32.totalorder %s34, %s35
    %p47 = scmp.eq.s32.totalorder %s30, 2
    %p48 = por %p46, %p47
    %p50 = scmp.ne.s32.totalorder %s35, %s49
    %p51 = scmp.eq.s32.totalorder %s30, 0
    %p52 = por %p50, %p51
    %s53 = ssub.s32 %s24, %s31
    %p54 = scmp.eq.s32.totalorder %s53, 0
    %s56 = sadd.s32 %s55, 1
    %s57 = scalar_select %p54, %s55, %s56
    %p60 = pneg %p54
    %p61 = scmp.eq.s32.totalorder %s24, 2
    %p62 = por %p60, %p61
    %p63 = scmp.ne.s32.totalorder %s55, %s58
    %p64 = scmp.eq.s32.totalorder %s24, 0
    %p65 = por %p63, %p64
    %p66 = scmp.ne.s32.totalorder %s55, %s58
    %p67 = scmp.eq.s32.totalorder %s29, 2
    %p68 = por %p66, %p67
    %p69 = scmp.ne.s32.totalorder %s58, %s59
    %p70 = scmp.eq.s32.totalorder %s29, 0
    %p71 = por %p69, %p70
    %p72 = scmp.ne.s32.totalorder %s58, %s59
    %p73 = scmp.eq.s32.totalorder %s30, 2
    %p74 = por %p72, %p73
    %p76 = scmp.ne.s32.totalorder %s59, %s75
    %p77 = scmp.eq.s32.totalorder %s30, 0
    %p78 = por %p76, %p77
    %s79 = ssub.s32 %s24, %s31
    %p80 = scmp.eq.s32.totalorder %s79, 0
    %s82 = sadd.s32 %s81, 1
    %s83 = scalar_select %p80, %s81, %s82
    %p86 = pneg %p80
    %p87 = scmp.eq.s32.totalorder %s24, 2
    %p88 = por %p86, %p87
    %p89 = scmp.ne.s32.totalorder %s81, %s84
    %p90 = scmp.eq.s32.totalorder %s24, 0
    %p91 = por %p89, %p90
    %p92 = scmp.ne.s32.totalorder %s81, %s84
    %p93 = scmp.eq.s32.totalorder %s29, 2
    %p94 = por %p92, %p93
    %p95 = scmp.ne.s32.totalorder %s84, %s85
    %p96 = scmp.eq.s32.totalorder %s29, 0
    %p97 = por %p95, %p96
    %p98 = scmp.ne.s32.totalorder %s84, %s85
    %p99 = scmp.eq.s32.totalorder %s30, 2
    %p100 = por %p98, %p99
    %p102 = scmp.ne.s32.totalorder %s85, %s101
    %p103 = scmp.eq.s32.totalorder %s30, 0
    %p104 = por %p102, %p103
    %s105 = ssub.s32 %s24, %s31
    %p106 = scmp.eq.s32.totalorder %s105, 0
    %s108 = sadd.s32 %s107, 1
    %s109 = scalar_select %p106, %s107, %s108
    %p112 = pneg %p106
    %p113 = scmp.eq.s32.totalorder %s24, 2
    %p114 = por %p112, %p113
    %p115 = scmp.ne.s32.totalorder %s107, %s110
    %p116 = scmp.eq.s32.totalorder %s24, 0
    %p117 = por %p115, %p116
    %p118 = scmp.ne.s32.totalorder %s107, %s110
    %p119 = scmp.eq.s32.totalorder %s29, 2
    %p120 = por %p118, %p119
    %p121 = scmp.ne.s32.totalorder %s110, %s111
    %p122 = scmp.eq.s32.totalorder %s29, 0
    %p123 = por %p121, %p122
    %p124 = scmp.ne.s32.totalorder %s110, %s111
    %p125 = scmp.eq.s32.totalorder %s30, 2
    %p126 = por %p124, %p125
    %p128 = scmp.ne.s32.totalorder %s111, %s127
    %p129 = scmp.eq.s32.totalorder %s30, 0
    %p130 = por %p128, %p129
    %s131 = ssub.s32 %s24, %s31
    %p132 = scmp.eq.s32.totalorder %s131, 0
    %s134 = sadd.s32 %s133, 1
    %s135 = scalar_select %p132, %s133, %s134
    %p138 = pneg %p132
    %p139 = scmp.eq.s32.totalorder %s24, 2
    %p140 = por %p138, %p139
    %p141 = scmp.ne.s32.totalorder %s133, %s136
    %p142 = scmp.eq.s32.totalorder %s24, 0
    %p143 = por %p141, %p142
    %p144 = scmp.ne.s32.totalorder %s133, %s136
    %p145 = scmp.eq.s32.totalorder %s29, 2
    %p146 = por %p144, %p145
    %p147 = scmp.ne.s32.totalorder %s136, %s137
    %p148 = scmp.eq.s32.totalorder %s29, 0
    %p149 = por %p147, %p148
    %p150 = scmp.ne.s32.totalorder %s136, %s137
    %p151 = scmp.eq.s32.totalorder %s30, 2
    %p152 = por %p150, %p151
    %p154 = scmp.ne.s32.totalorder %s137, %s153
    %p155 = scmp.eq.s32.totalorder %s30, 0
    %p156 = por %p154, %p155
    %s157 = ssub.s32 %s24, %s31
    %p158 = scmp.eq.s32.totalorder %s157, 0
    %s160 = sadd.s32 %s159, 1
    %s161 = scalar_select %p158, %s159, %s160
    %p164 = pneg %p158
    %p165 = scmp.eq.s32.totalorder %s24, 2
    %p166 = por %p164, %p165
    %p167 = scmp.ne.s32.totalorder %s159, %s162
    %p168 = scmp.eq.s32.totalorder %s24, 0
    %p169 = por %p167, %p168
    %p170 = scmp.ne.s32.totalorder %s159, %s162
    %p171 = scmp.eq.s32.totalorder %s29, 2
    %p172 = por %p170, %p171
    %p173 = scmp.ne.s32.totalorder %s162, %s163
    %p174 = scmp.eq.s32.totalorder %s29, 0
    %p175 = por %p173, %p174
    %p176 = scmp.ne.s32.totalorder %s162, %s163
    %p177 = scmp.eq.s32.totalorder %s30, 2
    %p178 = por %p176, %p177
    %p180 = scmp.ne.s32.totalorder %s163, %s179
    %p181 = scmp.eq.s32.totalorder %s30, 0
    %p182 = por %p180, %p181
    %s183 = ssub.s32 %s24, %s31
    %p184 = scmp.eq.s32.totalorder %s183, 0
    %s186 = sadd.s32 %s185, 1
    %s187 = scalar_select %p184, %s185, %s186
    %p190 = pneg %p184
    %p191 = scmp.eq.s32.totalorder %s24, 2
    %p192 = por %p190, %p191
    %p193 = scmp.ne.s32.totalorder %s185, %s188
    %p194 = scmp.eq.s32.totalorder %s24, 0
    %p195 = por %p193, %p194
    %p196 = scmp.ne.s32.totalorder %s185, %s188
    %p197 = scmp.eq.s32.totalorder %s29, 2
    %p198 = por %p196, %p197
    %p199 = scmp.ne.s32.totalorder %s188, %s189
    %p200 = scmp.eq.s32.totalorder %s29, 0
    %p201 = por %p199, %p200
    %p202 = scmp.ne.s32.totalorder %s188, %s189
    %p203 = scmp.eq.s32.totalorder %s30, 2
    %p204 = por %p202, %p203
    %p206 = scmp.ne.s32.totalorder %s189, %s205
    %p207 = scmp.eq.s32.totalorder %s30, 0
    %p208 = por %p206, %p207
    %s209 = ssub.s32 %s24, %s31
    %p210 = scmp.eq.s32.totalorder %s209, 0
    %s212 = sadd.s32 %s211, 1
    %s213 = scalar_select %p210, %s211, %s212
    %p216 = pneg %p210
    %p217 = scmp.eq.s32.totalorder %s24, 2
    %p218 = por %p216, %p217
    %p219 = scmp.ne.s32.totalorder %s211, %s214
    %p220 = scmp.eq.s32.totalorder %s24, 0
    %p221 = por %p219, %p220
    %p222 = scmp.ne.s32.totalorder %s211, %s214
    %p223 = scmp.eq.s32.totalorder %s29, 2
    %p224 = por %p222, %p223
    %p225 = scmp.ne.s32.totalorder %s214, %s215
    %p226 = scmp.eq.s32.totalorder %s29, 0
    %p227 = por %p225, %p226
    %p228 = scmp.ne.s32.totalorder %s214, %s215
    %p229 = scmp.eq.s32.totalorder %s30, 2
    %p230 = por %p228, %p229
    %p232 = scmp.ne.s32.totalorder %s215, %s231
    %p233 = scmp.eq.s32.totalorder %s30, 0
    %p234 = por %p232, %p233
    %s235 = ssub.s32 %s24, %s31
    %p236 = scmp.eq.s32.totalorder %s235, 0
    %s238 = sadd.s32 %s237, 1
    %s239 = scalar_select %p236, %s237, %s238
    %p242 = pneg %p236
    %p243 = scmp.eq.s32.totalorder %s24, 2
    %p244 = por %p242, %p243
    %p245 = scmp.ne.s32.totalorder %s237, %s240
    %p246 = scmp.eq.s32.totalorder %s24, 0
    %p247 = por %p245, %p246
    %p248 = scmp.ne.s32.totalorder %s237, %s240
    %p249 = scmp.eq.s32.totalorder %s29, 2
    %p250 = por %p248, %p249
    %p251 = scmp.ne.s32.totalorder %s240, %s241
    %p252 = scmp.eq.s32.totalorder %s29, 0
    %p253 = por %p251, %p252
    %p254 = scmp.ne.s32.totalorder %s240, %s241
    %p255 = scmp.eq.s32.totalorder %s30, 2
    %p256 = por %p254, %p255
    %p258 = scmp.ne.s32.totalorder %s241, %s257
    %p259 = scmp.eq.s32.totalorder %s30, 0
    %p260 = por %p258, %p259
    %s261 = ssub.s32 %s24, %s31
    %p262 = scmp.eq.s32.totalorder %s261, 0
    %s264 = sadd.s32 %s263, 1
    %s265 = scalar_select %p262, %s263, %s264
    %p268 = pneg %p262
    %p269 = scmp.eq.s32.totalorder %s24, 2
    %p270 = por %p268, %p269
    %p271 = scmp.ne.s32.totalorder %s263, %s266
    %p272 = scmp.eq.s32.totalorder %s24, 0
    %p273 = por %p271, %p272
    %p274 = scmp.ne.s32.totalorder %s263, %s266
    %p275 = scmp.eq.s32.totalorder %s29, 2
    %p276 = por %p274, %p275
    %p277 = scmp.ne.s32.totalorder %s266, %s267
    %p278 = scmp.eq.s32.totalorder %s29, 0
    %p279 = por %p277, %p278
    %p280 = scmp.ne.s32.totalorder %s266, %s267
    %p281 = scmp.eq.s32.totalorder %s30, 2
    %p282 = por %p280, %p281
    %p284 = scmp.ne.s32.totalorder %s267, %s283
    %p285 = scmp.eq.s32.totalorder %s30, 0
    %p286 = por %p284, %p285
    %s287 = ssub.s32 %s24, %s31
    %p288 = scmp.eq.s32.totalorder %s287, 0
    %s290 = sadd.s32 %s289, 1
    %s291 = scalar_select %p288, %s289, %s290
    %p294 = pneg %p288
    %p295 = scmp.eq.s32.totalorder %s24, 2
    %p296 = por %p294, %p295
    %p297 = scmp.ne.s32.totalorder %s289, %s292
    %p298 = scmp.eq.s32.totalorder %s24, 0
    %p299 = por %p297, %p298
    %p300 = scmp.ne.s32.totalorder %s289, %s292
    %p301 = scmp.eq.s32.totalorder %s29, 2
    %p302 = por %p300, %p301
    %p303 = scmp.ne.s32.totalorder %s292, %s293
    %p304 = scmp.eq.s32.totalorder %s29, 0
    %p305 = por %p303, %p304
    %p306 = scmp.ne.s32.totalorder %s292, %s293
    %p307 = scmp.eq.s32.totalorder %s30, 2
    %p308 = por %p306, %p307
    %p310 = scmp.ne.s32.totalorder %s293, %s309
    %p311 = scmp.eq.s32.totalorder %s30, 0
    %p312 = por %p310, %p311
    %s313 = ssub.s32 %s24, %s31
    %p314 = scmp.eq.s32.totalorder %s313, 0
    %s316 = sadd.s32 %s315, 1
    %s317 = scalar_select %p314, %s315, %s316
    %p320 = pneg %p314
    %p321 = scmp.eq.s32.totalorder %s24, 2
    %p322 = por %p320, %p321
    %p323 = scmp.ne.s32.totalorder %s315, %s318
    %p324 = scmp.eq.s32.totalorder %s24, 0
    %p325 = por %p323, %p324
    %p326 = scmp.ne.s32.totalorder %s315, %s318
    %p327 = scmp.eq.s32.totalorder %s29, 2
    %p328 = por %p326, %p327
    %p329 = scmp.ne.s32.totalorder %s318, %s319
    %p330 = scmp.eq.s32.totalorder %s29, 0
    %p331 = por %p329, %p330
    %p332 = scmp.ne.s32.totalorder %s318, %s319
    %p333 = scmp.eq.s32.totalorder %s30, 2
    %p334 = por %p332, %p333
    %p336 = scmp.ne.s32.totalorder %s319, %s335
    %p337 = scmp.eq.s32.totalorder %s30, 0
    %p338 = por %p336, %p337
    %s339 = ssub.s32 %s24, %s31
    %p340 = scmp.eq.s32.totalorder %s339, 0
    %s342 = sadd.s32 %s341, 1
    %s343 = scalar_select %p340, %s341, %s342
    %p346 = pneg %p340
    %p347 = scmp.eq.s32.totalorder %s24, 2
    %p348 = por %p346, %p347
    %p349 = scmp.ne.s32.totalorder %s341, %s344
    %p350 = scmp.eq.s32.totalorder %s24, 0
    %p351 = por %p349, %p350
    %p352 = scmp.ne.s32.totalorder %s341, %s344
    %p353 = scmp.eq.s32.totalorder %s29, 2
    %p354 = por %p352, %p353
    %p355 = scmp.ne.s32.totalorder %s344, %s345
    %p356 = scmp.eq.s32.totalorder %s29, 0
    %p357 = por %p355, %p356
    %p358 = scmp.ne.s32.totalorder %s344, %s345
    %p359 = scmp.eq.s32.totalorder %s30, 2
    %p360 = por %p358, %p359
    %p362 = scmp.ne.s32.totalorder %s345, %s361
    %p363 = scmp.eq.s32.totalorder %s30, 0
    %p364 = por %p362, %p363
    %s365 = ssub.s32 %s24, %s31
    %p366 = scmp.eq.s32.totalorder %s365, 0
    %s368 = sadd.s32 %s367, 1
    %s369 = scalar_select %p366, %s367, %s368
    %p372 = pneg %p366
    %p373 = scmp.eq.s32.totalorder %s24, 2
    %p374 = por %p372, %p373
    %p375 = scmp.ne.s32.totalorder %s367, %s370
    %p376 = scmp.eq.s32.totalorder %s24, 0
    %p377 = por %p375, %p376
    %p378 = scmp.ne.s32.totalorder %s367, %s370
    %p379 = scmp.eq.s32.totalorder %s29, 2
    %p380 = por %p378, %p379
    %p381 = scmp.ne.s32.totalorder %s370, %s371
    %p382 = scmp.eq.s32.totalorder %s29, 0
    %p383 = por %p381, %p382
    %p384 = scmp.ne.s32.totalorder %s370, %s371
    %p385 = scmp.eq.s32.totalorder %s30, 2
    %p386 = por %p384, %p385
    %p388 = scmp.ne.s32.totalorder %s371, %s387
    %p389 = scmp.eq.s32.totalorder %s30, 0
    %p390 = por %p388, %p389
    %s391 = ssub.s32 %s24, %s31
    %p392 = scmp.eq.s32.totalorder %s391, 0
    %s394 = sadd.s32 %s393, 1
    %s395 = scalar_select %p392, %s393, %s394
    %p398 = pneg %p392
    %p399 = scmp.eq.s32.totalorder %s24, 2
    %p400 = por %p398, %p399
    %p401 = scmp.ne.s32.totalorder %s393, %s396
    %p402 = scmp.eq.s32.totalorder %s24, 0
    %p403 = por %p401, %p402
    %p404 = scmp.ne.s32.totalorder %s393, %s396
    %p405 = scmp.eq.s32.totalorder %s29, 2
    %p406 = por %p404, %p405
    %p407 = scmp.ne.s32.totalorder %s396, %s397
    %p408 = scmp.eq.s32.totalorder %s29, 0
    %p409 = por %p407, %p408
    %p410 = scmp.ne.s32.totalorder %s396, %s397
    %p411 = scmp.eq.s32.totalorder %s30, 2
    %p412 = por %p410, %p411
    %p414 = scmp.ne.s32.totalorder %s397, %s413
    %p415 = scmp.eq.s32.totalorder %s30, 0
    %p416 = por %p414, %p415
    %s417 = ssub.s32 %s24, %s31
    %p418 = scmp.eq.s32.totalorder %s417, 0
    %s420 = sadd.s32 %s419, 1
    %s421 = scalar_select %p418, %s419, %s420
    %p424 = pneg %p418
    %p425 = scmp.eq.s32.totalorder %s24, 2
    %p426 = por %p424, %p425
    %p427 = scmp.ne.s32.totalorder %s419, %s422
    %p428 = scmp.eq.s32.totalorder %s24, 0
    %p429 = por %p427, %p428
    %p430 = scmp.ne.s32.totalorder %s419, %s422
    %p431 = scmp.eq.s32.totalorder %s29, 2
    %p432 = por %p430, %p431
    %p433 = scmp.ne.s32.totalorder %s422, %s423
    %p434 = scmp.eq.s32.totalorder %s29, 0
    %p435 = por %p433, %p434
    %p436 = scmp.ne.s32.totalorder %s422, %s423
    %p437 = scmp.eq.s32.totalorder %s30, 2
    %p438 = por %p436, %p437
    %p440 = scmp.ne.s32.totalorder %s423, %s439
    %p441 = scmp.eq.s32.totalorder %s30, 0
    %p442 = por %p440, %p441
    %s443 = ssub.s32 %s24, %s31
    %p444 = scmp.eq.s32.totalorder %s443, 0
    %s446 = sadd.s32 %s445, 1
    %s447 = scalar_select %p444, %s445, %s446
    %p450 = pneg %p444
    %p451 = scmp.eq.s32.totalorder %s24, 2
    %p452 = por %p450, %p451
    %p453 = scmp.ne.s32.totalorder %s445, %s448
    %p454 = scmp.eq.s32.totalorder %s24, 0
    %p455 = por %p453, %p454
    %p456 = scmp.ne.s32.totalorder %s445, %s448
    %p457 = scmp.eq.s32.totalorder %s29, 2
    %p458 = por %p456, %p457
    %p459 = scmp.ne.s32.totalorder %s448, %s449
    %p460 = scmp.eq.s32.totalorder %s29, 0
    %p461 = por %p459, %p460
    %p462 = scmp.ne.s32.totalorder %s448, %s449
    %p463 = scmp.eq.s32.totalorder %s30, 2
    %p464 = por %p462, %p463
    %p466 = scmp.ne.s32.totalorder %s449, %s465
    %p467 = scmp.eq.s32.totalorder %s30, 0
    %p468 = por %p466, %p467
    %s469 = ssub.s32 %s24, %s31
    %p470 = scmp.eq.s32.totalorder %s469, 0
    %s472 = sadd.s32 %s471, 1
    %s473 = scalar_select %p470, %s471, %s472
    %p476 = pneg %p470
    %p477 = scmp.eq.s32.totalorder %s24, 2
    %p478 = por %p476, %p477
    %p479 = scmp.ne.s32.totalorder %s471, %s474
    %p480 = scmp.eq.s32.totalorder %s24, 0
    %p481 = por %p479, %p480
    %p482 = scmp.ne.s32.totalorder %s471, %s474
    %p483 = scmp.eq.s32.totalorder %s29, 2
    %p484 = por %p482, %p483
    %p485 = scmp.ne.s32.totalorder %s474, %s475
    %p486 = scmp.eq.s32.totalorder %s29, 0
    %p487 = por %p485, %p486
    %p488 = scmp.ne.s32.totalorder %s474, %s475
    %p489 = scmp.eq.s32.totalorder %s30, 2
    %p490 = por %p488, %p489
    %p492 = scmp.ne.s32.totalorder %s475, %s491
    %p493 = scmp.eq.s32.totalorder %s30, 0
    %p494 = por %p492, %p493
    %s495 = ssub.s32 %s24, %s31
    %p496 = scmp.eq.s32.totalorder %s495, 0
    %s498 = sadd.s32 %s497, 1
    %s499 = scalar_select %p496, %s497, %s498
    %p502 = pneg %p496
    %p503 = scmp.eq.s32.totalorder %s24, 2
    %p504 = por %p502, %p503
    %p505 = scmp.ne.s32.totalorder %s497, %s500
    %p506 = scmp.eq.s32.totalorder %s24, 0
    %p507 = por %p505, %p506
    %p508 = scmp.ne.s32.totalorder %s497, %s500
    %p509 = scmp.eq.s32.totalorder %s29, 2
    %p510 = por %p508, %p509
    %p511 = scmp.ne.s32.totalorder %s500, %s501
    %p512 = scmp.eq.s32.totalorder %s29, 0
    %p513 = por %p511, %p512
    %p514 = scmp.ne.s32.totalorder %s500, %s501
    %p515 = scmp.eq.s32.totalorder %s30, 2
    %p516 = por %p514, %p515
    %p518 = scmp.ne.s32.totalorder %s501, %s517
    %p519 = scmp.eq.s32.totalorder %s30, 0
    %p520 = por %p518, %p519
    %p521 = scmp.le.s32.totalorder 1, %s24
    %p522 = scmp.lt.s32.totalorder %s24, 4
    %p523 = pnand %p521, %p522
    %p524 = pneg %p523
    // Predicated region
    $region9: #{_lambda_.4} parent=5 // pred_check
      _
    $region10: #{_lambda_.4} parent=5 // pred_check_branch
      %526 = sbr.rel (%p523) target = $region12
    $region11: #{_lambda_.4} parent=5 // pred_region
      %s527 = ssub.s32 %s24, 1
      // Predicated region
      $region13: #{_lambda_.4} parent=11 // pred_check
        %p528 = pneg %p45
      $region14: #{_lambda_.4} parent=11 // pred_check_branch
        %530 = sbr.rel (%p528) target = $region16
      $region15: #{_lambda_.4} parent=11 // pred_region
        _
      $region16: #{_lambda_.4} parent=11 // pred_fallthru
        _
    $region12: #{_lambda_.4} parent=5 // pred_fallthru
      _
    %p531 = scmp.lt.s32.totalorder %s24, 3
    // Predicated region
    $region17: #{_lambda_.4} parent=5 // pred_check
      %p532 = pneg %p531
    $region18: #{_lambda_.4} parent=5 // pred_check_branch
      %534 = sbr.rel (%p532) target = $region20
    $region19: #{_lambda_.4} parent=5 // pred_region
      // Predicated region
      $region21: #{_lambda_.4} parent=19 // pred_check
        %p535 = pneg %p65
      $region22: #{_lambda_.4} parent=19 // pred_check_branch
        %537 = sbr.rel (%p535) target = $region24
      $region23: #{_lambda_.4} parent=19 // pred_region
        %s538 = smul.u32 5, %s24
        %p539 = scmp.lt.s32.totalorder %s538, 14
        %s540 = scalar_select %p539, %s538, 14
        %s541 = smul.addr %s540, 2
        %s542 = scalar_lea.vmem %s1, %s541
        %s543 = smul.u32 5, %s24
      $region24: #{_lambda_.4} parent=19 // pred_fallthru
        _
      // Predicated region
      $region25: #{_lambda_.4} parent=19 // pred_check
        %p544 = pneg %p91
      $region26: #{_lambda_.4} parent=19 // pred_check_branch
        %546 = sbr.rel (%p544) target = $region28
      $region27: #{_lambda_.4} parent=19 // pred_region
        %p547 = scmp.lt.s32.totalorder %s24, 2
        %s548 = scalar_select %p547, %s24, 2
        %s549 = smul.addr %s548, 3
        %s550 = scalar_lea.vmem %s2, %s549
      $region28: #{_lambda_.4} parent=19 // pred_fallthru
        _
      // Predicated region
      $region29: #{_lambda_.4} parent=19 // pred_check
        %p551 = pneg %p117
      $region30: #{_lambda_.4} parent=19 // pred_check_branch
        %553 = sbr.rel (%p551) target = $region32
      $region31: #{_lambda_.4} parent=19 // pred_region
        %p554 = scmp.lt.s32.totalorder %s24, 2
        %s555 = scalar_select %p554, %s24, 2
        %s556 = scalar_lea.vmem %s3, %s555
      $region32: #{_lambda_.4} parent=19 // pred_fallthru
        _
      // Predicated region
      $region33: #{_lambda_.4} parent=19 // pred_check
        %p557 = pneg %p143
      $region34: #{_lambda_.4} parent=19 // pred_check_branch
        %559 = sbr.rel (%p557) target = $region36
      $region35: #{_lambda_.4} parent=19 // pred_region
        %p560 = scmp.lt.s32.totalorder %s24, 2
        %s561 = scalar_select %p560, %s24, 2
        %s562 = smul.addr %s561, 24
        %s563 = smul.addr %s562, 4
        %s564 = scalar_lea.vmem %s4, %s563
      $region36: #{_lambda_.4} parent=19 // pred_fallthru
        _
      // Predicated region
      $region37: #{_lambda_.4} parent=19 // pred_check
        %p565 = pneg %p169
      $region38: #{_lambda_.4} parent=19 // pred_check_branch
        %567 = sbr.rel (%p565) target = $region40
      $region39: #{_lambda_.4} parent=19 // pred_region
        %p568 = scmp.lt.s32.totalorder %s24, 2
        %s569 = scalar_select %p568, %s24, 2
        %s570 = scalar_lea.vmem %s5, %s569
      $region40: #{_lambda_.4} parent=19 // pred_fallthru
        _
      // Predicated region
      $region41: #{_lambda_.4} parent=19 // pred_check
        %p571 = pneg %p195
      $region42: #{_lambda_.4} parent=19 // pred_check_branch
        %573 = sbr.rel (%p571) target = $region44
      $region43: #{_lambda_.4} parent=19 // pred_region
        %p574 = scmp.lt.s32.totalorder %s24, 2
        %s575 = scalar_select %p574, %s24, 2
        %s576 = smul.addr %s575, 24
        %s577 = smul.addr %s576, 4
        %s578 = scalar_lea.vmem %s6, %s577
      $region44: #{_lambda_.4} parent=19 // pred_fallthru
        _
      // Predicated region
      $region45: #{_lambda_.4} parent=19 // pred_check
        %p579 = pneg %p221
      $region46: #{_lambda_.4} parent=19 // pred_check_branch
        %581 = sbr.rel (%p579) target = $region48
      $region47: #{_lambda_.4} parent=19 // pred_region
        %p582 = scmp.lt.s32.totalorder %s24, 2
        %s583 = scalar_select %p582, %s24, 2
        %s584 = scalar_lea.vmem %s7, %s583
      $region48: #{_lambda_.4} parent=19 // pred_fallthru
        _
      // Predicated region
      $region49: #{_lambda_.4} parent=19 // pred_check
        %p585 = pneg %p247
      $region50: #{_lambda_.4} parent=19 // pred_check_branch
        %587 = sbr.rel (%p585) target = $region52
      $region51: #{_lambda_.4} parent=19 // pred_region
        %p588 = scmp.lt.s32.totalorder %s24, 2
        %s589 = scalar_select %p588, %s24, 2
        %s590 = smul.addr %s589, 24
        %s591 = smul.addr %s590, 4
        %s592 = scalar_lea.vmem %s8, %s591
      $region52: #{_lambda_.4} parent=19 // pred_fallthru
        _
      // Predicated region
      $region53: #{_lambda_.4} parent=19 // pred_check
        %p593 = pneg %p273
      $region54: #{_lambda_.4} parent=19 // pred_check_branch
        %595 = sbr.rel (%p593) target = $region56
      $region55: #{_lambda_.4} parent=19 // pred_region
        %p596 = scmp.lt.s32.totalorder %s24, 2
        %s597 = scalar_select %p596, %s24, 2
        %s598 = scalar_lea.vmem %s9, %s597
      $region56: #{_lambda_.4} parent=19 // pred_fallthru
        _
      // Predicated region
      $region57: #{_lambda_.4} parent=19 // pred_check
        %p599 = pneg %p299
      $region58: #{_lambda_.4} parent=19 // pred_check_branch
        %601 = sbr.rel (%p599) target = $region60
      $region59: #{_lambda_.4} parent=19 // pred_region
        %p602 = scmp.lt.s32.totalorder %s24, 2
        %s603 = scalar_select %p602, %s24, 2
        %s604 = smul.addr %s603, 12
        %s605 = smul.addr %s604, 4
        %s606 = scalar_lea.vmem %s10, %s605
      $region60: #{_lambda_.4} parent=19 // pred_fallthru
        _
      // Predicated region
      $region61: #{_lambda_.4} parent=19 // pred_check
        %p607 = pneg %p325
      $region62: #{_lambda_.4} parent=19 // pred_check_branch
        %609 = sbr.rel (%p607) target = $region64
      $region63: #{_lambda_.4} parent=19 // pred_region
        %p610 = scmp.lt.s32.totalorder %s24, 2
        %s611 = scalar_select %p610, %s24, 2
        %s612 = scalar_lea.vmem %s11, %s611
      $region64: #{_lambda_.4} parent=19 // pred_fallthru
        _
      // Predicated region
      $region65: #{_lambda_.4} parent=19 // pred_check
        %p613 = pneg %p351
      $region66: #{_lambda_.4} parent=19 // pred_check_branch
        %615 = sbr.rel (%p613) target = $region68
      $region67: #{_lambda_.4} parent=19 // pred_region
        %p616 = scmp.lt.s32.totalorder %s24, 2
        %s617 = scalar_select %p616, %s24, 2
        %s618 = smul.addr %s617, 8
        %s619 = smul.addr %s618, 4
        %s620 = scalar_lea.vmem %s12, %s619
      $region68: #{_lambda_.4} parent=19 // pred_fallthru
        _
      // Predicated region
      $region69: #{_lambda_.4} parent=19 // pred_check
        %p621 = pneg %p377
      $region70: #{_lambda_.4} parent=19 // pred_check_branch
        %623 = sbr.rel (%p621) target = $region72
      $region71: #{_lambda_.4} parent=19 // pred_region
        %p624 = scmp.lt.s32.totalorder %s24, 2
        %s625 = scalar_select %p624, %s24, 2
        %s626 = smul.addr %s625, 12
        %s627 = smul.addr %s626, 4
        %s628 = scalar_lea.vmem %s13, %s627
      $region72: #{_lambda_.4} parent=19 // pred_fallthru
        _
      // Predicated region
      $region73: #{_lambda_.4} parent=19 // pred_check
        %p629 = pneg %p403
      $region74: #{_lambda_.4} parent=19 // pred_check_branch
        %631 = sbr.rel (%p629) target = $region76
      $region75: #{_lambda_.4} parent=19 // pred_region
        %p632 = scmp.lt.s32.totalorder %s24, 2
        %s633 = scalar_select %p632, %s24, 2
        %s634 = scalar_lea.vmem %s14, %s633
      $region76: #{_lambda_.4} parent=19 // pred_fallthru
        _
      // Predicated region
      $region77: #{_lambda_.4} parent=19 // pred_check
        %p635 = pneg %p429
      $region78: #{_lambda_.4} parent=19 // pred_check_branch
        %637 = sbr.rel (%p635) target = $region80
      $region79: #{_lambda_.4} parent=19 // pred_region
        %p638 = scmp.lt.s32.totalorder %s24, 2
        %s639 = scalar_select %p638, %s24, 2
        %s640 = smul.addr %s639, 6
        %s641 = smul.addr %s640, 4
        %s642 = scalar_lea.vmem %s15, %s641
      $region80: #{_lambda_.4} parent=19 // pred_fallthru
        _
      // Predicated region
      $region81: #{_lambda_.4} parent=19 // pred_check
        %p643 = pneg %p455
      $region82: #{_lambda_.4} parent=19 // pred_check_branch
        %645 = sbr.rel (%p643) target = $region84
      $region83: #{_lambda_.4} parent=19 // pred_region
        %p646 = scmp.lt.s32.totalorder %s24, 2
        %s647 = scalar_select %p646, %s24, 2
        %s648 = scalar_lea.vmem %s16, %s647
      $region84: #{_lambda_.4} parent=19 // pred_fallthru
        _
      // Predicated region
      $region85: #{_lambda_.4} parent=19 // pred_check
        %p649 = pneg %p481
      $region86: #{_lambda_.4} parent=19 // pred_check_branch
        %651 = sbr.rel (%p649) target = $region88
      $region87: #{_lambda_.4} parent=19 // pred_region
        %p652 = scmp.lt.s32.totalorder %s24, 2
        %s653 = scalar_select %p652, %s24, 2
        %s654 = smul.addr %s653, 4
        %s655 = smul.addr %s654, 4
        %s656 = scalar_lea.vmem %s17, %s655
      $region88: #{_lambda_.4} parent=19 // pred_fallthru
        _
    $region20: #{_lambda_.4} parent=5 // pred_fallthru
      _
    %p657 = scmp.le.s32.totalorder 1, %s24
    %p658 = scmp.lt.s32.totalorder %s24, 4
    %p659 = pnand %p657, %p658
    %p660 = pneg %p659
    // Predicated region
    $region89: #{_lambda_.4} parent=5 // pred_check
      _
    $region90: #{_lambda_.4} parent=5 // pred_check_branch
      %662 = sbr.rel (%p659) target = $region92
    $region91: #{_lambda_.4} parent=5 // pred_region
      %s663 = ssub.s32 %s24, 1
      %p664 = pneg %p45
      %p665 = pneg %p42
      %s666 = smul.u32 5, %s29
      %p667 = scmp.lt.s32.totalorder %s666, 14
      %s668 = scalar_select %p667, %s666, 14
      %s669 = smul.addr %s668, 2
      %s670 = scalar_lea.vmem %s1, %s669
      %p671 = pneg %p71
      %p672 = pneg %p68
      %p673 = scmp.lt.s32.totalorder %s29, 2
      %s674 = scalar_select %p673, %s29, 2
      %s675 = smul.addr %s674, 3
      %s676 = scalar_lea.vmem %s2, %s675
      %p677 = pneg %p97
      %p678 = pneg %p94
      %p679 = scmp.lt.s32.totalorder %s29, 2
      %s680 = scalar_select %p679, %s29, 2
      %s681 = scalar_lea.vmem %s3, %s680
      %p682 = pneg %p123
      %p683 = pneg %p120
      %p684 = scmp.lt.s32.totalorder %s29, 2
      %s685 = scalar_select %p684, %s29, 2
      %s686 = smul.addr %s685, 24
      %s687 = smul.addr %s686, 4
      %s688 = scalar_lea.vmem %s4, %s687
      %p689 = pneg %p149
      %p690 = pneg %p146
      %p691 = scmp.lt.s32.totalorder %s29, 2
      %s692 = scalar_select %p691, %s29, 2
      %s693 = scalar_lea.vmem %s5, %s692
      %p694 = pneg %p175
      %p695 = pneg %p172
      %p696 = scmp.lt.s32.totalorder %s29, 2
      %s697 = scalar_select %p696, %s29, 2
      %s698 = smul.addr %s697, 24
      %s699 = smul.addr %s698, 4
      %s700 = scalar_lea.vmem %s6, %s699
      %p701 = pneg %p201
      %p702 = pneg %p198
      %p703 = scmp.lt.s32.totalorder %s29, 2
      %s704 = scalar_select %p703, %s29, 2
      %s705 = scalar_lea.vmem %s7, %s704
      %p706 = pneg %p227
      %p707 = pneg %p224
      %p708 = scmp.lt.s32.totalorder %s29, 2
      %s709 = scalar_select %p708, %s29, 2
      %s710 = smul.addr %s709, 24
      %s711 = smul.addr %s710, 4
      %s712 = scalar_lea.vmem %s8, %s711
      %p713 = pneg %p253
      %p714 = pneg %p250
      %p715 = scmp.lt.s32.totalorder %s29, 2
      %s716 = scalar_select %p715, %s29, 2
      %s717 = scalar_lea.vmem %s9, %s716
      %p718 = pneg %p279
      %p719 = pneg %p276
      %p720 = scmp.lt.s32.totalorder %s29, 2
      %s721 = scalar_select %p720, %s29, 2
      %s722 = smul.addr %s721, 12
      %s723 = smul.addr %s722, 4
      %s724 = scalar_lea.vmem %s10, %s723
      %p725 = pneg %p305
      %p726 = pneg %p302
      %p727 = scmp.lt.s32.totalorder %s29, 2
      %s728 = scalar_select %p727, %s29, 2
      %s729 = scalar_lea.vmem %s11, %s728
      %p730 = pneg %p331
      %p731 = pneg %p328
      %p732 = scmp.lt.s32.totalorder %s29, 2
      %s733 = scalar_select %p732, %s29, 2
      %s734 = smul.addr %s733, 8
      %s735 = smul.addr %s734, 4
      %s736 = scalar_lea.vmem %s12, %s735
      %p737 = pneg %p357
      %p738 = pneg %p354
      %p739 = scmp.lt.s32.totalorder %s29, 2
      %s740 = scalar_select %p739, %s29, 2
      %s741 = smul.addr %s740, 12
      %s742 = smul.addr %s741, 4
      %s743 = scalar_lea.vmem %s13, %s742
      %p744 = pneg %p383
      %p745 = pneg %p380
      %p746 = scmp.lt.s32.totalorder %s29, 2
      %s747 = scalar_select %p746, %s29, 2
      %s748 = scalar_lea.vmem %s14, %s747
      %p749 = pneg %p409
      %p750 = pneg %p406
      %p751 = scmp.lt.s32.totalorder %s29, 2
      %s752 = scalar_select %p751, %s29, 2
      %s753 = smul.addr %s752, 6
      %s754 = smul.addr %s753, 4
      %s755 = scalar_lea.vmem %s15, %s754
      %p756 = pneg %p435
      %p757 = pneg %p432
      %p758 = scmp.lt.s32.totalorder %s29, 2
      %s759 = scalar_select %p758, %s29, 2
      %s760 = scalar_lea.vmem %s16, %s759
      %p761 = pneg %p461
      %p762 = pneg %p458
      %p763 = scmp.lt.s32.totalorder %s29, 2
      %s764 = scalar_select %p763, %s29, 2
      %s765 = smul.addr %s764, 4
      %s766 = smul.addr %s765, 4
      %s767 = scalar_lea.vmem %s17, %s766
      %p768 = pneg %p487
      %p769 = pneg %p484
      %p770 = pneg %p513
      %p771 = pneg %p510
      %p772 = scmp.lt.s32.totalorder %s29, 2
      %s773 = scalar_select %p772, %s29, 2
      %s774 = smul.addr %s773, 8
      %s775 = smul.addr %s774, 8
      %s776 = scalar_lea.vmem %s18, %s775
      %s777 = smul.u32 5, %s29
      %p778 = scmp.lt.s32.totalorder %s777, 14
      %s779 = scalar_select %p778, %s777, 14
      %s780 = smul.addr %s779, 2
      %s781 = scalar_lea.vmem %s1, %s780
      %s782 = smul.u32 5, %s29
      %p783 = scmp.lt.s32.totalorder %s29, 2
      %s784 = scalar_select %p783, %s29, 2
      %s785 = smul.addr %s784, 3
      %s786 = scalar_lea.vmem %s2, %s785
      %p787 = scmp.lt.s32.totalorder %s29, 2
      %s788 = scalar_select %p787, %s29, 2
      %s789 = scalar_lea.vmem %s3, %s788
      %p790 = scmp.lt.s32.totalorder %s29, 2
      %s791 = scalar_select %p790, %s29, 2
      %s792 = smul.addr %s791, 24
      %s793 = smul.addr %s792, 4
      %s794 = scalar_lea.vmem %s4, %s793
      %p795 = scmp.lt.s32.totalorder %s29, 2
      %s796 = scalar_select %p795, %s29, 2
      %s797 = scalar_lea.vmem %s5, %s796
      %p798 = scmp.lt.s32.totalorder %s29, 2
      %s799 = scalar_select %p798, %s29, 2
      %s800 = smul.addr %s799, 24
      %s801 = smul.addr %s800, 4
      %s802 = scalar_lea.vmem %s6, %s801
      %p803 = scmp.lt.s32.totalorder %s29, 2
      %s804 = scalar_select %p803, %s29, 2
      %s805 = scalar_lea.vmem %s7, %s804
      %p806 = scmp.lt.s32.totalorder %s29, 2
      %s807 = scalar_select %p806, %s29, 2
      %s808 = smul.addr %s807, 24
      %s809 = smul.addr %s808, 4
      %s810 = scalar_lea.vmem %s8, %s809
      %p811 = scmp.lt.s32.totalorder %s29, 2
      %s812 = scalar_select %p811, %s29, 2
      %s813 = scalar_lea.vmem %s9, %s812
      %p814 = scmp.lt.s32.totalorder %s29, 2
      %s815 = scalar_select %p814, %s29, 2
      %s816 = smul.addr %s815, 12
      %s817 = smul.addr %s816, 4
      %s818 = scalar_lea.vmem %s10, %s817
      %p819 = scmp.lt.s32.totalorder %s29, 2
      %s820 = scalar_select %p819, %s29, 2
      %s821 = scalar_lea.vmem %s11, %s820
      %p822 = scmp.lt.s32.totalorder %s29, 2
      %s823 = scalar_select %p822, %s29, 2
      %s824 = smul.addr %s823, 8
      %s825 = smul.addr %s824, 4
      %s826 = scalar_lea.vmem %s12, %s825
      %p827 = scmp.lt.s32.totalorder %s29, 2
      %s828 = scalar_select %p827, %s29, 2
      %s829 = smul.addr %s828, 12
      %s830 = smul.addr %s829, 4
      %s831 = scalar_lea.vmem %s13, %s830
      %p832 = scmp.lt.s32.totalorder %s29, 2
      %s833 = scalar_select %p832, %s29, 2
      %s834 = scalar_lea.vmem %s14, %s833
      %p835 = scmp.lt.s32.totalorder %s29, 2
      %s836 = scalar_select %p835, %s29, 2
      %s837 = smul.addr %s836, 6
      %s838 = smul.addr %s837, 4
      %s839 = scalar_lea.vmem %s15, %s838
      %p840 = scmp.lt.s32.totalorder %s29, 2
      %s841 = scalar_select %p840, %s29, 2
      %s842 = scalar_lea.vmem %s16, %s841
      %p843 = scmp.lt.s32.totalorder %s29, 2
      %s844 = scalar_select %p843, %s29, 2
      %s845 = smul.addr %s844, 4
      %s846 = smul.addr %s845, 4
      %s847 = scalar_lea.vmem %s17, %s846
      %p848 = scmp.lt.s32.totalorder %s29, 2
      %s849 = scalar_select %p848, %s29, 2
      %s850 = smul.addr %s849, 8
      %s851 = smul.addr %s850, 8
      %s852 = scalar_lea.vmem %s18, %s851
      %v854 = vld [vmem:[%s781] sm:$0xff]
      %v855 = vld [vmem:[%s781 + $0x8] sm:$0x3]
      %v856 = vld [vmem:[%s0] sm:$0xff]
      %v857 = vld [vmem:[%s0 + $0x8] sm:$0xff]
      %v858 = vld [vmem:[%s0 + $0x10] sm:$0xff]
      %v859 = vld [vmem:[%s0 + $0x18] sm:$0xff]
      %v862 = vunpack.c.l.s4 1966171168
      %v863 = vunpack.c.0.s8 %v862
      %v864 = vlaneseq
      %v865 = vshrl.u32 %v864, 7
      %v866 = vsub.s32 %v863, %v865
      %v867 = vrot.slane %v854, %v866
      %v868 = vcombine.high %v867, %v867
      %vm871 = vcmask 523264
      %v872 = vsel %vm871, %v856, 0.0
      %v873 = vsel %vm871, %v857, 0.0
      %v874 = vadd.f32 %v872, %v873
      %v875 = vrot.slane %v874, 4
      %v876 = vadd.f32 %v874, %v875
      %v877 = vrot.slane %v876, 2
      %v878 = vadd.f32 %v876, %v877
      %v879 = vrot.slane %v878, 1
      %v880 = vadd.f32 %v878, %v879
      %v881 = vsel %vm871, %v858, 0.0
      %v882 = vsel %vm871, %v859, 0.0
      %v883 = vadd.f32 %v881, %v882
      %v884 = vrot.slane %v883, 4
      %v885 = vadd.f32 %v883, %v884
      %v886 = vrot.slane %v885, 2
      %v887 = vadd.f32 %v885, %v886
      %v888 = vrot.slane %v887, 1
      %v889 = vadd.f32 %v887, %v888
      %v890 = vrcp.pop 16.0
      %v891 = vmul.f32 %v880, %v890
      %v892 = vmul.f32 %v889, %v890
      %v893 = vsub.f32 %v856, %v891
      %v894 = vsub.f32 %v857, %v891
      %v895 = vsub.f32 %v858, %v892
      %v896 = vsub.f32 %v859, %v892
      %v897 = vmul.f32 %v893, %v893
      %v898 = vmul.f32 %v894, %v894
      %v899 = vmul.f32 %v895, %v895
      %v900 = vmul.f32 %v896, %v896
      %v901 = vsel %vm871, %v897, 0.0
      %v902 = vsel %vm871, %v898, 0.0
      %v903 = vadd.f32 %v901, %v902
      %v904 = vrot.slane %v903, 4
      %v905 = vadd.f32 %v903, %v904
      %v906 = vrot.slane %v905, 2
      %v907 = vadd.f32 %v905, %v906
      %v908 = vrot.slane %v907, 1
      %v909 = vadd.f32 %v907, %v908
      %v910 = vsel %vm871, %v899, 0.0
      %v911 = vsel %vm871, %v900, 0.0
      %v912 = vadd.f32 %v910, %v911
      %v913 = vrot.slane %v912, 4
      %v914 = vadd.f32 %v912, %v913
      %v915 = vrot.slane %v914, 2
      %v916 = vadd.f32 %v914, %v915
      %v917 = vrot.slane %v916, 1
      %v918 = vadd.f32 %v916, %v917
      %v919 = vmul.f32 %v909, %v890
      %v920 = vmul.f32 %v918, %v890
      %v921 = vadd.f32 %v867, 1.0
      %v922 = vadd.f32 %v868, 1.0
      %v923 = vadd.f32 %v919, 1e-05
      %v924 = vadd.f32 %v920, 1e-05
      %v925 = vrsqrt.pop %v923
      %v926 = vrsqrt.pop %v924
      %v927 = vmul.f32 %v893, %v925
      %v928 = vmul.f32 %v894, %v925
      %v929 = vmul.f32 %v895, %v926
      %v930 = vmul.f32 %v896, %v926
      %v933 = vlaneseq
      %v934 = vshrl.u32 %v933, 7
      %v935 = vsub.s32 0, %v934
      %v936 = vrot.slane %v921, %v935
      %v937 = vlaneseq
      %v938 = vshrl.u32 %v937, 7
      %v939 = vsub.s32 0, %v938
      %v940 = vrot.slane %v922, %v939
      %v943 = vmul.f32 %v936, %v927
      %v944 = vmul.f32 %v936, %v928
      %v945 = vmul.f32 %v940, %v929
      %v946 = vmul.f32 %v940, %v930
      %v947 = vlaneseq
      %v948 = vshrl.u32 %v947, 7
      %v949 = vsub.s32 0, %v948
      %v950 = vrot.slane %v867, %v949
      %v951 = vlaneseq
      %v952 = vshrl.u32 %v951, 7
      %v953 = vsub.s32 0, %v952
      %v954 = vrot.slane %v868, %v953
      %955 = vrot.lane.b32.xlu0 %v950, 64
      %v956 = vpop.permute.xlu0 %955
      %957 = vrot.lane.b32.xlu0 %v954, 64
      %v958 = vpop.permute.xlu0 %957
      %v961 = vadd.f32 %v943, %v956
      %v962 = vadd.f32 %v944, %v956
      %v963 = vadd.f32 %v945, %v958
      %v964 = vadd.f32 %v946, %v958
      %vm965 = vcmp.ge.f32.partialorder %v961, 0.0
      %vm966 = vcmp.ge.f32.partialorder %v962, 0.0
      %vm967 = vcmp.ge.f32.partialorder %v963, 0.0
      %vm968 = vcmp.ge.f32.partialorder %v964, 0.0
      %v969 = vmul.f32 %v961, 0.2
      %v970 = vmul.f32 %v962, 0.2
      %v971 = vmul.f32 %v963, 0.2
      %v972 = vmul.f32 %v964, 0.2
      %v973 = vsel %vm965, %v961, %v969
      %v974 = vsel %vm966, %v962, %v970
      %v975 = vsel %vm967, %v963, %v971
      %v976 = vsel %vm968, %v964, %v972
      %v977 = vld [vmem:[%s786] sm:$0x1]
      %v978 = vld [vmem:[%s786 + $0x1] sm:$0x1]
      %v979 = vld [vmem:[%s786 + $0x2] sm:$0x1]
      %v980 = vld [vmem:[%s789] sm:$0x1]
      %vm985 = vcmask 1046528
      %v986 = vrot.slane %v973, 1
      %v987 = vrot.slane %v974, 1
      %v988 = vsel %vm985, %v986, %v987
      %v989 = vrot.slane %v975, 1
      %v990 = vrot.slane %v976, 1
      %v991 = vsel %vm985, %v989, %v990
      %v996 = vsel %vm985, %v987, 0.0
      %v997 = vsel %vm985, %v990, 0.0
      %v999 = vlaneseq
      %v1000 = vshrl.u32 %v999, 7
      %v1001 = vsub.s32 0, %v1000
      %v1002 = vrot.slane %v978, %v1001
      %v1004 = vmul.f32 %v973, %v1002
      %v1005 = vmul.f32 %v974, %v1002
      %v1006 = vmul.f32 %v975, %v1002
      %v1007 = vmul.f32 %v976, %v1002
      %v1009 = vlaneseq
      %v1010 = vshrl.u32 %v1009, 7
      %v1011 = vsub.s32 0, %v1010
      %v1012 = vrot.slane %v980, %v1011
      %v1014 = vadd.f32 %v1004, %v1012
      %v1015 = vadd.f32 %v1005, %v1012
      %v1016 = vadd.f32 %v1006, %v1012
      %v1017 = vadd.f32 %v1007, %v1012
      %v1019 = vlaneseq
      %v1020 = vshrl.u32 %v1019, 7
      %v1021 = vsub.s32 0, %v1020
      %v1022 = vrot.slane %v979, %v1021
      %v1024 = vmul.f32 %v973, %v1022
      %v1025 = vmul.f32 %v974, %v1022
      %v1026 = vmul.f32 %v975, %v1022
      %v1027 = vmul.f32 %v976, %v1022
      %v1029 = vlaneseq
      %v1030 = vshrl.u32 %v1029, 7
      %v1031 = vsub.s32 0, %v1030
      %v1032 = vrot.slane %v977, %v1031
      %v1034 = vmul.f32 %v988, %v1032
      %v1035 = vmul.f32 %v996, %v1032
      %v1036 = vmul.f32 %v991, %v1032
      %v1037 = vmul.f32 %v997, %v1032
      %v1038 = vadd.f32 %v1024, %v1034
      %v1039 = vadd.f32 %v1025, %v1035
      %v1040 = vadd.f32 %v1026, %v1036
      %v1041 = vadd.f32 %v1027, %v1037
      %v1042 = vadd.f32 %v1038, %v1012
      %v1043 = vadd.f32 %v1039, %v1012
      %v1044 = vadd.f32 %v1040, %v1012
      %v1045 = vadd.f32 %v1041, %v1012
      %v1046 = vld [vmem:[%s797] sm:$0x1]
      %vm1051 = vcmask 1040384
      %v1052 = vrot.slane %v1042, 7
      %v1053 = vrot.slane %v1043, 7
      %v1054 = vsel %vm1051, %v1052, %v1053
      %v1055 = vrot.slane %v1044, 7
      %v1056 = vrot.slane %v1045, 7
      %v1057 = vsel %vm1051, %v1055, %v1056
      %v1062 = vsel %vm1051, 0.0, %v1052
      %v1063 = vsel %vm1051, 0.0, %v1055
      %v1068 = vrot.slane %v1014, 1
      %v1069 = vrot.slane %v1015, 1
      %v1070 = vsel %vm985, %v1068, %v1069
      %v1071 = vrot.slane %v1016, 1
      %v1072 = vrot.slane %v1017, 1
      %v1073 = vsel %vm985, %v1071, %v1072
      %v1078 = vsel %vm985, %v1069, 0.0
      %v1079 = vsel %vm985, %v1072, 0.0
      %v1080 = vpack.c.bf16 %v1054, %v1062
      %v1081 = vpack.c.bf16 %v1057, %v1063
      %v1082 = vpack.c.bf16 %v1015, %v1014
      %v1083 = vpack.c.bf16 %v1017, %v1016
      %v1084 = vld [vmem:[%s794] sm:$0xf]
      %v1085 = vld [vmem:[%s794 + $0x4] sm:$0xf]
      %v1086 = vld [vmem:[%s794 + $0x8] sm:$0xf]
      %v1087 = vld [vmem:[%s794 + $0xc] sm:$0xf]
      %v1088 = vld [vmem:[%s794 + $0x10] sm:$0xf]
      %v1089 = vld [vmem:[%s794 + $0x14] sm:$0xf]
      %v1090 = vld [vmem:[%s794 + $0x18] sm:$0xf]
      %v1091 = vld [vmem:[%s794 + $0x1c] sm:$0xf]
      %v1092 = vpack.c.bf16 %v1043, %v1042
      %v1093 = vpack.c.bf16 %v1045, %v1044
      %s1094 = scalar_lea.vmem %s794, 32
      %v1095 = vld [vmem:[%s1094] sm:$0xf]
      %v1096 = vld [vmem:[%s1094 + $0x4] sm:$0xf]
      %v1097 = vld [vmem:[%s1094 + $0x8] sm:$0xf]
      %v1098 = vld [vmem:[%s1094 + $0xc] sm:$0xf]
      %v1099 = vld [vmem:[%s1094 + $0x10] sm:$0xf]
      %v1100 = vld [vmem:[%s1094 + $0x14] sm:$0xf]
      %v1101 = vld [vmem:[%s1094 + $0x18] sm:$0xf]
      %v1102 = vld [vmem:[%s1094 + $0x1c] sm:$0xf]
      %v1111 = vunpack.c.l.b16 %v1095
      %v1112 = vunpack.c.l.b16 %v1096
      %v1113 = vunpack.c.l.b16 %v1097
      %v1114 = vunpack.c.l.b16 %v1098
      %v1115 = vunpack.c.l.b16 %v1099
      %v1116 = vunpack.c.l.b16 %v1100
      %v1117 = vunpack.c.l.b16 %v1101
      %v1118 = vunpack.c.l.b16 %v1102
      %v1119 = vpack.c.b16 %v1112, %v1111
      %v1120 = vpack.c.b16 %v1114, %v1113
      %v1121 = vpack.c.b16 %v1116, %v1115
      %v1122 = vpack.c.b16 %v1118, %v1117
      %v1128 = vsel %vm871, %v1082, 0
      %v1131 = vsel %vm871, %v1083, 0
      %v1134 = vsel %vm871, %v1092, 0
      %v1137 = vsel %vm871, %v1093, 0
      %1139 = vmatprep.subr.bf16.mxu0 0
      %1140 = vmatpush1.bf16.msra.mxu0 %v1119
      %1141 = vmatprep.subr.bf16.mxu0 0
      %1142 = vmatpush1.bf16.msra.mxu0 %v1120
      %1143 = vmatprep.subr.bf16.mxu0 0
      %1144 = vmatpush1.bf16.msra.mxu0 %v1121
      %1145 = vmatprep.subr.bf16.mxu0 0
      %1146 = vmatpush1.bf16.msra.mxu0 %v1122
      %1147 = vmatprep.subr.bf16.mxu0 0
      %1148 = vmatpush1.bf16.msra.mxu0 0
      %1149 = vmatprep.subr.bf16.mxu0 0
      %1150 = vmatpush1.bf16.msra.mxu0 0
      %1151 = vmatprep.subr.bf16.mxu0 0
      %1152 = vmatpush1.bf16.msra.mxu0 0
      %1153 = vmatprep.subr.bf16.mxu0 0
      %1154 = vmatpush1.bf16.msra.mxu0 0
      %1155 = vmatprep.subr.bf16.mxu0 0
      %1156 = vmatpush1.bf16.msra.mxu0 0
      %1157 = vmatprep.subr.bf16.mxu0 0
      %1158 = vmatpush1.bf16.msra.mxu0 0
      %1159 = vmatprep.subr.bf16.mxu0 0
      %1160 = vmatpush1.bf16.msra.mxu0 0
      %1161 = vmatprep.subr.bf16.mxu0 0
      %1162 = vmatpush1.bf16.msra.mxu0 0
      %1163 = vmatprep.subr.bf16.mxu0 0
      %1164 = vmatpush1.bf16.msra.mxu0 0
      %1165 = vmatprep.subr.bf16.mxu0 0
      %1166 = vmatpush1.bf16.msra.mxu0 0
      %1167 = vmatprep.subr.bf16.mxu0 0
      %1168 = vmatpush1.bf16.msra.mxu0 0
      %1169 = vmatprep.subr.bf16.mxu0 0
      %1170 = vmatpush1.bf16.msra.mxu0 0
      %1171 = vmatprep.mubr.bf16.mxu0 0
      %1172 = vmatmul.mubr.bf16.gmra.mrb[0].mxu0 %v1128
      %v1173 = vpop.f32.mrb[0].mxu0
      %v1174 = vadd.f32 0.0, %v1173
      %v1175 = vpop.f32.mrb[0].mxu0
      %v1176 = vpop.f32.mrb[0].mxu0
      %v1177 = vadd.f32 0.0, %v1176
      %v1178 = vpop.f32.mrb[0].mxu0
      %1179 = vmatprep.mubr.bf16.mxu0 0
      %1180 = vmatmul.mubr.bf16.gmra.mrb[0].mxu0 %v1131
      %v1181 = vpop.f32.mrb[0].mxu0
      %v1182 = vadd.f32 0.0, %v1181
      %v1183 = vpop.f32.mrb[0].mxu0
      %v1184 = vpop.f32.mrb[0].mxu0
      %v1185 = vadd.f32 0.0, %v1184
      %v1186 = vpop.f32.mrb[0].mxu0
      %1187 = vmatprep.mubr.bf16.mxu0 0
      %1188 = vmatmul.mubr.bf16.gmra.mrb[0].mxu0 %v1134
      %v1189 = vpop.f32.mrb[0].mxu0
      %v1190 = vadd.f32 0.0, %v1189
      %v1191 = vpop.f32.mrb[0].mxu0
      %v1192 = vpop.f32.mrb[0].mxu0
      %v1193 = vadd.f32 0.0, %v1192
      %v1194 = vpop.f32.mrb[0].mxu0
      %1195 = vmatprep.mubr.bf16.mxu0 0
      %1196 = vmatmul.mubr.bf16.gmra.mrb[0].mxu0 %v1137
      %v1197 = vpop.f32.mrb[0].mxu0
      %v1198 = vadd.f32 0.0, %v1197
      %v1199 = vpop.f32.mrb[0].mxu0
      %v1200 = vpop.f32.mrb[0].mxu0
      %v1201 = vadd.f32 0.0, %v1200
      %v1202 = vpop.f32.mrb[0].mxu0
      %1203 = vdwg.mxu0
      %v1212 = vunpack.c.l.b16 %v1084
      %v1213 = vunpack.c.l.b16 %v1085
      %v1214 = vunpack.c.l.b16 %v1086
      %v1215 = vunpack.c.l.b16 %v1087
      %v1216 = vunpack.c.l.b16 %v1088
      %v1217 = vunpack.c.l.b16 %v1089
      %v1218 = vunpack.c.l.b16 %v1090
      %v1219 = vunpack.c.l.b16 %v1091
      %v1220 = vpack.c.b16 %v1213, %v1212
      %v1221 = vpack.c.b16 %v1215, %v1214
      %v1222 = vpack.c.b16 %v1217, %v1216
      %v1223 = vpack.c.b16 %v1219, %v1218
      %v1229 = vsel %vm871, %v1080, 0
      %v1232 = vsel %vm871, %v1081, 0
      %1234 = vmatprep.subr.bf16.mxu0 0
      %1235 = vmatpush1.bf16.msra.mxu0 %v1220
      %1236 = vmatprep.subr.bf16.mxu0 0
      %1237 = vmatpush1.bf16.msra.mxu0 %v1221
      %1238 = vmatprep.subr.bf16.mxu0 0
      %1239 = vmatpush1.bf16.msra.mxu0 %v1222
      %1240 = vmatprep.subr.bf16.mxu0 0
      %1241 = vmatpush1.bf16.msra.mxu0 %v1223
      %1242 = vmatprep.subr.bf16.mxu0 0
      %1243 = vmatpush1.bf16.msra.mxu0 0
      %1244 = vmatprep.subr.bf16.mxu0 0
      %1245 = vmatpush1.bf16.msra.mxu0 0
      %1246 = vmatprep.subr.bf16.mxu0 0
      %1247 = vmatpush1.bf16.msra.mxu0 0
      %1248 = vmatprep.subr.bf16.mxu0 0
      %1249 = vmatpush1.bf16.msra.mxu0 0
      %1250 = vmatprep.subr.bf16.mxu0 0
      %1251 = vmatpush1.bf16.msra.mxu0 0
      %1252 = vmatprep.subr.bf16.mxu0 0
      %1253 = vmatpush1.bf16.msra.mxu0 0
      %1254 = vmatprep.subr.bf16.mxu0 0
      %1255 = vmatpush1.bf16.msra.mxu0 0
      %1256 = vmatprep.subr.bf16.mxu0 0
      %1257 = vmatpush1.bf16.msra.mxu0 0
      %1258 = vmatprep.subr.bf16.mxu0 0
      %1259 = vmatpush1.bf16.msra.mxu0 0
      %1260 = vmatprep.subr.bf16.mxu0 0
      %1261 = vmatpush1.bf16.msra.mxu0 0
      %1262 = vmatprep.subr.bf16.mxu0 0
      %1263 = vmatpush1.bf16.msra.mxu0 0
      %1264 = vmatprep.subr.bf16.mxu0 0
      %1265 = vmatpush1.bf16.msra.mxu0 0
      %1266 = vmatprep.mubr.bf16.mxu0 0
      %1267 = vmatmul.mubr.bf16.gmra.mrb[0].mxu0 %v1229
      %v1268 = vpop.f32.mrb[0].mxu0
      %v1269 = vadd.f32 %v1174, %v1268
      %v1270 = vpop.f32.mrb[0].mxu0
      %v1271 = vpop.f32.mrb[0].mxu0
      %v1272 = vadd.f32 %v1177, %v1271
      %v1273 = vpop.f32.mrb[0].mxu0
      %1274 = vmatprep.mubr.bf16.mxu0 0
      %1275 = vmatmul.mubr.bf16.gmra.mrb[0].mxu0 %v1232
      %v1276 = vpop.f32.mrb[0].mxu0
      %v1277 = vadd.f32 %v1182, %v1276
      %v1278 = vpop.f32.mrb[0].mxu0
      %v1279 = vpop.f32.mrb[0].mxu0
      %v1280 = vadd.f32 %v1185, %v1279
      %v1281 = vpop.f32.mrb[0].mxu0
      %1282 = vmatprep.mubr.bf16.mxu0 0
      %1283 = vmatmul.mubr.bf16.gmra.mrb[0].mxu0 %v1128
      %v1284 = vpop.f32.mrb[0].mxu0
      %v1285 = vadd.f32 %v1190, %v1284
      %v1286 = vpop.f32.mrb[0].mxu0
      %v1287 = vpop.f32.mrb[0].mxu0
      %v1288 = vadd.f32 %v1193, %v1287
      %v1289 = vpop.f32.mrb[0].mxu0
      %1290 = vmatprep.mubr.bf16.mxu0 0
      %1291 = vmatmul.mubr.bf16.gmra.mrb[0].mxu0 %v1131
      %v1292 = vpop.f32.mrb[0].mxu0
      %v1293 = vadd.f32 %v1198, %v1292
      %v1294 = vpop.f32.mrb[0].mxu0
      %v1295 = vpop.f32.mrb[0].mxu0
      %v1296 = vadd.f32 %v1201, %v1295
      %v1297 = vpop.f32.mrb[0].mxu0
      %1298 = vdwg.mxu0
      %v1299 = vpack.c.bf16 %v1078, %v1070
      %v1300 = vpack.c.bf16 %v1079, %v1073
      %s1301 = scalar_lea.vmem %s794, 64
      %v1302 = vld [vmem:[%s1301] sm:$0xf]
      %v1303 = vld [vmem:[%s1301 + $0x4] sm:$0xf]
      %v1304 = vld [vmem:[%s1301 + $0x8] sm:$0xf]
      %v1305 = vld [vmem:[%s1301 + $0xc] sm:$0xf]
      %v1306 = vld [vmem:[%s1301 + $0x10] sm:$0xf]
      %v1307 = vld [vmem:[%s1301 + $0x14] sm:$0xf]
      %v1308 = vld [vmem:[%s1301 + $0x18] sm:$0xf]
      %v1309 = vld [vmem:[%s1301 + $0x1c] sm:$0xf]
      %v1318 = vunpack.c.l.b16 %v1302
      %v1319 = vunpack.c.l.b16 %v1303
      %v1320 = vunpack.c.l.b16 %v1304
      %v1321 = vunpack.c.l.b16 %v1305
      %v1322 = vunpack.c.l.b16 %v1306
      %v1323 = vunpack.c.l.b16 %v1307
      %v1324 = vunpack.c.l.b16 %v1308
      %v1325 = vunpack.c.l.b16 %v1309
      %v1326 = vpack.c.b16 %v1319, %v1318
      %v1327 = vpack.c.b16 %v1321, %v1320
      %v1328 = vpack.c.b16 %v1323, %v1322
      %v1329 = vpack.c.b16 %v1325, %v1324
      %v1335 = vsel %vm871, %v1299, 0
      %v1338 = vsel %vm871, %v1300, 0
      %1340 = vmatprep.subr.bf16.mxu0 0
      %1341 = vmatpush1.bf16.msra.mxu0 %v1326
      %1342 = vmatprep.subr.bf16.mxu0 0
      %1343 = vmatpush1.bf16.msra.mxu0 %v1327
      %1344 = vmatprep.subr.bf16.mxu0 0
      %1345 = vmatpush1.bf16.msra.mxu0 %v1328
      %1346 = vmatprep.subr.bf16.mxu0 0
      %1347 = vmatpush1.bf16.msra.mxu0 %v1329
      %1348 = vmatprep.subr.bf16.mxu0 0
      %1349 = vmatpush1.bf16.msra.mxu0 0
      %1350 = vmatprep.subr.bf16.mxu0 0
      %1351 = vmatpush1.bf16.msra.mxu0 0
      %1352 = vmatprep.subr.bf16.mxu0 0
      %1353 = vmatpush1.bf16.msra.mxu0 0
      %1354 = vmatprep.subr.bf16.mxu0 0
      %1355 = vmatpush1.bf16.msra.mxu0 0
      %1356 = vmatprep.subr.bf16.mxu0 0
      %1357 = vmatpush1.bf16.msra.mxu0 0
      %1358 = vmatprep.subr.bf16.mxu0 0
      %1359 = vmatpush1.bf16.msra.mxu0 0
      %1360 = vmatprep.subr.bf16.mxu0 0
      %1361 = vmatpush1.bf16.msra.mxu0 0
      %1362 = vmatprep.subr.bf16.mxu0 0
      %1363 = vmatpush1.bf16.msra.mxu0 0
      %1364 = vmatprep.subr.bf16.mxu0 0
      %1365 = vmatpush1.bf16.msra.mxu0 0
      %1366 = vmatprep.subr.bf16.mxu0 0
      %1367 = vmatpush1.bf16.msra.mxu0 0
      %1368 = vmatprep.subr.bf16.mxu0 0
      %1369 = vmatpush1.bf16.msra.mxu0 0
      %1370 = vmatprep.subr.bf16.mxu0 0
      %1371 = vmatpush1.bf16.msra.mxu0 0
      %1372 = vmatprep.mubr.bf16.mxu0 0
      %1373 = vmatmul.mubr.bf16.gmra.mrb[0].mxu0 %v1134
      %v1374 = vpop.f32.mrb[0].mxu0
      %v1375 = vadd.f32 0.0, %v1374
      %v1376 = vpop.f32.mrb[0].mxu0
      %v1377 = vpop.f32.mrb[0].mxu0
      %v1378 = vadd.f32 0.0, %v1377
      %v1379 = vpop.f32.mrb[0].mxu0
      %1380 = vmatprep.mubr.bf16.mxu0 0
      %1381 = vmatmul.mubr.bf16.gmra.mrb[0].mxu0 %v1137
      %v1382 = vpop.f32.mrb[0].mxu0
      %v1383 = vadd.f32 0.0, %v1382
      %v1384 = vpop.f32.mrb[0].mxu0
      %v1385 = vpop.f32.mrb[0].mxu0
      %v1386 = vadd.f32 0.0, %v1385
      %v1387 = vpop.f32.mrb[0].mxu0
      %1388 = vmatprep.mubr.bf16.mxu0 0
      %1389 = vmatmul.mubr.bf16.gmra.mrb[0].mxu0 %v1335
      %v1390 = vpop.f32.mrb[0].mxu0
      %v1391 = vadd.f32 0.0, %v1390
      %v1392 = vpop.f32.mrb[0].mxu0
      %v1393 = vpop.f32.mrb[0].mxu0
      %v1394 = vadd.f32 0.0, %v1393
      %v1395 = vpop.f32.mrb[0].mxu0
      %1396 = vmatprep.mubr.bf16.mxu0 0
      %1397 = vmatmul.mubr.bf16.gmra.mrb[0].mxu0 %v1338
      %v1398 = vpop.f32.mrb[0].mxu0
      %v1399 = vadd.f32 0.0, %v1398
      %v1400 = vpop.f32.mrb[0].mxu0
      %v1401 = vpop.f32.mrb[0].mxu0
      %v1402 = vadd.f32 0.0, %v1401
      %v1403 = vpop.f32.mrb[0].mxu0
      %1404 = vdwg.mxu0
      %v1405 = vadd.f32 %v1269, %v1375
      %v1406 = vadd.f32 %v1272, %v1378
      %v1407 = vadd.f32 %v1277, %v1383
      %v1408 = vadd.f32 %v1280, %v1386
      %v1409 = vadd.f32 %v1285, %v1391
      %v1410 = vadd.f32 %v1288, %v1394
      %v1411 = vadd.f32 %v1293, %v1399
      %v1412 = vadd.f32 %v1296, %v1402
      %v1414 = vlaneseq
      %v1415 = vshrl.u32 %v1414, 7
      %v1416 = vsub.s32 0, %v1415
      %v1417 = vrot.slane %v1046, %v1416
      %v1419 = vadd.f32 %v1405, %v1417
      %v1420 = vadd.f32 %v1406, %v1417
      %v1421 = vadd.f32 %v1407, %v1417
      %v1422 = vadd.f32 %v1408, %v1417
      %v1423 = vadd.f32 %v1409, %v1417
      %v1424 = vadd.f32 %v1410, %v1417
      %v1425 = vadd.f32 %v1411, %v1417
      %v1426 = vadd.f32 %v1412, %v1417
      %v1427 = vrot.slane %v867, 1
      %v1428 = vrot.slane %v868, 1
      %1431 = vrot.lane.b32.xlu0 %v867, 64
      %v1432 = vpop.permute.xlu0 %1431
      %1433 = vrot.lane.b32.xlu0 %v868, 64
      %v1434 = vpop.permute.xlu0 %1433
      %v1435 = vrot.slane %v1432, 1
      %v1436 = vrot.slane %v1434, 1
      %v1437 = vsel %vm871, %v1419, 0.0
      %v1438 = vsel %vm871, %v1420, 0.0
      %v1439 = vadd.f32 %v1437, %v1438
      %v1440 = vrot.slane %v1439, 4
      %v1441 = vadd.f32 %v1439, %v1440
      %v1442 = vrot.slane %v1441, 2
      %v1443 = vadd.f32 %v1441, %v1442
      %v1444 = vrot.slane %v1443, 1
      %v1445 = vadd.f32 %v1443, %v1444
      %v1446 = vsel %vm871, %v1421, 0.0
      %v1447 = vsel %vm871, %v1422, 0.0
      %v1448 = vadd.f32 %v1446, %v1447
      %v1449 = vrot.slane %v1448, 4
      %v1450 = vadd.f32 %v1448, %v1449
      %v1451 = vrot.slane %v1450, 2
      %v1452 = vadd.f32 %v1450, %v1451
      %v1453 = vrot.slane %v1452, 1
      %v1454 = vadd.f32 %v1452, %v1453
      %v1455 = vsel %vm871, %v1423, 0.0
      %v1456 = vsel %vm871, %v1424, 0.0
      %v1457 = vadd.f32 %v1455, %v1456
      %v1458 = vrot.slane %v1457, 4
      %v1459 = vadd.f32 %v1457, %v1458
      %v1460 = vrot.slane %v1459, 2
      %v1461 = vadd.f32 %v1459, %v1460
      %v1462 = vrot.slane %v1461, 1
      %v1463 = vadd.f32 %v1461, %v1462
      %v1464 = vsel %vm871, %v1425, 0.0
      %v1465 = vsel %vm871, %v1426, 0.0
      %v1466 = vadd.f32 %v1464, %v1465
      %v1467 = vrot.slane %v1466, 4
      %v1468 = vadd.f32 %v1466, %v1467
      %v1469 = vrot.slane %v1468, 2
      %v1470 = vadd.f32 %v1468, %v1469
      %v1471 = vrot.slane %v1470, 1
      %v1472 = vadd.f32 %v1470, %v1471
      %v1473 = vmul.f32 %v1445, %v890
      %v1474 = vmul.f32 %v1454, %v890
      %v1475 = vmul.f32 %v1463, %v890
      %v1476 = vmul.f32 %v1472, %v890
      %v1477 = vsel %vm871, %v1473, 0.0
      %v1478 = vsel %vm871, %v1475, 0.0
      %v1479 = vadd.f32 %v1477, %v1478
      %v1480 = vsel %vm871, %v1474, 0.0
      %v1481 = vsel %vm871, %v1476, 0.0
      %v1482 = vadd.f32 %v1480, %v1481
      %v1483 = vrcp.pop 2.0
      %v1484 = vmul.f32 %v1479, %v1483
      %v1485 = vmul.f32 %v1482, %v1483
      %v1486 = vsub.f32 %v1419, %v1484
      %v1487 = vsub.f32 %v1420, %v1484
      %v1488 = vsub.f32 %v1421, %v1485
      %v1489 = vsub.f32 %v1422, %v1485
      %v1490 = vsub.f32 %v1423, %v1484
      %v1491 = vsub.f32 %v1424, %v1484
      %v1492 = vsub.f32 %v1425, %v1485
      %v1493 = vsub.f32 %v1426, %v1485
      %v1494 = vmul.f32 %v1486, %v1486
      %v1495 = vmul.f32 %v1487, %v1487
      %v1496 = vmul.f32 %v1488, %v1488
      %v1497 = vmul.f32 %v1489, %v1489
      %v1498 = vmul.f32 %v1490, %v1490
      %v1499 = vmul.f32 %v1491, %v1491
      %v1500 = vmul.f32 %v1492, %v1492
      %v1501 = vmul.f32 %v1493, %v1493
      %v1502 = vsel %vm871, %v1494, 0.0
      %v1503 = vsel %vm871, %v1495, 0.0
      %v1504 = vadd.f32 %v1502, %v1503
      %v1505 = vrot.slane %v1504, 4
      %v1506 = vadd.f32 %v1504, %v1505
      %v1507 = vrot.slane %v1506, 2
      %v1508 = vadd.f32 %v1506, %v1507
      %v1509 = vrot.slane %v1508, 1
      %v1510 = vadd.f32 %v1508, %v1509
      %v1511 = vsel %vm871, %v1496, 0.0
      %v1512 = vsel %vm871, %v1497, 0.0
      %v1513 = vadd.f32 %v1511, %v1512
      %v1514 = vrot.slane %v1513, 4
      %v1515 = vadd.f32 %v1513, %v1514
      %v1516 = vrot.slane %v1515, 2
      %v1517 = vadd.f32 %v1515, %v1516
      %v1518 = vrot.slane %v1517, 1
      %v1519 = vadd.f32 %v1517, %v1518
      %v1520 = vsel %vm871, %v1498, 0.0
      %v1521 = vsel %vm871, %v1499, 0.0
      %v1522 = vadd.f32 %v1520, %v1521
      %v1523 = vrot.slane %v1522, 4
      %v1524 = vadd.f32 %v1522, %v1523
      %v1525 = vrot.slane %v1524, 2
      %v1526 = vadd.f32 %v1524, %v1525
      %v1527 = vrot.slane %v1526, 1
      %v1528 = vadd.f32 %v1526, %v1527
      %v1529 = vsel %vm871, %v1500, 0.0
      %v1530 = vsel %vm871, %v1501, 0.0
      %v1531 = vadd.f32 %v1529, %v1530
      %v1532 = vrot.slane %v1531, 4
      %v1533 = vadd.f32 %v1531, %v1532
      %v1534 = vrot.slane %v1533, 2
      %v1535 = vadd.f32 %v1533, %v1534
      %v1536 = vrot.slane %v1535, 1
      %v1537 = vadd.f32 %v1535, %v1536
      %v1538 = vmul.f32 %v1510, %v890
      %v1539 = vmul.f32 %v1519, %v890
      %v1540 = vmul.f32 %v1528, %v890
      %v1541 = vmul.f32 %v1537, %v890
      %v1542 = vsel %vm871, %v1538, 0.0
      %v1543 = vsel %vm871, %v1540, 0.0
      %v1544 = vadd.f32 %v1542, %v1543
      %v1545 = vsel %vm871, %v1539, 0.0
      %v1546 = vsel %vm871, %v1541, 0.0
      %v1547 = vadd.f32 %v1545, %v1546
      %v1548 = vmul.f32 %v1544, %v1483
      %v1549 = vmul.f32 %v1547, %v1483
      %v1550 = vadd.f32 %v1427, 1.0
      %v1551 = vadd.f32 %v1428, 1.0
      %v1552 = vadd.f32 %v1548, 1e-05
      %v1553 = vadd.f32 %v1549, 1e-05
      %v1554 = vrsqrt.pop %v1552
      %v1555 = vrsqrt.pop %v1553
      %v1556 = vmul.f32 %v1486, %v1554
      %v1557 = vmul.f32 %v1487, %v1554
      %v1558 = vmul.f32 %v1488, %v1555
      %v1559 = vmul.f32 %v1489, %v1555
      %v1560 = vmul.f32 %v1490, %v1554
      %v1561 = vmul.f32 %v1491, %v1554
      %v1562 = vmul.f32 %v1492, %v1555
      %v1563 = vmul.f32 %v1493, %v1555
      %v1566 = vlaneseq
      %v1567 = vshrl.u32 %v1566, 7
      %v1568 = vsub.s32 0, %v1567
      %v1569 = vrot.slane %v1550, %v1568
      %v1570 = vlaneseq
      %v1571 = vshrl.u32 %v1570, 7
      %v1572 = vsub.s32 0, %v1571
      %v1573 = vrot.slane %v1551, %v1572
      %v1576 = vmul.f32 %v1569, %v1556
      %v1577 = vmul.f32 %v1569, %v1557
      %v1578 = vmul.f32 %v1573, %v1558
      %v1579 = vmul.f32 %v1573, %v1559
      %v1580 = vmul.f32 %v1569, %v1560
      %v1581 = vmul.f32 %v1569, %v1561
      %v1582 = vmul.f32 %v1573, %v1562
      %v1583 = vmul.f32 %v1573, %v1563
      %v1584 = vlaneseq
      %v1585 = vshrl.u32 %v1584, 7
      %v1586 = vsub.s32 0, %v1585
      %v1587 = vrot.slane %v1435, %v1586
      %v1588 = vlaneseq
      %v1589 = vshrl.u32 %v1588, 7
      %v1590 = vsub.s32 0, %v1589
      %v1591 = vrot.slane %v1436, %v1590
      %v1594 = vadd.f32 %v1576, %v1587
      %v1595 = vadd.f32 %v1577, %v1587
      %v1596 = vadd.f32 %v1578, %v1591
      %v1597 = vadd.f32 %v1579, %v1591
      %v1598 = vadd.f32 %v1580, %v1587
      %v1599 = vadd.f32 %v1581, %v1587
      %v1600 = vadd.f32 %v1582, %v1591
      %v1601 = vadd.f32 %v1583, %v1591
      %vm1602 = vcmp.ge.f32.partialorder %v1594, 0.0
      %vm1603 = vcmp.ge.f32.partialorder %v1595, 0.0
      %vm1604 = vcmp.ge.f32.partialorder %v1596, 0.0
      %vm1605 = vcmp.ge.f32.partialorder %v1597, 0.0
      %vm1606 = vcmp.ge.f32.partialorder %v1598, 0.0
      %vm1607 = vcmp.ge.f32.partialorder %v1599, 0.0
      %vm1608 = vcmp.ge.f32.partialorder %v1600, 0.0
      %vm1609 = vcmp.ge.f32.partialorder %v1601, 0.0
      %v1610 = vmul.f32 %v1594, 0.2
      %v1611 = vmul.f32 %v1595, 0.2
      %v1612 = vmul.f32 %v1596, 0.2
      %v1613 = vmul.f32 %v1597, 0.2
      %v1614 = vmul.f32 %v1598, 0.2
      %v1615 = vmul.f32 %v1599, 0.2
      %v1616 = vmul.f32 %v1600, 0.2
      %v1617 = vmul.f32 %v1601, 0.2
      %v1618 = vsel %vm1602, %v1594, %v1610
      %v1619 = vsel %vm1603, %v1595, %v1611
      %v1620 = vsel %vm1604, %v1596, %v1612
      %v1621 = vsel %vm1605, %v1597, %v1613
      %v1622 = vsel %vm1606, %v1598, %v1614
      %v1623 = vsel %vm1607, %v1599, %v1615
      %v1624 = vsel %vm1608, %v1600, %v1616
      %v1625 = vsel %vm1609, %v1601, %v1617
      %v1626 = vld [vmem:[%s805] sm:$0x1]
      %v1631 = vrot.slane %v1622, 7
      %v1632 = vrot.slane %v1623, 7
      %v1633 = vsel %vm1051, %v1631, %v1632
      %v1634 = vrot.slane %v1624, 7
      %v1635 = vrot.slane %v1625, 7
      %v1636 = vsel %vm1051, %v1634, %v1635
      %v1641 = vsel %vm1051, 0.0, %v1631
      %v1642 = vsel %vm1051, 0.0, %v1634
      %v1647 = vrot.slane %v1618, 1
      %v1648 = vrot.slane %v1619, 1
      %v1649 = vsel %vm985, %v1647, %v1648
      %v1650 = vrot.slane %v1620, 1
      %v1651 = vrot.slane %v1621, 1
      %v1652 = vsel %vm985, %v1650, %v1651
      %v1657 = vsel %vm985, %v1648, 0.0
      %v1658 = vsel %vm985, %v1651, 0.0
      %v1659 = vpack.c.bf16 %v1633, %v1641
      %v1660 = vpack.c.bf16 %v1636, %v1642
      %v1661 = vpack.c.bf16 %v1619, %v1618
      %v1662 = vpack.c.bf16 %v1621, %v1620
      %v1663 = vld [vmem:[%s802] sm:$0xf]
      %v1664 = vld [vmem:[%s802 + $0x4] sm:$0xf]
      %v1665 = vld [vmem:[%s802 + $0x8] sm:$0xf]
      %v1666 = vld [vmem:[%s802 + $0xc] sm:$0xf]
      %v1667 = vld [vmem:[%s802 + $0x10] sm:$0xf]
      %v1668 = vld [vmem:[%s802 + $0x14] sm:$0xf]
      %v1669 = vld [vmem:[%s802 + $0x18] sm:$0xf]
      %v1670 = vld [vmem:[%s802 + $0x1c] sm:$0xf]
      %v1671 = vpack.c.bf16 %v1623, %v1622
      %v1672 = vpack.c.bf16 %v1625, %v1624
      %s1673 = scalar_lea.vmem %s802, 32
      %v1674 = vld [vmem:[%s1673] sm:$0xf]
      %v1675 = vld [vmem:[%s1673 + $0x4] sm:$0xf]
      %v1676 = vld [vmem:[%s1673 + $0x8] sm:$0xf]
      %v1677 = vld [vmem:[%s1673 + $0xc] sm:$0xf]
      %v1678 = vld [vmem:[%s1673 + $0x10] sm:$0xf]
      %v1679 = vld [vmem:[%s1673 + $0x14] sm:$0xf]
      %v1680 = vld [vmem:[%s1673 + $0x18] sm:$0xf]
      %v1681 = vld [vmem:[%s1673 + $0x1c] sm:$0xf]
      %v1690 = vunpack.c.l.b16 %v1674
      %v1691 = vunpack.c.l.b16 %v1675
      %v1692 = vunpack.c.l.b16 %v1676
      %v1693 = vunpack.c.l.b16 %v1677
      %v1694 = vunpack.c.l.b16 %v1678
      %v1695 = vunpack.c.l.b16 %v1679
      %v1696 = vunpack.c.l.b16 %v1680
      %v1697 = vunpack.c.l.b16 %v1681
      %v1698 = vpack.c.b16 %v1691, %v1690
      %v1699 = vpack.c.b16 %v1693, %v1692
      %v1700 = vpack.c.b16 %v1695, %v1694
      %v1701 = vpack.c.b16 %v1697, %v1696
      %v1707 = vsel %vm871, %v1661, 0
      %v1710 = vsel %vm871, %v1662, 0
      %v1713 = vsel %vm871, %v1671, 0
      %v1716 = vsel %vm871, %v1672, 0
      %1718 = vmatprep.subr.bf16.mxu0 0
      %1719 = vmatpush1.bf16.msra.mxu0 %v1698
      %1720 = vmatprep.subr.bf16.mxu0 0
      %1721 = vmatpush1.bf16.msra.mxu0 %v1699
      %1722 = vmatprep.subr.bf16.mxu0 0
      %1723 = vmatpush1.bf16.msra.mxu0 %v1700
      %1724 = vmatprep.subr.bf16.mxu0 0
      %1725 = vmatpush1.bf16.msra.mxu0 %v1701
      %1726 = vmatprep.subr.bf16.mxu0 0
      %1727 = vmatpush1.bf16.msra.mxu0 0
      %1728 = vmatprep.subr.bf16.mxu0 0
      %1729 = vmatpush1.bf16.msra.mxu0 0
      %1730 = vmatprep.subr.bf16.mxu0 0
      %1731 = vmatpush1.bf16.msra.mxu0 0
      %1732 = vmatprep.subr.bf16.mxu0 0
      %1733 = vmatpush1.bf16.msra.mxu0 0
      %1734 = vmatprep.subr.bf16.mxu0 0
      %1735 = vmatpush1.bf16.msra.mxu0 0
      %1736 = vmatprep.subr.bf16.mxu0 0
      %1737 = vmatpush1.bf16.msra.mxu0 0
      %1738 = vmatprep.subr.bf16.mxu0 0
      %1739 = vmatpush1.bf16.msra.mxu0 0
      %1740 = vmatprep.subr.bf16.mxu0 0
      %1741 = vmatpush1.bf16.msra.mxu0 0
      %1742 = vmatprep.subr.bf16.mxu0 0
      %1743 = vmatpush1.bf16.msra.mxu0 0
      %1744 = vmatprep.subr.bf16.mxu0 0
      %1745 = vmatpush1.bf16.msra.mxu0 0
      %1746 = vmatprep.subr.bf16.mxu0 0
      %1747 = vmatpush1.bf16.msra.mxu0 0
      %1748 = vmatprep.subr.bf16.mxu0 0
      %1749 = vmatpush1.bf16.msra.mxu0 0
      %1750 = vmatprep.mubr.bf16.mxu0 0
      %1751 = vmatmul.mubr.bf16.gmra.mrb[0].mxu0 %v1707
      %v1752 = vpop.f32.mrb[0].mxu0
      %v1753 = vadd.f32 0.0, %v1752
      %v1754 = vpop.f32.mrb[0].mxu0
      %v1755 = vpop.f32.mrb[0].mxu0
      %v1756 = vadd.f32 0.0, %v1755
      %v1757 = vpop.f32.mrb[0].mxu0
      %1758 = vmatprep.mubr.bf16.mxu0 0
      %1759 = vmatmul.mubr.bf16.gmra.mrb[0].mxu0 %v1710
      %v1760 = vpop.f32.mrb[0].mxu0
      %v1761 = vadd.f32 0.0, %v1760
      %v1762 = vpop.f32.mrb[0].mxu0
      %v1763 = vpop.f32.mrb[0].mxu0
      %v1764 = vadd.f32 0.0, %v1763
      %v1765 = vpop.f32.mrb[0].mxu0
      %1766 = vmatprep.mubr.bf16.mxu0 0
      %1767 = vmatmul.mubr.bf16.gmra.mrb[0].mxu0 %v1713
      %v1768 = vpop.f32.mrb[0].mxu0
      %v1769 = vadd.f32 0.0, %v1768
      %v1770 = vpop.f32.mrb[0].mxu0
      %v1771 = vpop.f32.mrb[0].mxu0
      %v1772 = vadd.f32 0.0, %v1771
      %v1773 = vpop.f32.mrb[0].mxu0
      %1774 = vmatprep.mubr.bf16.mxu0 0
      %1775 = vmatmul.mubr.bf16.gmra.mrb[0].mxu0 %v1716
      %v1776 = vpop.f32.mrb[0].mxu0
      %v1777 = vadd.f32 0.0, %v1776
      %v1778 = vpop.f32.mrb[0].mxu0
      %v1779 = vpop.f32.mrb[0].mxu0
      %v1780 = vadd.f32 0.0, %v1779
      %v1781 = vpop.f32.mrb[0].mxu0
      %1782 = vdwg.mxu0
      %v1791 = vunpack.c.l.b16 %v1663
      %v1792 = vunpack.c.l.b16 %v1664
      %v1793 = vunpack.c.l.b16 %v1665
      %v1794 = vunpack.c.l.b16 %v1666
      %v1795 = vunpack.c.l.b16 %v1667
      %v1796 = vunpack.c.l.b16 %v1668
      %v1797 = vunpack.c.l.b16 %v1669
      %v1798 = vunpack.c.l.b16 %v1670
      %v1799 = vpack.c.b16 %v1792, %v1791
      %v1800 = vpack.c.b16 %v1794, %v1793
      %v1801 = vpack.c.b16 %v1796, %v1795
      %v1802 = vpack.c.b16 %v1798, %v1797
      %v1808 = vsel %vm871, %v1659, 0
      %v1811 = vsel %vm871, %v1660, 0
      %1813 = vmatprep.subr.bf16.mxu0 0
      %1814 = vmatpush1.bf16.msra.mxu0 %v1799
      %1815 = vmatprep.subr.bf16.mxu0 0
      %1816 = vmatpush1.bf16.msra.mxu0 %v1800
      %1817 = vmatprep.subr.bf16.mxu0 0
      %1818 = vmatpush1.bf16.msra.mxu0 %v1801
      %1819 = vmatprep.subr.bf16.mxu0 0
      %1820 = vmatpush1.bf16.msra.mxu0 %v1802
      %1821 = vmatprep.subr.bf16.mxu0 0
      %1822 = vmatpush1.bf16.msra.mxu0 0
      %1823 = vmatprep.subr.bf16.mxu0 0
      %1824 = vmatpush1.bf16.msra.mxu0 0
      %1825 = vmatprep.subr.bf16.mxu0 0
      %1826 = vmatpush1.bf16.msra.mxu0 0
      %1827 = vmatprep.subr.bf16.mxu0 0
      %1828 = vmatpush1.bf16.msra.mxu0 0
      %1829 = vmatprep.subr.bf16.mxu0 0
      %1830 = vmatpush1.bf16.msra.mxu0 0
      %1831 = vmatprep.subr.bf16.mxu0 0
      %1832 = vmatpush1.bf16.msra.mxu0 0
      %1833 = vmatprep.subr.bf16.mxu0 0
      %1834 = vmatpush1.bf16.msra.mxu0 0
      %1835 = vmatprep.subr.bf16.mxu0 0
      %1836 = vmatpush1.bf16.msra.mxu0 0
      %1837 = vmatprep.subr.bf16.mxu0 0
      %1838 = vmatpush1.bf16.msra.mxu0 0
      %1839 = vmatprep.subr.bf16.mxu0 0
      %1840 = vmatpush1.bf16.msra.mxu0 0
      %1841 = vmatprep.subr.bf16.mxu0 0
      %1842 = vmatpush1.bf16.msra.mxu0 0
      %1843 = vmatprep.subr.bf16.mxu0 0
      %1844 = vmatpush1.bf16.msra.mxu0 0
      %1845 = vmatprep.mubr.bf16.mxu0 0
      %1846 = vmatmul.mubr.bf16.gmra.mrb[0].mxu0 %v1808
      %v1847 = vpop.f32.mrb[0].mxu0
      %v1848 = vadd.f32 %v1753, %v1847
      %v1849 = vpop.f32.mrb[0].mxu0
      %v1850 = vpop.f32.mrb[0].mxu0
      %v1851 = vadd.f32 %v1756, %v1850
      %v1852 = vpop.f32.mrb[0].mxu0
      %1853 = vmatprep.mubr.bf16.mxu0 0
      %1854 = vmatmul.mubr.bf16.gmra.mrb[0].mxu0 %v1811
      %v1855 = vpop.f32.mrb[0].mxu0
      %v1856 = vadd.f32 %v1761, %v1855
      %v1857 = vpop.f32.mrb[0].mxu0
      %v1858 = vpop.f32.mrb[0].mxu0
      %v1859 = vadd.f32 %v1764, %v1858
      %v1860 = vpop.f32.mrb[0].mxu0
      %1861 = vmatprep.mubr.bf16.mxu0 0
      %1862 = vmatmul.mubr.bf16.gmra.mrb[0].mxu0 %v1707
      %v1863 = vpop.f32.mrb[0].mxu0
      %v1864 = vadd.f32 %v1769, %v1863
      %v1865 = vpop.f32.mrb[0].mxu0
      %v1866 = vpop.f32.mrb[0].mxu0
      %v1867 = vadd.f32 %v1772, %v1866
      %v1868 = vpop.f32.mrb[0].mxu0
      %1869 = vmatprep.mubr.bf16.mxu0 0
      %1870 = vmatmul.mubr.bf16.gmra.mrb[0].mxu0 %v1710
      %v1871 = vpop.f32.mrb[0].mxu0
      %v1872 = vadd.f32 %v1777, %v1871
      %v1873 = vpop.f32.mrb[0].mxu0
      %v1874 = vpop.f32.mrb[0].mxu0
      %v1875 = vadd.f32 %v1780, %v1874
      %v1876 = vpop.f32.mrb[0].mxu0
      %1877 = vdwg.mxu0
      %v1878 = vpack.c.bf16 %v1657, %v1649
      %v1879 = vpack.c.bf16 %v1658, %v1652
      %s1880 = scalar_lea.vmem %s802, 64
      %v1881 = vld [vmem:[%s1880] sm:$0xf]
      %v1882 = vld [vmem:[%s1880 + $0x4] sm:$0xf]
      %v1883 = vld [vmem:[%s1880 + $0x8] sm:$0xf]
      %v1884 = vld [vmem:[%s1880 + $0xc] sm:$0xf]
      %v1885 = vld [vmem:[%s1880 + $0x10] sm:$0xf]
      %v1886 = vld [vmem:[%s1880 + $0x14] sm:$0xf]
      %v1887 = vld [vmem:[%s1880 + $0x18] sm:$0xf]
      %v1888 = vld [vmem:[%s1880 + $0x1c] sm:$0xf]
      %v1897 = vunpack.c.l.b16 %v1881
      %v1898 = vunpack.c.l.b16 %v1882
      %v1899 = vunpack.c.l.b16 %v1883
      %v1900 = vunpack.c.l.b16 %v1884
      %v1901 = vunpack.c.l.b16 %v1885
      %v1902 = vunpack.c.l.b16 %v1886
      %v1903 = vunpack.c.l.b16 %v1887
      %v1904 = vunpack.c.l.b16 %v1888
      %v1905 = vpack.c.b16 %v1898, %v1897
      %v1906 = vpack.c.b16 %v1900, %v1899
      %v1907 = vpack.c.b16 %v1902, %v1901
      %v1908 = vpack.c.b16 %v1904, %v1903
      %v1914 = vsel %vm871, %v1878, 0
      %v1917 = vsel %vm871, %v1879, 0
      %1919 = vmatprep.subr.bf16.mxu0 0
      %1920 = vmatpush1.bf16.msra.mxu0 %v1905
      %1921 = vmatprep.subr.bf16.mxu0 0
      %1922 = vmatpush1.bf16.msra.mxu0 %v1906
      %1923 = vmatprep.subr.bf16.mxu0 0
      %1924 = vmatpush1.bf16.msra.mxu0 %v1907
      %1925 = vmatprep.subr.bf16.mxu0 0
      %1926 = vmatpush1.bf16.msra.mxu0 %v1908
      %1927 = vmatprep.subr.bf16.mxu0 0
      %1928 = vmatpush1.bf16.msra.mxu0 0
      %1929 = vmatprep.subr.bf16.mxu0 0
      %1930 = vmatpush1.bf16.msra.mxu0 0
      %1931 = vmatprep.subr.bf16.mxu0 0
      %1932 = vmatpush1.bf16.msra.mxu0 0
      %1933 = vmatprep.subr.bf16.mxu0 0
      %1934 = vmatpush1.bf16.msra.mxu0 0
      %1935 = vmatprep.subr.bf16.mxu0 0
      %1936 = vmatpush1.bf16.msra.mxu0 0
      %1937 = vmatprep.subr.bf16.mxu0 0
      %1938 = vmatpush1.bf16.msra.mxu0 0
      %1939 = vmatprep.subr.bf16.mxu0 0
      %1940 = vmatpush1.bf16.msra.mxu0 0
      %1941 = vmatprep.subr.bf16.mxu0 0
      %1942 = vmatpush1.bf16.msra.mxu0 0
      %1943 = vmatprep.subr.bf16.mxu0 0
      %1944 = vmatpush1.bf16.msra.mxu0 0
      %1945 = vmatprep.subr.bf16.mxu0 0
      %1946 = vmatpush1.bf16.msra.mxu0 0
      %1947 = vmatprep.subr.bf16.mxu0 0
      %1948 = vmatpush1.bf16.msra.mxu0 0
      %1949 = vmatprep.subr.bf16.mxu0 0
      %1950 = vmatpush1.bf16.msra.mxu0 0
      %1951 = vmatprep.mubr.bf16.mxu0 0
      %1952 = vmatmul.mubr.bf16.gmra.mrb[0].mxu0 %v1713
      %v1953 = vpop.f32.mrb[0].mxu0
      %v1954 = vadd.f32 0.0, %v1953
      %v1955 = vpop.f32.mrb[0].mxu0
      %v1956 = vpop.f32.mrb[0].mxu0
      %v1957 = vadd.f32 0.0, %v1956
      %v1958 = vpop.f32.mrb[0].mxu0
      %1959 = vmatprep.mubr.bf16.mxu0 0
      %1960 = vmatmul.mubr.bf16.gmra.mrb[0].mxu0 %v1716
      %v1961 = vpop.f32.mrb[0].mxu0
      %v1962 = vadd.f32 0.0, %v1961
      %v1963 = vpop.f32.mrb[0].mxu0
      %v1964 = vpop.f32.mrb[0].mxu0
      %v1965 = vadd.f32 0.0, %v1964
      %v1966 = vpop.f32.mrb[0].mxu0
      %1967 = vmatprep.mubr.bf16.mxu0 0
      %1968 = vmatmul.mubr.bf16.gmra.mrb[0].mxu0 %v1914
      %v1969 = vpop.f32.mrb[0].mxu0
      %v1970 = vadd.f32 0.0, %v1969
      %v1971 = vpop.f32.mrb[0].mxu0
      %v1972 = vpop.f32.mrb[0].mxu0
      %v1973 = vadd.f32 0.0, %v1972
      %v1974 = vpop.f32.mrb[0].mxu0
      %1975 = vmatprep.mubr.bf16.mxu0 0
      %1976 = vmatmul.mubr.bf16.gmra.mrb[0].mxu0 %v1917
      %v1977 = vpop.f32.mrb[0].mxu0
      %v1978 = vadd.f32 0.0, %v1977
      %v1979 = vpop.f32.mrb[0].mxu0
      %v1980 = vpop.f32.mrb[0].mxu0
      %v1981 = vadd.f32 0.0, %v1980
      %v1982 = vpop.f32.mrb[0].mxu0
      %1983 = vdwg.mxu0
      %v1984 = vadd.f32 %v1848, %v1954
      %v1985 = vadd.f32 %v1851, %v1957
      %v1986 = vadd.f32 %v1856, %v1962
      %v1987 = vadd.f32 %v1859, %v1965
      %v1988 = vadd.f32 %v1864, %v1970
      %v1989 = vadd.f32 %v1867, %v1973
      %v1990 = vadd.f32 %v1872, %v1978
      %v1991 = vadd.f32 %v1875, %v1981
      %v1993 = vlaneseq
      %v1994 = vshrl.u32 %v1993, 7
      %v1995 = vsub.s32 0, %v1994
      %v1996 = vrot.slane %v1626, %v1995
      %v1998 = vadd.f32 %v1984, %v1996
      %v1999 = vadd.f32 %v1985, %v1996
      %v2000 = vadd.f32 %v1986, %v1996
      %v2001 = vadd.f32 %v1987, %v1996
      %v2002 = vadd.f32 %v1988, %v1996
      %v2003 = vadd.f32 %v1989, %v1996
      %v2004 = vadd.f32 %v1990, %v1996
      %v2005 = vadd.f32 %v1991, %v1996
      %v2006 = vadd.f32 %v1998, %v856
      %v2007 = vadd.f32 %v1999, %v857
      %v2008 = vadd.f32 %v2000, %v858
      %v2009 = vadd.f32 %v2001, %v859
      %v2010 = vadd.f32 %v2002, %v856
      %v2011 = vadd.f32 %v2003, %v857
      %v2012 = vadd.f32 %v2004, %v858
      %v2013 = vadd.f32 %v2005, %v859
      %v2014 = vmul.f32 %v2006, 0.70710677
      %v2015 = vmul.f32 %v2007, 0.70710677
      %v2016 = vmul.f32 %v2008, 0.70710677
      %v2017 = vmul.f32 %v2009, 0.70710677
      %v2018 = vmul.f32 %v2010, 0.70710677
      %v2019 = vmul.f32 %v2011, 0.70710677
      %v2020 = vmul.f32 %v2012, 0.70710677
      %v2021 = vmul.f32 %v2013, 0.70710677
      %v2022 = vrot.slane %v867, 2
      %v2023 = vrot.slane %v868, 2
      %v2026 = vrot.slane %v1432, 2
      %v2027 = vrot.slane %v1434, 2
      %v2028 = vsel %vm871, %v2014, 0.0
      %v2029 = vsel %vm871, %v2015, 0.0
      %v2030 = vadd.f32 %v2028, %v2029
      %v2031 = vrot.slane %v2030, 4
      %v2032 = vadd.f32 %v2030, %v2031
      %v2033 = vrot.slane %v2032, 2
      %v2034 = vadd.f32 %v2032, %v2033
      %v2035 = vrot.slane %v2034, 1
      %v2036 = vadd.f32 %v2034, %v2035
      %v2037 = vsel %vm871, %v2016, 0.0
      %v2038 = vsel %vm871, %v2017, 0.0
      %v2039 = vadd.f32 %v2037, %v2038
      %v2040 = vrot.slane %v2039, 4
      %v2041 = vadd.f32 %v2039, %v2040
      %v2042 = vrot.slane %v2041, 2
      %v2043 = vadd.f32 %v2041, %v2042
      %v2044 = vrot.slane %v2043, 1
      %v2045 = vadd.f32 %v2043, %v2044
      %v2046 = vsel %vm871, %v2018, 0.0
      %v2047 = vsel %vm871, %v2019, 0.0
      %v2048 = vadd.f32 %v2046, %v2047
      %v2049 = vrot.slane %v2048, 4
      %v2050 = vadd.f32 %v2048, %v2049
      %v2051 = vrot.slane %v2050, 2
      %v2052 = vadd.f32 %v2050, %v2051
      %v2053 = vrot.slane %v2052, 1
      %v2054 = vadd.f32 %v2052, %v2053
      %v2055 = vsel %vm871, %v2020, 0.0
      %v2056 = vsel %vm871, %v2021, 0.0
      %v2057 = vadd.f32 %v2055, %v2056
      %v2058 = vrot.slane %v2057, 4
      %v2059 = vadd.f32 %v2057, %v2058
      %v2060 = vrot.slane %v2059, 2
      %v2061 = vadd.f32 %v2059, %v2060
      %v2062 = vrot.slane %v2061, 1
      %v2063 = vadd.f32 %v2061, %v2062
      %v2064 = vmul.f32 %v2036, %v890
      %v2065 = vmul.f32 %v2045, %v890
      %v2066 = vmul.f32 %v2054, %v890
      %v2067 = vmul.f32 %v2063, %v890
      %v2068 = vsel %vm871, %v2064, 0.0
      %v2069 = vsel %vm871, %v2066, 0.0
      %v2070 = vadd.f32 %v2068, %v2069
      %v2071 = vsel %vm871, %v2065, 0.0
      %v2072 = vsel %vm871, %v2067, 0.0
      %v2073 = vadd.f32 %v2071, %v2072
      %v2074 = vmul.f32 %v2070, %v1483
      %v2075 = vmul.f32 %v2073, %v1483
      %v2076 = vsub.f32 %v2014, %v2074
      %v2077 = vsub.f32 %v2015, %v2074
      %v2078 = vsub.f32 %v2016, %v2075
      %v2079 = vsub.f32 %v2017, %v2075
      %v2080 = vsub.f32 %v2018, %v2074
      %v2081 = vsub.f32 %v2019, %v2074
      %v2082 = vsub.f32 %v2020, %v2075
      %v2083 = vsub.f32 %v2021, %v2075
      %v2084 = vmul.f32 %v2076, %v2076
      %v2085 = vmul.f32 %v2077, %v2077
      %v2086 = vmul.f32 %v2078, %v2078
      %v2087 = vmul.f32 %v2079, %v2079
      %v2088 = vmul.f32 %v2080, %v2080
      %v2089 = vmul.f32 %v2081, %v2081
      %v2090 = vmul.f32 %v2082, %v2082
      %v2091 = vmul.f32 %v2083, %v2083
      %v2092 = vsel %vm871, %v2084, 0.0
      %v2093 = vsel %vm871, %v2085, 0.0
      %v2094 = vadd.f32 %v2092, %v2093
      %v2095 = vrot.slane %v2094, 4
      %v2096 = vadd.f32 %v2094, %v2095
      %v2097 = vrot.slane %v2096, 2
      %v2098 = vadd.f32 %v2096, %v2097
      %v2099 = vrot.slane %v2098, 1
      %v2100 = vadd.f32 %v2098, %v2099
      %v2101 = vsel %vm871, %v2086, 0.0
      %v2102 = vsel %vm871, %v2087, 0.0
      %v2103 = vadd.f32 %v2101, %v2102
      %v2104 = vrot.slane %v2103, 4
      %v2105 = vadd.f32 %v2103, %v2104
      %v2106 = vrot.slane %v2105, 2
      %v2107 = vadd.f32 %v2105, %v2106
      %v2108 = vrot.slane %v2107, 1
      %v2109 = vadd.f32 %v2107, %v2108
      %v2110 = vsel %vm871, %v2088, 0.0
      %v2111 = vsel %vm871, %v2089, 0.0
      %v2112 = vadd.f32 %v2110, %v2111
      %v2113 = vrot.slane %v2112, 4
      %v2114 = vadd.f32 %v2112, %v2113
      %v2115 = vrot.slane %v2114, 2
      %v2116 = vadd.f32 %v2114, %v2115
      %v2117 = vrot.slane %v2116, 1
      %v2118 = vadd.f32 %v2116, %v2117
      %v2119 = vsel %vm871, %v2090, 0.0
      %v2120 = vsel %vm871, %v2091, 0.0
      %v2121 = vadd.f32 %v2119, %v2120
      %v2122 = vrot.slane %v2121, 4
      %v2123 = vadd.f32 %v2121, %v2122
      %v2124 = vrot.slane %v2123, 2
      %v2125 = vadd.f32 %v2123, %v2124
      %v2126 = vrot.slane %v2125, 1
      %v2127 = vadd.f32 %v2125, %v2126
      %v2128 = vmul.f32 %v2100, %v890
      %v2129 = vmul.f32 %v2109, %v890
      %v2130 = vmul.f32 %v2118, %v890
      %v2131 = vmul.f32 %v2127, %v890
      %v2132 = vsel %vm871, %v2128, 0.0
      %v2133 = vsel %vm871, %v2130, 0.0
      %v2134 = vadd.f32 %v2132, %v2133
      %v2135 = vsel %vm871, %v2129, 0.0
      %v2136 = vsel %vm871, %v2131, 0.0
      %v2137 = vadd.f32 %v2135, %v2136
      %v2138 = vmul.f32 %v2134, %v1483
      %v2139 = vmul.f32 %v2137, %v1483
      %v2140 = vadd.f32 %v2022, 1.0
      %v2141 = vadd.f32 %v2023, 1.0
      %v2142 = vadd.f32 %v2138, 1e-05
      %v2143 = vadd.f32 %v2139, 1e-05
      %v2144 = vrsqrt.pop %v2142
      %v2145 = vrsqrt.pop %v2143
      %v2146 = vmul.f32 %v2076, %v2144
      %v2147 = vmul.f32 %v2077, %v2144
      %v2148 = vmul.f32 %v2078, %v2145
      %v2149 = vmul.f32 %v2079, %v2145
      %v2150 = vmul.f32 %v2080, %v2144
      %v2151 = vmul.f32 %v2081, %v2144
      %v2152 = vmul.f32 %v2082, %v2145
      %v2153 = vmul.f32 %v2083, %v2145
      %v2156 = vlaneseq
      %v2157 = vshrl.u32 %v2156, 7
      %v2158 = vsub.s32 0, %v2157
      %v2159 = vrot.slane %v2140, %v2158
      %v2160 = vlaneseq
      %v2161 = vshrl.u32 %v2160, 7
      %v2162 = vsub.s32 0, %v2161
      %v2163 = vrot.slane %v2141, %v2162
      %v2166 = vmul.f32 %v2159, %v2146
      %v2167 = vmul.f32 %v2159, %v2147
      %v2168 = vmul.f32 %v2163, %v2148
      %v2169 = vmul.f32 %v2163, %v2149
      %v2170 = vmul.f32 %v2159, %v2150
      %v2171 = vmul.f32 %v2159, %v2151
      %v2172 = vmul.f32 %v2163, %v2152
      %v2173 = vmul.f32 %v2163, %v2153
      %v2174 = vlaneseq
      %v2175 = vshrl.u32 %v2174, 7
      %v2176 = vsub.s32 0, %v2175
      %v2177 = vrot.slane %v2026, %v2176
      %v2178 = vlaneseq
      %v2179 = vshrl.u32 %v2178, 7
      %v2180 = vsub.s32 0, %v2179
      %v2181 = vrot.slane %v2027, %v2180
      %v2184 = vadd.f32 %v2166, %v2177
      %v2185 = vadd.f32 %v2167, %v2177
      %v2186 = vadd.f32 %v2168, %v2181
      %v2187 = vadd.f32 %v2169, %v2181
      %v2188 = vadd.f32 %v2170, %v2177
      %v2189 = vadd.f32 %v2171, %v2177
      %v2190 = vadd.f32 %v2172, %v2181
      %v2191 = vadd.f32 %v2173, %v2181
      %vm2192 = vcmp.ge.f32.partialorder %v2184, 0.0
      %vm2193 = vcmp.ge.f32.partialorder %v2185, 0.0
      %vm2194 = vcmp.ge.f32.partialorder %v2186, 0.0
      %vm2195 = vcmp.ge.f32.partialorder %v2187, 0.0
      %vm2196 = vcmp.ge.f32.partialorder %v2188, 0.0
      %vm2197 = vcmp.ge.f32.partialorder %v2189, 0.0
      %vm2198 = vcmp.ge.f32.partialorder %v2190, 0.0
      %vm2199 = vcmp.ge.f32.partialorder %v2191, 0.0
      %v2200 = vmul.f32 %v2184, 0.2
      %v2201 = vmul.f32 %v2185, 0.2
      %v2202 = vmul.f32 %v2186, 0.2
      %v2203 = vmul.f32 %v2187, 0.2
      %v2204 = vmul.f32 %v2188, 0.2
      %v2205 = vmul.f32 %v2189, 0.2
      %v2206 = vmul.f32 %v2190, 0.2
      %v2207 = vmul.f32 %v2191, 0.2
      %v2208 = vsel %vm2192, %v2184, %v2200
      %v2209 = vsel %vm2193, %v2185, %v2201
      %v2210 = vsel %vm2194, %v2186, %v2202
      %v2211 = vsel %vm2195, %v2187, %v2203
      %v2212 = vsel %vm2196, %v2188, %v2204
      %v2213 = vsel %vm2197, %v2189, %v2205
      %v2214 = vsel %vm2198, %v2190, %v2206
      %v2215 = vsel %vm2199, %v2191, %v2207
      %v2216 = vld [vmem:[%s813] sm:$0x1]
      %v2221 = vrot.slane %v2212, 7
      %v2222 = vrot.slane %v2213, 7
      %v2223 = vsel %vm1051, %v2221, %v2222
      %v2224 = vrot.slane %v2214, 7
      %v2225 = vrot.slane %v2215, 7
      %v2226 = vsel %vm1051, %v2224, %v2225
      %v2231 = vsel %vm1051, 0.0, %v2221
      %v2232 = vsel %vm1051, 0.0, %v2224
      %v2237 = vrot.slane %v2208, 1
      %v2238 = vrot.slane %v2209, 1
      %v2239 = vsel %vm985, %v2237, %v2238
      %v2240 = vrot.slane %v2210, 1
      %v2241 = vrot.slane %v2211, 1
      %v2242 = vsel %vm985, %v2240, %v2241
      %v2247 = vsel %vm985, %v2238, 0.0
      %v2248 = vsel %vm985, %v2241, 0.0
      %v2249 = vpack.c.bf16 %v2223, %v2231
      %v2250 = vpack.c.bf16 %v2226, %v2232
      %v2251 = vpack.c.bf16 %v2209, %v2208
      %v2252 = vpack.c.bf16 %v2211, %v2210
      %v2253 = vld [vmem:[%s810] sm:$0xf]
      %v2254 = vld [vmem:[%s810 + $0x4] sm:$0xf]
      %v2255 = vld [vmem:[%s810 + $0x8] sm:$0xf]
      %v2256 = vld [vmem:[%s810 + $0xc] sm:$0xf]
      %v2257 = vld [vmem:[%s810 + $0x10] sm:$0xf]
      %v2258 = vld [vmem:[%s810 + $0x14] sm:$0xf]
      %v2259 = vld [vmem:[%s810 + $0x18] sm:$0xf]
      %v2260 = vld [vmem:[%s810 + $0x1c] sm:$0xf]
      %v2261 = vpack.c.bf16 %v2213, %v2212
      %v2262 = vpack.c.bf16 %v2215, %v2214
      %s2263 = scalar_lea.vmem %s810, 32
      %v2264 = vld [vmem:[%s2263] sm:$0xf]
      %v2265 = vld [vmem:[%s2263 + $0x4] sm:$0xf]
      %v2266 = vld [vmem:[%s2263 + $0x8] sm:$0xf]
      %v2267 = vld [vmem:[%s2263 + $0xc] sm:$0xf]
      %v2268 = vld [vmem:[%s2263 + $0x10] sm:$0xf]
      %v2269 = vld [vmem:[%s2263 + $0x14] sm:$0xf]
      %v2270 = vld [vmem:[%s2263 + $0x18] sm:$0xf]
      %v2271 = vld [vmem:[%s2263 + $0x1c] sm:$0xf]
      %v2280 = vunpack.c.l.b16 %v2264
      %v2281 = vunpack.c.l.b16 %v2265
      %v2282 = vunpack.c.l.b16 %v2266
      %v2283 = vunpack.c.l.b16 %v2267
      %v2284 = vunpack.c.l.b16 %v2268
      %v2285 = vunpack.c.l.b16 %v2269
      %v2286 = vunpack.c.l.b16 %v2270
      %v2287 = vunpack.c.l.b16 %v2271
      %v2288 = vpack.c.b16 %v2281, %v2280
      %v2289 = vpack.c.b16 %v2283, %v2282
      %v2290 = vpack.c.b16 %v2285, %v2284
      %v2291 = vpack.c.b16 %v2287, %v2286
      %v2297 = vsel %vm871, %v2251, 0
      %v2300 = vsel %vm871, %v2252, 0
      %v2303 = vsel %vm871, %v2261, 0
      %v2306 = vsel %vm871, %v2262, 0
      %2308 = vmatprep.subr.bf16.mxu0 0
      %2309 = vmatpush1.bf16.msra.mxu0 %v2288
      %2310 = vmatprep.subr.bf16.mxu0 0
      %2311 = vmatpush1.bf16.msra.mxu0 %v2289
      %2312 = vmatprep.subr.bf16.mxu0 0
      %2313 = vmatpush1.bf16.msra.mxu0 %v2290
      %2314 = vmatprep.subr.bf16.mxu0 0
      %2315 = vmatpush1.bf16.msra.mxu0 %v2291
      %2316 = vmatprep.subr.bf16.mxu0 0
      %2317 = vmatpush1.bf16.msra.mxu0 0
      %2318 = vmatprep.subr.bf16.mxu0 0
      %2319 = vmatpush1.bf16.msra.mxu0 0
      %2320 = vmatprep.subr.bf16.mxu0 0
      %2321 = vmatpush1.bf16.msra.mxu0 0
      %2322 = vmatprep.subr.bf16.mxu0 0
      %2323 = vmatpush1.bf16.msra.mxu0 0
      %2324 = vmatprep.subr.bf16.mxu0 0
      %2325 = vmatpush1.bf16.msra.mxu0 0
      %2326 = vmatprep.subr.bf16.mxu0 0
      %2327 = vmatpush1.bf16.msra.mxu0 0
      %2328 = vmatprep.subr.bf16.mxu0 0
      %2329 = vmatpush1.bf16.msra.mxu0 0
      %2330 = vmatprep.subr.bf16.mxu0 0
      %2331 = vmatpush1.bf16.msra.mxu0 0
      %2332 = vmatprep.subr.bf16.mxu0 0
      %2333 = vmatpush1.bf16.msra.mxu0 0
      %2334 = vmatprep.subr.bf16.mxu0 0
      %2335 = vmatpush1.bf16.msra.mxu0 0
      %2336 = vmatprep.subr.bf16.mxu0 0
      %2337 = vmatpush1.bf16.msra.mxu0 0
      %2338 = vmatprep.subr.bf16.mxu0 0
      %2339 = vmatpush1.bf16.msra.mxu0 0
      %2340 = vmatprep.mubr.bf16.mxu0 0
      %2341 = vmatmul.mubr.bf16.gmra.mrb[0].mxu0 %v2297
      %v2342 = vpop.f32.mrb[0].mxu0
      %v2343 = vadd.f32 0.0, %v2342
      %v2344 = vpop.f32.mrb[0].mxu0
      %v2345 = vpop.f32.mrb[0].mxu0
      %v2346 = vadd.f32 0.0, %v2345
      %v2347 = vpop.f32.mrb[0].mxu0
      %2348 = vmatprep.mubr.bf16.mxu0 0
      %2349 = vmatmul.mubr.bf16.gmra.mrb[0].mxu0 %v2300
      %v2350 = vpop.f32.mrb[0].mxu0
      %v2351 = vadd.f32 0.0, %v2350
      %v2352 = vpop.f32.mrb[0].mxu0
      %v2353 = vpop.f32.mrb[0].mxu0
      %v2354 = vadd.f32 0.0, %v2353
      %v2355 = vpop.f32.mrb[0].mxu0
      %2356 = vmatprep.mubr.bf16.mxu0 0
      %2357 = vmatmul.mubr.bf16.gmra.mrb[0].mxu0 %v2303
      %v2358 = vpop.f32.mrb[0].mxu0
      %v2359 = vadd.f32 0.0, %v2358
      %v2360 = vpop.f32.mrb[0].mxu0
      %v2361 = vpop.f32.mrb[0].mxu0
      %v2362 = vadd.f32 0.0, %v2361
      %v2363 = vpop.f32.mrb[0].mxu0
      %2364 = vmatprep.mubr.bf16.mxu0 0
      %2365 = vmatmul.mubr.bf16.gmra.mrb[0].mxu0 %v2306
      %v2366 = vpop.f32.mrb[0].mxu0
      %v2367 = vadd.f32 0.0, %v2366
      %v2368 = vpop.f32.mrb[0].mxu0
      %v2369 = vpop.f32.mrb[0].mxu0
      %v2370 = vadd.f32 0.0, %v2369
      %v2371 = vpop.f32.mrb[0].mxu0
      %2372 = vdwg.mxu0
      %v2381 = vunpack.c.l.b16 %v2253
      %v2382 = vunpack.c.l.b16 %v2254
      %v2383 = vunpack.c.l.b16 %v2255
      %v2384 = vunpack.c.l.b16 %v2256
      %v2385 = vunpack.c.l.b16 %v2257
      %v2386 = vunpack.c.l.b16 %v2258
      %v2387 = vunpack.c.l.b16 %v2259
      %v2388 = vunpack.c.l.b16 %v2260
      %v2389 = vpack.c.b16 %v2382, %v2381
      %v2390 = vpack.c.b16 %v2384, %v2383
      %v2391 = vpack.c.b16 %v2386, %v2385
      %v2392 = vpack.c.b16 %v2388, %v2387
      %v2398 = vsel %vm871, %v2249, 0
      %v2401 = vsel %vm871, %v2250, 0
      %2403 = vmatprep.subr.bf16.mxu0 0
      %2404 = vmatpush1.bf16.msra.mxu0 %v2389
      %2405 = vmatprep.subr.bf16.mxu0 0
      %2406 = vmatpush1.bf16.msra.mxu0 %v2390
      %2407 = vmatprep.subr.bf16.mxu0 0
      %2408 = vmatpush1.bf16.msra.mxu0 %v2391
      %2409 = vmatprep.subr.bf16.mxu0 0
      %2410 = vmatpush1.bf16.msra.mxu0 %v2392
      %2411 = vmatprep.subr.bf16.mxu0 0
      %2412 = vmatpush1.bf16.msra.mxu0 0
      %2413 = vmatprep.subr.bf16.mxu0 0
      %2414 = vmatpush1.bf16.msra.mxu0 0
      %2415 = vmatprep.subr.bf16.mxu0 0
      %2416 = vmatpush1.bf16.msra.mxu0 0
      %2417 = vmatprep.subr.bf16.mxu0 0
      %2418 = vmatpush1.bf16.msra.mxu0 0
      %2419 = vmatprep.subr.bf16.mxu0 0
      %2420 = vmatpush1.bf16.msra.mxu0 0
      %2421 = vmatprep.subr.bf16.mxu0 0
      %2422 = vmatpush1.bf16.msra.mxu0 0
      %2423 = vmatprep.subr.bf16.mxu0 0
      %2424 = vmatpush1.bf16.msra.mxu0 0
      %2425 = vmatprep.subr.bf16.mxu0 0
      %2426 = vmatpush1.bf16.msra.mxu0 0
      %2427 = vmatprep.subr.bf16.mxu0 0
      %2428 = vmatpush1.bf16.msra.mxu0 0
      %2429 = vmatprep.subr.bf16.mxu0 0
      %2430 = vmatpush1.bf16.msra.mxu0 0
      %2431 = vmatprep.subr.bf16.mxu0 0
      %2432 = vmatpush1.bf16.msra.mxu0 0
      %2433 = vmatprep.subr.bf16.mxu0 0
      %2434 = vmatpush1.bf16.msra.mxu0 0
      %2435 = vmatprep.mubr.bf16.mxu0 0
      %2436 = vmatmul.mubr.bf16.gmra.mrb[0].mxu0 %v2398
      %v2437 = vpop.f32.mrb[0].mxu0
      %v2438 = vadd.f32 %v2343, %v2437
      %v2439 = vpop.f32.mrb[0].mxu0
      %v2440 = vpop.f32.mrb[0].mxu0
      %v2441 = vadd.f32 %v2346, %v2440
      %v2442 = vpop.f32.mrb[0].mxu0
      %2443 = vmatprep.mubr.bf16.mxu0 0
      %2444 = vmatmul.mubr.bf16.gmra.mrb[0].mxu0 %v2401
      %v2445 = vpop.f32.mrb[0].mxu0
      %v2446 = vadd.f32 %v2351, %v2445
      %v2447 = vpop.f32.mrb[0].mxu0
      %v2448 = vpop.f32.mrb[0].mxu0
      %v2449 = vadd.f32 %v2354, %v2448
      %v2450 = vpop.f32.mrb[0].mxu0
      %2451 = vmatprep.mubr.bf16.mxu0 0
      %2452 = vmatmul.mubr.bf16.gmra.mrb[0].mxu0 %v2297
      %v2453 = vpop.f32.mrb[0].mxu0
      %v2454 = vadd.f32 %v2359, %v2453
      %v2455 = vpop.f32.mrb[0].mxu0
      %v2456 = vpop.f32.mrb[0].mxu0
      %v2457 = vadd.f32 %v2362, %v2456
      %v2458 = vpop.f32.mrb[0].mxu0
      %2459 = vmatprep.mubr.bf16.mxu0 0
      %2460 = vmatmul.mubr.bf16.gmra.mrb[0].mxu0 %v2300
      %v2461 = vpop.f32.mrb[0].mxu0
      %v2462 = vadd.f32 %v2367, %v2461
      %v2463 = vpop.f32.mrb[0].mxu0
      %v2464 = vpop.f32.mrb[0].mxu0
      %v2465 = vadd.f32 %v2370, %v2464
      %v2466 = vpop.f32.mrb[0].mxu0
      %2467 = vdwg.mxu0
      %v2468 = vpack.c.bf16 %v2247, %v2239
      %v2469 = vpack.c.bf16 %v2248, %v2242
      %s2470 = scalar_lea.vmem %s810, 64
      %v2471 = vld [vmem:[%s2470] sm:$0xf]
      %v2472 = vld [vmem:[%s2470 + $0x4] sm:$0xf]
      %v2473 = vld [vmem:[%s2470 + $0x8] sm:$0xf]
      %v2474 = vld [vmem:[%s2470 + $0xc] sm:$0xf]
      %v2475 = vld [vmem:[%s2470 + $0x10] sm:$0xf]
      %v2476 = vld [vmem:[%s2470 + $0x14] sm:$0xf]
      %v2477 = vld [vmem:[%s2470 + $0x18] sm:$0xf]
      %v2478 = vld [vmem:[%s2470 + $0x1c] sm:$0xf]
      %v2487 = vunpack.c.l.b16 %v2471
      %v2488 = vunpack.c.l.b16 %v2472
      %v2489 = vunpack.c.l.b16 %v2473
      %v2490 = vunpack.c.l.b16 %v2474
      %v2491 = vunpack.c.l.b16 %v2475
      %v2492 = vunpack.c.l.b16 %v2476
      %v2493 = vunpack.c.l.b16 %v2477
      %v2494 = vunpack.c.l.b16 %v2478
      %v2495 = vpack.c.b16 %v2488, %v2487
      %v2496 = vpack.c.b16 %v2490, %v2489
      %v2497 = vpack.c.b16 %v2492, %v2491
      %v2498 = vpack.c.b16 %v2494, %v2493
      %v2504 = vsel %vm871, %v2468, 0
      %v2507 = vsel %vm871, %v2469, 0
      %2509 = vmatprep.subr.bf16.mxu0 0
      %2510 = vmatpush1.bf16.msra.mxu0 %v2495
      %2511 = vmatprep.subr.bf16.mxu0 0
      %2512 = vmatpush1.bf16.msra.mxu0 %v2496
      %2513 = vmatprep.subr.bf16.mxu0 0
      %2514 = vmatpush1.bf16.msra.mxu0 %v2497
      %2515 = vmatprep.subr.bf16.mxu0 0
      %2516 = vmatpush1.bf16.msra.mxu0 %v2498
      %2517 = vmatprep.subr.bf16.mxu0 0
      %2518 = vmatpush1.bf16.msra.mxu0 0
      %2519 = vmatprep.subr.bf16.mxu0 0
      %2520 = vmatpush1.bf16.msra.mxu0 0
      %2521 = vmatprep.subr.bf16.mxu0 0
      %2522 = vmatpush1.bf16.msra.mxu0 0
      %2523 = vmatprep.subr.bf16.mxu0 0
      %2524 = vmatpush1.bf16.msra.mxu0 0
      %2525 = vmatprep.subr.bf16.mxu0 0
      %2526 = vmatpush1.bf16.msra.mxu0 0
      %2527 = vmatprep.subr.bf16.mxu0 0
      %2528 = vmatpush1.bf16.msra.mxu0 0
      %2529 = vmatprep.subr.bf16.mxu0 0
      %2530 = vmatpush1.bf16.msra.mxu0 0
      %2531 = vmatprep.subr.bf16.mxu0 0
      %2532 = vmatpush1.bf16.msra.mxu0 0
      %2533 = vmatprep.subr.bf16.mxu0 0
      %2534 = vmatpush1.bf16.msra.mxu0 0
      %2535 = vmatprep.subr.bf16.mxu0 0
      %2536 = vmatpush1.bf16.msra.mxu0 0
      %2537 = vmatprep.subr.bf16.mxu0 0
      %2538 = vmatpush1.bf16.msra.mxu0 0
      %2539 = vmatprep.subr.bf16.mxu0 0
      %2540 = vmatpush1.bf16.msra.mxu0 0
      %2541 = vmatprep.mubr.bf16.mxu0 0
      %2542 = vmatmul.mubr.bf16.gmra.mrb[0].mxu0 %v2303
      %v2543 = vpop.f32.mrb[0].mxu0
      %v2544 = vadd.f32 0.0, %v2543
      %v2545 = vpop.f32.mrb[0].mxu0
      %v2546 = vpop.f32.mrb[0].mxu0
      %v2547 = vadd.f32 0.0, %v2546
      %v2548 = vpop.f32.mrb[0].mxu0
      %2549 = vmatprep.mubr.bf16.mxu0 0
      %2550 = vmatmul.mubr.bf16.gmra.mrb[0].mxu0 %v2306
      %v2551 = vpop.f32.mrb[0].mxu0
      %v2552 = vadd.f32 0.0, %v2551
      %v2553 = vpop.f32.mrb[0].mxu0
      %v2554 = vpop.f32.mrb[0].mxu0
      %v2555 = vadd.f32 0.0, %v2554
      %v2556 = vpop.f32.mrb[0].mxu0
      %2557 = vmatprep.mubr.bf16.mxu0 0
      %2558 = vmatmul.mubr.bf16.gmra.mrb[0].mxu0 %v2504
      %v2559 = vpop.f32.mrb[0].mxu0
      %v2560 = vadd.f32 0.0, %v2559
      %v2561 = vpop.f32.mrb[0].mxu0
      %v2562 = vpop.f32.mrb[0].mxu0
      %v2563 = vadd.f32 0.0, %v2562
      %v2564 = vpop.f32.mrb[0].mxu0
      %2565 = vmatprep.mubr.bf16.mxu0 0
      %2566 = vmatmul.mubr.bf16.gmra.mrb[0].mxu0 %v2507
      %v2567 = vpop.f32.mrb[0].mxu0
      %v2568 = vadd.f32 0.0, %v2567
      %v2569 = vpop.f32.mrb[0].mxu0
      %v2570 = vpop.f32.mrb[0].mxu0
      %v2571 = vadd.f32 0.0, %v2570
      %v2572 = vpop.f32.mrb[0].mxu0
      %2573 = vdwg.mxu0
      %v2574 = vadd.f32 %v2438, %v2544
      %v2575 = vadd.f32 %v2441, %v2547
      %v2576 = vadd.f32 %v2446, %v2552
      %v2577 = vadd.f32 %v2449, %v2555
      %v2578 = vadd.f32 %v2454, %v2560
      %v2579 = vadd.f32 %v2457, %v2563
      %v2580 = vadd.f32 %v2462, %v2568
      %v2581 = vadd.f32 %v2465, %v2571
      %v2583 = vlaneseq
      %v2584 = vshrl.u32 %v2583, 7
      %v2585 = vsub.s32 0, %v2584
      %v2586 = vrot.slane %v2216, %v2585
      %v2588 = vadd.f32 %v2574, %v2586
      %v2589 = vadd.f32 %v2575, %v2586
      %v2590 = vadd.f32 %v2576, %v2586
      %v2591 = vadd.f32 %v2577, %v2586
      %v2592 = vadd.f32 %v2578, %v2586
      %v2593 = vadd.f32 %v2579, %v2586
      %v2594 = vadd.f32 %v2580, %v2586
      %v2595 = vadd.f32 %v2581, %v2586
      %v2596 = vrot.slane %v867, 3
      %v2597 = vrot.slane %v868, 3
      %2600 = vrot.lane.b32.xlu0 %v867, 96
      %v2601 = vpop.permute.xlu0 %2600
      %2602 = vrot.lane.b32.xlu0 %v868, 96
      %v2603 = vpop.permute.xlu0 %2602
      %v2604 = vrot.slane %v2601, 3
      %v2605 = vrot.slane %v2603, 3
      %vm2606 = vcmask 261120
      %v2607 = vsel %vm2606, %v2588, 0.0
      %v2608 = vsel %vm2606, %v2589, 0.0
      %v2609 = vadd.f32 %v2607, %v2608
      %v2610 = vrot.slane %v2609, 4
      %v2611 = vadd.f32 %v2609, %v2610
      %v2612 = vrot.slane %v2611, 2
      %v2613 = vadd.f32 %v2611, %v2612
      %v2614 = vrot.slane %v2613, 1
      %v2615 = vadd.f32 %v2613, %v2614
      %v2616 = vsel %vm2606, %v2590, 0.0
      %v2617 = vsel %vm2606, %v2591, 0.0
      %v2618 = vadd.f32 %v2616, %v2617
      %v2619 = vrot.slane %v2618, 4
      %v2620 = vadd.f32 %v2618, %v2619
      %v2621 = vrot.slane %v2620, 2
      %v2622 = vadd.f32 %v2620, %v2621
      %v2623 = vrot.slane %v2622, 1
      %v2624 = vadd.f32 %v2622, %v2623
      %v2625 = vsel %vm2606, %v2592, 0.0
      %v2626 = vsel %vm2606, %v2593, 0.0
      %v2627 = vadd.f32 %v2625, %v2626
      %v2628 = vrot.slane %v2627, 4
      %v2629 = vadd.f32 %v2627, %v2628
      %v2630 = vrot.slane %v2629, 2
      %v2631 = vadd.f32 %v2629, %v2630
      %v2632 = vrot.slane %v2631, 1
      %v2633 = vadd.f32 %v2631, %v2632
      %v2634 = vsel %vm2606, %v2594, 0.0
      %v2635 = vsel %vm2606, %v2595, 0.0
      %v2636 = vadd.f32 %v2634, %v2635
      %v2637 = vrot.slane %v2636, 4
      %v2638 = vadd.f32 %v2636, %v2637
      %v2639 = vrot.slane %v2638, 2
      %v2640 = vadd.f32 %v2638, %v2639
      %v2641 = vrot.slane %v2640, 1
      %v2642 = vadd.f32 %v2640, %v2641
      %v2643 = vmul.f32 %v2615, %v890
      %v2644 = vmul.f32 %v2624, %v890
      %v2645 = vmul.f32 %v2633, %v890
      %v2646 = vmul.f32 %v2642, %v890
      %v2647 = vsel %vm2606, %v2643, 0.0
      %v2648 = vsel %vm2606, %v2645, 0.0
      %v2649 = vadd.f32 %v2647, %v2648
      %v2650 = vsel %vm2606, %v2644, 0.0
      %v2651 = vsel %vm2606, %v2646, 0.0
      %v2652 = vadd.f32 %v2650, %v2651
      %v2653 = vmul.f32 %v2649, %v1483
      %v2654 = vmul.f32 %v2652, %v1483
      %v2655 = vsub.f32 %v2588, %v2653
      %v2656 = vsub.f32 %v2589, %v2653
      %v2657 = vsub.f32 %v2590, %v2654
      %v2658 = vsub.f32 %v2591, %v2654
      %v2659 = vsub.f32 %v2592, %v2653
      %v2660 = vsub.f32 %v2593, %v2653
      %v2661 = vsub.f32 %v2594, %v2654
      %v2662 = vsub.f32 %v2595, %v2654
      %v2663 = vmul.f32 %v2655, %v2655
      %v2664 = vmul.f32 %v2656, %v2656
      %v2665 = vmul.f32 %v2657, %v2657
      %v2666 = vmul.f32 %v2658, %v2658
      %v2667 = vmul.f32 %v2659, %v2659
      %v2668 = vmul.f32 %v2660, %v2660
      %v2669 = vmul.f32 %v2661, %v2661
      %v2670 = vmul.f32 %v2662, %v2662
      %v2671 = vsel %vm2606, %v2663, 0.0
      %v2672 = vsel %vm2606, %v2664, 0.0
      %v2673 = vadd.f32 %v2671, %v2672
      %v2674 = vrot.slane %v2673, 4
      %v2675 = vadd.f32 %v2673, %v2674
      %v2676 = vrot.slane %v2675, 2
      %v2677 = vadd.f32 %v2675, %v2676
      %v2678 = vrot.slane %v2677, 1
      %v2679 = vadd.f32 %v2677, %v2678
      %v2680 = vsel %vm2606, %v2665, 0.0
      %v2681 = vsel %vm2606, %v2666, 0.0
      %v2682 = vadd.f32 %v2680, %v2681
      %v2683 = vrot.slane %v2682, 4
      %v2684 = vadd.f32 %v2682, %v2683
      %v2685 = vrot.slane %v2684, 2
      %v2686 = vadd.f32 %v2684, %v2685
      %v2687 = vrot.slane %v2686, 1
      %v2688 = vadd.f32 %v2686, %v2687
      %v2689 = vsel %vm2606, %v2667, 0.0
      %v2690 = vsel %vm2606, %v2668, 0.0
      %v2691 = vadd.f32 %v2689, %v2690
      %v2692 = vrot.slane %v2691, 4
      %v2693 = vadd.f32 %v2691, %v2692
      %v2694 = vrot.slane %v2693, 2
      %v2695 = vadd.f32 %v2693, %v2694
      %v2696 = vrot.slane %v2695, 1
      %v2697 = vadd.f32 %v2695, %v2696
      %v2698 = vsel %vm2606, %v2669, 0.0
      %v2699 = vsel %vm2606, %v2670, 0.0
      %v2700 = vadd.f32 %v2698, %v2699
      %v2701 = vrot.slane %v2700, 4
      %v2702 = vadd.f32 %v2700, %v2701
      %v2703 = vrot.slane %v2702, 2
      %v2704 = vadd.f32 %v2702, %v2703
      %v2705 = vrot.slane %v2704, 1
      %v2706 = vadd.f32 %v2704, %v2705
      %v2707 = vmul.f32 %v2679, %v890
      %v2708 = vmul.f32 %v2688, %v890
      %v2709 = vmul.f32 %v2697, %v890
      %v2710 = vmul.f32 %v2706, %v890
      %v2711 = vsel %vm2606, %v2707, 0.0
      %v2712 = vsel %vm2606, %v2709, 0.0
      %v2713 = vadd.f32 %v2711, %v2712
      %v2714 = vsel %vm2606, %v2708, 0.0
      %v2715 = vsel %vm2606, %v2710, 0.0
      %v2716 = vadd.f32 %v2714, %v2715
      %v2717 = vmul.f32 %v2713, %v1483
      %v2718 = vmul.f32 %v2716, %v1483
      %v2719 = vadd.f32 %v2596, 1.0
      %v2720 = vadd.f32 %v2597, 1.0
      %v2721 = vadd.f32 %v2717, 1e-05
      %v2722 = vadd.f32 %v2718, 1e-05
      %v2723 = vrsqrt.pop %v2721
      %v2724 = vrsqrt.pop %v2722
      %v2725 = vmul.f32 %v2655, %v2723
      %v2726 = vmul.f32 %v2656, %v2723
      %v2727 = vmul.f32 %v2657, %v2724
      %v2728 = vmul.f32 %v2658, %v2724
      %v2729 = vmul.f32 %v2659, %v2723
      %v2730 = vmul.f32 %v2660, %v2723
      %v2731 = vmul.f32 %v2661, %v2724
      %v2732 = vmul.f32 %v2662, %v2724
      %v2735 = vlaneseq
      %v2736 = vshrl.u32 %v2735, 7
      %v2737 = vsub.s32 0, %v2736
      %v2738 = vrot.slane %v2719, %v2737
      %v2739 = vlaneseq
      %v2740 = vshrl.u32 %v2739, 7
      %v2741 = vsub.s32 0, %v2740
      %v2742 = vrot.slane %v2720, %v2741
      %v2745 = vmul.f32 %v2738, %v2725
      %v2746 = vmul.f32 %v2738, %v2726
      %v2747 = vmul.f32 %v2742, %v2727
      %v2748 = vmul.f32 %v2742, %v2728
      %v2749 = vmul.f32 %v2738, %v2729
      %v2750 = vmul.f32 %v2738, %v2730
      %v2751 = vmul.f32 %v2742, %v2731
      %v2752 = vmul.f32 %v2742, %v2732
      %v2753 = vlaneseq
      %v2754 = vshrl.u32 %v2753, 7
      %v2755 = vsub.s32 0, %v2754
      %v2756 = vrot.slane %v2604, %v2755
      %v2757 = vlaneseq
      %v2758 = vshrl.u32 %v2757, 7
      %v2759 = vsub.s32 0, %v2758
      %v2760 = vrot.slane %v2605, %v2759
      %v2763 = vadd.f32 %v2745, %v2756
      %v2764 = vadd.f32 %v2746, %v2756
      %v2765 = vadd.f32 %v2747, %v2760
      %v2766 = vadd.f32 %v2748, %v2760
      %v2767 = vadd.f32 %v2749, %v2756
      %v2768 = vadd.f32 %v2750, %v2756
      %v2769 = vadd.f32 %v2751, %v2760
      %v2770 = vadd.f32 %v2752, %v2760
      %vm2771 = vcmp.ge.f32.partialorder %v2763, 0.0
      %vm2772 = vcmp.ge.f32.partialorder %v2764, 0.0
      %vm2773 = vcmp.ge.f32.partialorder %v2765, 0.0
      %vm2774 = vcmp.ge.f32.partialorder %v2766, 0.0
      %vm2775 = vcmp.ge.f32.partialorder %v2767, 0.0
      %vm2776 = vcmp.ge.f32.partialorder %v2768, 0.0
      %vm2777 = vcmp.ge.f32.partialorder %v2769, 0.0
      %vm2778 = vcmp.ge.f32.partialorder %v2770, 0.0
      %v2779 = vmul.f32 %v2763, 0.2
      %v2780 = vmul.f32 %v2764, 0.2
      %v2781 = vmul.f32 %v2765, 0.2
      %v2782 = vmul.f32 %v2766, 0.2
      %v2783 = vmul.f32 %v2767, 0.2
      %v2784 = vmul.f32 %v2768, 0.2
      %v2785 = vmul.f32 %v2769, 0.2
      %v2786 = vmul.f32 %v2770, 0.2
      %v2787 = vsel %vm2771, %v2763, %v2779
      %v2788 = vsel %vm2772, %v2764, %v2780
      %v2789 = vsel %vm2773, %v2765, %v2781
      %v2790 = vsel %vm2774, %v2766, %v2782
      %v2791 = vsel %vm2775, %v2767, %v2783
      %v2792 = vsel %vm2776, %v2768, %v2784
      %v2793 = vsel %vm2777, %v2769, %v2785
      %v2794 = vsel %vm2778, %v2770, %v2786
      %v2795 = vld [vmem:[%s821] sm:$0x1]
      %v2800 = vrot.slane %v2791, 7
      %v2801 = vrot.slane %v2792, 7
      %v2802 = vsel %vm1051, %v2800, %v2801
      %v2803 = vrot.slane %v2793, 7
      %v2804 = vrot.slane %v2794, 7
      %v2805 = vsel %vm1051, %v2803, %v2804
      %v2810 = vsel %vm1051, 0.0, %v2800
      %v2811 = vsel %vm1051, 0.0, %v2803
      %v2816 = vrot.slane %v2787, 1
      %v2817 = vrot.slane %v2788, 1
      %v2818 = vsel %vm985, %v2816, %v2817
      %v2819 = vrot.slane %v2789, 1
      %v2820 = vrot.slane %v2790, 1
      %v2821 = vsel %vm985, %v2819, %v2820
      %v2826 = vsel %vm985, %v2817, 0.0
      %v2827 = vsel %vm985, %v2820, 0.0
      %v2828 = vpack.c.bf16 %v2802, %v2810
      %v2829 = vpack.c.bf16 %v2805, %v2811
      %v2830 = vpack.c.bf16 %v2788, %v2787
      %v2831 = vpack.c.bf16 %v2790, %v2789
      %v2832 = vld [vmem:[%s818] sm:$0xf]
      %v2833 = vld [vmem:[%s818 + $0x4] sm:$0xf]
      %v2834 = vld [vmem:[%s818 + $0x8] sm:$0xf]
      %v2835 = vld [vmem:[%s818 + $0xc] sm:$0xf]
      %v2836 = vpack.c.bf16 %v2792, %v2791
      %v2837 = vpack.c.bf16 %v2794, %v2793
      %s2838 = scalar_lea.vmem %s818, 16
      %v2839 = vld [vmem:[%s2838] sm:$0xf]
      %v2840 = vld [vmem:[%s2838 + $0x4] sm:$0xf]
      %v2841 = vld [vmem:[%s2838 + $0x8] sm:$0xf]
      %v2842 = vld [vmem:[%s2838 + $0xc] sm:$0xf]
      %v2847 = vunpack.c.l.b16 %v2839
      %v2848 = vunpack.c.l.b16 %v2840
      %v2849 = vunpack.c.l.b16 %v2841
      %v2850 = vunpack.c.l.b16 %v2842
      %v2851 = vpack.c.b16 %v2848, %v2847
      %v2852 = vpack.c.b16 %v2850, %v2849
      %v2856 = vsel %vm2606, %v2830, 0
      %v2859 = vsel %vm2606, %v2831, 0
      %v2862 = vsel %vm2606, %v2836, 0
      %v2865 = vsel %vm2606, %v2837, 0
      %2867 = vmatprep.subr.bf16.mxu0 0
      %2868 = vmatpush1.bf16.msra.mxu0 %v2851
      %2869 = vmatprep.subr.bf16.mxu0 0
      %2870 = vmatpush1.bf16.msra.mxu0 %v2852
      %2871 = vmatprep.subr.bf16.mxu0 0
      %2872 = vmatpush1.bf16.msra.mxu0 0
      %2873 = vmatprep.subr.bf16.mxu0 0
      %2874 = vmatpush1.bf16.msra.mxu0 0
      %2875 = vmatprep.subr.bf16.mxu0 0
      %2876 = vmatpush1.bf16.msra.mxu0 0
      %2877 = vmatprep.subr.bf16.mxu0 0
      %2878 = vmatpush1.bf16.msra.mxu0 0
      %2879 = vmatprep.subr.bf16.mxu0 0
      %2880 = vmatpush1.bf16.msra.mxu0 0
      %2881 = vmatprep.subr.bf16.mxu0 0
      %2882 = vmatpush1.bf16.msra.mxu0 0
      %2883 = vmatprep.subr.bf16.mxu0 0
      %2884 = vmatpush1.bf16.msra.mxu0 0
      %2885 = vmatprep.subr.bf16.mxu0 0
      %2886 = vmatpush1.bf16.msra.mxu0 0
      %2887 = vmatprep.subr.bf16.mxu0 0
      %2888 = vmatpush1.bf16.msra.mxu0 0
      %2889 = vmatprep.subr.bf16.mxu0 0
      %2890 = vmatpush1.bf16.msra.mxu0 0
      %2891 = vmatprep.subr.bf16.mxu0 0
      %2892 = vmatpush1.bf16.msra.mxu0 0
      %2893 = vmatprep.subr.bf16.mxu0 0
      %2894 = vmatpush1.bf16.msra.mxu0 0
      %2895 = vmatprep.subr.bf16.mxu0 0
      %2896 = vmatpush1.bf16.msra.mxu0 0
      %2897 = vmatprep.subr.bf16.mxu0 0
      %2898 = vmatpush1.bf16.msra.mxu0 0
      %2899 = vmatprep.mubr.bf16.mxu0 0
      %2900 = vmatmul.mubr.bf16.gmra.mrb[0].mxu0 %v2856
      %v2901 = vpop.f32.mrb[0].mxu0
      %v2902 = vadd.f32 0.0, %v2901
      %v2903 = vpop.f32.mrb[0].mxu0
      %v2904 = vpop.f32.mrb[0].mxu0
      %v2905 = vadd.f32 0.0, %v2904
      %v2906 = vpop.f32.mrb[0].mxu0
      %2907 = vmatprep.mubr.bf16.mxu0 0
      %2908 = vmatmul.mubr.bf16.gmra.mrb[0].mxu0 %v2859
      %v2909 = vpop.f32.mrb[0].mxu0
      %v2910 = vadd.f32 0.0, %v2909
      %v2911 = vpop.f32.mrb[0].mxu0
      %v2912 = vpop.f32.mrb[0].mxu0
      %v2913 = vadd.f32 0.0, %v2912
      %v2914 = vpop.f32.mrb[0].mxu0
      %2915 = vmatprep.mubr.bf16.mxu0 0
      %2916 = vmatmul.mubr.bf16.gmra.mrb[0].mxu0 %v2862
      %v2917 = vpop.f32.mrb[0].mxu0
      %v2918 = vadd.f32 0.0, %v2917
      %v2919 = vpop.f32.mrb[0].mxu0
      %v2920 = vpop.f32.mrb[0].mxu0
      %v2921 = vadd.f32 0.0, %v2920
      %v2922 = vpop.f32.mrb[0].mxu0
      %2923 = vmatprep.mubr.bf16.mxu0 0
      %2924 = vmatmul.mubr.bf16.gmra.mrb[0].mxu0 %v2865
      %v2925 = vpop.f32.mrb[0].mxu0
      %v2926 = vadd.f32 0.0, %v2925
      %v2927 = vpop.f32.mrb[0].mxu0
      %v2928 = vpop.f32.mrb[0].mxu0
      %v2929 = vadd.f32 0.0, %v2928
      %v2930 = vpop.f32.mrb[0].mxu0
      %2931 = vdwg.mxu0
      %v2936 = vunpack.c.l.b16 %v2832
      %v2937 = vunpack.c.l.b16 %v2833
      %v2938 = vunpack.c.l.b16 %v2834
      %v2939 = vunpack.c.l.b16 %v2835
      %v2940 = vpack.c.b16 %v2937, %v2936
      %v2941 = vpack.c.b16 %v2939, %v2938
      %v2945 = vsel %vm2606, %v2828, 0
      %v2948 = vsel %vm2606, %v2829, 0
      %2950 = vmatprep.subr.bf16.mxu0 0
      %2951 = vmatpush1.bf16.msra.mxu0 %v2940
      %2952 = vmatprep.subr.bf16.mxu0 0
      %2953 = vmatpush1.bf16.msra.mxu0 %v2941
      %2954 = vmatprep.subr.bf16.mxu0 0
      %2955 = vmatpush1.bf16.msra.mxu0 0
      %2956 = vmatprep.subr.bf16.mxu0 0
      %2957 = vmatpush1.bf16.msra.mxu0 0
      %2958 = vmatprep.subr.bf16.mxu0 0
      %2959 = vmatpush1.bf16.msra.mxu0 0
      %2960 = vmatprep.subr.bf16.mxu0 0
      %2961 = vmatpush1.bf16.msra.mxu0 0
      %2962 = vmatprep.subr.bf16.mxu0 0
      %2963 = vmatpush1.bf16.msra.mxu0 0
      %2964 = vmatprep.subr.bf16.mxu0 0
      %2965 = vmatpush1.bf16.msra.mxu0 0
      %2966 = vmatprep.subr.bf16.mxu0 0
      %2967 = vmatpush1.bf16.msra.mxu0 0
      %2968 = vmatprep.subr.bf16.mxu0 0
      %2969 = vmatpush1.bf16.msra.mxu0 0
      %2970 = vmatprep.subr.bf16.mxu0 0
      %2971 = vmatpush1.bf16.msra.mxu0 0
      %2972 = vmatprep.subr.bf16.mxu0 0
      %2973 = vmatpush1.bf16.msra.mxu0 0
      %2974 = vmatprep.subr.bf16.mxu0 0
      %2975 = vmatpush1.bf16.msra.mxu0 0
      %2976 = vmatprep.subr.bf16.mxu0 0
      %2977 = vmatpush1.bf16.msra.mxu0 0
      %2978 = vmatprep.subr.bf16.mxu0 0
      %2979 = vmatpush1.bf16.msra.mxu0 0
      %2980 = vmatprep.subr.bf16.mxu0 0
      %2981 = vmatpush1.bf16.msra.mxu0 0
      %2982 = vmatprep.mubr.bf16.mxu0 0
      %2983 = vmatmul.mubr.bf16.gmra.mrb[0].mxu0 %v2945
      %v2984 = vpop.f32.mrb[0].mxu0
      %v2985 = vadd.f32 %v2902, %v2984
      %v2986 = vpop.f32.mrb[0].mxu0
      %v2987 = vpop.f32.mrb[0].mxu0
      %v2988 = vadd.f32 %v2905, %v2987
      %v2989 = vpop.f32.mrb[0].mxu0
      %2990 = vmatprep.mubr.bf16.mxu0 0
      %2991 = vmatmul.mubr.bf16.gmra.mrb[0].mxu0 %v2948
      %v2992 = vpop.f32.mrb[0].mxu0
      %v2993 = vadd.f32 %v2910, %v2992
      %v2994 = vpop.f32.mrb[0].mxu0
      %v2995 = vpop.f32.mrb[0].mxu0
      %v2996 = vadd.f32 %v2913, %v2995
      %v2997 = vpop.f32.mrb[0].mxu0
      %2998 = vmatprep.mubr.bf16.mxu0 0
      %2999 = vmatmul.mubr.bf16.gmra.mrb[0].mxu0 %v2856
      %v3000 = vpop.f32.mrb[0].mxu0
      %v3001 = vadd.f32 %v2918, %v3000
      %v3002 = vpop.f32.mrb[0].mxu0
      %v3003 = vpop.f32.mrb[0].mxu0
      %v3004 = vadd.f32 %v2921, %v3003
      %v3005 = vpop.f32.mrb[0].mxu0
      %3006 = vmatprep.mubr.bf16.mxu0 0
      %3007 = vmatmul.mubr.bf16.gmra.mrb[0].mxu0 %v2859
      %v3008 = vpop.f32.mrb[0].mxu0
      %v3009 = vadd.f32 %v2926, %v3008
      %v3010 = vpop.f32.mrb[0].mxu0
      %v3011 = vpop.f32.mrb[0].mxu0
      %v3012 = vadd.f32 %v2929, %v3011
      %v3013 = vpop.f32.mrb[0].mxu0
      %3014 = vdwg.mxu0
      %v3015 = vpack.c.bf16 %v2826, %v2818
      %v3016 = vpack.c.bf16 %v2827, %v2821
      %s3017 = scalar_lea.vmem %s818, 32
      %v3018 = vld [vmem:[%s3017] sm:$0xf]
      %v3019 = vld [vmem:[%s3017 + $0x4] sm:$0xf]
      %v3020 = vld [vmem:[%s3017 + $0x8] sm:$0xf]
      %v3021 = vld [vmem:[%s3017 + $0xc] sm:$0xf]
      %v3026 = vunpack.c.l.b16 %v3018
      %v3027 = vunpack.c.l.b16 %v3019
      %v3028 = vunpack.c.l.b16 %v3020
      %v3029 = vunpack.c.l.b16 %v3021
      %v3030 = vpack.c.b16 %v3027, %v3026
      %v3031 = vpack.c.b16 %v3029, %v3028
      %v3035 = vsel %vm2606, %v3015, 0
      %v3038 = vsel %vm2606, %v3016, 0
      %3040 = vmatprep.subr.bf16.mxu0 0
      %3041 = vmatpush1.bf16.msra.mxu0 %v3030
      %3042 = vmatprep.subr.bf16.mxu0 0
      %3043 = vmatpush1.bf16.msra.mxu0 %v3031
      %3044 = vmatprep.subr.bf16.mxu0 0
      %3045 = vmatpush1.bf16.msra.mxu0 0
      %3046 = vmatprep.subr.bf16.mxu0 0
      %3047 = vmatpush1.bf16.msra.mxu0 0
      %3048 = vmatprep.subr.bf16.mxu0 0
      %3049 = vmatpush1.bf16.msra.mxu0 0
      %3050 = vmatprep.subr.bf16.mxu0 0
      %3051 = vmatpush1.bf16.msra.mxu0 0
      %3052 = vmatprep.subr.bf16.mxu0 0
      %3053 = vmatpush1.bf16.msra.mxu0 0
      %3054 = vmatprep.subr.bf16.mxu0 0
      %3055 = vmatpush1.bf16.msra.mxu0 0
      %3056 = vmatprep.subr.bf16.mxu0 0
      %3057 = vmatpush1.bf16.msra.mxu0 0
      %3058 = vmatprep.subr.bf16.mxu0 0
      %3059 = vmatpush1.bf16.msra.mxu0 0
      %3060 = vmatprep.subr.bf16.mxu0 0
      %3061 = vmatpush1.bf16.msra.mxu0 0
      %3062 = vmatprep.subr.bf16.mxu0 0
      %3063 = vmatpush1.bf16.msra.mxu0 0
      %3064 = vmatprep.subr.bf16.mxu0 0
      %3065 = vmatpush1.bf16.msra.mxu0 0
      %3066 = vmatprep.subr.bf16.mxu0 0
      %3067 = vmatpush1.bf16.msra.mxu0 0
      %3068 = vmatprep.subr.bf16.mxu0 0
      %3069 = vmatpush1.bf16.msra.mxu0 0
      %3070 = vmatprep.subr.bf16.mxu0 0
      %3071 = vmatpush1.bf16.msra.mxu0 0
      %3072 = vmatprep.mubr.bf16.mxu0 0
      %3073 = vmatmul.mubr.bf16.gmra.mrb[0].mxu0 %v2862
      %v3074 = vpop.f32.mrb[0].mxu0
      %v3075 = vadd.f32 0.0, %v3074
      %v3076 = vpop.f32.mrb[0].mxu0
      %v3077 = vpop.f32.mrb[0].mxu0
      %v3078 = vadd.f32 0.0, %v3077
      %v3079 = vpop.f32.mrb[0].mxu0
      %3080 = vmatprep.mubr.bf16.mxu0 0
      %3081 = vmatmul.mubr.bf16.gmra.mrb[0].mxu0 %v2865
      %v3082 = vpop.f32.mrb[0].mxu0
      %v3083 = vadd.f32 0.0, %v3082
      %v3084 = vpop.f32.mrb[0].mxu0
      %v3085 = vpop.f32.mrb[0].mxu0
      %v3086 = vadd.f32 0.0, %v3085
      %v3087 = vpop.f32.mrb[0].mxu0
      %3088 = vmatprep.mubr.bf16.mxu0 0
      %3089 = vmatmul.mubr.bf16.gmra.mrb[0].mxu0 %v3035
      %v3090 = vpop.f32.mrb[0].mxu0
      %v3091 = vadd.f32 0.0, %v3090
      %v3092 = vpop.f32.mrb[0].mxu0
      %v3093 = vpop.f32.mrb[0].mxu0
      %v3094 = vadd.f32 0.0, %v3093
      %v3095 = vpop.f32.mrb[0].mxu0
      %3096 = vmatprep.mubr.bf16.mxu0 0
      %3097 = vmatmul.mubr.bf16.gmra.mrb[0].mxu0 %v3038
      %v3098 = vpop.f32.mrb[0].mxu0
      %v3099 = vadd.f32 0.0, %v3098
      %v3100 = vpop.f32.mrb[0].mxu0
      %v3101 = vpop.f32.mrb[0].mxu0
      %v3102 = vadd.f32 0.0, %v3101
      %v3103 = vpop.f32.mrb[0].mxu0
      %3104 = vdwg.mxu0
      %v3105 = vadd.f32 %v2985, %v3075
      %v3106 = vadd.f32 %v2988, %v3078
      %v3107 = vadd.f32 %v2993, %v3083
      %v3108 = vadd.f32 %v2996, %v3086
      %v3109 = vadd.f32 %v3001, %v3091
      %v3110 = vadd.f32 %v3004, %v3094
      %v3111 = vadd.f32 %v3009, %v3099
      %v3112 = vadd.f32 %v3012, %v3102
      %v3114 = vlaneseq
      %v3115 = vshrl.u32 %v3114, 7
      %v3116 = vsub.s32 0, %v3115
      %v3117 = vrot.slane %v2795, %v3116
      %v3119 = vadd.f32 %v3105, %v3117
      %v3120 = vadd.f32 %v3106, %v3117
      %v3121 = vadd.f32 %v3107, %v3117
      %v3122 = vadd.f32 %v3108, %v3117
      %v3123 = vadd.f32 %v3109, %v3117
      %v3124 = vadd.f32 %v3110, %v3117
      %v3125 = vadd.f32 %v3111, %v3117
      %v3126 = vadd.f32 %v3112, %v3117
      %v3127 = vpack.c.bf16 %v2015, %v2014
      %v3128 = vpack.c.bf16 %v2017, %v2016
      %v3129 = vpack.c.bf16 %v2019, %v2018
      %v3130 = vpack.c.bf16 %v2021, %v2020
      %v3131 = vld [vmem:[%s826] sm:$0xf]
      %v3132 = vld [vmem:[%s826 + $0x4] sm:$0xf]
      %v3133 = vld [vmem:[%s826 + $0x8] sm:$0xf]
      %v3134 = vld [vmem:[%s826 + $0xc] sm:$0xf]
      %v3135 = vld [vmem:[%s826 + $0x10] sm:$0xf]
      %v3136 = vld [vmem:[%s826 + $0x14] sm:$0xf]
      %v3137 = vld [vmem:[%s826 + $0x18] sm:$0xf]
      %v3138 = vld [vmem:[%s826 + $0x1c] sm:$0xf]
      %v3147 = vunpack.c.l.b16 %v3131
      %v3148 = vunpack.c.l.b16 %v3132
      %v3149 = vunpack.c.l.b16 %v3133
      %v3150 = vunpack.c.l.b16 %v3134
      %v3151 = vunpack.c.l.b16 %v3135
      %v3152 = vunpack.c.l.b16 %v3136
      %v3153 = vunpack.c.l.b16 %v3137
      %v3154 = vunpack.c.l.b16 %v3138
      %v3155 = vpack.c.b16 %v3148, %v3147
      %v3156 = vpack.c.b16 %v3150, %v3149
      %v3157 = vpack.c.b16 %v3152, %v3151
      %v3158 = vpack.c.b16 %v3154, %v3153
      %v3164 = vsel %vm871, %v3127, 0
      %v3167 = vsel %vm871, %v3128, 0
      %v3170 = vsel %vm871, %v3129, 0
      %v3173 = vsel %vm871, %v3130, 0
      %3175 = vmatprep.subr.bf16.mxu0 0
      %3176 = vmatpush1.bf16.msra.mxu0 %v3155
      %3177 = vmatprep.subr.bf16.mxu0 0
      %3178 = vmatpush1.bf16.msra.mxu0 %v3156
      %3179 = vmatprep.subr.bf16.mxu0 0
      %3180 = vmatpush1.bf16.msra.mxu0 %v3157
      %3181 = vmatprep.subr.bf16.mxu0 0
      %3182 = vmatpush1.bf16.msra.mxu0 %v3158
      %3183 = vmatprep.subr.bf16.mxu0 0
      %3184 = vmatpush1.bf16.msra.mxu0 0
      %3185 = vmatprep.subr.bf16.mxu0 0
      %3186 = vmatpush1.bf16.msra.mxu0 0
      %3187 = vmatprep.subr.bf16.mxu0 0
      %3188 = vmatpush1.bf16.msra.mxu0 0
      %3189 = vmatprep.subr.bf16.mxu0 0
      %3190 = vmatpush1.bf16.msra.mxu0 0
      %3191 = vmatprep.subr.bf16.mxu0 0
      %3192 = vmatpush1.bf16.msra.mxu0 0
      %3193 = vmatprep.subr.bf16.mxu0 0
      %3194 = vmatpush1.bf16.msra.mxu0 0
      %3195 = vmatprep.subr.bf16.mxu0 0
      %3196 = vmatpush1.bf16.msra.mxu0 0
      %3197 = vmatprep.subr.bf16.mxu0 0
      %3198 = vmatpush1.bf16.msra.mxu0 0
      %3199 = vmatprep.subr.bf16.mxu0 0
      %3200 = vmatpush1.bf16.msra.mxu0 0
      %3201 = vmatprep.subr.bf16.mxu0 0
      %3202 = vmatpush1.bf16.msra.mxu0 0
      %3203 = vmatprep.subr.bf16.mxu0 0
      %3204 = vmatpush1.bf16.msra.mxu0 0
      %3205 = vmatprep.subr.bf16.mxu0 0
      %3206 = vmatpush1.bf16.msra.mxu0 0
      %3207 = vmatprep.mubr.bf16.mxu0 0
      %3208 = vmatmul.mubr.bf16.gmra.mrb[0].mxu0 %v3164
      %v3209 = vpop.f32.mrb[0].mxu0
      %v3210 = vadd.f32 0.0, %v3209
      %v3211 = vpop.f32.mrb[0].mxu0
      %v3212 = vpop.f32.mrb[0].mxu0
      %v3213 = vadd.f32 0.0, %v3212
      %v3214 = vpop.f32.mrb[0].mxu0
      %3215 = vmatprep.mubr.bf16.mxu0 0
      %3216 = vmatmul.mubr.bf16.gmra.mrb[0].mxu0 %v3167
      %v3217 = vpop.f32.mrb[0].mxu0
      %v3218 = vadd.f32 0.0, %v3217
      %v3219 = vpop.f32.mrb[0].mxu0
      %v3220 = vpop.f32.mrb[0].mxu0
      %v3221 = vadd.f32 0.0, %v3220
      %v3222 = vpop.f32.mrb[0].mxu0
      %3223 = vmatprep.mubr.bf16.mxu0 0
      %3224 = vmatmul.mubr.bf16.gmra.mrb[0].mxu0 %v3170
      %v3225 = vpop.f32.mrb[0].mxu0
      %v3226 = vadd.f32 0.0, %v3225
      %v3227 = vpop.f32.mrb[0].mxu0
      %v3228 = vpop.f32.mrb[0].mxu0
      %v3229 = vadd.f32 0.0, %v3228
      %v3230 = vpop.f32.mrb[0].mxu0
      %3231 = vmatprep.mubr.bf16.mxu0 0
      %3232 = vmatmul.mubr.bf16.gmra.mrb[0].mxu0 %v3173
      %v3233 = vpop.f32.mrb[0].mxu0
      %v3234 = vadd.f32 0.0, %v3233
      %v3235 = vpop.f32.mrb[0].mxu0
      %v3236 = vpop.f32.mrb[0].mxu0
      %v3237 = vadd.f32 0.0, %v3236
      %v3238 = vpop.f32.mrb[0].mxu0
      %3239 = vdwg.mxu0
      %v3240 = vadd.f32 %v3119, %v3210
      %v3241 = vadd.f32 %v3120, %v3213
      %v3242 = vadd.f32 %v3121, %v3218
      %v3243 = vadd.f32 %v3122, %v3221
      %v3244 = vadd.f32 %v3123, %v3226
      %v3245 = vadd.f32 %v3124, %v3229
      %v3246 = vadd.f32 %v3125, %v3234
      %v3247 = vadd.f32 %v3126, %v3237
      %v3248 = vmul.f32 %v3240, 0.70710677
      %v3249 = vmul.f32 %v3241, 0.70710677
      %v3250 = vmul.f32 %v3242, 0.70710677
      %v3251 = vmul.f32 %v3243, 0.70710677
      %v3252 = vmul.f32 %v3244, 0.70710677
      %v3253 = vmul.f32 %v3245, 0.70710677
      %v3254 = vmul.f32 %v3246, 0.70710677
      %v3255 = vmul.f32 %v3247, 0.70710677
      %v3256 = vrot.slane %v1432, 3
      %v3257 = vrot.slane %v1434, 3
      %3260 = vrot.lane.b32.xlu0 %v867, 32
      %v3261 = vpop.permute.xlu0 %3260
      %3262 = vrot.lane.b32.xlu0 %v868, 32
      %v3263 = vpop.permute.xlu0 %3262
      %v3264 = vrot.slane %v3261, 3
      %v3265 = vrot.slane %v3263, 3
      %v3266 = vsel %vm2606, %v3248, 0.0
      %v3267 = vsel %vm2606, %v3249, 0.0
      %v3268 = vadd.f32 %v3266, %v3267
      %v3269 = vrot.slane %v3268, 4
      %v3270 = vadd.f32 %v3268, %v3269
      %v3271 = vrot.slane %v3270, 2
      %v3272 = vadd.f32 %v3270, %v3271
      %v3273 = vrot.slane %v3272, 1
      %v3274 = vadd.f32 %v3272, %v3273
      %v3275 = vsel %vm2606, %v3250, 0.0
      %v3276 = vsel %vm2606, %v3251, 0.0
      %v3277 = vadd.f32 %v3275, %v3276
      %v3278 = vrot.slane %v3277, 4
      %v3279 = vadd.f32 %v3277, %v3278
      %v3280 = vrot.slane %v3279, 2
      %v3281 = vadd.f32 %v3279, %v3280
      %v3282 = vrot.slane %v3281, 1
      %v3283 = vadd.f32 %v3281, %v3282
      %v3284 = vsel %vm2606, %v3252, 0.0
      %v3285 = vsel %vm2606, %v3253, 0.0
      %v3286 = vadd.f32 %v3284, %v3285
      %v3287 = vrot.slane %v3286, 4
      %v3288 = vadd.f32 %v3286, %v3287
      %v3289 = vrot.slane %v3288, 2
      %v3290 = vadd.f32 %v3288, %v3289
      %v3291 = vrot.slane %v3290, 1
      %v3292 = vadd.f32 %v3290, %v3291
      %v3293 = vsel %vm2606, %v3254, 0.0
      %v3294 = vsel %vm2606, %v3255, 0.0
      %v3295 = vadd.f32 %v3293, %v3294
      %v3296 = vrot.slane %v3295, 4
      %v3297 = vadd.f32 %v3295, %v3296
      %v3298 = vrot.slane %v3297, 2
      %v3299 = vadd.f32 %v3297, %v3298
      %v3300 = vrot.slane %v3299, 1
      %v3301 = vadd.f32 %v3299, %v3300
      %v3302 = vmul.f32 %v3274, %v890
      %v3303 = vmul.f32 %v3283, %v890
      %v3304 = vmul.f32 %v3292, %v890
      %v3305 = vmul.f32 %v3301, %v890
      %v3306 = vsel %vm2606, %v3302, 0.0
      %v3307 = vsel %vm2606, %v3304, 0.0
      %v3308 = vadd.f32 %v3306, %v3307
      %v3309 = vsel %vm2606, %v3303, 0.0
      %v3310 = vsel %vm2606, %v3305, 0.0
      %v3311 = vadd.f32 %v3309, %v3310
      %v3312 = vmul.f32 %v3308, %v1483
      %v3313 = vmul.f32 %v3311, %v1483
      %v3314 = vsub.f32 %v3248, %v3312
      %v3315 = vsub.f32 %v3249, %v3312
      %v3316 = vsub.f32 %v3250, %v3313
      %v3317 = vsub.f32 %v3251, %v3313
      %v3318 = vsub.f32 %v3252, %v3312
      %v3319 = vsub.f32 %v3253, %v3312
      %v3320 = vsub.f32 %v3254, %v3313
      %v3321 = vsub.f32 %v3255, %v3313
      %v3322 = vmul.f32 %v3314, %v3314
      %v3323 = vmul.f32 %v3315, %v3315
      %v3324 = vmul.f32 %v3316, %v3316
      %v3325 = vmul.f32 %v3317, %v3317
      %v3326 = vmul.f32 %v3318, %v3318
      %v3327 = vmul.f32 %v3319, %v3319
      %v3328 = vmul.f32 %v3320, %v3320
      %v3329 = vmul.f32 %v3321, %v3321
      %v3330 = vsel %vm2606, %v3322, 0.0
      %v3331 = vsel %vm2606, %v3323, 0.0
      %v3332 = vadd.f32 %v3330, %v3331
      %v3333 = vrot.slane %v3332, 4
      %v3334 = vadd.f32 %v3332, %v3333
      %v3335 = vrot.slane %v3334, 2
      %v3336 = vadd.f32 %v3334, %v3335
      %v3337 = vrot.slane %v3336, 1
      %v3338 = vadd.f32 %v3336, %v3337
      %v3339 = vsel %vm2606, %v3324, 0.0
      %v3340 = vsel %vm2606, %v3325, 0.0
      %v3341 = vadd.f32 %v3339, %v3340
      %v3342 = vrot.slane %v3341, 4
      %v3343 = vadd.f32 %v3341, %v3342
      %v3344 = vrot.slane %v3343, 2
      %v3345 = vadd.f32 %v3343, %v3344
      %v3346 = vrot.slane %v3345, 1
      %v3347 = vadd.f32 %v3345, %v3346
      %v3348 = vsel %vm2606, %v3326, 0.0
      %v3349 = vsel %vm2606, %v3327, 0.0
      %v3350 = vadd.f32 %v3348, %v3349
      %v3351 = vrot.slane %v3350, 4
      %v3352 = vadd.f32 %v3350, %v3351
      %v3353 = vrot.slane %v3352, 2
      %v3354 = vadd.f32 %v3352, %v3353
      %v3355 = vrot.slane %v3354, 1
      %v3356 = vadd.f32 %v3354, %v3355
      %v3357 = vsel %vm2606, %v3328, 0.0
      %v3358 = vsel %vm2606, %v3329, 0.0
      %v3359 = vadd.f32 %v3357, %v3358
      %v3360 = vrot.slane %v3359, 4
      %v3361 = vadd.f32 %v3359, %v3360
      %v3362 = vrot.slane %v3361, 2
      %v3363 = vadd.f32 %v3361, %v3362
      %v3364 = vrot.slane %v3363, 1
      %v3365 = vadd.f32 %v3363, %v3364
      %v3366 = vmul.f32 %v3338, %v890
      %v3367 = vmul.f32 %v3347, %v890
      %v3368 = vmul.f32 %v3356, %v890
      %v3369 = vmul.f32 %v3365, %v890
      %v3370 = vsel %vm2606, %v3366, 0.0
      %v3371 = vsel %vm2606, %v3368, 0.0
      %v3372 = vadd.f32 %v3370, %v3371
      %v3373 = vsel %vm2606, %v3367, 0.0
      %v3374 = vsel %vm2606, %v3369, 0.0
      %v3375 = vadd.f32 %v3373, %v3374
      %v3376 = vmul.f32 %v3372, %v1483
      %v3377 = vmul.f32 %v3375, %v1483
      %v3378 = vadd.f32 %v3256, 1.0
      %v3379 = vadd.f32 %v3257, 1.0
      %v3380 = vadd.f32 %v3376, 1e-05
      %v3381 = vadd.f32 %v3377, 1e-05
      %v3382 = vrsqrt.pop %v3380
      %v3383 = vrsqrt.pop %v3381
      %v3384 = vmul.f32 %v3314, %v3382
      %v3385 = vmul.f32 %v3315, %v3382
      %v3386 = vmul.f32 %v3316, %v3383
      %v3387 = vmul.f32 %v3317, %v3383
      %v3388 = vmul.f32 %v3318, %v3382
      %v3389 = vmul.f32 %v3319, %v3382
      %v3390 = vmul.f32 %v3320, %v3383
      %v3391 = vmul.f32 %v3321, %v3383
      %v3394 = vlaneseq
      %v3395 = vshrl.u32 %v3394, 7
      %v3396 = vsub.s32 0, %v3395
      %v3397 = vrot.slane %v3378, %v3396
      %v3398 = vlaneseq
      %v3399 = vshrl.u32 %v3398, 7
      %v3400 = vsub.s32 0, %v3399
      %v3401 = vrot.slane %v3379, %v3400
      %v3404 = vmul.f32 %v3397, %v3384
      %v3405 = vmul.f32 %v3397, %v3385
      %v3406 = vmul.f32 %v3401, %v3386
      %v3407 = vmul.f32 %v3401, %v3387
      %v3408 = vmul.f32 %v3397, %v3388
      %v3409 = vmul.f32 %v3397, %v3389
      %v3410 = vmul.f32 %v3401, %v3390
      %v3411 = vmul.f32 %v3401, %v3391
      %v3412 = vlaneseq
      %v3413 = vshrl.u32 %v3412, 7
      %v3414 = vsub.s32 0, %v3413
      %v3415 = vrot.slane %v3264, %v3414
      %v3416 = vlaneseq
      %v3417 = vshrl.u32 %v3416, 7
      %v3418 = vsub.s32 0, %v3417
      %v3419 = vrot.slane %v3265, %v3418
      %v3422 = vadd.f32 %v3404, %v3415
      %v3423 = vadd.f32 %v3405, %v3415
      %v3424 = vadd.f32 %v3406, %v3419
      %v3425 = vadd.f32 %v3407, %v3419
      %v3426 = vadd.f32 %v3408, %v3415
      %v3427 = vadd.f32 %v3409, %v3415
      %v3428 = vadd.f32 %v3410, %v3419
      %v3429 = vadd.f32 %v3411, %v3419
      %vm3430 = vcmp.ge.f32.partialorder %v3422, 0.0
      %vm3431 = vcmp.ge.f32.partialorder %v3423, 0.0
      %vm3432 = vcmp.ge.f32.partialorder %v3424, 0.0
      %vm3433 = vcmp.ge.f32.partialorder %v3425, 0.0
      %vm3434 = vcmp.ge.f32.partialorder %v3426, 0.0
      %vm3435 = vcmp.ge.f32.partialorder %v3427, 0.0
      %vm3436 = vcmp.ge.f32.partialorder %v3428, 0.0
      %vm3437 = vcmp.ge.f32.partialorder %v3429, 0.0
      %v3438 = vmul.f32 %v3422, 0.2
      %v3439 = vmul.f32 %v3423, 0.2
      %v3440 = vmul.f32 %v3424, 0.2
      %v3441 = vmul.f32 %v3425, 0.2
      %v3442 = vmul.f32 %v3426, 0.2
      %v3443 = vmul.f32 %v3427, 0.2
      %v3444 = vmul.f32 %v3428, 0.2
      %v3445 = vmul.f32 %v3429, 0.2
      %v3446 = vsel %vm3430, %v3422, %v3438
      %v3447 = vsel %vm3431, %v3423, %v3439
      %v3448 = vsel %vm3432, %v3424, %v3440
      %v3449 = vsel %vm3433, %v3425, %v3441
      %v3450 = vsel %vm3434, %v3426, %v3442
      %v3451 = vsel %vm3435, %v3427, %v3443
      %v3452 = vsel %vm3436, %v3428, %v3444
      %v3453 = vsel %vm3437, %v3429, %v3445
      %v3454 = vld [vmem:[%s834] sm:$0x1]
      %v3459 = vrot.slane %v3450, 7
      %v3460 = vrot.slane %v3451, 7
      %v3461 = vsel %vm1051, %v3459, %v3460
      %v3462 = vrot.slane %v3452, 7
      %v3463 = vrot.slane %v3453, 7
      %v3464 = vsel %vm1051, %v3462, %v3463
      %v3469 = vsel %vm1051, 0.0, %v3459
      %v3470 = vsel %vm1051, 0.0, %v3462
      %v3475 = vrot.slane %v3446, 1
      %v3476 = vrot.slane %v3447, 1
      %v3477 = vsel %vm985, %v3475, %v3476
      %v3478 = vrot.slane %v3448, 1
      %v3479 = vrot.slane %v3449, 1
      %v3480 = vsel %vm985, %v3478, %v3479
      %v3485 = vsel %vm985, %v3476, 0.0
      %v3486 = vsel %vm985, %v3479, 0.0
      %v3487 = vpack.c.bf16 %v3461, %v3469
      %v3488 = vpack.c.bf16 %v3464, %v3470
      %v3489 = vpack.c.bf16 %v3447, %v3446
      %v3490 = vpack.c.bf16 %v3449, %v3448
      %v3491 = vld [vmem:[%s831] sm:$0xf]
      %v3492 = vld [vmem:[%s831 + $0x4] sm:$0xf]
      %v3493 = vld [vmem:[%s831 + $0x8] sm:$0xf]
      %v3494 = vld [vmem:[%s831 + $0xc] sm:$0xf]
      %v3495 = vpack.c.bf16 %v3451, %v3450
      %v3496 = vpack.c.bf16 %v3453, %v3452
      %s3497 = scalar_lea.vmem %s831, 16
      %v3498 = vld [vmem:[%s3497] sm:$0xf]
      %v3499 = vld [vmem:[%s3497 + $0x4] sm:$0xf]
      %v3500 = vld [vmem:[%s3497 + $0x8] sm:$0xf]
      %v3501 = vld [vmem:[%s3497 + $0xc] sm:$0xf]
      %v3506 = vunpack.c.l.b16 %v3498
      %v3507 = vunpack.c.l.b16 %v3499
      %v3508 = vunpack.c.l.b16 %v3500
      %v3509 = vunpack.c.l.b16 %v3501
      %v3510 = vpack.c.b16 %v3507, %v3506
      %v3511 = vpack.c.b16 %v3509, %v3508
      %v3515 = vsel %vm2606, %v3489, 0
      %v3518 = vsel %vm2606, %v3490, 0
      %v3521 = vsel %vm2606, %v3495, 0
      %v3524 = vsel %vm2606, %v3496, 0
      %3526 = vmatprep.subr.bf16.mxu0 0
      %3527 = vmatpush1.bf16.msra.mxu0 %v3510
      %3528 = vmatprep.subr.bf16.mxu0 0
      %3529 = vmatpush1.bf16.msra.mxu0 %v3511
      %3530 = vmatprep.subr.bf16.mxu0 0
      %3531 = vmatpush1.bf16.msra.mxu0 0
      %3532 = vmatprep.subr.bf16.mxu0 0
      %3533 = vmatpush1.bf16.msra.mxu0 0
      %3534 = vmatprep.subr.bf16.mxu0 0
      %3535 = vmatpush1.bf16.msra.mxu0 0
      %3536 = vmatprep.subr.bf16.mxu0 0
      %3537 = vmatpush1.bf16.msra.mxu0 0
      %3538 = vmatprep.subr.bf16.mxu0 0
      %3539 = vmatpush1.bf16.msra.mxu0 0
      %3540 = vmatprep.subr.bf16.mxu0 0
      %3541 = vmatpush1.bf16.msra.mxu0 0
      %3542 = vmatprep.subr.bf16.mxu0 0
      %3543 = vmatpush1.bf16.msra.mxu0 0
      %3544 = vmatprep.subr.bf16.mxu0 0
      %3545 = vmatpush1.bf16.msra.mxu0 0
      %3546 = vmatprep.subr.bf16.mxu0 0
      %3547 = vmatpush1.bf16.msra.mxu0 0
      %3548 = vmatprep.subr.bf16.mxu0 0
      %3549 = vmatpush1.bf16.msra.mxu0 0
      %3550 = vmatprep.subr.bf16.mxu0 0
      %3551 = vmatpush1.bf16.msra.mxu0 0
      %3552 = vmatprep.subr.bf16.mxu0 0
      %3553 = vmatpush1.bf16.msra.mxu0 0
      %3554 = vmatprep.subr.bf16.mxu0 0
      %3555 = vmatpush1.bf16.msra.mxu0 0
      %3556 = vmatprep.subr.bf16.mxu0 0
      %3557 = vmatpush1.bf16.msra.mxu0 0
      %3558 = vmatprep.mubr.bf16.mxu0 0
      %3559 = vmatmul.mubr.bf16.gmra.mrb[0].mxu0 %v3515
      %v3560 = vpop.f32.mrb[0].mxu0
      %v3561 = vadd.f32 0.0, %v3560
      %v3562 = vpop.f32.mrb[0].mxu0
      %v3563 = vpop.f32.mrb[0].mxu0
      %v3564 = vadd.f32 0.0, %v3563
      %v3565 = vpop.f32.mrb[0].mxu0
      %3566 = vmatprep.mubr.bf16.mxu0 0
      %3567 = vmatmul.mubr.bf16.gmra.mrb[0].mxu0 %v3518
      %v3568 = vpop.f32.mrb[0].mxu0
      %v3569 = vadd.f32 0.0, %v3568
      %v3570 = vpop.f32.mrb[0].mxu0
      %v3571 = vpop.f32.mrb[0].mxu0
      %v3572 = vadd.f32 0.0, %v3571
      %v3573 = vpop.f32.mrb[0].mxu0
      %3574 = vmatprep.mubr.bf16.mxu0 0
      %3575 = vmatmul.mubr.bf16.gmra.mrb[0].mxu0 %v3521
      %v3576 = vpop.f32.mrb[0].mxu0
      %v3577 = vadd.f32 0.0, %v3576
      %v3578 = vpop.f32.mrb[0].mxu0
      %v3579 = vpop.f32.mrb[0].mxu0
      %v3580 = vadd.f32 0.0, %v3579
      %v3581 = vpop.f32.mrb[0].mxu0
      %3582 = vmatprep.mubr.bf16.mxu0 0
      %3583 = vmatmul.mubr.bf16.gmra.mrb[0].mxu0 %v3524
      %v3584 = vpop.f32.mrb[0].mxu0
      %v3585 = vadd.f32 0.0, %v3584
      %v3586 = vpop.f32.mrb[0].mxu0
      %v3587 = vpop.f32.mrb[0].mxu0
      %v3588 = vadd.f32 0.0, %v3587
      %v3589 = vpop.f32.mrb[0].mxu0
      %3590 = vdwg.mxu0
      %v3595 = vunpack.c.l.b16 %v3491
      %v3596 = vunpack.c.l.b16 %v3492
      %v3597 = vunpack.c.l.b16 %v3493
      %v3598 = vunpack.c.l.b16 %v3494
      %v3599 = vpack.c.b16 %v3596, %v3595
      %v3600 = vpack.c.b16 %v3598, %v3597
      %v3604 = vsel %vm2606, %v3487, 0
      %v3607 = vsel %vm2606, %v3488, 0
      %3609 = vmatprep.subr.bf16.mxu0 0
      %3610 = vmatpush1.bf16.msra.mxu0 %v3599
      %3611 = vmatprep.subr.bf16.mxu0 0
      %3612 = vmatpush1.bf16.msra.mxu0 %v3600
      %3613 = vmatprep.subr.bf16.mxu0 0
      %3614 = vmatpush1.bf16.msra.mxu0 0
      %3615 = vmatprep.subr.bf16.mxu0 0
      %3616 = vmatpush1.bf16.msra.mxu0 0
      %3617 = vmatprep.subr.bf16.mxu0 0
      %3618 = vmatpush1.bf16.msra.mxu0 0
      %3619 = vmatprep.subr.bf16.mxu0 0
      %3620 = vmatpush1.bf16.msra.mxu0 0
      %3621 = vmatprep.subr.bf16.mxu0 0
      %3622 = vmatpush1.bf16.msra.mxu0 0
      %3623 = vmatprep.subr.bf16.mxu0 0
      %3624 = vmatpush1.bf16.msra.mxu0 0
      %3625 = vmatprep.subr.bf16.mxu0 0
      %3626 = vmatpush1.bf16.msra.mxu0 0
      %3627 = vmatprep.subr.bf16.mxu0 0
      %3628 = vmatpush1.bf16.msra.mxu0 0
      %3629 = vmatprep.subr.bf16.mxu0 0
      %3630 = vmatpush1.bf16.msra.mxu0 0
      %3631 = vmatprep.subr.bf16.mxu0 0
      %3632 = vmatpush1.bf16.msra.mxu0 0
      %3633 = vmatprep.subr.bf16.mxu0 0
      %3634 = vmatpush1.bf16.msra.mxu0 0
      %3635 = vmatprep.subr.bf16.mxu0 0
      %3636 = vmatpush1.bf16.msra.mxu0 0
      %3637 = vmatprep.subr.bf16.mxu0 0
      %3638 = vmatpush1.bf16.msra.mxu0 0
      %3639 = vmatprep.subr.bf16.mxu0 0
      %3640 = vmatpush1.bf16.msra.mxu0 0
      %3641 = vmatprep.mubr.bf16.mxu0 0
      %3642 = vmatmul.mubr.bf16.gmra.mrb[0].mxu0 %v3604
      %v3643 = vpop.f32.mrb[0].mxu0
      %v3644 = vadd.f32 %v3561, %v3643
      %v3645 = vpop.f32.mrb[0].mxu0
      %v3646 = vpop.f32.mrb[0].mxu0
      %v3647 = vadd.f32 %v3564, %v3646
      %v3648 = vpop.f32.mrb[0].mxu0
      %3649 = vmatprep.mubr.bf16.mxu0 0
      %3650 = vmatmul.mubr.bf16.gmra.mrb[0].mxu0 %v3607
      %v3651 = vpop.f32.mrb[0].mxu0
      %v3652 = vadd.f32 %v3569, %v3651
      %v3653 = vpop.f32.mrb[0].mxu0
      %v3654 = vpop.f32.mrb[0].mxu0
      %v3655 = vadd.f32 %v3572, %v3654
      %v3656 = vpop.f32.mrb[0].mxu0
      %3657 = vmatprep.mubr.bf16.mxu0 0
      %3658 = vmatmul.mubr.bf16.gmra.mrb[0].mxu0 %v3515
      %v3659 = vpop.f32.mrb[0].mxu0
      %v3660 = vadd.f32 %v3577, %v3659
      %v3661 = vpop.f32.mrb[0].mxu0
      %v3662 = vpop.f32.mrb[0].mxu0
      %v3663 = vadd.f32 %v3580, %v3662
      %v3664 = vpop.f32.mrb[0].mxu0
      %3665 = vmatprep.mubr.bf16.mxu0 0
      %3666 = vmatmul.mubr.bf16.gmra.mrb[0].mxu0 %v3518
      %v3667 = vpop.f32.mrb[0].mxu0
      %v3668 = vadd.f32 %v3585, %v3667
      %v3669 = vpop.f32.mrb[0].mxu0
      %v3670 = vpop.f32.mrb[0].mxu0
      %v3671 = vadd.f32 %v3588, %v3670
      %v3672 = vpop.f32.mrb[0].mxu0
      %3673 = vdwg.mxu0
      %v3674 = vpack.c.bf16 %v3485, %v3477
      %v3675 = vpack.c.bf16 %v3486, %v3480
      %s3676 = scalar_lea.vmem %s831, 32
      %v3677 = vld [vmem:[%s3676] sm:$0xf]
      %v3678 = vld [vmem:[%s3676 + $0x4] sm:$0xf]
      %v3679 = vld [vmem:[%s3676 + $0x8] sm:$0xf]
      %v3680 = vld [vmem:[%s3676 + $0xc] sm:$0xf]
      %v3685 = vunpack.c.l.b16 %v3677
      %v3686 = vunpack.c.l.b16 %v3678
      %v3687 = vunpack.c.l.b16 %v3679
      %v3688 = vunpack.c.l.b16 %v3680
      %v3689 = vpack.c.b16 %v3686, %v3685
      %v3690 = vpack.c.b16 %v3688, %v3687
      %v3694 = vsel %vm2606, %v3674, 0
      %v3697 = vsel %vm2606, %v3675, 0
      %3699 = vmatprep.subr.bf16.mxu0 0
      %3700 = vmatpush1.bf16.msra.mxu0 %v3689
      %3701 = vmatprep.subr.bf16.mxu0 0
      %3702 = vmatpush1.bf16.msra.mxu0 %v3690
      %3703 = vmatprep.subr.bf16.mxu0 0
      %3704 = vmatpush1.bf16.msra.mxu0 0
      %3705 = vmatprep.subr.bf16.mxu0 0
      %3706 = vmatpush1.bf16.msra.mxu0 0
      %3707 = vmatprep.subr.bf16.mxu0 0
      %3708 = vmatpush1.bf16.msra.mxu0 0
      %3709 = vmatprep.subr.bf16.mxu0 0
      %3710 = vmatpush1.bf16.msra.mxu0 0
      %3711 = vmatprep.subr.bf16.mxu0 0
      %3712 = vmatpush1.bf16.msra.mxu0 0
      %3713 = vmatprep.subr.bf16.mxu0 0
      %3714 = vmatpush1.bf16.msra.mxu0 0
      %3715 = vmatprep.subr.bf16.mxu0 0
      %3716 = vmatpush1.bf16.msra.mxu0 0
      %3717 = vmatprep.subr.bf16.mxu0 0
      %3718 = vmatpush1.bf16.msra.mxu0 0
      %3719 = vmatprep.subr.bf16.mxu0 0
      %3720 = vmatpush1.bf16.msra.mxu0 0
      %3721 = vmatprep.subr.bf16.mxu0 0
      %3722 = vmatpush1.bf16.msra.mxu0 0
      %3723 = vmatprep.subr.bf16.mxu0 0
      %3724 = vmatpush1.bf16.msra.mxu0 0
      %3725 = vmatprep.subr.bf16.mxu0 0
      %3726 = vmatpush1.bf16.msra.mxu0 0
      %3727 = vmatprep.subr.bf16.mxu0 0
      %3728 = vmatpush1.bf16.msra.mxu0 0
      %3729 = vmatprep.subr.bf16.mxu0 0
      %3730 = vmatpush1.bf16.msra.mxu0 0
      %3731 = vmatprep.mubr.bf16.mxu0 0
      %3732 = vmatmul.mubr.bf16.gmra.mrb[0].mxu0 %v3521
      %v3733 = vpop.f32.mrb[0].mxu0
      %v3734 = vadd.f32 0.0, %v3733
      %v3735 = vpop.f32.mrb[0].mxu0
      %v3736 = vpop.f32.mrb[0].mxu0
      %v3737 = vadd.f32 0.0, %v3736
      %v3738 = vpop.f32.mrb[0].mxu0
      %3739 = vmatprep.mubr.bf16.mxu0 0
      %3740 = vmatmul.mubr.bf16.gmra.mrb[0].mxu0 %v3524
      %v3741 = vpop.f32.mrb[0].mxu0
      %v3742 = vadd.f32 0.0, %v3741
      %v3743 = vpop.f32.mrb[0].mxu0
      %v3744 = vpop.f32.mrb[0].mxu0
      %v3745 = vadd.f32 0.0, %v3744
      %v3746 = vpop.f32.mrb[0].mxu0
      %3747 = vmatprep.mubr.bf16.mxu0 0
      %3748 = vmatmul.mubr.bf16.gmra.mrb[0].mxu0 %v3694
      %v3749 = vpop.f32.mrb[0].mxu0
      %v3750 = vadd.f32 0.0, %v3749
      %v3751 = vpop.f32.mrb[0].mxu0
      %v3752 = vpop.f32.mrb[0].mxu0
      %v3753 = vadd.f32 0.0, %v3752
      %v3754 = vpop.f32.mrb[0].mxu0
      %3755 = vmatprep.mubr.bf16.mxu0 0
      %3756 = vmatmul.mubr.bf16.gmra.mrb[0].mxu0 %v3697
      %v3757 = vpop.f32.mrb[0].mxu0
      %v3758 = vadd.f32 0.0, %v3757
      %v3759 = vpop.f32.mrb[0].mxu0
      %v3760 = vpop.f32.mrb[0].mxu0
      %v3761 = vadd.f32 0.0, %v3760
      %v3762 = vpop.f32.mrb[0].mxu0
      %3763 = vdwg.mxu0
      %v3764 = vadd.f32 %v3644, %v3734
      %v3765 = vadd.f32 %v3647, %v3737
      %v3766 = vadd.f32 %v3652, %v3742
      %v3767 = vadd.f32 %v3655, %v3745
      %v3768 = vadd.f32 %v3660, %v3750
      %v3769 = vadd.f32 %v3663, %v3753
      %v3770 = vadd.f32 %v3668, %v3758
      %v3771 = vadd.f32 %v3671, %v3761
      %v3773 = vlaneseq
      %v3774 = vshrl.u32 %v3773, 7
      %v3775 = vsub.s32 0, %v3774
      %v3776 = vrot.slane %v3454, %v3775
      %v3778 = vadd.f32 %v3764, %v3776
      %v3779 = vadd.f32 %v3765, %v3776
      %v3780 = vadd.f32 %v3766, %v3776
      %v3781 = vadd.f32 %v3767, %v3776
      %v3782 = vadd.f32 %v3768, %v3776
      %v3783 = vadd.f32 %v3769, %v3776
      %v3784 = vadd.f32 %v3770, %v3776
      %v3785 = vadd.f32 %v3771, %v3776
      %v3788 = vunpack.c.l.s4 1966171168
      %v3789 = vunpack.c.0.s8 %v3788
      %v3790 = vlaneseq
      %v3791 = vshrl.u32 %v3790, 7
      %v3792 = vsub.s32 %v3789, %v3791
      %v3793 = vrot.slane %v855, %v3792
      %v3794 = vcombine.high %v3793, %v3793
      %vm3797 = vcmask 130048
      %v3798 = vsel %vm3797, %v3778, 0.0
      %v3799 = vsel %vm3797, %v3779, 0.0
      %v3800 = vadd.f32 %v3798, %v3799
      %v3801 = vrot.slane %v3800, 4
      %v3802 = vadd.f32 %v3800, %v3801
      %v3803 = vrot.slane %v3802, 2
      %v3804 = vadd.f32 %v3802, %v3803
      %v3805 = vrot.slane %v3804, 1
      %v3806 = vadd.f32 %v3804, %v3805
      %v3807 = vsel %vm3797, %v3780, 0.0
      %v3808 = vsel %vm3797, %v3781, 0.0
      %v3809 = vadd.f32 %v3807, %v3808
      %v3810 = vrot.slane %v3809, 4
      %v3811 = vadd.f32 %v3809, %v3810
      %v3812 = vrot.slane %v3811, 2
      %v3813 = vadd.f32 %v3811, %v3812
      %v3814 = vrot.slane %v3813, 1
      %v3815 = vadd.f32 %v3813, %v3814
      %v3816 = vsel %vm3797, %v3782, 0.0
      %v3817 = vsel %vm3797, %v3783, 0.0
      %v3818 = vadd.f32 %v3816, %v3817
      %v3819 = vrot.slane %v3818, 4
      %v3820 = vadd.f32 %v3818, %v3819
      %v3821 = vrot.slane %v3820, 2
      %v3822 = vadd.f32 %v3820, %v3821
      %v3823 = vrot.slane %v3822, 1
      %v3824 = vadd.f32 %v3822, %v3823
      %v3825 = vsel %vm3797, %v3784, 0.0
      %v3826 = vsel %vm3797, %v3785, 0.0
      %v3827 = vadd.f32 %v3825, %v3826
      %v3828 = vrot.slane %v3827, 4
      %v3829 = vadd.f32 %v3827, %v3828
      %v3830 = vrot.slane %v3829, 2
      %v3831 = vadd.f32 %v3829, %v3830
      %v3832 = vrot.slane %v3831, 1
      %v3833 = vadd.f32 %v3831, %v3832
      %v3834 = vmul.f32 %v3806, %v890
      %v3835 = vmul.f32 %v3815, %v890
      %v3836 = vmul.f32 %v3824, %v890
      %v3837 = vmul.f32 %v3833, %v890
      %v3838 = vsel %vm3797, %v3834, 0.0
      %v3839 = vsel %vm3797, %v3836, 0.0
      %v3840 = vadd.f32 %v3838, %v3839
      %v3841 = vsel %vm3797, %v3835, 0.0
      %v3842 = vsel %vm3797, %v3837, 0.0
      %v3843 = vadd.f32 %v3841, %v3842
      %v3844 = vmul.f32 %v3840, %v1483
      %v3845 = vmul.f32 %v3843, %v1483
      %v3846 = vsub.f32 %v3778, %v3844
      %v3847 = vsub.f32 %v3779, %v3844
      %v3848 = vsub.f32 %v3780, %v3845
      %v3849 = vsub.f32 %v3781, %v3845
      %v3850 = vsub.f32 %v3782, %v3844
      %v3851 = vsub.f32 %v3783, %v3844
      %v3852 = vsub.f32 %v3784, %v3845
      %v3853 = vsub.f32 %v3785, %v3845
      %v3854 = vmul.f32 %v3846, %v3846
      %v3855 = vmul.f32 %v3847, %v3847
      %v3856 = vmul.f32 %v3848, %v3848
      %v3857 = vmul.f32 %v3849, %v3849
      %v3858 = vmul.f32 %v3850, %v3850
      %v3859 = vmul.f32 %v3851, %v3851
      %v3860 = vmul.f32 %v3852, %v3852
      %v3861 = vmul.f32 %v3853, %v3853
      %v3862 = vsel %vm3797, %v3854, 0.0
      %v3863 = vsel %vm3797, %v3855, 0.0
      %v3864 = vadd.f32 %v3862, %v3863
      %v3865 = vrot.slane %v3864, 4
      %v3866 = vadd.f32 %v3864, %v3865
      %v3867 = vrot.slane %v3866, 2
      %v3868 = vadd.f32 %v3866, %v3867
      %v3869 = vrot.slane %v3868, 1
      %v3870 = vadd.f32 %v3868, %v3869
      %v3871 = vsel %vm3797, %v3856, 0.0
      %v3872 = vsel %vm3797, %v3857, 0.0
      %v3873 = vadd.f32 %v3871, %v3872
      %v3874 = vrot.slane %v3873, 4
      %v3875 = vadd.f32 %v3873, %v3874
      %v3876 = vrot.slane %v3875, 2
      %v3877 = vadd.f32 %v3875, %v3876
      %v3878 = vrot.slane %v3877, 1
      %v3879 = vadd.f32 %v3877, %v3878
      %v3880 = vsel %vm3797, %v3858, 0.0
      %v3881 = vsel %vm3797, %v3859, 0.0
      %v3882 = vadd.f32 %v3880, %v3881
      %v3883 = vrot.slane %v3882, 4
      %v3884 = vadd.f32 %v3882, %v3883
      %v3885 = vrot.slane %v3884, 2
      %v3886 = vadd.f32 %v3884, %v3885
      %v3887 = vrot.slane %v3886, 1
      %v3888 = vadd.f32 %v3886, %v3887
      %v3889 = vsel %vm3797, %v3860, 0.0
      %v3890 = vsel %vm3797, %v3861, 0.0
      %v3891 = vadd.f32 %v3889, %v3890
      %v3892 = vrot.slane %v3891, 4
      %v3893 = vadd.f32 %v3891, %v3892
      %v3894 = vrot.slane %v3893, 2
      %v3895 = vadd.f32 %v3893, %v3894
      %v3896 = vrot.slane %v3895, 1
      %v3897 = vadd.f32 %v3895, %v3896
      %v3898 = vmul.f32 %v3870, %v890
      %v3899 = vmul.f32 %v3879, %v890
      %v3900 = vmul.f32 %v3888, %v890
      %v3901 = vmul.f32 %v3897, %v890
      %v3902 = vsel %vm3797, %v3898, 0.0
      %v3903 = vsel %vm3797, %v3900, 0.0
      %v3904 = vadd.f32 %v3902, %v3903
      %v3905 = vsel %vm3797, %v3899, 0.0
      %v3906 = vsel %vm3797, %v3901, 0.0
      %v3907 = vadd.f32 %v3905, %v3906
      %v3908 = vmul.f32 %v3904, %v1483
      %v3909 = vmul.f32 %v3907, %v1483
      %v3910 = vadd.f32 %v3793, 1.0
      %v3911 = vadd.f32 %v3794, 1.0
      %v3912 = vadd.f32 %v3908, 1e-05
      %v3913 = vadd.f32 %v3909, 1e-05
      %v3914 = vrsqrt.pop %v3912
      %v3915 = vrsqrt.pop %v3913
      %v3916 = vmul.f32 %v3846, %v3914
      %v3917 = vmul.f32 %v3847, %v3914
      %v3918 = vmul.f32 %v3848, %v3915
      %v3919 = vmul.f32 %v3849, %v3915
      %v3920 = vmul.f32 %v3850, %v3914
      %v3921 = vmul.f32 %v3851, %v3914
      %v3922 = vmul.f32 %v3852, %v3915
      %v3923 = vmul.f32 %v3853, %v3915
      %v3926 = vlaneseq
      %v3927 = vshrl.u32 %v3926, 7
      %v3928 = vsub.s32 0, %v3927
      %v3929 = vrot.slane %v3910, %v3928
      %v3930 = vlaneseq
      %v3931 = vshrl.u32 %v3930, 7
      %v3932 = vsub.s32 0, %v3931
      %v3933 = vrot.slane %v3911, %v3932
      %v3936 = vmul.f32 %v3929, %v3916
      %v3937 = vmul.f32 %v3929, %v3917
      %v3938 = vmul.f32 %v3933, %v3918
      %v3939 = vmul.f32 %v3933, %v3919
      %v3940 = vmul.f32 %v3929, %v3920
      %v3941 = vmul.f32 %v3929, %v3921
      %v3942 = vmul.f32 %v3933, %v3922
      %v3943 = vmul.f32 %v3933, %v3923
      %v3944 = vlaneseq
      %v3945 = vshrl.u32 %v3944, 7
      %v3946 = vsub.s32 0, %v3945
      %v3947 = vrot.slane %v3793, %v3946
      %v3948 = vlaneseq
      %v3949 = vshrl.u32 %v3948, 7
      %v3950 = vsub.s32 0, %v3949
      %v3951 = vrot.slane %v3794, %v3950
      %3952 = vrot.lane.b32.xlu0 %v3947, 112
      %v3953 = vpop.permute.xlu0 %3952
      %3954 = vrot.lane.b32.xlu0 %v3951, 112
      %v3955 = vpop.permute.xlu0 %3954
      %v3958 = vadd.f32 %v3936, %v3953
      %v3959 = vadd.f32 %v3937, %v3953
      %v3960 = vadd.f32 %v3938, %v3955
      %v3961 = vadd.f32 %v3939, %v3955
      %v3962 = vadd.f32 %v3940, %v3953
      %v3963 = vadd.f32 %v3941, %v3953
      %v3964 = vadd.f32 %v3942, %v3955
      %v3965 = vadd.f32 %v3943, %v3955
      %vm3966 = vcmp.ge.f32.partialorder %v3958, 0.0
      %vm3967 = vcmp.ge.f32.partialorder %v3959, 0.0
      %vm3968 = vcmp.ge.f32.partialorder %v3960, 0.0
      %vm3969 = vcmp.ge.f32.partialorder %v3961, 0.0
      %vm3970 = vcmp.ge.f32.partialorder %v3962, 0.0
      %vm3971 = vcmp.ge.f32.partialorder %v3963, 0.0
      %vm3972 = vcmp.ge.f32.partialorder %v3964, 0.0
      %vm3973 = vcmp.ge.f32.partialorder %v3965, 0.0
      %v3974 = vmul.f32 %v3958, 0.2
      %v3975 = vmul.f32 %v3959, 0.2
      %v3976 = vmul.f32 %v3960, 0.2
      %v3977 = vmul.f32 %v3961, 0.2
      %v3978 = vmul.f32 %v3962, 0.2
      %v3979 = vmul.f32 %v3963, 0.2
      %v3980 = vmul.f32 %v3964, 0.2
      %v3981 = vmul.f32 %v3965, 0.2
      %v3982 = vsel %vm3966, %v3958, %v3974
      %v3983 = vsel %vm3967, %v3959, %v3975
      %v3984 = vsel %vm3968, %v3960, %v3976
      %v3985 = vsel %vm3969, %v3961, %v3977
      %v3986 = vsel %vm3970, %v3962, %v3978
      %v3987 = vsel %vm3971, %v3963, %v3979
      %v3988 = vsel %vm3972, %v3964, %v3980
      %v3989 = vsel %vm3973, %v3965, %v3981
      %v3990 = vld [vmem:[%s842] sm:$0x1]
      %v3995 = vrot.slane %v3986, 7
      %v3996 = vrot.slane %v3987, 7
      %v3997 = vsel %vm1051, %v3995, %v3996
      %v3998 = vrot.slane %v3988, 7
      %v3999 = vrot.slane %v3989, 7
      %v4000 = vsel %vm1051, %v3998, %v3999
      %v4005 = vsel %vm1051, 0.0, %v3995
      %v4006 = vsel %vm1051, 0.0, %v3998
      %v4011 = vrot.slane %v3982, 1
      %v4012 = vrot.slane %v3983, 1
      %v4013 = vsel %vm985, %v4011, %v4012
      %v4014 = vrot.slane %v3984, 1
      %v4015 = vrot.slane %v3985, 1
      %v4016 = vsel %vm985, %v4014, %v4015
      %v4021 = vsel %vm985, %v4012, 0.0
      %v4022 = vsel %vm985, %v4015, 0.0
      %v4023 = vpack.c.bf16 %v3997, %v4005
      %v4024 = vpack.c.bf16 %v4000, %v4006
      %v4025 = vpack.c.bf16 %v3983, %v3982
      %v4026 = vpack.c.bf16 %v3985, %v3984
      %v4027 = vld [vmem:[%s839] sm:$0xf]
      %v4028 = vld [vmem:[%s839 + $0x4] sm:$0xf]
      %v4029 = vpack.c.bf16 %v3987, %v3986
      %v4030 = vpack.c.bf16 %v3989, %v3988
      %s4031 = scalar_lea.vmem %s839, 8
      %v4032 = vld [vmem:[%s4031] sm:$0xf]
      %v4033 = vld [vmem:[%s4031 + $0x4] sm:$0xf]
      %v4036 = vunpack.c.l.b16 %v4032
      %v4037 = vunpack.c.l.b16 %v4033
      %v4038 = vpack.c.b16 %v4037, %v4036
      %v4041 = vsel %vm3797, %v4025, 0
      %v4044 = vsel %vm3797, %v4026, 0
      %v4047 = vsel %vm3797, %v4029, 0
      %v4050 = vsel %vm3797, %v4030, 0
      %4052 = vmatprep.subr.bf16.mxu0 0
      %4053 = vmatpush1.bf16.msra.mxu0 %v4038
      %4054 = vmatprep.subr.bf16.mxu0 0
      %4055 = vmatpush1.bf16.msra.mxu0 0
      %4056 = vmatprep.subr.bf16.mxu0 0
      %4057 = vmatpush1.bf16.msra.mxu0 0
      %4058 = vmatprep.subr.bf16.mxu0 0
      %4059 = vmatpush1.bf16.msra.mxu0 0
      %4060 = vmatprep.subr.bf16.mxu0 0
      %4061 = vmatpush1.bf16.msra.mxu0 0
      %4062 = vmatprep.subr.bf16.mxu0 0
      %4063 = vmatpush1.bf16.msra.mxu0 0
      %4064 = vmatprep.subr.bf16.mxu0 0
      %4065 = vmatpush1.bf16.msra.mxu0 0
      %4066 = vmatprep.subr.bf16.mxu0 0
      %4067 = vmatpush1.bf16.msra.mxu0 0
      %4068 = vmatprep.subr.bf16.mxu0 0
      %4069 = vmatpush1.bf16.msra.mxu0 0
      %4070 = vmatprep.subr.bf16.mxu0 0
      %4071 = vmatpush1.bf16.msra.mxu0 0
      %4072 = vmatprep.subr.bf16.mxu0 0
      %4073 = vmatpush1.bf16.msra.mxu0 0
      %4074 = vmatprep.subr.bf16.mxu0 0
      %4075 = vmatpush1.bf16.msra.mxu0 0
      %4076 = vmatprep.subr.bf16.mxu0 0
      %4077 = vmatpush1.bf16.msra.mxu0 0
      %4078 = vmatprep.subr.bf16.mxu0 0
      %4079 = vmatpush1.bf16.msra.mxu0 0
      %4080 = vmatprep.subr.bf16.mxu0 0
      %4081 = vmatpush1.bf16.msra.mxu0 0
      %4082 = vmatprep.subr.bf16.mxu0 0
      %4083 = vmatpush1.bf16.msra.mxu0 0
      %4084 = vmatprep.mubr.bf16.mxu0 0
      %4085 = vmatmul.mubr.bf16.gmra.mrb[0].mxu0 %v4041
      %v4086 = vpop.f32.mrb[0].mxu0
      %v4087 = vadd.f32 0.0, %v4086
      %v4088 = vpop.f32.mrb[0].mxu0
      %v4089 = vpop.f32.mrb[0].mxu0
      %v4090 = vadd.f32 0.0, %v4089
      %v4091 = vpop.f32.mrb[0].mxu0
      %4092 = vmatprep.mubr.bf16.mxu0 0
      %4093 = vmatmul.mubr.bf16.gmra.mrb[0].mxu0 %v4044
      %v4094 = vpop.f32.mrb[0].mxu0
      %v4095 = vadd.f32 0.0, %v4094
      %v4096 = vpop.f32.mrb[0].mxu0
      %v4097 = vpop.f32.mrb[0].mxu0
      %v4098 = vadd.f32 0.0, %v4097
      %v4099 = vpop.f32.mrb[0].mxu0
      %4100 = vmatprep.mubr.bf16.mxu0 0
      %4101 = vmatmul.mubr.bf16.gmra.mrb[0].mxu0 %v4047
      %v4102 = vpop.f32.mrb[0].mxu0
      %v4103 = vadd.f32 0.0, %v4102
      %v4104 = vpop.f32.mrb[0].mxu0
      %v4105 = vpop.f32.mrb[0].mxu0
      %v4106 = vadd.f32 0.0, %v4105
      %v4107 = vpop.f32.mrb[0].mxu0
      %4108 = vmatprep.mubr.bf16.mxu0 0
      %4109 = vmatmul.mubr.bf16.gmra.mrb[0].mxu0 %v4050
      %v4110 = vpop.f32.mrb[0].mxu0
      %v4111 = vadd.f32 0.0, %v4110
      %v4112 = vpop.f32.mrb[0].mxu0
      %v4113 = vpop.f32.mrb[0].mxu0
      %v4114 = vadd.f32 0.0, %v4113
      %v4115 = vpop.f32.mrb[0].mxu0
      %4116 = vdwg.mxu0
      %v4119 = vunpack.c.l.b16 %v4027
      %v4120 = vunpack.c.l.b16 %v4028
      %v4121 = vpack.c.b16 %v4120, %v4119
      %v4124 = vsel %vm3797, %v4023, 0
      %v4127 = vsel %vm3797, %v4024, 0
      %4129 = vmatprep.subr.bf16.mxu0 0
      %4130 = vmatpush1.bf16.msra.mxu0 %v4121
      %4131 = vmatprep.subr.bf16.mxu0 0
      %4132 = vmatpush1.bf16.msra.mxu0 0
      %4133 = vmatprep.subr.bf16.mxu0 0
      %4134 = vmatpush1.bf16.msra.mxu0 0
      %4135 = vmatprep.subr.bf16.mxu0 0
      %4136 = vmatpush1.bf16.msra.mxu0 0
      %4137 = vmatprep.subr.bf16.mxu0 0
      %4138 = vmatpush1.bf16.msra.mxu0 0
      %4139 = vmatprep.subr.bf16.mxu0 0
      %4140 = vmatpush1.bf16.msra.mxu0 0
      %4141 = vmatprep.subr.bf16.mxu0 0
      %4142 = vmatpush1.bf16.msra.mxu0 0
      %4143 = vmatprep.subr.bf16.mxu0 0
      %4144 = vmatpush1.bf16.msra.mxu0 0
      %4145 = vmatprep.subr.bf16.mxu0 0
      %4146 = vmatpush1.bf16.msra.mxu0 0
      %4147 = vmatprep.subr.bf16.mxu0 0
      %4148 = vmatpush1.bf16.msra.mxu0 0
      %4149 = vmatprep.subr.bf16.mxu0 0
      %4150 = vmatpush1.bf16.msra.mxu0 0
      %4151 = vmatprep.subr.bf16.mxu0 0
      %4152 = vmatpush1.bf16.msra.mxu0 0
      %4153 = vmatprep.subr.bf16.mxu0 0
      %4154 = vmatpush1.bf16.msra.mxu0 0
      %4155 = vmatprep.subr.bf16.mxu0 0
      %4156 = vmatpush1.bf16.msra.mxu0 0
      %4157 = vmatprep.subr.bf16.mxu0 0
      %4158 = vmatpush1.bf16.msra.mxu0 0
      %4159 = vmatprep.subr.bf16.mxu0 0
      %4160 = vmatpush1.bf16.msra.mxu0 0
      %4161 = vmatprep.mubr.bf16.mxu0 0
      %4162 = vmatmul.mubr.bf16.gmra.mrb[0].mxu0 %v4124
      %v4163 = vpop.f32.mrb[0].mxu0
      %v4164 = vadd.f32 %v4087, %v4163
      %v4165 = vpop.f32.mrb[0].mxu0
      %v4166 = vpop.f32.mrb[0].mxu0
      %v4167 = vadd.f32 %v4090, %v4166
      %v4168 = vpop.f32.mrb[0].mxu0
      %4169 = vmatprep.mubr.bf16.mxu0 0
      %4170 = vmatmul.mubr.bf16.gmra.mrb[0].mxu0 %v4127
      %v4171 = vpop.f32.mrb[0].mxu0
      %v4172 = vadd.f32 %v4095, %v4171
      %v4173 = vpop.f32.mrb[0].mxu0
      %v4174 = vpop.f32.mrb[0].mxu0
      %v4175 = vadd.f32 %v4098, %v4174
      %v4176 = vpop.f32.mrb[0].mxu0
      %4177 = vmatprep.mubr.bf16.mxu0 0
      %4178 = vmatmul.mubr.bf16.gmra.mrb[0].mxu0 %v4041
      %v4179 = vpop.f32.mrb[0].mxu0
      %v4180 = vadd.f32 %v4103, %v4179
      %v4181 = vpop.f32.mrb[0].mxu0
      %v4182 = vpop.f32.mrb[0].mxu0
      %v4183 = vadd.f32 %v4106, %v4182
      %v4184 = vpop.f32.mrb[0].mxu0
      %4185 = vmatprep.mubr.bf16.mxu0 0
      %4186 = vmatmul.mubr.bf16.gmra.mrb[0].mxu0 %v4044
      %v4187 = vpop.f32.mrb[0].mxu0
      %v4188 = vadd.f32 %v4111, %v4187
      %v4189 = vpop.f32.mrb[0].mxu0
      %v4190 = vpop.f32.mrb[0].mxu0
      %v4191 = vadd.f32 %v4114, %v4190
      %v4192 = vpop.f32.mrb[0].mxu0
      %4193 = vdwg.mxu0
      %v4194 = vpack.c.bf16 %v4021, %v4013
      %v4195 = vpack.c.bf16 %v4022, %v4016
      %s4196 = scalar_lea.vmem %s839, 16
      %v4197 = vld [vmem:[%s4196] sm:$0xf]
      %v4198 = vld [vmem:[%s4196 + $0x4] sm:$0xf]
      %v4201 = vunpack.c.l.b16 %v4197
      %v4202 = vunpack.c.l.b16 %v4198
      %v4203 = vpack.c.b16 %v4202, %v4201
      %v4206 = vsel %vm3797, %v4194, 0
      %v4209 = vsel %vm3797, %v4195, 0
      %4211 = vmatprep.subr.bf16.mxu0 0
      %4212 = vmatpush1.bf16.msra.mxu0 %v4203
      %4213 = vmatprep.subr.bf16.mxu0 0
      %4214 = vmatpush1.bf16.msra.mxu0 0
      %4215 = vmatprep.subr.bf16.mxu0 0
      %4216 = vmatpush1.bf16.msra.mxu0 0
      %4217 = vmatprep.subr.bf16.mxu0 0
      %4218 = vmatpush1.bf16.msra.mxu0 0
      %4219 = vmatprep.subr.bf16.mxu0 0
      %4220 = vmatpush1.bf16.msra.mxu0 0
      %4221 = vmatprep.subr.bf16.mxu0 0
      %4222 = vmatpush1.bf16.msra.mxu0 0
      %4223 = vmatprep.subr.bf16.mxu0 0
      %4224 = vmatpush1.bf16.msra.mxu0 0
      %4225 = vmatprep.subr.bf16.mxu0 0
      %4226 = vmatpush1.bf16.msra.mxu0 0
      %4227 = vmatprep.subr.bf16.mxu0 0
      %4228 = vmatpush1.bf16.msra.mxu0 0
      %4229 = vmatprep.subr.bf16.mxu0 0
      %4230 = vmatpush1.bf16.msra.mxu0 0
      %4231 = vmatprep.subr.bf16.mxu0 0
      %4232 = vmatpush1.bf16.msra.mxu0 0
      %4233 = vmatprep.subr.bf16.mxu0 0
      %4234 = vmatpush1.bf16.msra.mxu0 0
      %4235 = vmatprep.subr.bf16.mxu0 0
      %4236 = vmatpush1.bf16.msra.mxu0 0
      %4237 = vmatprep.subr.bf16.mxu0 0
      %4238 = vmatpush1.bf16.msra.mxu0 0
      %4239 = vmatprep.subr.bf16.mxu0 0
      %4240 = vmatpush1.bf16.msra.mxu0 0
      %4241 = vmatprep.subr.bf16.mxu0 0
      %4242 = vmatpush1.bf16.msra.mxu0 0
      %4243 = vmatprep.mubr.bf16.mxu0 0
      %4244 = vmatmul.mubr.bf16.gmra.mrb[0].mxu0 %v4047
      %v4245 = vpop.f32.mrb[0].mxu0
      %v4246 = vadd.f32 0.0, %v4245
      %v4247 = vpop.f32.mrb[0].mxu0
      %v4248 = vpop.f32.mrb[0].mxu0
      %v4249 = vadd.f32 0.0, %v4248
      %v4250 = vpop.f32.mrb[0].mxu0
      %4251 = vmatprep.mubr.bf16.mxu0 0
      %4252 = vmatmul.mubr.bf16.gmra.mrb[0].mxu0 %v4050
      %v4253 = vpop.f32.mrb[0].mxu0
      %v4254 = vadd.f32 0.0, %v4253
      %v4255 = vpop.f32.mrb[0].mxu0
      %v4256 = vpop.f32.mrb[0].mxu0
      %v4257 = vadd.f32 0.0, %v4256
      %v4258 = vpop.f32.mrb[0].mxu0
      %4259 = vmatprep.mubr.bf16.mxu0 0
      %4260 = vmatmul.mubr.bf16.gmra.mrb[0].mxu0 %v4206
      %v4261 = vpop.f32.mrb[0].mxu0
      %v4262 = vadd.f32 0.0, %v4261
      %v4263 = vpop.f32.mrb[0].mxu0
      %v4264 = vpop.f32.mrb[0].mxu0
      %v4265 = vadd.f32 0.0, %v4264
      %v4266 = vpop.f32.mrb[0].mxu0
      %4267 = vmatprep.mubr.bf16.mxu0 0
      %4268 = vmatmul.mubr.bf16.gmra.mrb[0].mxu0 %v4209
      %v4269 = vpop.f32.mrb[0].mxu0
      %v4270 = vadd.f32 0.0, %v4269
      %v4271 = vpop.f32.mrb[0].mxu0
      %v4272 = vpop.f32.mrb[0].mxu0
      %v4273 = vadd.f32 0.0, %v4272
      %v4274 = vpop.f32.mrb[0].mxu0
      %4275 = vdwg.mxu0
      %v4276 = vadd.f32 %v4164, %v4246
      %v4277 = vadd.f32 %v4167, %v4249
      %v4278 = vadd.f32 %v4172, %v4254
      %v4279 = vadd.f32 %v4175, %v4257
      %v4280 = vadd.f32 %v4180, %v4262
      %v4281 = vadd.f32 %v4183, %v4265
      %v4282 = vadd.f32 %v4188, %v4270
      %v4283 = vadd.f32 %v4191, %v4273
      %v4285 = vlaneseq
      %v4286 = vshrl.u32 %v4285, 7
      %v4287 = vsub.s32 0, %v4286
      %v4288 = vrot.slane %v3990, %v4287
      %v4290 = vadd.f32 %v4276, %v4288
      %v4291 = vadd.f32 %v4277, %v4288
      %v4292 = vadd.f32 %v4278, %v4288
      %v4293 = vadd.f32 %v4279, %v4288
      %v4294 = vadd.f32 %v4280, %v4288
      %v4295 = vadd.f32 %v4281, %v4288
      %v4296 = vadd.f32 %v4282, %v4288
      %v4297 = vadd.f32 %v4283, %v4288
      %v4298 = vpack.c.bf16 %v3249, %v3248
      %v4299 = vpack.c.bf16 %v3251, %v3250
      %v4300 = vpack.c.bf16 %v3253, %v3252
      %v4301 = vpack.c.bf16 %v3255, %v3254
      %v4302 = vld [vmem:[%s847] sm:$0xf]
      %v4303 = vld [vmem:[%s847 + $0x4] sm:$0xf]
      %v4304 = vld [vmem:[%s847 + $0x8] sm:$0xf]
      %v4305 = vld [vmem:[%s847 + $0xc] sm:$0xf]
      %v4310 = vunpack.c.l.b16 %v4302
      %v4311 = vunpack.c.l.b16 %v4303
      %v4312 = vunpack.c.l.b16 %v4304
      %v4313 = vunpack.c.l.b16 %v4305
      %v4314 = vpack.c.b16 %v4311, %v4310
      %v4315 = vpack.c.b16 %v4313, %v4312
      %v4319 = vsel %vm2606, %v4298, 0
      %v4322 = vsel %vm2606, %v4299, 0
      %v4325 = vsel %vm2606, %v4300, 0
      %v4328 = vsel %vm2606, %v4301, 0
      %4330 = vmatprep.subr.bf16.mxu0 0
      %4331 = vmatpush1.bf16.msra.mxu0 %v4314
      %4332 = vmatprep.subr.bf16.mxu0 0
      %4333 = vmatpush1.bf16.msra.mxu0 %v4315
      %4334 = vmatprep.subr.bf16.mxu0 0
      %4335 = vmatpush1.bf16.msra.mxu0 0
      %4336 = vmatprep.subr.bf16.mxu0 0
      %4337 = vmatpush1.bf16.msra.mxu0 0
      %4338 = vmatprep.subr.bf16.mxu0 0
      %4339 = vmatpush1.bf16.msra.mxu0 0
      %4340 = vmatprep.subr.bf16.mxu0 0
      %4341 = vmatpush1.bf16.msra.mxu0 0
      %4342 = vmatprep.subr.bf16.mxu0 0
      %4343 = vmatpush1.bf16.msra.mxu0 0
      %4344 = vmatprep.subr.bf16.mxu0 0
      %4345 = vmatpush1.bf16.msra.mxu0 0
      %4346 = vmatprep.subr.bf16.mxu0 0
      %4347 = vmatpush1.bf16.msra.mxu0 0
      %4348 = vmatprep.subr.bf16.mxu0 0
      %4349 = vmatpush1.bf16.msra.mxu0 0
      %4350 = vmatprep.subr.bf16.mxu0 0
      %4351 = vmatpush1.bf16.msra.mxu0 0
      %4352 = vmatprep.subr.bf16.mxu0 0
      %4353 = vmatpush1.bf16.msra.mxu0 0
      %4354 = vmatprep.subr.bf16.mxu0 0
      %4355 = vmatpush1.bf16.msra.mxu0 0
      %4356 = vmatprep.subr.bf16.mxu0 0
      %4357 = vmatpush1.bf16.msra.mxu0 0
      %4358 = vmatprep.subr.bf16.mxu0 0
      %4359 = vmatpush1.bf16.msra.mxu0 0
      %4360 = vmatprep.subr.bf16.mxu0 0
      %4361 = vmatpush1.bf16.msra.mxu0 0
      %4362 = vmatprep.mubr.bf16.mxu0 0
      %4363 = vmatmul.mubr.bf16.gmra.mrb[0].mxu0 %v4319
      %v4364 = vpop.f32.mrb[0].mxu0
      %v4365 = vadd.f32 0.0, %v4364
      %v4366 = vpop.f32.mrb[0].mxu0
      %v4367 = vpop.f32.mrb[0].mxu0
      %v4368 = vadd.f32 0.0, %v4367
      %v4369 = vpop.f32.mrb[0].mxu0
      %4370 = vmatprep.mubr.bf16.mxu0 0
      %4371 = vmatmul.mubr.bf16.gmra.mrb[0].mxu0 %v4322
      %v4372 = vpop.f32.mrb[0].mxu0
      %v4373 = vadd.f32 0.0, %v4372
      %v4374 = vpop.f32.mrb[0].mxu0
      %v4375 = vpop.f32.mrb[0].mxu0
      %v4376 = vadd.f32 0.0, %v4375
      %v4377 = vpop.f32.mrb[0].mxu0
      %4378 = vmatprep.mubr.bf16.mxu0 0
      %4379 = vmatmul.mubr.bf16.gmra.mrb[0].mxu0 %v4325
      %v4380 = vpop.f32.mrb[0].mxu0
      %v4381 = vadd.f32 0.0, %v4380
      %v4382 = vpop.f32.mrb[0].mxu0
      %v4383 = vpop.f32.mrb[0].mxu0
      %v4384 = vadd.f32 0.0, %v4383
      %v4385 = vpop.f32.mrb[0].mxu0
      %4386 = vmatprep.mubr.bf16.mxu0 0
      %4387 = vmatmul.mubr.bf16.gmra.mrb[0].mxu0 %v4328
      %v4388 = vpop.f32.mrb[0].mxu0
      %v4389 = vadd.f32 0.0, %v4388
      %v4390 = vpop.f32.mrb[0].mxu0
      %v4391 = vpop.f32.mrb[0].mxu0
      %v4392 = vadd.f32 0.0, %v4391
      %v4393 = vpop.f32.mrb[0].mxu0
      %4394 = vdwg.mxu0
      %v4395 = vadd.f32 %v4290, %v4365
      %v4396 = vadd.f32 %v4291, %v4368
      %v4397 = vadd.f32 %v4292, %v4373
      %v4398 = vadd.f32 %v4293, %v4376
      %v4399 = vadd.f32 %v4294, %v4381
      %v4400 = vadd.f32 %v4295, %v4384
      %v4401 = vadd.f32 %v4296, %v4389
      %v4402 = vadd.f32 %v4297, %v4392
      %v4403 = vmul.f32 %v4395, 0.70710677
      %v4404 = vmul.f32 %v4396, 0.70710677
      %v4405 = vmul.f32 %v4397, 0.70710677
      %v4406 = vmul.f32 %v4398, 0.70710677
      %v4407 = vmul.f32 %v4399, 0.70710677
      %v4408 = vmul.f32 %v4400, 0.70710677
      %v4409 = vmul.f32 %v4401, 0.70710677
      %v4410 = vmul.f32 %v4402, 0.70710677
      %4411 = vst.msk [vmem:[%s852] sm:$0xff] %vm3797, %v4403
      %4412 = vst.msk [vmem:[%s852 + $0x8] sm:$0xff] %vm3797, %v4404
      %4413 = vst.msk [vmem:[%s852 + $0x10] sm:$0xff] %vm3797, %v4405
      %4414 = vst.msk [vmem:[%s852 + $0x18] sm:$0xff] %vm3797, %v4406
      %4415 = vst.msk [vmem:[%s852 + $0x20] sm:$0xff] %vm3797, %v4407
      %4416 = vst.msk [vmem:[%s852 + $0x28] sm:$0xff] %vm3797, %v4408
      %4417 = vst.msk [vmem:[%s852 + $0x30] sm:$0xff] %vm3797, %v4409
      %4418 = vst.msk [vmem:[%s852 + $0x38] sm:$0xff] %vm3797, %v4410
      %p4419 = scmp.lt.s32.totalorder %s29, 2
      %s4420 = scalar_select %p4419, %s29, 2
      %s4421 = smul.addr %s4420, 8
      %s4422 = smul.addr %s4421, 8
      %s4423 = scalar_lea.vmem %s18, %s4422
      // Predicated region
      $region93: #{_lambda_.4} parent=91 // pred_check
        %p4424 = pneg %p510
      $region94: #{_lambda_.4} parent=91 // pred_check_branch
        %4426 = sbr.rel (%p4424) target = $region96
      $region95: #{_lambda_.4} parent=91 // pred_region
        _
      $region96: #{_lambda_.4} parent=91 // pred_fallthru
        _
    $region92: #{_lambda_.4} parent=5 // pred_fallthru
      _
    %p4427 = scmp.le.s32.totalorder 2, %s24
    // Predicated region
    $region97: #{_lambda_.4} parent=5 // pred_check
      %p4428 = pneg %p4427
    $region98: #{_lambda_.4} parent=5 // pred_check_branch
      %4430 = sbr.rel (%p4428) target = $region100
    $region99: #{_lambda_.4} parent=5 // pred_region
      %s4431 = ssub.s32 %s24, 2
      // Predicated region
      $region101: #{_lambda_.4} parent=99 // pred_check
        %p4432 = pneg %p516
      $region102: #{_lambda_.4} parent=99 // pred_check_branch
        %4434 = sbr.rel (%p4432) target = $region104
      $region103: #{_lambda_.4} parent=99 // pred_region
        %p4435 = scmp.lt.s32.totalorder %s30, 2
        %s4436 = scalar_select %p4435, %s30, 2
        %s4437 = smul.addr %s4436, 8
        %s4438 = smul.addr %s4437, 8
        %s4439 = scalar_lea.vmem %s18, %s4438
      $region104: #{_lambda_.4} parent=99 // pred_fallthru
        _
    $region100: #{_lambda_.4} parent=5 // pred_fallthru
      _
  $region6: #{_lambda_.4} parent=0 // loop_footer
    %s28 = sadd.s32 1, %s24
  $region7: #{_lambda_.4} parent=0 // loop_footer_branch
    %23 = sbr.rel target = $region3
  $region8: #{_lambda_.4} parent=0 // loop_exit
    _

// kernel: _lambda_.5
$region0: #{_lambda_.5}
  #allocation0 [shape = 'u32[]', space=smem, size = 0x4, offset = 0x4, fixed_abs, tag = 'smem constant byte address 0x4 - core index']
  #allocation1 [shape = 'u32[144,128]{1,0:T(1,128)}', space=vmem, size = 0x12000, scoped, tag = 'internal scratch']
  #allocation2 [shape = 'f32[32,2,192]{2,1,0:T(2,128)}', space=vmem, size = 0x10000, scoped, tag = 'scratch operand']
  #allocation3 [shape = 'f32[32,2,192]{2,1,0:T(2,128)}', space=vmem, size = 0x10000, scoped, tag = 'scratch operand']
  #allocation4 [shape = 'f32[32,2,48]{2,1,0:T(2,128)}', space=vmem, size = 0x8000, scoped, tag = 'scratch operand']
  #allocation5 [shape = 'f32[32,2,48]{2,1,0:T(2,128)}', space=vmem, size = 0x8000, scoped, tag = 'scratch operand']
  %s0 = inlined_call_operand.vmem [shape: f32[32,2,48], index: 0, kind: input, shape index: {}]
  %s1 = inlined_call_operand.vmem [shape: bf16[48,192], index: 1, kind: input, shape index: {}]
  %s2 = inlined_call_operand.vmem [shape: bf16[48,192], index: 2, kind: input, shape index: {}]
  %s3 = inlined_call_operand.vmem [shape: f32[1,192], index: 3, kind: input, shape index: {}]
  %s4 = inlined_call_operand.vmem [shape: f32[1,192], index: 4, kind: input, shape index: {}]
  %s5 = inlined_call_operand.vmem [shape: bf16[48,192], index: 5, kind: input, shape index: {}]
  %s6 = inlined_call_operand.vmem [shape: bf16[48,192], index: 6, kind: input, shape index: {}]
  %s7 = inlined_call_operand.vmem [shape: bf16[96,128], index: 7, kind: input, shape index: {}]
  %s8 = inlined_call_operand.vmem [shape: f32[1,128], index: 8, kind: input, shape index: {}]
  %s9 = inlined_call_operand.vmem [shape: f32[32,2,128], index: 9, kind: output, shape index: {}]
  %s10 = sld [smem:[#allocation0]]
  $region53: #{_lambda_.5} parent=0
    _
  %s12 = ssub.s32 1, %s10
  %s13 = scalar_select 0, %s12, %s10
  // Predicated region
  $region2: #{_lambda_.5} parent=0 // pred_check
    _
  $region3: #{_lambda_.5} parent=0 // pred_check_branch
    %15 = sbr.rel (0) target = $region5
  $region4: #{_lambda_.5} parent=0 // pred_region
    _
  $region5: #{_lambda_.5} parent=0 // pred_fallthru
    _
  // Predicated region
  $region6: #{_lambda_.5} parent=0 // pred_check
    _
  $region7: #{_lambda_.5} parent=0 // pred_check_branch
    %17 = sbr.rel (0) target = $region9
  $region8: #{_lambda_.5} parent=0 // pred_region
    _
  $region9: #{_lambda_.5} parent=0 // pred_fallthru
    _
  // Predicated region
  $region10: #{_lambda_.5} parent=0 // pred_check
    _
  $region11: #{_lambda_.5} parent=0 // pred_check_branch
    %19 = sbr.rel (0) target = $region13
  $region12: #{_lambda_.5} parent=0 // pred_region
    _
  $region13: #{_lambda_.5} parent=0 // pred_fallthru
    _
  // Predicated region
  $region14: #{_lambda_.5} parent=0 // pred_check
    _
  $region15: #{_lambda_.5} parent=0 // pred_check_branch
    %21 = sbr.rel (0) target = $region17
  $region16: #{_lambda_.5} parent=0 // pred_region
    _
  $region17: #{_lambda_.5} parent=0 // pred_fallthru
    _
  // Predicated region
  $region18: #{_lambda_.5} parent=0 // pred_check
    _
  $region19: #{_lambda_.5} parent=0 // pred_check_branch
    %23 = sbr.rel (0) target = $region21
  $region20: #{_lambda_.5} parent=0 // pred_region
    _
  $region21: #{_lambda_.5} parent=0 // pred_fallthru
    _
  // Predicated region
  $region22: #{_lambda_.5} parent=0 // pred_check
    _
  $region23: #{_lambda_.5} parent=0 // pred_check_branch
    %25 = sbr.rel (0) target = $region25
  $region24: #{_lambda_.5} parent=0 // pred_region
    _
  $region25: #{_lambda_.5} parent=0 // pred_fallthru
    _
  // Predicated region
  $region26: #{_lambda_.5} parent=0 // pred_check
    _
  $region27: #{_lambda_.5} parent=0 // pred_check_branch
    %27 = sbr.rel (0) target = $region29
  $region28: #{_lambda_.5} parent=0 // pred_region
    _
  $region29: #{_lambda_.5} parent=0 // pred_fallthru
    _
  // Predicated region
  $region30: #{_lambda_.5} parent=0 // pred_check
    _
  $region31: #{_lambda_.5} parent=0 // pred_check_branch
    %29 = sbr.rel (0) target = $region33
  $region32: #{_lambda_.5} parent=0 // pred_region
    _
  $region33: #{_lambda_.5} parent=0 // pred_fallthru
    _
  // Predicated region
  $region34: #{_lambda_.5} parent=0 // pred_check
    _
  $region35: #{_lambda_.5} parent=0 // pred_check_branch
    %31 = sbr.rel (0) target = $region37
  $region36: #{_lambda_.5} parent=0 // pred_region
    _
  $region37: #{_lambda_.5} parent=0 // pred_fallthru
    _
  %v33 = vld [vmem:[%s0] sm:$0x3]
  %v34 = vld [vmem:[%s0 + $0x2] sm:$0x3]
  %v35 = vld [vmem:[%s0 + $0x4] sm:$0x3]
  %v36 = vld [vmem:[%s0 + $0x6] sm:$0x3]
  %v37 = vld [vmem:[%s0 + $0x8] sm:$0x3]
  %v38 = vld [vmem:[%s0 + $0xa] sm:$0x3]
  %v39 = vld [vmem:[%s0 + $0xc] sm:$0x3]
  %v40 = vld [vmem:[%s0 + $0xe] sm:$0x3]
  %v41 = vld [vmem:[%s0 + $0x10] sm:$0x3]
  %v42 = vld [vmem:[%s0 + $0x12] sm:$0x3]
  %v43 = vld [vmem:[%s0 + $0x14] sm:$0x3]
  %v44 = vld [vmem:[%s0 + $0x16] sm:$0x3]
  %v45 = vld [vmem:[%s0 + $0x18] sm:$0x3]
  %v46 = vld [vmem:[%s0 + $0x1a] sm:$0x3]
  %v47 = vld [vmem:[%s0 + $0x1c] sm:$0x3]
  %v48 = vld [vmem:[%s0 + $0x1e] sm:$0x3]
  %v49 = vld [vmem:[%s0 + $0x20] sm:$0x3]
  %v50 = vld [vmem:[%s0 + $0x22] sm:$0x3]
  %v51 = vld [vmem:[%s0 + $0x24] sm:$0x3]
  %v52 = vld [vmem:[%s0 + $0x26] sm:$0x3]
  %v53 = vld [vmem:[%s0 + $0x28] sm:$0x3]
  %v54 = vld [vmem:[%s0 + $0x2a] sm:$0x3]
  %v55 = vld [vmem:[%s0 + $0x2c] sm:$0x3]
  %v56 = vld [vmem:[%s0 + $0x2e] sm:$0x3]
  %v57 = vld [vmem:[%s0 + $0x30] sm:$0x3]
  %v58 = vld [vmem:[%s0 + $0x32] sm:$0x3]
  %v59 = vld [vmem:[%s0 + $0x34] sm:$0x3]
  %v60 = vld [vmem:[%s0 + $0x36] sm:$0x3]
  %v61 = vld [vmem:[%s0 + $0x38] sm:$0x3]
  %v62 = vld [vmem:[%s0 + $0x3a] sm:$0x3]
  %v63 = vld [vmem:[%s0 + $0x3c] sm:$0x3]
  %v64 = vld [vmem:[%s0 + $0x3e] sm:$0x3]
  %v65 = vpack.c.bf16 %v33, %v33
  %v66 = vpack.c.bf16 %v34, %v34
  %v67 = vpack.c.bf16 %v35, %v35
  %v68 = vpack.c.bf16 %v36, %v36
  %v69 = vpack.c.bf16 %v37, %v37
  %v70 = vpack.c.bf16 %v38, %v38
  %v71 = vpack.c.bf16 %v39, %v39
  %v72 = vpack.c.bf16 %v40, %v40
  %v73 = vpack.c.bf16 %v41, %v41
  %v74 = vpack.c.bf16 %v42, %v42
  %v75 = vpack.c.bf16 %v43, %v43
  %v76 = vpack.c.bf16 %v44, %v44
  %v77 = vpack.c.bf16 %v45, %v45
  %v78 = vpack.c.bf16 %v46, %v46
  %v79 = vpack.c.bf16 %v47, %v47
  %v80 = vpack.c.bf16 %v48, %v48
  %v81 = vpack.c.bf16 %v49, %v49
  %v82 = vpack.c.bf16 %v50, %v50
  %v83 = vpack.c.bf16 %v51, %v51
  %v84 = vpack.c.bf16 %v52, %v52
  %v85 = vpack.c.bf16 %v53, %v53
  %v86 = vpack.c.bf16 %v54, %v54
  %v87 = vpack.c.bf16 %v55, %v55
  %v88 = vpack.c.bf16 %v56, %v56
  %v89 = vpack.c.bf16 %v57, %v57
  %v90 = vpack.c.bf16 %v58, %v58
  %v91 = vpack.c.bf16 %v59, %v59
  %v92 = vpack.c.bf16 %v60, %v60
  %v93 = vpack.c.bf16 %v61, %v61
  %v94 = vpack.c.bf16 %v62, %v62
  %v95 = vpack.c.bf16 %v63, %v63
  %v96 = vpack.c.bf16 %v64, %v64
  %v97 = vld [vmem:[%s1] sm:$0xff]
  %v98 = vld [vmem:[%s1 + $0x8] sm:$0xff]
  %v99 = vld [vmem:[%s1 + $0x10] sm:$0xff]
  %v100 = vld [vmem:[%s1 + $0x18] sm:$0xff]
  %v101 = vld [vmem:[%s1 + $0x20] sm:$0xff]
  %v102 = vld [vmem:[%s1 + $0x28] sm:$0xff]
  %v103 = vld [vmem:[%s3] sm:$0x3]
  %v105 = vlaneseq
  %v106 = vshrl.u32 %v105, 7
  %v107 = vsub.s32 0, %v106
  %v108 = vrot.slane %v103, %v107
  %v109 = vlaneseq
  %v110 = vshrl.u32 %v109, 7
  %v111 = vsub.s32 1, %v110
  %v112 = vrot.slane %v103, %v111
  %v147 = vcombine.low %v65, %v66
  %v148 = vcombine.low %v67, %v68
  %v149 = vcombine.low %v69, %v70
  %v150 = vcombine.low %v71, %v72
  %v152 = vunpack.c.l.s4 1966171168
  %v153 = vunpack.c.0.s8 %v152
  %v154 = vlaneseq
  %v155 = vshrl.u32 %v154, 7
  %v156 = vsub.s32 %v153, %v155
  %v157 = vrot.slane %v147, %v156
  %v159 = vunpack.c.l.s4 1966171168
  %v160 = vunpack.c.0.s8 %v159
  %v161 = vlaneseq
  %v162 = vshrl.u32 %v161, 7
  %v163 = vsub.s32 %v160, %v162
  %v164 = vrot.slane %v148, %v163
  %v166 = vunpack.c.l.s4 1966171168
  %v167 = vunpack.c.0.s8 %v166
  %v168 = vlaneseq
  %v169 = vshrl.u32 %v168, 7
  %v170 = vsub.s32 %v167, %v169
  %v171 = vrot.slane %v149, %v170
  %v173 = vunpack.c.l.s4 1966171168
  %v174 = vunpack.c.0.s8 %v173
  %v175 = vlaneseq
  %v176 = vshrl.u32 %v175, 7
  %v177 = vsub.s32 %v174, %v176
  %v178 = vrot.slane %v150, %v177
  %v179 = vcombine.low %v157, %v164
  %v180 = vcombine.low %v171, %v178
  %v182 = vunpack.c.l.s4 1966171168
  %v183 = vunpack.c.0.s8 %v182
  %v184 = vlaneseq
  %v185 = vshrl.u32 %v184, 7
  %v186 = vsub.s32 %v183, %v185
  %v187 = vrot.slane %v179, %v186
  %v189 = vunpack.c.l.s4 1966171168
  %v190 = vunpack.c.0.s8 %v189
  %v191 = vlaneseq
  %v192 = vshrl.u32 %v191, 7
  %v193 = vsub.s32 %v190, %v192
  %v194 = vrot.slane %v180, %v193
  %v195 = vcombine.low %v187, %v194
  %v196 = vcombine.low %v73, %v74
  %v197 = vcombine.low %v75, %v76
  %v198 = vcombine.low %v77, %v78
  %v199 = vcombine.low %v79, %v80
  %v201 = vunpack.c.l.s4 1966171168
  %v202 = vunpack.c.0.s8 %v201
  %v203 = vlaneseq
  %v204 = vshrl.u32 %v203, 7
  %v205 = vsub.s32 %v202, %v204
  %v206 = vrot.slane %v196, %v205
  %v208 = vunpack.c.l.s4 1966171168
  %v209 = vunpack.c.0.s8 %v208
  %v210 = vlaneseq
  %v211 = vshrl.u32 %v210, 7
  %v212 = vsub.s32 %v209, %v211
  %v213 = vrot.slane %v197, %v212
  %v215 = vunpack.c.l.s4 1966171168
  %v216 = vunpack.c.0.s8 %v215
  %v217 = vlaneseq
  %v218 = vshrl.u32 %v217, 7
  %v219 = vsub.s32 %v216, %v218
  %v220 = vrot.slane %v198, %v219
  %v222 = vunpack.c.l.s4 1966171168
  %v223 = vunpack.c.0.s8 %v222
  %v224 = vlaneseq
  %v225 = vshrl.u32 %v224, 7
  %v226 = vsub.s32 %v223, %v225
  %v227 = vrot.slane %v199, %v226
  %v228 = vcombine.low %v206, %v213
  %v229 = vcombine.low %v220, %v227
  %v231 = vunpack.c.l.s4 1966171168
  %v232 = vunpack.c.0.s8 %v231
  %v233 = vlaneseq
  %v234 = vshrl.u32 %v233, 7
  %v235 = vsub.s32 %v232, %v234
  %v236 = vrot.slane %v228, %v235
  %v238 = vunpack.c.l.s4 1966171168
  %v239 = vunpack.c.0.s8 %v238
  %v240 = vlaneseq
  %v241 = vshrl.u32 %v240, 7
  %v242 = vsub.s32 %v239, %v241
  %v243 = vrot.slane %v229, %v242
  %v244 = vcombine.low %v236, %v243
  %v245 = vcombine.low %v81, %v82
  %v246 = vcombine.low %v83, %v84
  %v247 = vcombine.low %v85, %v86
  %v248 = vcombine.low %v87, %v88
  %v250 = vunpack.c.l.s4 1966171168
  %v251 = vunpack.c.0.s8 %v250
  %v252 = vlaneseq
  %v253 = vshrl.u32 %v252, 7
  %v254 = vsub.s32 %v251, %v253
  %v255 = vrot.slane %v245, %v254
  %v257 = vunpack.c.l.s4 1966171168
  %v258 = vunpack.c.0.s8 %v257
  %v259 = vlaneseq
  %v260 = vshrl.u32 %v259, 7
  %v261 = vsub.s32 %v258, %v260
  %v262 = vrot.slane %v246, %v261
  %v264 = vunpack.c.l.s4 1966171168
  %v265 = vunpack.c.0.s8 %v264
  %v266 = vlaneseq
  %v267 = vshrl.u32 %v266, 7
  %v268 = vsub.s32 %v265, %v267
  %v269 = vrot.slane %v247, %v268
  %v271 = vunpack.c.l.s4 1966171168
  %v272 = vunpack.c.0.s8 %v271
  %v273 = vlaneseq
  %v274 = vshrl.u32 %v273, 7
  %v275 = vsub.s32 %v272, %v274
  %v276 = vrot.slane %v248, %v275
  %v277 = vcombine.low %v255, %v262
  %v278 = vcombine.low %v269, %v276
  %v280 = vunpack.c.l.s4 1966171168
  %v281 = vunpack.c.0.s8 %v280
  %v282 = vlaneseq
  %v283 = vshrl.u32 %v282, 7
  %v284 = vsub.s32 %v281, %v283
  %v285 = vrot.slane %v277, %v284
  %v287 = vunpack.c.l.s4 1966171168
  %v288 = vunpack.c.0.s8 %v287
  %v289 = vlaneseq
  %v290 = vshrl.u32 %v289, 7
  %v291 = vsub.s32 %v288, %v290
  %v292 = vrot.slane %v278, %v291
  %v293 = vcombine.low %v285, %v292
  %v294 = vcombine.low %v89, %v90
  %v295 = vcombine.low %v91, %v92
  %v296 = vcombine.low %v93, %v94
  %v297 = vcombine.low %v95, %v96
  %v299 = vunpack.c.l.s4 1966171168
  %v300 = vunpack.c.0.s8 %v299
  %v301 = vlaneseq
  %v302 = vshrl.u32 %v301, 7
  %v303 = vsub.s32 %v300, %v302
  %v304 = vrot.slane %v294, %v303
  %v306 = vunpack.c.l.s4 1966171168
  %v307 = vunpack.c.0.s8 %v306
  %v308 = vlaneseq
  %v309 = vshrl.u32 %v308, 7
  %v310 = vsub.s32 %v307, %v309
  %v311 = vrot.slane %v295, %v310
  %v313 = vunpack.c.l.s4 1966171168
  %v314 = vunpack.c.0.s8 %v313
  %v315 = vlaneseq
  %v316 = vshrl.u32 %v315, 7
  %v317 = vsub.s32 %v314, %v316
  %v318 = vrot.slane %v296, %v317
  %v320 = vunpack.c.l.s4 1966171168
  %v321 = vunpack.c.0.s8 %v320
  %v322 = vlaneseq
  %v323 = vshrl.u32 %v322, 7
  %v324 = vsub.s32 %v321, %v323
  %v325 = vrot.slane %v297, %v324
  %v326 = vcombine.low %v304, %v311
  %v327 = vcombine.low %v318, %v325
  %v329 = vunpack.c.l.s4 1966171168
  %v330 = vunpack.c.0.s8 %v329
  %v331 = vlaneseq
  %v332 = vshrl.u32 %v331, 7
  %v333 = vsub.s32 %v330, %v332
  %v334 = vrot.slane %v326, %v333
  %v336 = vunpack.c.l.s4 1966171168
  %v337 = vunpack.c.0.s8 %v336
  %v338 = vlaneseq
  %v339 = vshrl.u32 %v338, 7
  %v340 = vsub.s32 %v337, %v339
  %v341 = vrot.slane %v327, %v340
  %v342 = vcombine.low %v334, %v341
  %v349 = vunpack.c.l.b16 %v97
  %v350 = vunpack.c.h.b16 %v97
  %v351 = vunpack.c.l.b16 %v98
  %v352 = vunpack.c.h.b16 %v98
  %v353 = vunpack.c.l.b16 %v99
  %v354 = vunpack.c.h.b16 %v99
  %v355 = vunpack.c.l.b16 %v100
  %v356 = vunpack.c.h.b16 %v100
  %v357 = vunpack.c.l.b16 %v101
  %v358 = vunpack.c.h.b16 %v101
  %v359 = vunpack.c.l.b16 %v102
  %v360 = vunpack.c.h.b16 %v102
  %v361 = vpack.c.b16 %v351, %v349
  %v362 = vpack.c.b16 %v352, %v350
  %v363 = vpack.c.b16 %v355, %v353
  %v364 = vpack.c.b16 %v356, %v354
  %v365 = vpack.c.b16 %v359, %v357
  %v366 = vpack.c.b16 %v360, %v358
  %vm373 = vcmask 392192
  %v375 = vsel %vm373, %v195, 0
  %v378 = vsel %vm373, %v244, 0
  %v381 = vsel %vm373, %v293, 0
  %v384 = vsel %vm373, %v342, 0
  %386 = vmatprep.subr.bf16.mxu0 %v362
  %387 = vmatpush1.bf16.msra.mxu0 %v361
  %388 = vmatprep.subr.bf16.mxu0 %v364
  %389 = vmatpush1.bf16.msra.mxu0 %v363
  %390 = vmatprep.subr.bf16.mxu0 %v366
  %391 = vmatpush1.bf16.msra.mxu0 %v365
  %392 = vmatprep.subr.bf16.mxu0 0
  %393 = vmatpush1.bf16.msra.mxu0 0
  %394 = vmatprep.subr.bf16.mxu0 0
  %395 = vmatpush1.bf16.msra.mxu0 0
  %396 = vmatprep.subr.bf16.mxu0 0
  %397 = vmatpush1.bf16.msra.mxu0 0
  %398 = vmatprep.subr.bf16.mxu0 0
  %399 = vmatpush1.bf16.msra.mxu0 0
  %400 = vmatprep.subr.bf16.mxu0 0
  %401 = vmatpush1.bf16.msra.mxu0 0
  %402 = vmatprep.subr.bf16.mxu0 0
  %403 = vmatpush1.bf16.msra.mxu0 0
  %404 = vmatprep.subr.bf16.mxu0 0
  %405 = vmatpush1.bf16.msra.mxu0 0
  %406 = vmatprep.subr.bf16.mxu0 0
  %407 = vmatpush1.bf16.msra.mxu0 0
  %408 = vmatprep.subr.bf16.mxu0 0
  %409 = vmatpush1.bf16.msra.mxu0 0
  %410 = vmatprep.subr.bf16.mxu0 0
  %411 = vmatpush1.bf16.msra.mxu0 0
  %412 = vmatprep.subr.bf16.mxu0 0
  %413 = vmatpush1.bf16.msra.mxu0 0
  %414 = vmatprep.subr.bf16.mxu0 0
  %415 = vmatpush1.bf16.msra.mxu0 0
  %416 = vmatprep.subr.bf16.mxu0 0
  %417 = vmatpush1.bf16.msra.mxu0 0
  %418 = vmatprep.mubr.bf16.mxu0 0
  %419 = vmatmul.mubr.bf16.gmra.mrb[0].mxu0 %v375
  %v420 = vpop.f32.mrb[0].mxu0
  %v421 = vadd.f32 %v108, %v420
  %v422 = vpop.f32.mrb[0].mxu0
  %v423 = vadd.f32 %v112, %v422
  %v424 = vpop.f32.mrb[0].mxu0
  %v425 = vadd.f32 %v108, %v424
  %v426 = vpop.f32.mrb[0].mxu0
  %v427 = vadd.f32 %v112, %v426
  %428 = vmatprep.mubr.bf16.mxu0 0
  %429 = vmatmul.mubr.bf16.gmra.mrb[0].mxu0 %v378
  %v430 = vpop.f32.mrb[0].mxu0
  %v431 = vadd.f32 %v108, %v430
  %v432 = vpop.f32.mrb[0].mxu0
  %v433 = vadd.f32 %v112, %v432
  %v434 = vpop.f32.mrb[0].mxu0
  %v435 = vadd.f32 %v108, %v434
  %v436 = vpop.f32.mrb[0].mxu0
  %v437 = vadd.f32 %v112, %v436
  %438 = vmatprep.mubr.bf16.mxu0 0
  %439 = vmatmul.mubr.bf16.gmra.mrb[0].mxu0 %v381
  %v440 = vpop.f32.mrb[0].mxu0
  %v441 = vadd.f32 %v108, %v440
  %v442 = vpop.f32.mrb[0].mxu0
  %v443 = vadd.f32 %v112, %v442
  %v444 = vpop.f32.mrb[0].mxu0
  %v445 = vadd.f32 %v108, %v444
  %v446 = vpop.f32.mrb[0].mxu0
  %v447 = vadd.f32 %v112, %v446
  %448 = vmatprep.mubr.bf16.mxu0 0
  %449 = vmatmul.mubr.bf16.gmra.mrb[0].mxu0 %v384
  %v450 = vpop.f32.mrb[0].mxu0
  %v451 = vadd.f32 %v108, %v450
  %v452 = vpop.f32.mrb[0].mxu0
  %v453 = vadd.f32 %v112, %v452
  %v454 = vpop.f32.mrb[0].mxu0
  %v455 = vadd.f32 %v108, %v454
  %v456 = vpop.f32.mrb[0].mxu0
  %v457 = vadd.f32 %v112, %v456
  %458 = vdwg.mxu0
  %v475 = vcombine.low %v421, %v423
  %v476 = vcombine.high %v421, %v423
  %v478 = vunpack.c.l.s4 1983009808
  %v479 = vunpack.c.0.s8 %v478
  %v480 = vlaneseq
  %v481 = vshrl.u32 %v480, 7
  %v482 = vsub.s32 %v479, %v481
  %v483 = vrot.slane %v475, %v482
  %v485 = vunpack.c.l.s4 1983009808
  %v486 = vunpack.c.0.s8 %v485
  %v487 = vlaneseq
  %v488 = vshrl.u32 %v487, 7
  %v489 = vsub.s32 %v486, %v488
  %v490 = vrot.slane %v476, %v489
  %v491 = vcombine.high %v483, %v483
  %v492 = vcombine.high %v490, %v490
  %v493 = vcombine.low %v425, %v427
  %v494 = vcombine.high %v425, %v427
  %v496 = vunpack.c.l.s4 1983009808
  %v497 = vunpack.c.0.s8 %v496
  %v498 = vlaneseq
  %v499 = vshrl.u32 %v498, 7
  %v500 = vsub.s32 %v497, %v499
  %v501 = vrot.slane %v493, %v500
  %v503 = vunpack.c.l.s4 1983009808
  %v504 = vunpack.c.0.s8 %v503
  %v505 = vlaneseq
  %v506 = vshrl.u32 %v505, 7
  %v507 = vsub.s32 %v504, %v506
  %v508 = vrot.slane %v494, %v507
  %v509 = vcombine.high %v501, %v501
  %v510 = vcombine.high %v508, %v508
  %v511 = vcombine.low %v431, %v433
  %v512 = vcombine.high %v431, %v433
  %v514 = vunpack.c.l.s4 1983009808
  %v515 = vunpack.c.0.s8 %v514
  %v516 = vlaneseq
  %v517 = vshrl.u32 %v516, 7
  %v518 = vsub.s32 %v515, %v517
  %v519 = vrot.slane %v511, %v518
  %v521 = vunpack.c.l.s4 1983009808
  %v522 = vunpack.c.0.s8 %v521
  %v523 = vlaneseq
  %v524 = vshrl.u32 %v523, 7
  %v525 = vsub.s32 %v522, %v524
  %v526 = vrot.slane %v512, %v525
  %v527 = vcombine.high %v519, %v519
  %v528 = vcombine.high %v526, %v526
  %v529 = vcombine.low %v435, %v437
  %v530 = vcombine.high %v435, %v437
  %v532 = vunpack.c.l.s4 1983009808
  %v533 = vunpack.c.0.s8 %v532
  %v534 = vlaneseq
  %v535 = vshrl.u32 %v534, 7
  %v536 = vsub.s32 %v533, %v535
  %v537 = vrot.slane %v529, %v536
  %v539 = vunpack.c.l.s4 1983009808
  %v540 = vunpack.c.0.s8 %v539
  %v541 = vlaneseq
  %v542 = vshrl.u32 %v541, 7
  %v543 = vsub.s32 %v540, %v542
  %v544 = vrot.slane %v530, %v543
  %v545 = vcombine.high %v537, %v537
  %v546 = vcombine.high %v544, %v544
  %v547 = vcombine.low %v441, %v443
  %v548 = vcombine.high %v441, %v443
  %v550 = vunpack.c.l.s4 1983009808
  %v551 = vunpack.c.0.s8 %v550
  %v552 = vlaneseq
  %v553 = vshrl.u32 %v552, 7
  %v554 = vsub.s32 %v551, %v553
  %v555 = vrot.slane %v547, %v554
  %v557 = vunpack.c.l.s4 1983009808
  %v558 = vunpack.c.0.s8 %v557
  %v559 = vlaneseq
  %v560 = vshrl.u32 %v559, 7
  %v561 = vsub.s32 %v558, %v560
  %v562 = vrot.slane %v548, %v561
  %v563 = vcombine.high %v555, %v555
  %v564 = vcombine.high %v562, %v562
  %v565 = vcombine.low %v445, %v447
  %v566 = vcombine.high %v445, %v447
  %v568 = vunpack.c.l.s4 1983009808
  %v569 = vunpack.c.0.s8 %v568
  %v570 = vlaneseq
  %v571 = vshrl.u32 %v570, 7
  %v572 = vsub.s32 %v569, %v571
  %v573 = vrot.slane %v565, %v572
  %v575 = vunpack.c.l.s4 1983009808
  %v576 = vunpack.c.0.s8 %v575
  %v577 = vlaneseq
  %v578 = vshrl.u32 %v577, 7
  %v579 = vsub.s32 %v576, %v578
  %v580 = vrot.slane %v566, %v579
  %v581 = vcombine.high %v573, %v573
  %v582 = vcombine.high %v580, %v580
  %v583 = vcombine.low %v451, %v453
  %v584 = vcombine.high %v451, %v453
  %v586 = vunpack.c.l.s4 1983009808
  %v587 = vunpack.c.0.s8 %v586
  %v588 = vlaneseq
  %v589 = vshrl.u32 %v588, 7
  %v590 = vsub.s32 %v587, %v589
  %v591 = vrot.slane %v583, %v590
  %v593 = vunpack.c.l.s4 1983009808
  %v594 = vunpack.c.0.s8 %v593
  %v595 = vlaneseq
  %v596 = vshrl.u32 %v595, 7
  %v597 = vsub.s32 %v594, %v596
  %v598 = vrot.slane %v584, %v597
  %v599 = vcombine.high %v591, %v591
  %v600 = vcombine.high %v598, %v598
  %v601 = vcombine.low %v455, %v457
  %v602 = vcombine.high %v455, %v457
  %v604 = vunpack.c.l.s4 1983009808
  %v605 = vunpack.c.0.s8 %v604
  %v606 = vlaneseq
  %v607 = vshrl.u32 %v606, 7
  %v608 = vsub.s32 %v605, %v607
  %v609 = vrot.slane %v601, %v608
  %v611 = vunpack.c.l.s4 1983009808
  %v612 = vunpack.c.0.s8 %v611
  %v613 = vlaneseq
  %v614 = vshrl.u32 %v613, 7
  %v615 = vsub.s32 %v612, %v614
  %v616 = vrot.slane %v602, %v615
  %v617 = vcombine.high %v609, %v609
  %v618 = vcombine.high %v616, %v616
  %vm651 = vcmask 1041408
  %vm652 = vcmask 519170
  %vm653 = vmor %vm652, %vm651
  %654 = vst.msk [vmem:[#allocation2] sm:$0xf] %vm653, %v483
  %655 = vst.msk [vmem:[#allocation2 + $0x4] sm:$0xf] %vm653, %v491
  %656 = vst.msk [vmem:[#allocation2 + $0x8] sm:$0xf] %vm653, %v490
  %657 = vst.msk [vmem:[#allocation2 + $0xc] sm:$0xf] %vm653, %v492
  %658 = vst.msk [vmem:[#allocation2 + $0x10] sm:$0xf] %vm653, %v501
  %659 = vst.msk [vmem:[#allocation2 + $0x14] sm:$0xf] %vm653, %v509
  %660 = vst.msk [vmem:[#allocation2 + $0x18] sm:$0xf] %vm653, %v508
  %661 = vst.msk [vmem:[#allocation2 + $0x1c] sm:$0xf] %vm653, %v510
  %662 = vst.msk [vmem:[#allocation2 + $0x20] sm:$0xf] %vm653, %v519
  %663 = vst.msk [vmem:[#allocation2 + $0x24] sm:$0xf] %vm653, %v527
  %664 = vst.msk [vmem:[#allocation2 + $0x28] sm:$0xf] %vm653, %v526
  %665 = vst.msk [vmem:[#allocation2 + $0x2c] sm:$0xf] %vm653, %v528
  %666 = vst.msk [vmem:[#allocation2 + $0x30] sm:$0xf] %vm653, %v537
  %667 = vst.msk [vmem:[#allocation2 + $0x34] sm:$0xf] %vm653, %v545
  %668 = vst.msk [vmem:[#allocation2 + $0x38] sm:$0xf] %vm653, %v544
  %669 = vst.msk [vmem:[#allocation2 + $0x3c] sm:$0xf] %vm653, %v546
  %670 = vst.msk [vmem:[#allocation2 + $0x40] sm:$0xf] %vm653, %v555
  %671 = vst.msk [vmem:[#allocation2 + $0x44] sm:$0xf] %vm653, %v563
  %672 = vst.msk [vmem:[#allocation2 + $0x48] sm:$0xf] %vm653, %v562
  %673 = vst.msk [vmem:[#allocation2 + $0x4c] sm:$0xf] %vm653, %v564
  %674 = vst.msk [vmem:[#allocation2 + $0x50] sm:$0xf] %vm653, %v573
  %675 = vst.msk [vmem:[#allocation2 + $0x54] sm:$0xf] %vm653, %v581
  %676 = vst.msk [vmem:[#allocation2 + $0x58] sm:$0xf] %vm653, %v580
  %677 = vst.msk [vmem:[#allocation2 + $0x5c] sm:$0xf] %vm653, %v582
  %678 = vst.msk [vmem:[#allocation2 + $0x60] sm:$0xf] %vm653, %v591
  %679 = vst.msk [vmem:[#allocation2 + $0x64] sm:$0xf] %vm653, %v599
  %680 = vst.msk [vmem:[#allocation2 + $0x68] sm:$0xf] %vm653, %v598
  %681 = vst.msk [vmem:[#allocation2 + $0x6c] sm:$0xf] %vm653, %v600
  %682 = vst.msk [vmem:[#allocation2 + $0x70] sm:$0xf] %vm653, %v609
  %683 = vst.msk [vmem:[#allocation2 + $0x74] sm:$0xf] %vm653, %v617
  %684 = vst.msk [vmem:[#allocation2 + $0x78] sm:$0xf] %vm653, %v616
  %685 = vst.msk [vmem:[#allocation2 + $0x7c] sm:$0xf] %vm653, %v618
  %v686 = vld [vmem:[%s2] sm:$0xff]
  %v687 = vld [vmem:[%s2 + $0x8] sm:$0xff]
  %v688 = vld [vmem:[%s2 + $0x10] sm:$0xff]
  %v689 = vld [vmem:[%s2 + $0x18] sm:$0xff]
  %v690 = vld [vmem:[%s2 + $0x20] sm:$0xff]
  %v691 = vld [vmem:[%s2 + $0x28] sm:$0xff]
  %v692 = vld [vmem:[%s4] sm:$0x3]
  %v694 = vlaneseq
  %v695 = vshrl.u32 %v694, 7
  %v696 = vsub.s32 0, %v695
  %v697 = vrot.slane %v692, %v696
  %v698 = vlaneseq
  %v699 = vshrl.u32 %v698, 7
  %v700 = vsub.s32 1, %v699
  %v701 = vrot.slane %v692, %v700
  %v710 = vunpack.c.l.b16 %v686
  %v711 = vunpack.c.h.b16 %v686
  %v712 = vunpack.c.l.b16 %v687
  %v713 = vunpack.c.h.b16 %v687
  %v714 = vunpack.c.l.b16 %v688
  %v715 = vunpack.c.h.b16 %v688
  %v716 = vunpack.c.l.b16 %v689
  %v717 = vunpack.c.h.b16 %v689
  %v718 = vunpack.c.l.b16 %v690
  %v719 = vunpack.c.h.b16 %v690
  %v720 = vunpack.c.l.b16 %v691
  %v721 = vunpack.c.h.b16 %v691
  %v722 = vpack.c.b16 %v712, %v710
  %v723 = vpack.c.b16 %v713, %v711
  %v724 = vpack.c.b16 %v716, %v714
  %v725 = vpack.c.b16 %v717, %v715
  %v726 = vpack.c.b16 %v720, %v718
  %v727 = vpack.c.b16 %v721, %v719
  %734 = vmatprep.subr.bf16.mxu0 %v723
  %735 = vmatpush1.bf16.msra.mxu0 %v722
  %736 = vmatprep.subr.bf16.mxu0 %v725
  %737 = vmatpush1.bf16.msra.mxu0 %v724
  %738 = vmatprep.subr.bf16.mxu0 %v727
  %739 = vmatpush1.bf16.msra.mxu0 %v726
  %740 = vmatprep.subr.bf16.mxu0 0
  %741 = vmatpush1.bf16.msra.mxu0 0
  %742 = vmatprep.subr.bf16.mxu0 0
  %743 = vmatpush1.bf16.msra.mxu0 0
  %744 = vmatprep.subr.bf16.mxu0 0
  %745 = vmatpush1.bf16.msra.mxu0 0
  %746 = vmatprep.subr.bf16.mxu0 0
  %747 = vmatpush1.bf16.msra.mxu0 0
  %748 = vmatprep.subr.bf16.mxu0 0
  %749 = vmatpush1.bf16.msra.mxu0 0
  %750 = vmatprep.subr.bf16.mxu0 0
  %751 = vmatpush1.bf16.msra.mxu0 0
  %752 = vmatprep.subr.bf16.mxu0 0
  %753 = vmatpush1.bf16.msra.mxu0 0
  %754 = vmatprep.subr.bf16.mxu0 0
  %755 = vmatpush1.bf16.msra.mxu0 0
  %756 = vmatprep.subr.bf16.mxu0 0
  %757 = vmatpush1.bf16.msra.mxu0 0
  %758 = vmatprep.subr.bf16.mxu0 0
  %759 = vmatpush1.bf16.msra.mxu0 0
  %760 = vmatprep.subr.bf16.mxu0 0
  %761 = vmatpush1.bf16.msra.mxu0 0
  %762 = vmatprep.subr.bf16.mxu0 0
  %763 = vmatpush1.bf16.msra.mxu0 0
  %764 = vmatprep.subr.bf16.mxu0 0
  %765 = vmatpush1.bf16.msra.mxu0 0
  %766 = vmatprep.mubr.bf16.mxu0 0
  %767 = vmatmul.mubr.bf16.gmra.mrb[0].mxu0 %v375
  %v768 = vpop.f32.mrb[0].mxu0
  %v769 = vadd.f32 %v697, %v768
  %v770 = vpop.f32.mrb[0].mxu0
  %v771 = vadd.f32 %v701, %v770
  %v772 = vpop.f32.mrb[0].mxu0
  %v773 = vadd.f32 %v697, %v772
  %v774 = vpop.f32.mrb[0].mxu0
  %v775 = vadd.f32 %v701, %v774
  %776 = vmatprep.mubr.bf16.mxu0 0
  %777 = vmatmul.mubr.bf16.gmra.mrb[0].mxu0 %v378
  %v778 = vpop.f32.mrb[0].mxu0
  %v779 = vadd.f32 %v697, %v778
  %v780 = vpop.f32.mrb[0].mxu0
  %v781 = vadd.f32 %v701, %v780
  %v782 = vpop.f32.mrb[0].mxu0
  %v783 = vadd.f32 %v697, %v782
  %v784 = vpop.f32.mrb[0].mxu0
  %v785 = vadd.f32 %v701, %v784
  %786 = vmatprep.mubr.bf16.mxu0 0
  %787 = vmatmul.mubr.bf16.gmra.mrb[0].mxu0 %v381
  %v788 = vpop.f32.mrb[0].mxu0
  %v789 = vadd.f32 %v697, %v788
  %v790 = vpop.f32.mrb[0].mxu0
  %v791 = vadd.f32 %v701, %v790
  %v792 = vpop.f32.mrb[0].mxu0
  %v793 = vadd.f32 %v697, %v792
  %v794 = vpop.f32.mrb[0].mxu0
  %v795 = vadd.f32 %v701, %v794
  %796 = vmatprep.mubr.bf16.mxu0 0
  %797 = vmatmul.mubr.bf16.gmra.mrb[0].mxu0 %v384
  %v798 = vpop.f32.mrb[0].mxu0
  %v799 = vadd.f32 %v697, %v798
  %v800 = vpop.f32.mrb[0].mxu0
  %v801 = vadd.f32 %v701, %v800
  %v802 = vpop.f32.mrb[0].mxu0
  %v803 = vadd.f32 %v697, %v802
  %v804 = vpop.f32.mrb[0].mxu0
  %v805 = vadd.f32 %v701, %v804
  %806 = vdwg.mxu0
  %v823 = vcombine.low %v769, %v771
  %v824 = vcombine.high %v769, %v771
  %v826 = vunpack.c.l.s4 1983009808
  %v827 = vunpack.c.0.s8 %v826
  %v828 = vlaneseq
  %v829 = vshrl.u32 %v828, 7
  %v830 = vsub.s32 %v827, %v829
  %v831 = vrot.slane %v823, %v830
  %v833 = vunpack.c.l.s4 1983009808
  %v834 = vunpack.c.0.s8 %v833
  %v835 = vlaneseq
  %v836 = vshrl.u32 %v835, 7
  %v837 = vsub.s32 %v834, %v836
  %v838 = vrot.slane %v824, %v837
  %v839 = vcombine.high %v831, %v831
  %v840 = vcombine.high %v838, %v838
  %v841 = vcombine.low %v773, %v775
  %v842 = vcombine.high %v773, %v775
  %v844 = vunpack.c.l.s4 1983009808
  %v845 = vunpack.c.0.s8 %v844
  %v846 = vlaneseq
  %v847 = vshrl.u32 %v846, 7
  %v848 = vsub.s32 %v845, %v847
  %v849 = vrot.slane %v841, %v848
  %v851 = vunpack.c.l.s4 1983009808
  %v852 = vunpack.c.0.s8 %v851
  %v853 = vlaneseq
  %v854 = vshrl.u32 %v853, 7
  %v855 = vsub.s32 %v852, %v854
  %v856 = vrot.slane %v842, %v855
  %v857 = vcombine.high %v849, %v849
  %v858 = vcombine.high %v856, %v856
  %v859 = vcombine.low %v779, %v781
  %v860 = vcombine.high %v779, %v781
  %v862 = vunpack.c.l.s4 1983009808
  %v863 = vunpack.c.0.s8 %v862
  %v864 = vlaneseq
  %v865 = vshrl.u32 %v864, 7
  %v866 = vsub.s32 %v863, %v865
  %v867 = vrot.slane %v859, %v866
  %v869 = vunpack.c.l.s4 1983009808
  %v870 = vunpack.c.0.s8 %v869
  %v871 = vlaneseq
  %v872 = vshrl.u32 %v871, 7
  %v873 = vsub.s32 %v870, %v872
  %v874 = vrot.slane %v860, %v873
  %v875 = vcombine.high %v867, %v867
  %v876 = vcombine.high %v874, %v874
  %v877 = vcombine.low %v783, %v785
  %v878 = vcombine.high %v783, %v785
  %v880 = vunpack.c.l.s4 1983009808
  %v881 = vunpack.c.0.s8 %v880
  %v882 = vlaneseq
  %v883 = vshrl.u32 %v882, 7
  %v884 = vsub.s32 %v881, %v883
  %v885 = vrot.slane %v877, %v884
  %v887 = vunpack.c.l.s4 1983009808
  %v888 = vunpack.c.0.s8 %v887
  %v889 = vlaneseq
  %v890 = vshrl.u32 %v889, 7
  %v891 = vsub.s32 %v888, %v890
  %v892 = vrot.slane %v878, %v891
  %v893 = vcombine.high %v885, %v885
  %v894 = vcombine.high %v892, %v892
  %v895 = vcombine.low %v789, %v791
  %v896 = vcombine.high %v789, %v791
  %v898 = vunpack.c.l.s4 1983009808
  %v899 = vunpack.c.0.s8 %v898
  %v900 = vlaneseq
  %v901 = vshrl.u32 %v900, 7
  %v902 = vsub.s32 %v899, %v901
  %v903 = vrot.slane %v895, %v902
  %v905 = vunpack.c.l.s4 1983009808
  %v906 = vunpack.c.0.s8 %v905
  %v907 = vlaneseq
  %v908 = vshrl.u32 %v907, 7
  %v909 = vsub.s32 %v906, %v908
  %v910 = vrot.slane %v896, %v909
  %v911 = vcombine.high %v903, %v903
  %v912 = vcombine.high %v910, %v910
  %v913 = vcombine.low %v793, %v795
  %v914 = vcombine.high %v793, %v795
  %v916 = vunpack.c.l.s4 1983009808
  %v917 = vunpack.c.0.s8 %v916
  %v918 = vlaneseq
  %v919 = vshrl.u32 %v918, 7
  %v920 = vsub.s32 %v917, %v919
  %v921 = vrot.slane %v913, %v920
  %v923 = vunpack.c.l.s4 1983009808
  %v924 = vunpack.c.0.s8 %v923
  %v925 = vlaneseq
  %v926 = vshrl.u32 %v925, 7
  %v927 = vsub.s32 %v924, %v926
  %v928 = vrot.slane %v914, %v927
  %v929 = vcombine.high %v921, %v921
  %v930 = vcombine.high %v928, %v928
  %v931 = vcombine.low %v799, %v801
  %v932 = vcombine.high %v799, %v801
  %v934 = vunpack.c.l.s4 1983009808
  %v935 = vunpack.c.0.s8 %v934
  %v936 = vlaneseq
  %v937 = vshrl.u32 %v936, 7
  %v938 = vsub.s32 %v935, %v937
  %v939 = vrot.slane %v931, %v938
  %v941 = vunpack.c.l.s4 1983009808
  %v942 = vunpack.c.0.s8 %v941
  %v943 = vlaneseq
  %v944 = vshrl.u32 %v943, 7
  %v945 = vsub.s32 %v942, %v944
  %v946 = vrot.slane %v932, %v945
  %v947 = vcombine.high %v939, %v939
  %v948 = vcombine.high %v946, %v946
  %v949 = vcombine.low %v803, %v805
  %v950 = vcombine.high %v803, %v805
  %v952 = vunpack.c.l.s4 1983009808
  %v953 = vunpack.c.0.s8 %v952
  %v954 = vlaneseq
  %v955 = vshrl.u32 %v954, 7
  %v956 = vsub.s32 %v953, %v955
  %v957 = vrot.slane %v949, %v956
  %v959 = vunpack.c.l.s4 1983009808
  %v960 = vunpack.c.0.s8 %v959
  %v961 = vlaneseq
  %v962 = vshrl.u32 %v961, 7
  %v963 = vsub.s32 %v960, %v962
  %v964 = vrot.slane %v950, %v963
  %v965 = vcombine.high %v957, %v957
  %v966 = vcombine.high %v964, %v964
  %999 = vst.msk [vmem:[#allocation3] sm:$0xf] %vm653, %v831
  %1000 = vst.msk [vmem:[#allocation3 + $0x4] sm:$0xf] %vm653, %v839
  %1001 = vst.msk [vmem:[#allocation3 + $0x8] sm:$0xf] %vm653, %v838
  %1002 = vst.msk [vmem:[#allocation3 + $0xc] sm:$0xf] %vm653, %v840
  %1003 = vst.msk [vmem:[#allocation3 + $0x10] sm:$0xf] %vm653, %v849
  %1004 = vst.msk [vmem:[#allocation3 + $0x14] sm:$0xf] %vm653, %v857
  %1005 = vst.msk [vmem:[#allocation3 + $0x18] sm:$0xf] %vm653, %v856
  %1006 = vst.msk [vmem:[#allocation3 + $0x1c] sm:$0xf] %vm653, %v858
  %1007 = vst.msk [vmem:[#allocation3 + $0x20] sm:$0xf] %vm653, %v867
  %1008 = vst.msk [vmem:[#allocation3 + $0x24] sm:$0xf] %vm653, %v875
  %1009 = vst.msk [vmem:[#allocation3 + $0x28] sm:$0xf] %vm653, %v874
  %1010 = vst.msk [vmem:[#allocation3 + $0x2c] sm:$0xf] %vm653, %v876
  %1011 = vst.msk [vmem:[#allocation3 + $0x30] sm:$0xf] %vm653, %v885
  %1012 = vst.msk [vmem:[#allocation3 + $0x34] sm:$0xf] %vm653, %v893
  %1013 = vst.msk [vmem:[#allocation3 + $0x38] sm:$0xf] %vm653, %v892
  %1014 = vst.msk [vmem:[#allocation3 + $0x3c] sm:$0xf] %vm653, %v894
  %1015 = vst.msk [vmem:[#allocation3 + $0x40] sm:$0xf] %vm653, %v903
  %1016 = vst.msk [vmem:[#allocation3 + $0x44] sm:$0xf] %vm653, %v911
  %1017 = vst.msk [vmem:[#allocation3 + $0x48] sm:$0xf] %vm653, %v910
  %1018 = vst.msk [vmem:[#allocation3 + $0x4c] sm:$0xf] %vm653, %v912
  %1019 = vst.msk [vmem:[#allocation3 + $0x50] sm:$0xf] %vm653, %v921
  %1020 = vst.msk [vmem:[#allocation3 + $0x54] sm:$0xf] %vm653, %v929
  %1021 = vst.msk [vmem:[#allocation3 + $0x58] sm:$0xf] %vm653, %v928
  %1022 = vst.msk [vmem:[#allocation3 + $0x5c] sm:$0xf] %vm653, %v930
  %1023 = vst.msk [vmem:[#allocation3 + $0x60] sm:$0xf] %vm653, %v939
  %1024 = vst.msk [vmem:[#allocation3 + $0x64] sm:$0xf] %vm653, %v947
  %1025 = vst.msk [vmem:[#allocation3 + $0x68] sm:$0xf] %vm653, %v946
  %1026 = vst.msk [vmem:[#allocation3 + $0x6c] sm:$0xf] %vm653, %v948
  %1027 = vst.msk [vmem:[#allocation3 + $0x70] sm:$0xf] %vm653, %v957
  %1028 = vst.msk [vmem:[#allocation3 + $0x74] sm:$0xf] %vm653, %v965
  %1029 = vst.msk [vmem:[#allocation3 + $0x78] sm:$0xf] %vm653, %v964
  %1030 = vst.msk [vmem:[#allocation3 + $0x7c] sm:$0xf] %vm653, %v966
  %v1031 = vld [vmem:[%s5] sm:$0xff]
  %v1032 = vld [vmem:[%s5 + $0x8] sm:$0xff]
  %v1033 = vld [vmem:[%s5 + $0x10] sm:$0xff]
  %v1034 = vld [vmem:[%s5 + $0x18] sm:$0xff]
  %v1035 = vld [vmem:[%s5 + $0x20] sm:$0xff]
  %v1036 = vld [vmem:[%s5 + $0x28] sm:$0xff]
  %v1037 = vld [vmem:[%s6] sm:$0xff]
  %v1038 = vld [vmem:[%s6 + $0x8] sm:$0xff]
  %v1039 = vld [vmem:[%s6 + $0x10] sm:$0xff]
  %v1040 = vld [vmem:[%s6 + $0x18] sm:$0xff]
  %v1041 = vld [vmem:[%s6 + $0x20] sm:$0xff]
  %v1042 = vld [vmem:[%s6 + $0x28] sm:$0xff]
  loop: start=0, step=1, limit=32
  $region38: #{_lambda_.5} parent=0 // loop_pre_header
    _
  $region39: #{_lambda_.5} parent=0 // loop_header
    %s1044 = sphi 0, %s1048
    %p1045 = scmp.ge.s32.totalorder %s1044, 32
    %v1049 = vphi 0.0, %v1304
    %v1050 = vphi 0.0, %v1285
    %v1051 = vphi 0.0, %v1310
    %v1052 = vphi 0.0, %v1298
  $region40: #{_lambda_.5} parent=0 // loop_header_branch
    %1047 = sbr.rel (%p1045) target = $region44
  $region41: #{_lambda_.5} parent=0 // loop_body
    %s1053 = ssub.s32 31, %s1044
    %s1054 = smul.u32 %s1044, 2
    %s1055 = smul.addr %s1054, 2
    %s1056 = scalar_lea.vmem [#allocation2], %s1055
    %v1057 = vld [vmem:[%s1056] sm:$0xf]
    %v1058 = vpack.c.bf16 %v1049, %v1049
    %v1065 = vunpack.c.l.b16 %v1031
    %v1066 = vunpack.c.h.b16 %v1031
    %v1067 = vunpack.c.l.b16 %v1032
    %v1068 = vunpack.c.h.b16 %v1032
    %v1069 = vunpack.c.l.b16 %v1033
    %v1070 = vunpack.c.h.b16 %v1033
    %v1071 = vunpack.c.l.b16 %v1034
    %v1072 = vunpack.c.h.b16 %v1034
    %v1073 = vunpack.c.l.b16 %v1035
    %v1074 = vunpack.c.h.b16 %v1035
    %v1075 = vunpack.c.l.b16 %v1036
    %v1076 = vunpack.c.h.b16 %v1036
    %v1077 = vpack.c.b16 %v1067, %v1065
    %v1078 = vpack.c.b16 %v1068, %v1066
    %v1079 = vpack.c.b16 %v1071, %v1069
    %v1080 = vpack.c.b16 %v1072, %v1070
    %v1081 = vpack.c.b16 %v1075, %v1073
    %v1082 = vpack.c.b16 %v1076, %v1074
    %v1090 = vsel %vm373, %v1058, 0
    %1092 = vmatprep.subr.bf16.mxu0 %v1078
    %1093 = vmatpush1.bf16.msra.mxu0 %v1077
    %1094 = vmatprep.subr.bf16.mxu0 %v1080
    %1095 = vmatpush1.bf16.msra.mxu0 %v1079
    %1096 = vmatprep.subr.bf16.mxu0 %v1082
    %1097 = vmatpush1.bf16.msra.mxu0 %v1081
    %1098 = vmatprep.subr.bf16.mxu0 0
    %1099 = vmatpush1.bf16.msra.mxu0 0
    %1100 = vmatprep.subr.bf16.mxu0 0
    %1101 = vmatpush1.bf16.msra.mxu0 0
    %1102 = vmatprep.subr.bf16.mxu0 0
    %1103 = vmatpush1.bf16.msra.mxu0 0
    %1104 = vmatprep.subr.bf16.mxu0 0
    %1105 = vmatpush1.bf16.msra.mxu0 0
    %1106 = vmatprep.subr.bf16.mxu0 0
    %1107 = vmatpush1.bf16.msra.mxu0 0
    %1108 = vmatprep.subr.bf16.mxu0 0
    %1109 = vmatpush1.bf16.msra.mxu0 0
    %1110 = vmatprep.subr.bf16.mxu0 0
    %1111 = vmatpush1.bf16.msra.mxu0 0
    %1112 = vmatprep.subr.bf16.mxu0 0
    %1113 = vmatpush1.bf16.msra.mxu0 0
    %1114 = vmatprep.subr.bf16.mxu0 0
    %1115 = vmatpush1.bf16.msra.mxu0 0
    %1116 = vmatprep.subr.bf16.mxu0 0
    %1117 = vmatpush1.bf16.msra.mxu0 0
    %1118 = vmatprep.subr.bf16.mxu0 0
    %1119 = vmatpush1.bf16.msra.mxu0 0
    %1120 = vmatprep.subr.bf16.mxu0 0
    %1121 = vmatpush1.bf16.msra.mxu0 0
    %1122 = vmatprep.subr.bf16.mxu0 0
    %1123 = vmatpush1.bf16.msra.mxu0 0
    %1124 = vmatprep.mubr.bf16.mxu0 0
    %1125 = vmatmul.mubr.bf16.gmra.mrb[0].mxu0 %v1090
    %v1126 = vpop.f32.mrb[0].mxu0
    %v1127 = vadd.f32 0.0, %v1126
    %v1128 = vpop.f32.mrb[0].mxu0
    %v1129 = vadd.f32 0.0, %v1128
    %v1130 = vpop.f32.mrb[0].mxu0
    %v1131 = vpop.f32.mrb[0].mxu0
    %1132 = vdwg.mxu0
    %v1135 = vcombine.low %v1127, %v1129
    %v1137 = vunpack.c.l.s4 1983009808
    %v1138 = vunpack.c.0.s8 %v1137
    %v1139 = vlaneseq
    %v1140 = vshrl.u32 %v1139, 7
    %v1141 = vsub.s32 %v1138, %v1140
    %v1142 = vrot.slane %v1135, %v1141
    %v1144 = vadd.f32 %v1057, %v1142
    %s1145 = smul.u32 %s1053, 2
    %s1146 = smul.addr %s1145, 2
    %s1147 = scalar_lea.vmem [#allocation3], %s1146
    %v1148 = vld [vmem:[%s1147] sm:$0xf]
    %v1149 = vpack.c.bf16 %v1051, %v1051
    %v1156 = vunpack.c.l.b16 %v1037
    %v1157 = vunpack.c.h.b16 %v1037
    %v1158 = vunpack.c.l.b16 %v1038
    %v1159 = vunpack.c.h.b16 %v1038
    %v1160 = vunpack.c.l.b16 %v1039
    %v1161 = vunpack.c.h.b16 %v1039
    %v1162 = vunpack.c.l.b16 %v1040
    %v1163 = vunpack.c.h.b16 %v1040
    %v1164 = vunpack.c.l.b16 %v1041
    %v1165 = vunpack.c.h.b16 %v1041
    %v1166 = vunpack.c.l.b16 %v1042
    %v1167 = vunpack.c.h.b16 %v1042
    %v1168 = vpack.c.b16 %v1158, %v1156
    %v1169 = vpack.c.b16 %v1159, %v1157
    %v1170 = vpack.c.b16 %v1162, %v1160
    %v1171 = vpack.c.b16 %v1163, %v1161
    %v1172 = vpack.c.b16 %v1166, %v1164
    %v1173 = vpack.c.b16 %v1167, %v1165
    %v1181 = vsel %vm373, %v1149, 0
    %1183 = vmatprep.subr.bf16.mxu0 %v1169
    %1184 = vmatpush1.bf16.msra.mxu0 %v1168
    %1185 = vmatprep.subr.bf16.mxu0 %v1171
    %1186 = vmatpush1.bf16.msra.mxu0 %v1170
    %1187 = vmatprep.subr.bf16.mxu0 %v1173
    %1188 = vmatpush1.bf16.msra.mxu0 %v1172
    %1189 = vmatprep.subr.bf16.mxu0 0
    %1190 = vmatpush1.bf16.msra.mxu0 0
    %1191 = vmatprep.subr.bf16.mxu0 0
    %1192 = vmatpush1.bf16.msra.mxu0 0
    %1193 = vmatprep.subr.bf16.mxu0 0
    %1194 = vmatpush1.bf16.msra.mxu0 0
    %1195 = vmatprep.subr.bf16.mxu0 0
    %1196 = vmatpush1.bf16.msra.mxu0 0
    %1197 = vmatprep.subr.bf16.mxu0 0
    %1198 = vmatpush1.bf16.msra.mxu0 0
    %1199 = vmatprep.subr.bf16.mxu0 0
    %1200 = vmatpush1.bf16.msra.mxu0 0
    %1201 = vmatprep.subr.bf16.mxu0 0
    %1202 = vmatpush1.bf16.msra.mxu0 0
    %1203 = vmatprep.subr.bf16.mxu0 0
    %1204 = vmatpush1.bf16.msra.mxu0 0
    %1205 = vmatprep.subr.bf16.mxu0 0
    %1206 = vmatpush1.bf16.msra.mxu0 0
    %1207 = vmatprep.subr.bf16.mxu0 0
    %1208 = vmatpush1.bf16.msra.mxu0 0
    %1209 = vmatprep.subr.bf16.mxu0 0
    %1210 = vmatpush1.bf16.msra.mxu0 0
    %1211 = vmatprep.subr.bf16.mxu0 0
    %1212 = vmatpush1.bf16.msra.mxu0 0
    %1213 = vmatprep.subr.bf16.mxu0 0
    %1214 = vmatpush1.bf16.msra.mxu0 0
    %1215 = vmatprep.mubr.bf16.mxu0 0
    %1216 = vmatmul.mubr.bf16.gmra.mrb[0].mxu0 %v1181
    %v1217 = vpop.f32.mrb[0].mxu0
    %v1218 = vadd.f32 0.0, %v1217
    %v1219 = vpop.f32.mrb[0].mxu0
    %v1220 = vadd.f32 0.0, %v1219
    %v1221 = vpop.f32.mrb[0].mxu0
    %v1222 = vpop.f32.mrb[0].mxu0
    %1223 = vdwg.mxu0
    %v1226 = vcombine.low %v1218, %v1220
    %v1228 = vunpack.c.l.s4 1983009808
    %v1229 = vunpack.c.0.s8 %v1228
    %v1230 = vlaneseq
    %v1231 = vshrl.u32 %v1230, 7
    %v1232 = vsub.s32 %v1229, %v1231
    %v1233 = vrot.slane %v1226, %v1232
    %v1235 = vadd.f32 %v1148, %v1233
    %v1236 = vxor.u32 %v1144, 2147483648
    %v1237 = vmul.f32 %v1236, 1.442695
    %v1238 = vpow.pop %v1237
    %v1239 = vadd.f32 %v1238, 1.0
    %v1240 = vrcp.pop %v1239
    %v1241 = vmul.f32 1.0, %v1240
    %v1242 = vtanh.pop %v1144
    %1244 = vrot.lane.b32.xlu0 %v1144, 112
    %v1245 = vpop.permute.xlu0 %1244
    %v1246 = vrot.slane %v1245, 2
    %v1248 = vxor.u32 %v1246, 2147483648
    %v1249 = vmul.f32 %v1248, 1.442695
    %v1250 = vpow.pop %v1249
    %v1251 = vadd.f32 %v1250, 1.0
    %v1252 = vrcp.pop %v1251
    %v1253 = vmul.f32 1.0, %v1252
    %v1254 = vxor.u32 %v1235, 2147483648
    %v1255 = vmul.f32 %v1254, 1.442695
    %v1256 = vpow.pop %v1255
    %v1257 = vadd.f32 %v1256, 1.0
    %v1258 = vrcp.pop %v1257
    %v1259 = vmul.f32 1.0, %v1258
    %v1260 = vtanh.pop %v1235
    %1262 = vrot.lane.b32.xlu0 %v1235, 112
    %v1263 = vpop.permute.xlu0 %1262
    %v1264 = vrot.slane %v1263, 2
    %v1266 = vxor.u32 %v1264, 2147483648
    %v1267 = vmul.f32 %v1266, 1.442695
    %v1268 = vpow.pop %v1267
    %v1269 = vadd.f32 %v1268, 1.0
    %v1270 = vrcp.pop %v1269
    %v1271 = vmul.f32 1.0, %v1270
    %v1272 = vmul.f32 %v1241, %v1050
    %1274 = vrot.lane.b32.xlu0 %v1242, 32
    %v1275 = vpop.permute.xlu0 %1274
    %v1276 = vrot.slane %v1275, 2
    %vm1277 = vcmask 261120
    %v1278 = vsel %vm1277, %v1275, %v1276
    %v1280 = vmul.f32 %v1241, %v1278
    %1282 = vrot.lane.b32.xlu0 %v1280, 48
    %v1283 = vpop.permute.xlu0 %1282
    %v1285 = vadd.f32 %v1272, %v1283
    %v1286 = vmul.f32 %v1259, %v1052
    %1288 = vrot.lane.b32.xlu0 %v1260, 32
    %v1289 = vpop.permute.xlu0 %1288
    %v1290 = vrot.slane %v1289, 2
    %v1291 = vsel %vm1277, %v1289, %v1290
    %v1293 = vmul.f32 %v1259, %v1291
    %1295 = vrot.lane.b32.xlu0 %v1293, 48
    %v1296 = vpop.permute.xlu0 %1295
    %v1298 = vadd.f32 %v1286, %v1296
    %v1299 = vtanh.pop %v1285
    %1301 = vrot.lane.b32.xlu0 %v1299, 80
    %v1302 = vpop.permute.xlu0 %1301
    %v1304 = vmul.f32 %v1253, %v1302
    %v1305 = vtanh.pop %v1298
    %1307 = vrot.lane.b32.xlu0 %v1305, 80
    %v1308 = vpop.permute.xlu0 %1307
    %v1310 = vmul.f32 %v1271, %v1308
    %s1311 = scalar_lea.vmem [#allocation4], %s1054
    %vm1312 = vcmask 386048
    %1313 = vst.msk [vmem:[%s1311] sm:$0x3] %vm1312, %v1304
    %s1314 = scalar_lea.vmem [#allocation5], %s1145
    %1315 = vst.msk [vmem:[%s1314] sm:$0x3] %vm1312, %v1310
  $region42: #{_lambda_.5} parent=0 // loop_footer
    %s1048 = sadd.s32 1, %s1044
  $region43: #{_lambda_.5} parent=0 // loop_footer_branch
    %1043 = sbr.rel target = $region39
  $region44: #{_lambda_.5} parent=0 // loop_exit
    _
  %v1316 = vld [vmem:[#allocation4] sm:$0x3]
  %v1317 = vld [vmem:[#allocation4 + $0x2] sm:$0x3]
  %v1318 = vld [vmem:[#allocation4 + $0x4] sm:$0x3]
  %v1319 = vld [vmem:[#allocation4 + $0x6] sm:$0x3]
  %v1320 = vld [vmem:[#allocation4 + $0x8] sm:$0x3]
  %v1321 = vld [vmem:[#allocation4 + $0xa] sm:$0x3]
  %v1322 = vld [vmem:[#allocation4 + $0xc] sm:$0x3]
  %v1323 = vld [vmem:[#allocation4 + $0xe] sm:$0x3]
  %v1324 = vld [vmem:[#allocation4 + $0x10] sm:$0x3]
  %v1325 = vld [vmem:[#allocation4 + $0x12] sm:$0x3]
  %v1326 = vld [vmem:[#allocation4 + $0x14] sm:$0x3]
  %v1327 = vld [vmem:[#allocation4 + $0x16] sm:$0x3]
  %v1328 = vld [vmem:[#allocation4 + $0x18] sm:$0x3]
  %v1329 = vld [vmem:[#allocation4 + $0x1a] sm:$0x3]
  %v1330 = vld [vmem:[#allocation4 + $0x1c] sm:$0x3]
  %v1331 = vld [vmem:[#allocation4 + $0x1e] sm:$0x3]
  %v1332 = vld [vmem:[#allocation4 + $0x20] sm:$0x3]
  %v1333 = vld [vmem:[#allocation4 + $0x22] sm:$0x3]
  %v1334 = vld [vmem:[#allocation4 + $0x24] sm:$0x3]
  %v1335 = vld [vmem:[#allocation4 + $0x26] sm:$0x3]
  %v1336 = vld [vmem:[#allocation4 + $0x28] sm:$0x3]
  %v1337 = vld [vmem:[#allocation4 + $0x2a] sm:$0x3]
  %v1338 = vld [vmem:[#allocation4 + $0x2c] sm:$0x3]
  %v1339 = vld [vmem:[#allocation4 + $0x2e] sm:$0x3]
  %v1340 = vld [vmem:[#allocation4 + $0x30] sm:$0x3]
  %v1341 = vld [vmem:[#allocation4 + $0x32] sm:$0x3]
  %v1342 = vld [vmem:[#allocation4 + $0x34] sm:$0x3]
  %v1343 = vld [vmem:[#allocation4 + $0x36] sm:$0x3]
  %v1344 = vld [vmem:[#allocation4 + $0x38] sm:$0x3]
  %v1345 = vld [vmem:[#allocation4 + $0x3a] sm:$0x3]
  %v1346 = vld [vmem:[#allocation4 + $0x3c] sm:$0x3]
  %v1347 = vld [vmem:[#allocation4 + $0x3e] sm:$0x3]
  %v1348 = vld [vmem:[#allocation5] sm:$0x3]
  %v1349 = vld [vmem:[#allocation5 + $0x2] sm:$0x3]
  %v1350 = vld [vmem:[#allocation5 + $0x4] sm:$0x3]
  %v1351 = vld [vmem:[#allocation5 + $0x6] sm:$0x3]
  %v1352 = vld [vmem:[#allocation5 + $0x8] sm:$0x3]
  %v1353 = vld [vmem:[#allocation5 + $0xa] sm:$0x3]
  %v1354 = vld [vmem:[#allocation5 + $0xc] sm:$0x3]
  %v1355 = vld [vmem:[#allocation5 + $0xe] sm:$0x3]
  %v1356 = vld [vmem:[#allocation5 + $0x10] sm:$0x3]
  %v1357 = vld [vmem:[#allocation5 + $0x12] sm:$0x3]
  %v1358 = vld [vmem:[#allocation5 + $0x14] sm:$0x3]
  %v1359 = vld [vmem:[#allocation5 + $0x16] sm:$0x3]
  %v1360 = vld [vmem:[#allocation5 + $0x18] sm:$0x3]
  %v1361 = vld [vmem:[#allocation5 + $0x1a] sm:$0x3]
  %v1362 = vld [vmem:[#allocation5 + $0x1c] sm:$0x3]
  %v1363 = vld [vmem:[#allocation5 + $0x1e] sm:$0x3]
  %v1364 = vld [vmem:[#allocation5 + $0x20] sm:$0x3]
  %v1365 = vld [vmem:[#allocation5 + $0x22] sm:$0x3]
  %v1366 = vld [vmem:[#allocation5 + $0x24] sm:$0x3]
  %v1367 = vld [vmem:[#allocation5 + $0x26] sm:$0x3]
  %v1368 = vld [vmem:[#allocation5 + $0x28] sm:$0x3]
  %v1369 = vld [vmem:[#allocation5 + $0x2a] sm:$0x3]
  %v1370 = vld [vmem:[#allocation5 + $0x2c] sm:$0x3]
  %v1371 = vld [vmem:[#allocation5 + $0x2e] sm:$0x3]
  %v1372 = vld [vmem:[#allocation5 + $0x30] sm:$0x3]
  %v1373 = vld [vmem:[#allocation5 + $0x32] sm:$0x3]
  %v1374 = vld [vmem:[#allocation5 + $0x34] sm:$0x3]
  %v1375 = vld [vmem:[#allocation5 + $0x36] sm:$0x3]
  %v1376 = vld [vmem:[#allocation5 + $0x38] sm:$0x3]
  %v1377 = vld [vmem:[#allocation5 + $0x3a] sm:$0x3]
  %v1378 = vld [vmem:[#allocation5 + $0x3c] sm:$0x3]
  %v1379 = vld [vmem:[#allocation5 + $0x3e] sm:$0x3]
  %1412 = vrot.lane.b32.xlu0 %v1348, 48
  %v1413 = vpop.permute.xlu0 %1412
  %1414 = vrot.lane.b32.xlu0 %v1349, 48
  %v1415 = vpop.permute.xlu0 %1414
  %1416 = vrot.lane.b32.xlu0 %v1350, 48
  %v1417 = vpop.permute.xlu0 %1416
  %1418 = vrot.lane.b32.xlu0 %v1351, 48
  %v1419 = vpop.permute.xlu0 %1418
  %1420 = vrot.lane.b32.xlu0 %v1352, 48
  %v1421 = vpop.permute.xlu0 %1420
  %1422 = vrot.lane.b32.xlu0 %v1353, 48
  %v1423 = vpop.permute.xlu0 %1422
  %1424 = vrot.lane.b32.xlu0 %v1354, 48
  %v1425 = vpop.permute.xlu0 %1424
  %1426 = vrot.lane.b32.xlu0 %v1355, 48
  %v1427 = vpop.permute.xlu0 %1426
  %1428 = vrot.lane.b32.xlu0 %v1356, 48
  %v1429 = vpop.permute.xlu0 %1428
  %1430 = vrot.lane.b32.xlu0 %v1357, 48
  %v1431 = vpop.permute.xlu0 %1430
  %1432 = vrot.lane.b32.xlu0 %v1358, 48
  %v1433 = vpop.permute.xlu0 %1432
  %1434 = vrot.lane.b32.xlu0 %v1359, 48
  %v1435 = vpop.permute.xlu0 %1434
  %1436 = vrot.lane.b32.xlu0 %v1360, 48
  %v1437 = vpop.permute.xlu0 %1436
  %1438 = vrot.lane.b32.xlu0 %v1361, 48
  %v1439 = vpop.permute.xlu0 %1438
  %1440 = vrot.lane.b32.xlu0 %v1362, 48
  %v1441 = vpop.permute.xlu0 %1440
  %1442 = vrot.lane.b32.xlu0 %v1363, 48
  %v1443 = vpop.permute.xlu0 %1442
  %1444 = vrot.lane.b32.xlu0 %v1364, 48
  %v1445 = vpop.permute.xlu0 %1444
  %1446 = vrot.lane.b32.xlu0 %v1365, 48
  %v1447 = vpop.permute.xlu0 %1446
  %1448 = vrot.lane.b32.xlu0 %v1366, 48
  %v1449 = vpop.permute.xlu0 %1448
  %1450 = vrot.lane.b32.xlu0 %v1367, 48
  %v1451 = vpop.permute.xlu0 %1450
  %1452 = vrot.lane.b32.xlu0 %v1368, 48
  %v1453 = vpop.permute.xlu0 %1452
  %1454 = vrot.lane.b32.xlu0 %v1369, 48
  %v1455 = vpop.permute.xlu0 %1454
  %1456 = vrot.lane.b32.xlu0 %v1370, 48
  %v1457 = vpop.permute.xlu0 %1456
  %1458 = vrot.lane.b32.xlu0 %v1371, 48
  %v1459 = vpop.permute.xlu0 %1458
  %1460 = vrot.lane.b32.xlu0 %v1372, 48
  %v1461 = vpop.permute.xlu0 %1460
  %1462 = vrot.lane.b32.xlu0 %v1373, 48
  %v1463 = vpop.permute.xlu0 %1462
  %1464 = vrot.lane.b32.xlu0 %v1374, 48
  %v1465 = vpop.permute.xlu0 %1464
  %1466 = vrot.lane.b32.xlu0 %v1375, 48
  %v1467 = vpop.permute.xlu0 %1466
  %1468 = vrot.lane.b32.xlu0 %v1376, 48
  %v1469 = vpop.permute.xlu0 %1468
  %1470 = vrot.lane.b32.xlu0 %v1377, 48
  %v1471 = vpop.permute.xlu0 %1470
  %1472 = vrot.lane.b32.xlu0 %v1378, 48
  %v1473 = vpop.permute.xlu0 %1472
  %1474 = vrot.lane.b32.xlu0 %v1379, 48
  %v1475 = vpop.permute.xlu0 %1474
  %v1508 = vsel %vm373, %v1316, %v1413
  %v1509 = vsel %vm373, %v1317, %v1415
  %v1510 = vsel %vm373, %v1318, %v1417
  %v1511 = vsel %vm373, %v1319, %v1419
  %v1512 = vsel %vm373, %v1320, %v1421
  %v1513 = vsel %vm373, %v1321, %v1423
  %v1514 = vsel %vm373, %v1322, %v1425
  %v1515 = vsel %vm373, %v1323, %v1427
  %v1516 = vsel %vm373, %v1324, %v1429
  %v1517 = vsel %vm373, %v1325, %v1431
  %v1518 = vsel %vm373, %v1326, %v1433
  %v1519 = vsel %vm373, %v1327, %v1435
  %v1520 = vsel %vm373, %v1328, %v1437
  %v1521 = vsel %vm373, %v1329, %v1439
  %v1522 = vsel %vm373, %v1330, %v1441
  %v1523 = vsel %vm373, %v1331, %v1443
  %v1524 = vsel %vm373, %v1332, %v1445
  %v1525 = vsel %vm373, %v1333, %v1447
  %v1526 = vsel %vm373, %v1334, %v1449
  %v1527 = vsel %vm373, %v1335, %v1451
  %v1528 = vsel %vm373, %v1336, %v1453
  %v1529 = vsel %vm373, %v1337, %v1455
  %v1530 = vsel %vm373, %v1338, %v1457
  %v1531 = vsel %vm373, %v1339, %v1459
  %v1532 = vsel %vm373, %v1340, %v1461
  %v1533 = vsel %vm373, %v1341, %v1463
  %v1534 = vsel %vm373, %v1342, %v1465
  %v1535 = vsel %vm373, %v1343, %v1467
  %v1536 = vsel %vm373, %v1344, %v1469
  %v1537 = vsel %vm373, %v1345, %v1471
  %v1538 = vsel %vm373, %v1346, %v1473
  %v1539 = vsel %vm373, %v1347, %v1475
  %v1540 = vpack.c.bf16 %v1508, %v1508
  %v1541 = vpack.c.bf16 %v1509, %v1509
  %v1542 = vpack.c.bf16 %v1510, %v1510
  %v1543 = vpack.c.bf16 %v1511, %v1511
  %v1544 = vpack.c.bf16 %v1512, %v1512
  %v1545 = vpack.c.bf16 %v1513, %v1513
  %v1546 = vpack.c.bf16 %v1514, %v1514
  %v1547 = vpack.c.bf16 %v1515, %v1515
  %v1548 = vpack.c.bf16 %v1516, %v1516
  %v1549 = vpack.c.bf16 %v1517, %v1517
  %v1550 = vpack.c.bf16 %v1518, %v1518
  %v1551 = vpack.c.bf16 %v1519, %v1519
  %v1552 = vpack.c.bf16 %v1520, %v1520
  %v1553 = vpack.c.bf16 %v1521, %v1521
  %v1554 = vpack.c.bf16 %v1522, %v1522
  %v1555 = vpack.c.bf16 %v1523, %v1523
  %v1556 = vpack.c.bf16 %v1524, %v1524
  %v1557 = vpack.c.bf16 %v1525, %v1525
  %v1558 = vpack.c.bf16 %v1526, %v1526
  %v1559 = vpack.c.bf16 %v1527, %v1527
  %v1560 = vpack.c.bf16 %v1528, %v1528
  %v1561 = vpack.c.bf16 %v1529, %v1529
  %v1562 = vpack.c.bf16 %v1530, %v1530
  %v1563 = vpack.c.bf16 %v1531, %v1531
  %v1564 = vpack.c.bf16 %v1532, %v1532
  %v1565 = vpack.c.bf16 %v1533, %v1533
  %v1566 = vpack.c.bf16 %v1534, %v1534
  %v1567 = vpack.c.bf16 %v1535, %v1535
  %v1568 = vpack.c.bf16 %v1536, %v1536
  %v1569 = vpack.c.bf16 %v1537, %v1537
  %v1570 = vpack.c.bf16 %v1538, %v1538
  %v1571 = vpack.c.bf16 %v1539, %v1539
  %v1572 = vld [vmem:[%s7] sm:$0xf]
  %v1573 = vld [vmem:[%s7 + $0x4] sm:$0xf]
  %v1574 = vld [vmem:[%s7 + $0x8] sm:$0xf]
  %v1575 = vld [vmem:[%s7 + $0xc] sm:$0xf]
  %v1576 = vld [vmem:[%s7 + $0x10] sm:$0xf]
  %v1577 = vld [vmem:[%s7 + $0x14] sm:$0xf]
  %v1578 = vld [vmem:[%s7 + $0x18] sm:$0xf]
  %v1579 = vld [vmem:[%s7 + $0x1c] sm:$0xf]
  %v1580 = vld [vmem:[%s7 + $0x20] sm:$0xf]
  %v1581 = vld [vmem:[%s7 + $0x24] sm:$0xf]
  %v1582 = vld [vmem:[%s7 + $0x28] sm:$0xf]
  %v1583 = vld [vmem:[%s7 + $0x2c] sm:$0xf]
  %v1584 = vld [vmem:[%s8] sm:$0x1]
  %v1586 = vlaneseq
  %v1587 = vshrl.u32 %v1586, 7
  %v1588 = vsub.s32 0, %v1587
  %v1589 = vrot.slane %v1584, %v1588
  %v1623 = vcombine.low %v1540, %v1541
  %v1624 = vcombine.low %v1542, %v1543
  %v1625 = vcombine.low %v1544, %v1545
  %v1626 = vcombine.low %v1546, %v1547
  %v1628 = vunpack.c.l.s4 1966171168
  %v1629 = vunpack.c.0.s8 %v1628
  %v1630 = vlaneseq
  %v1631 = vshrl.u32 %v1630, 7
  %v1632 = vsub.s32 %v1629, %v1631
  %v1633 = vrot.slane %v1623, %v1632
  %v1635 = vunpack.c.l.s4 1966171168
  %v1636 = vunpack.c.0.s8 %v1635
  %v1637 = vlaneseq
  %v1638 = vshrl.u32 %v1637, 7
  %v1639 = vsub.s32 %v1636, %v1638
  %v1640 = vrot.slane %v1624, %v1639
  %v1642 = vunpack.c.l.s4 1966171168
  %v1643 = vunpack.c.0.s8 %v1642
  %v1644 = vlaneseq
  %v1645 = vshrl.u32 %v1644, 7
  %v1646 = vsub.s32 %v1643, %v1645
  %v1647 = vrot.slane %v1625, %v1646
  %v1649 = vunpack.c.l.s4 1966171168
  %v1650 = vunpack.c.0.s8 %v1649
  %v1651 = vlaneseq
  %v1652 = vshrl.u32 %v1651, 7
  %v1653 = vsub.s32 %v1650, %v1652
  %v1654 = vrot.slane %v1626, %v1653
  %v1655 = vcombine.low %v1633, %v1640
  %v1656 = vcombine.low %v1647, %v1654
  %v1658 = vunpack.c.l.s4 1966171168
  %v1659 = vunpack.c.0.s8 %v1658
  %v1660 = vlaneseq
  %v1661 = vshrl.u32 %v1660, 7
  %v1662 = vsub.s32 %v1659, %v1661
  %v1663 = vrot.slane %v1655, %v1662
  %v1665 = vunpack.c.l.s4 1966171168
  %v1666 = vunpack.c.0.s8 %v1665
  %v1667 = vlaneseq
  %v1668 = vshrl.u32 %v1667, 7
  %v1669 = vsub.s32 %v1666, %v1668
  %v1670 = vrot.slane %v1656, %v1669
  %v1671 = vcombine.low %v1663, %v1670
  %v1672 = vcombine.low %v1548, %v1549
  %v1673 = vcombine.low %v1550, %v1551
  %v1674 = vcombine.low %v1552, %v1553
  %v1675 = vcombine.low %v1554, %v1555
  %v1677 = vunpack.c.l.s4 1966171168
  %v1678 = vunpack.c.0.s8 %v1677
  %v1679 = vlaneseq
  %v1680 = vshrl.u32 %v1679, 7
  %v1681 = vsub.s32 %v1678, %v1680
  %v1682 = vrot.slane %v1672, %v1681
  %v1684 = vunpack.c.l.s4 1966171168
  %v1685 = vunpack.c.0.s8 %v1684
  %v1686 = vlaneseq
  %v1687 = vshrl.u32 %v1686, 7
  %v1688 = vsub.s32 %v1685, %v1687
  %v1689 = vrot.slane %v1673, %v1688
  %v1691 = vunpack.c.l.s4 1966171168
  %v1692 = vunpack.c.0.s8 %v1691
  %v1693 = vlaneseq
  %v1694 = vshrl.u32 %v1693, 7
  %v1695 = vsub.s32 %v1692, %v1694
  %v1696 = vrot.slane %v1674, %v1695
  %v1698 = vunpack.c.l.s4 1966171168
  %v1699 = vunpack.c.0.s8 %v1698
  %v1700 = vlaneseq
  %v1701 = vshrl.u32 %v1700, 7
  %v1702 = vsub.s32 %v1699, %v1701
  %v1703 = vrot.slane %v1675, %v1702
  %v1704 = vcombine.low %v1682, %v1689
  %v1705 = vcombine.low %v1696, %v1703
  %v1707 = vunpack.c.l.s4 1966171168
  %v1708 = vunpack.c.0.s8 %v1707
  %v1709 = vlaneseq
  %v1710 = vshrl.u32 %v1709, 7
  %v1711 = vsub.s32 %v1708, %v1710
  %v1712 = vrot.slane %v1704, %v1711
  %v1714 = vunpack.c.l.s4 1966171168
  %v1715 = vunpack.c.0.s8 %v1714
  %v1716 = vlaneseq
  %v1717 = vshrl.u32 %v1716, 7
  %v1718 = vsub.s32 %v1715, %v1717
  %v1719 = vrot.slane %v1705, %v1718
  %v1720 = vcombine.low %v1712, %v1719
  %v1721 = vcombine.low %v1556, %v1557
  %v1722 = vcombine.low %v1558, %v1559
  %v1723 = vcombine.low %v1560, %v1561
  %v1724 = vcombine.low %v1562, %v1563
  %v1726 = vunpack.c.l.s4 1966171168
  %v1727 = vunpack.c.0.s8 %v1726
  %v1728 = vlaneseq
  %v1729 = vshrl.u32 %v1728, 7
  %v1730 = vsub.s32 %v1727, %v1729
  %v1731 = vrot.slane %v1721, %v1730
  %v1733 = vunpack.c.l.s4 1966171168
  %v1734 = vunpack.c.0.s8 %v1733
  %v1735 = vlaneseq
  %v1736 = vshrl.u32 %v1735, 7
  %v1737 = vsub.s32 %v1734, %v1736
  %v1738 = vrot.slane %v1722, %v1737
  %v1740 = vunpack.c.l.s4 1966171168
  %v1741 = vunpack.c.0.s8 %v1740
  %v1742 = vlaneseq
  %v1743 = vshrl.u32 %v1742, 7
  %v1744 = vsub.s32 %v1741, %v1743
  %v1745 = vrot.slane %v1723, %v1744
  %v1747 = vunpack.c.l.s4 1966171168
  %v1748 = vunpack.c.0.s8 %v1747
  %v1749 = vlaneseq
  %v1750 = vshrl.u32 %v1749, 7
  %v1751 = vsub.s32 %v1748, %v1750
  %v1752 = vrot.slane %v1724, %v1751
  %v1753 = vcombine.low %v1731, %v1738
  %v1754 = vcombine.low %v1745, %v1752
  %v1756 = vunpack.c.l.s4 1966171168
  %v1757 = vunpack.c.0.s8 %v1756
  %v1758 = vlaneseq
  %v1759 = vshrl.u32 %v1758, 7
  %v1760 = vsub.s32 %v1757, %v1759
  %v1761 = vrot.slane %v1753, %v1760
  %v1763 = vunpack.c.l.s4 1966171168
  %v1764 = vunpack.c.0.s8 %v1763
  %v1765 = vlaneseq
  %v1766 = vshrl.u32 %v1765, 7
  %v1767 = vsub.s32 %v1764, %v1766
  %v1768 = vrot.slane %v1754, %v1767
  %v1769 = vcombine.low %v1761, %v1768
  %v1770 = vcombine.low %v1564, %v1565
  %v1771 = vcombine.low %v1566, %v1567
  %v1772 = vcombine.low %v1568, %v1569
  %v1773 = vcombine.low %v1570, %v1571
  %v1775 = vunpack.c.l.s4 1966171168
  %v1776 = vunpack.c.0.s8 %v1775
  %v1777 = vlaneseq
  %v1778 = vshrl.u32 %v1777, 7
  %v1779 = vsub.s32 %v1776, %v1778
  %v1780 = vrot.slane %v1770, %v1779
  %v1782 = vunpack.c.l.s4 1966171168
  %v1783 = vunpack.c.0.s8 %v1782
  %v1784 = vlaneseq
  %v1785 = vshrl.u32 %v1784, 7
  %v1786 = vsub.s32 %v1783, %v1785
  %v1787 = vrot.slane %v1771, %v1786
  %v1789 = vunpack.c.l.s4 1966171168
  %v1790 = vunpack.c.0.s8 %v1789
  %v1791 = vlaneseq
  %v1792 = vshrl.u32 %v1791, 7
  %v1793 = vsub.s32 %v1790, %v1792
  %v1794 = vrot.slane %v1772, %v1793
  %v1796 = vunpack.c.l.s4 1966171168
  %v1797 = vunpack.c.0.s8 %v1796
  %v1798 = vlaneseq
  %v1799 = vshrl.u32 %v1798, 7
  %v1800 = vsub.s32 %v1797, %v1799
  %v1801 = vrot.slane %v1773, %v1800
  %v1802 = vcombine.low %v1780, %v1787
  %v1803 = vcombine.low %v1794, %v1801
  %v1805 = vunpack.c.l.s4 1966171168
  %v1806 = vunpack.c.0.s8 %v1805
  %v1807 = vlaneseq
  %v1808 = vshrl.u32 %v1807, 7
  %v1809 = vsub.s32 %v1806, %v1808
  %v1810 = vrot.slane %v1802, %v1809
  %v1812 = vunpack.c.l.s4 1966171168
  %v1813 = vunpack.c.0.s8 %v1812
  %v1814 = vlaneseq
  %v1815 = vshrl.u32 %v1814, 7
  %v1816 = vsub.s32 %v1813, %v1815
  %v1817 = vrot.slane %v1803, %v1816
  %v1818 = vcombine.low %v1810, %v1817
  %v1831 = vunpack.c.l.b16 %v1572
  %v1832 = vunpack.c.l.b16 %v1573
  %v1833 = vunpack.c.l.b16 %v1574
  %v1834 = vunpack.c.l.b16 %v1575
  %v1835 = vunpack.c.l.b16 %v1576
  %v1836 = vunpack.c.l.b16 %v1577
  %v1837 = vunpack.c.l.b16 %v1578
  %v1838 = vunpack.c.l.b16 %v1579
  %v1839 = vunpack.c.l.b16 %v1580
  %v1840 = vunpack.c.l.b16 %v1581
  %v1841 = vunpack.c.l.b16 %v1582
  %v1842 = vunpack.c.l.b16 %v1583
  %v1843 = vpack.c.b16 %v1832, %v1831
  %v1844 = vpack.c.b16 %v1834, %v1833
  %v1845 = vpack.c.b16 %v1836, %v1835
  %v1846 = vpack.c.b16 %v1838, %v1837
  %v1847 = vpack.c.b16 %v1840, %v1839
  %v1848 = vpack.c.b16 %v1842, %v1841
  %vm1855 = vcmask 785408
  %v1857 = vsel %vm1855, %v1671, 0
  %v1860 = vsel %vm1855, %v1720, 0
  %v1863 = vsel %vm1855, %v1769, 0
  %v1866 = vsel %vm1855, %v1818, 0
  %1868 = vmatprep.subr.bf16.mxu0 0
  %1869 = vmatpush1.bf16.msra.mxu0 %v1843
  %1870 = vmatprep.subr.bf16.mxu0 0
  %1871 = vmatpush1.bf16.msra.mxu0 %v1844
  %1872 = vmatprep.subr.bf16.mxu0 0
  %1873 = vmatpush1.bf16.msra.mxu0 %v1845
  %1874 = vmatprep.subr.bf16.mxu0 0
  %1875 = vmatpush1.bf16.msra.mxu0 %v1846
  %1876 = vmatprep.subr.bf16.mxu0 0
  %1877 = vmatpush1.bf16.msra.mxu0 %v1847
  %1878 = vmatprep.subr.bf16.mxu0 0
  %1879 = vmatpush1.bf16.msra.mxu0 %v1848
  %1880 = vmatprep.subr.bf16.mxu0 0
  %1881 = vmatpush1.bf16.msra.mxu0 0
  %1882 = vmatprep.subr.bf16.mxu0 0
  %1883 = vmatpush1.bf16.msra.mxu0 0
  %1884 = vmatprep.subr.bf16.mxu0 0
  %1885 = vmatpush1.bf16.msra.mxu0 0
  %1886 = vmatprep.subr.bf16.mxu0 0
  %1887 = vmatpush1.bf16.msra.mxu0 0
  %1888 = vmatprep.subr.bf16.mxu0 0
  %1889 = vmatpush1.bf16.msra.mxu0 0
  %1890 = vmatprep.subr.bf16.mxu0 0
  %1891 = vmatpush1.bf16.msra.mxu0 0
  %1892 = vmatprep.subr.bf16.mxu0 0
  %1893 = vmatpush1.bf16.msra.mxu0 0
  %1894 = vmatprep.subr.bf16.mxu0 0
  %1895 = vmatpush1.bf16.msra.mxu0 0
  %1896 = vmatprep.subr.bf16.mxu0 0
  %1897 = vmatpush1.bf16.msra.mxu0 0
  %1898 = vmatprep.subr.bf16.mxu0 0
  %1899 = vmatpush1.bf16.msra.mxu0 0
  %1900 = vmatprep.mubr.bf16.mxu0 0
  %1901 = vmatmul.mubr.bf16.gmra.mrb[0].mxu0 %v1857
  %v1902 = vpop.f32.mrb[0].mxu0
  %v1903 = vadd.f32 %v1589, %v1902
  %v1904 = vpop.f32.mrb[0].mxu0
  %v1905 = vpop.f32.mrb[0].mxu0
  %v1906 = vadd.f32 %v1589, %v1905
  %v1907 = vpop.f32.mrb[0].mxu0
  %1908 = vmatprep.mubr.bf16.mxu0 0
  %1909 = vmatmul.mubr.bf16.gmra.mrb[0].mxu0 %v1860
  %v1910 = vpop.f32.mrb[0].mxu0
  %v1911 = vadd.f32 %v1589, %v1910
  %v1912 = vpop.f32.mrb[0].mxu0
  %v1913 = vpop.f32.mrb[0].mxu0
  %v1914 = vadd.f32 %v1589, %v1913
  %v1915 = vpop.f32.mrb[0].mxu0
  %1916 = vmatprep.mubr.bf16.mxu0 0
  %1917 = vmatmul.mubr.bf16.gmra.mrb[0].mxu0 %v1863
  %v1918 = vpop.f32.mrb[0].mxu0
  %v1919 = vadd.f32 %v1589, %v1918
  %v1920 = vpop.f32.mrb[0].mxu0
  %v1921 = vpop.f32.mrb[0].mxu0
  %v1922 = vadd.f32 %v1589, %v1921
  %v1923 = vpop.f32.mrb[0].mxu0
  %1924 = vmatprep.mubr.bf16.mxu0 0
  %1925 = vmatmul.mubr.bf16.gmra.mrb[0].mxu0 %v1866
  %v1926 = vpop.f32.mrb[0].mxu0
  %v1927 = vadd.f32 %v1589, %v1926
  %v1928 = vpop.f32.mrb[0].mxu0
  %v1929 = vpop.f32.mrb[0].mxu0
  %v1930 = vadd.f32 %v1589, %v1929
  %v1931 = vpop.f32.mrb[0].mxu0
  %1932 = vdwg.mxu0
  %v1941 = vcombine.high %v1903, %v1903
  %v1943 = vunpack.c.l.s4 1983009808
  %v1944 = vunpack.c.0.s8 %v1943
  %v1945 = vlaneseq
  %v1946 = vshrl.u32 %v1945, 7
  %v1947 = vsub.s32 %v1944, %v1946
  %v1948 = vrot.slane %v1903, %v1947
  %v1950 = vunpack.c.l.s4 1983009808
  %v1951 = vunpack.c.0.s8 %v1950
  %v1952 = vlaneseq
  %v1953 = vshrl.u32 %v1952, 7
  %v1954 = vsub.s32 %v1951, %v1953
  %v1955 = vrot.slane %v1941, %v1954
  %v1956 = vcombine.high %v1948, %v1948
  %v1957 = vcombine.high %v1955, %v1955
  %v1958 = vcombine.high %v1906, %v1906
  %v1960 = vunpack.c.l.s4 1983009808
  %v1961 = vunpack.c.0.s8 %v1960
  %v1962 = vlaneseq
  %v1963 = vshrl.u32 %v1962, 7
  %v1964 = vsub.s32 %v1961, %v1963
  %v1965 = vrot.slane %v1906, %v1964
  %v1967 = vunpack.c.l.s4 1983009808
  %v1968 = vunpack.c.0.s8 %v1967
  %v1969 = vlaneseq
  %v1970 = vshrl.u32 %v1969, 7
  %v1971 = vsub.s32 %v1968, %v1970
  %v1972 = vrot.slane %v1958, %v1971
  %v1973 = vcombine.high %v1965, %v1965
  %v1974 = vcombine.high %v1972, %v1972
  %v1975 = vcombine.high %v1911, %v1911
  %v1977 = vunpack.c.l.s4 1983009808
  %v1978 = vunpack.c.0.s8 %v1977
  %v1979 = vlaneseq
  %v1980 = vshrl.u32 %v1979, 7
  %v1981 = vsub.s32 %v1978, %v1980
  %v1982 = vrot.slane %v1911, %v1981
  %v1984 = vunpack.c.l.s4 1983009808
  %v1985 = vunpack.c.0.s8 %v1984
  %v1986 = vlaneseq
  %v1987 = vshrl.u32 %v1986, 7
  %v1988 = vsub.s32 %v1985, %v1987
  %v1989 = vrot.slane %v1975, %v1988
  %v1990 = vcombine.high %v1982, %v1982
  %v1991 = vcombine.high %v1989, %v1989
  %v1992 = vcombine.high %v1914, %v1914
  %v1994 = vunpack.c.l.s4 1983009808
  %v1995 = vunpack.c.0.s8 %v1994
  %v1996 = vlaneseq
  %v1997 = vshrl.u32 %v1996, 7
  %v1998 = vsub.s32 %v1995, %v1997
  %v1999 = vrot.slane %v1914, %v1998
  %v2001 = vunpack.c.l.s4 1983009808
  %v2002 = vunpack.c.0.s8 %v2001
  %v2003 = vlaneseq
  %v2004 = vshrl.u32 %v2003, 7
  %v2005 = vsub.s32 %v2002, %v2004
  %v2006 = vrot.slane %v1992, %v2005
  %v2007 = vcombine.high %v1999, %v1999
  %v2008 = vcombine.high %v2006, %v2006
  %v2009 = vcombine.high %v1919, %v1919
  %v2011 = vunpack.c.l.s4 1983009808
  %v2012 = vunpack.c.0.s8 %v2011
  %v2013 = vlaneseq
  %v2014 = vshrl.u32 %v2013, 7
  %v2015 = vsub.s32 %v2012, %v2014
  %v2016 = vrot.slane %v1919, %v2015
  %v2018 = vunpack.c.l.s4 1983009808
  %v2019 = vunpack.c.0.s8 %v2018
  %v2020 = vlaneseq
  %v2021 = vshrl.u32 %v2020, 7
  %v2022 = vsub.s32 %v2019, %v2021
  %v2023 = vrot.slane %v2009, %v2022
  %v2024 = vcombine.high %v2016, %v2016
  %v2025 = vcombine.high %v2023, %v2023
  %v2026 = vcombine.high %v1922, %v1922
  %v2028 = vunpack.c.l.s4 1983009808
  %v2029 = vunpack.c.0.s8 %v2028
  %v2030 = vlaneseq
  %v2031 = vshrl.u32 %v2030, 7
  %v2032 = vsub.s32 %v2029, %v2031
  %v2033 = vrot.slane %v1922, %v2032
  %v2035 = vunpack.c.l.s4 1983009808
  %v2036 = vunpack.c.0.s8 %v2035
  %v2037 = vlaneseq
  %v2038 = vshrl.u32 %v2037, 7
  %v2039 = vsub.s32 %v2036, %v2038
  %v2040 = vrot.slane %v2026, %v2039
  %v2041 = vcombine.high %v2033, %v2033
  %v2042 = vcombine.high %v2040, %v2040
  %v2043 = vcombine.high %v1927, %v1927
  %v2045 = vunpack.c.l.s4 1983009808
  %v2046 = vunpack.c.0.s8 %v2045
  %v2047 = vlaneseq
  %v2048 = vshrl.u32 %v2047, 7
  %v2049 = vsub.s32 %v2046, %v2048
  %v2050 = vrot.slane %v1927, %v2049
  %v2052 = vunpack.c.l.s4 1983009808
  %v2053 = vunpack.c.0.s8 %v2052
  %v2054 = vlaneseq
  %v2055 = vshrl.u32 %v2054, 7
  %v2056 = vsub.s32 %v2053, %v2055
  %v2057 = vrot.slane %v2043, %v2056
  %v2058 = vcombine.high %v2050, %v2050
  %v2059 = vcombine.high %v2057, %v2057
  %v2060 = vcombine.high %v1930, %v1930
  %v2062 = vunpack.c.l.s4 1983009808
  %v2063 = vunpack.c.0.s8 %v2062
  %v2064 = vlaneseq
  %v2065 = vshrl.u32 %v2064, 7
  %v2066 = vsub.s32 %v2063, %v2065
  %v2067 = vrot.slane %v1930, %v2066
  %v2069 = vunpack.c.l.s4 1983009808
  %v2070 = vunpack.c.0.s8 %v2069
  %v2071 = vlaneseq
  %v2072 = vshrl.u32 %v2071, 7
  %v2073 = vsub.s32 %v2070, %v2072
  %v2074 = vrot.slane %v2060, %v2073
  %v2075 = vcombine.high %v2067, %v2067
  %v2076 = vcombine.high %v2074, %v2074
  %2109 = vst [vmem:[%s9] sm:$0x3] %v1948
  %2110 = vst [vmem:[%s9 + $0x2] sm:$0x3] %v1956
  %2111 = vst [vmem:[%s9 + $0x4] sm:$0x3] %v1955
  %2112 = vst [vmem:[%s9 + $0x6] sm:$0x3] %v1957
  %2113 = vst [vmem:[%s9 + $0x8] sm:$0x3] %v1965
  %2114 = vst [vmem:[%s9 + $0xa] sm:$0x3] %v1973
  %2115 = vst [vmem:[%s9 + $0xc] sm:$0x3] %v1972
  %2116 = vst [vmem:[%s9 + $0xe] sm:$0x3] %v1974
  %2117 = vst [vmem:[%s9 + $0x10] sm:$0x3] %v1982
  %2118 = vst [vmem:[%s9 + $0x12] sm:$0x3] %v1990
  %2119 = vst [vmem:[%s9 + $0x14] sm:$0x3] %v1989
  %2120 = vst [vmem:[%s9 + $0x16] sm:$0x3] %v1991
  %2121 = vst [vmem:[%s9 + $0x18] sm:$0x3] %v1999
  %2122 = vst [vmem:[%s9 + $0x1a] sm:$0x3] %v2007
  %2123 = vst [vmem:[%s9 + $0x1c] sm:$0x3] %v2006
  %2124 = vst [vmem:[%s9 + $0x1e] sm:$0x3] %v2008
  %2125 = vst [vmem:[%s9 + $0x20] sm:$0x3] %v2016
  %2126 = vst [vmem:[%s9 + $0x22] sm:$0x3] %v2024
  %2127 = vst [vmem:[%s9 + $0x24] sm:$0x3] %v2023
  %2128 = vst [vmem:[%s9 + $0x26] sm:$0x3] %v2025
  %2129 = vst [vmem:[%s9 + $0x28] sm:$0x3] %v2033
  %2130 = vst [vmem:[%s9 + $0x2a] sm:$0x3] %v2041
  %2131 = vst [vmem:[%s9 + $0x2c] sm:$0x3] %v2040
  %2132 = vst [vmem:[%s9 + $0x2e] sm:$0x3] %v2042
  %2133 = vst [vmem:[%s9 + $0x30] sm:$0x3] %v2050
  %2134 = vst [vmem:[%s9 + $0x32] sm:$0x3] %v2058
  %2135 = vst [vmem:[%s9 + $0x34] sm:$0x3] %v2057
  %2136 = vst [vmem:[%s9 + $0x36] sm:$0x3] %v2059
  %2137 = vst [vmem:[%s9 + $0x38] sm:$0x3] %v2067
  %2138 = vst [vmem:[%s9 + $0x3a] sm:$0x3] %v2075
  %2139 = vst [vmem:[%s9 + $0x3c] sm:$0x3] %v2074
  %2140 = vst [vmem:[%s9 + $0x3e] sm:$0x3] %v2076
  // Predicated region
  $region45: #{_lambda_.5} parent=0 // pred_check
    _
  $region46: #{_lambda_.5} parent=0 // pred_check_branch
    %2142 = sbr.rel (0) target = $region48
  $region47: #{_lambda_.5} parent=0 // pred_region
    _
  $region48: #{_lambda_.5} parent=0 // pred_fallthru
    _
  // Predicated region
  $region49: #{_lambda_.5} parent=0 // pred_check
    _
  $region50: #{_lambda_.5} parent=0 // pred_check_branch
    %2144 = sbr.rel (0) target = $region52
  $region51: #{_lambda_.5} parent=0 // pred_region
    _
  $region52: #{_lambda_.5} parent=0 // pred_fallthru
    _

// kernel: _lambda_.3
$region0: #{_lambda_.3}
  #allocation0 [shape = 'u32[]', space=smem, size = 0x4, offset = 0x4, fixed_abs, tag = 'smem constant byte address 0x4 - core index']
  #allocation1 [shape = 'u32[144,128]{1,0:T(1,128)}', space=vmem, size = 0x12000, scoped, tag = 'internal scratch']
  %s0 = inlined_call_operand.vmem [shape: f32[2,16,64], index: 0, kind: input, shape index: {}]
  %s1 = inlined_call_operand.vmem [shape: f32[2,512], index: 1, kind: input, shape index: {}]
  %s2 = inlined_call_operand.vmem [shape: bf16[512,2176], index: 2, kind: input, shape index: {}]
  %s3 = inlined_call_operand.vmem [shape: f32[1,2176], index: 3, kind: input, shape index: {}]
  %s4 = inlined_call_operand.vmem [shape: bf16[3,64,64], index: 4, kind: input, shape index: {}]
  %s5 = inlined_call_operand.vmem [shape: f32[1,64], index: 5, kind: input, shape index: {}]
  %s6 = inlined_call_operand.vmem [shape: bf16[3,64,64], index: 6, kind: input, shape index: {}]
  %s7 = inlined_call_operand.vmem [shape: f32[1,64], index: 7, kind: input, shape index: {}]
  %s8 = inlined_call_operand.vmem [shape: f32[2,16,64], index: 8, kind: output, shape index: {0}]
  %s9 = inlined_call_operand.vmem [shape: f32[2,1920], index: 9, kind: output, shape index: {1}]
  %10 = xla_tuple %s8, %s9
  %s11 = sld [smem:[#allocation0]]
  $region50: #{_lambda_.3} parent=0
    _
  %s13 = ssub.s32 1, %s11
  %s14 = scalar_select 0, %s13, %s11
  // Predicated region
  $region2: #{_lambda_.3} parent=0 // pred_check
    _
  $region3: #{_lambda_.3} parent=0 // pred_check_branch
    %16 = sbr.rel (0) target = $region5
  $region4: #{_lambda_.3} parent=0 // pred_region
    _
  $region5: #{_lambda_.3} parent=0 // pred_fallthru
    _
  // Predicated region
  $region6: #{_lambda_.3} parent=0 // pred_check
    _
  $region7: #{_lambda_.3} parent=0 // pred_check_branch
    %18 = sbr.rel (0) target = $region9
  $region8: #{_lambda_.3} parent=0 // pred_region
    _
  $region9: #{_lambda_.3} parent=0 // pred_fallthru
    _
  // Predicated region
  $region10: #{_lambda_.3} parent=0 // pred_check
    _
  $region11: #{_lambda_.3} parent=0 // pred_check_branch
    %20 = sbr.rel (0) target = $region13
  $region12: #{_lambda_.3} parent=0 // pred_region
    _
  $region13: #{_lambda_.3} parent=0 // pred_fallthru
    _
  // Predicated region
  $region14: #{_lambda_.3} parent=0 // pred_check
    _
  $region15: #{_lambda_.3} parent=0 // pred_check_branch
    %22 = sbr.rel (0) target = $region17
  $region16: #{_lambda_.3} parent=0 // pred_region
    _
  $region17: #{_lambda_.3} parent=0 // pred_fallthru
    _
  // Predicated region
  $region18: #{_lambda_.3} parent=0 // pred_check
    _
  $region19: #{_lambda_.3} parent=0 // pred_check_branch
    %24 = sbr.rel (0) target = $region21
  $region20: #{_lambda_.3} parent=0 // pred_region
    _
  $region21: #{_lambda_.3} parent=0 // pred_fallthru
    _
  // Predicated region
  $region22: #{_lambda_.3} parent=0 // pred_check
    _
  $region23: #{_lambda_.3} parent=0 // pred_check_branch
    %26 = sbr.rel (0) target = $region25
  $region24: #{_lambda_.3} parent=0 // pred_region
    _
  $region25: #{_lambda_.3} parent=0 // pred_fallthru
    _
  // Predicated region
  $region26: #{_lambda_.3} parent=0 // pred_check
    _
  $region27: #{_lambda_.3} parent=0 // pred_check_branch
    %28 = sbr.rel (0) target = $region29
  $region28: #{_lambda_.3} parent=0 // pred_region
    _
  $region29: #{_lambda_.3} parent=0 // pred_fallthru
    _
  // Predicated region
  $region30: #{_lambda_.3} parent=0 // pred_check
    _
  $region31: #{_lambda_.3} parent=0 // pred_check_branch
    %30 = sbr.rel (0) target = $region33
  $region32: #{_lambda_.3} parent=0 // pred_region
    _
  $region33: #{_lambda_.3} parent=0 // pred_fallthru
    _
  %v32 = vld [vmem:[%s1] sm:$0xff]
  %v34 = vcombine.high %v32, %v32
  %v36 = vunpack.c.l.s4 1983009808
  %v37 = vunpack.c.0.s8 %v36
  %v38 = vlaneseq
  %v39 = vshrl.u32 %v38, 7
  %v40 = vsub.s32 %v37, %v39
  %v41 = vrot.slane %v32, %v40
  %v43 = vunpack.c.l.s4 1983009808
  %v44 = vunpack.c.0.s8 %v43
  %v45 = vlaneseq
  %v46 = vshrl.u32 %v45, 7
  %v47 = vsub.s32 %v44, %v46
  %v48 = vrot.slane %v34, %v47
  %v49 = vcombine.high %v41, %v41
  %v50 = vcombine.high %v48, %v48
  %v55 = vpack.c.bf16 %v41, %v41
  %v56 = vpack.c.bf16 %v49, %v49
  %v57 = vpack.c.bf16 %v48, %v48
  %v58 = vpack.c.bf16 %v50, %v50
  %v59 = vld [vmem:[%s2] sm:$0xff]
  %v60 = vld [vmem:[%s2 + $0x8] sm:$0xff]
  %v61 = vld [vmem:[%s2 + $0x10] sm:$0xff]
  %v62 = vld [vmem:[%s2 + $0x18] sm:$0xff]
  %v63 = vld [vmem:[%s2 + $0x20] sm:$0xff]
  %v64 = vld [vmem:[%s2 + $0x28] sm:$0xff]
  %v65 = vld [vmem:[%s2 + $0x30] sm:$0xff]
  %v66 = vld [vmem:[%s2 + $0x38] sm:$0xff]
  %v67 = vld [vmem:[%s2 + $0x40] sm:$0xf]
  %v68 = vld [vmem:[%s2 + $0x44] sm:$0xff]
  %v69 = vld [vmem:[%s2 + $0x4c] sm:$0xff]
  %v70 = vld [vmem:[%s2 + $0x54] sm:$0xff]
  %v71 = vld [vmem:[%s2 + $0x5c] sm:$0xff]
  %v72 = vld [vmem:[%s2 + $0x64] sm:$0xff]
  %v73 = vld [vmem:[%s2 + $0x6c] sm:$0xff]
  %v74 = vld [vmem:[%s2 + $0x74] sm:$0xff]
  %v75 = vld [vmem:[%s2 + $0x7c] sm:$0xff]
  %v76 = vld [vmem:[%s2 + $0x84] sm:$0xf]
  %v77 = vld [vmem:[%s2 + $0x88] sm:$0xff]
  %v78 = vld [vmem:[%s2 + $0x90] sm:$0xff]
  %v79 = vld [vmem:[%s2 + $0x98] sm:$0xff]
  %v80 = vld [vmem:[%s2 + $0xa0] sm:$0xff]
  %v81 = vld [vmem:[%s2 + $0xa8] sm:$0xff]
  %v82 = vld [vmem:[%s2 + $0xb0] sm:$0xff]
  %v83 = vld [vmem:[%s2 + $0xb8] sm:$0xff]
  %v84 = vld [vmem:[%s2 + $0xc0] sm:$0xff]
  %v85 = vld [vmem:[%s2 + $0xc8] sm:$0xf]
  %v86 = vld [vmem:[%s2 + $0xcc] sm:$0xff]
  %v87 = vld [vmem:[%s2 + $0xd4] sm:$0xff]
  %v88 = vld [vmem:[%s2 + $0xdc] sm:$0xff]
  %v89 = vld [vmem:[%s2 + $0xe4] sm:$0xff]
  %v90 = vld [vmem:[%s2 + $0xec] sm:$0xff]
  %v91 = vld [vmem:[%s2 + $0xf4] sm:$0xff]
  %v92 = vld [vmem:[%s2 + $0xfc] sm:$0xff]
  %v93 = vld [vmem:[%s2 + $0x104] sm:$0xff]
  %v94 = vld [vmem:[%s2 + $0x10c] sm:$0xf]
  %v95 = vld [vmem:[%s2 + $0x110] sm:$0xff]
  %v96 = vld [vmem:[%s2 + $0x118] sm:$0xff]
  %v97 = vld [vmem:[%s2 + $0x120] sm:$0xff]
  %v98 = vld [vmem:[%s2 + $0x128] sm:$0xff]
  %v99 = vld [vmem:[%s2 + $0x130] sm:$0xff]
  %v100 = vld [vmem:[%s2 + $0x138] sm:$0xff]
  %v101 = vld [vmem:[%s2 + $0x140] sm:$0xff]
  %v102 = vld [vmem:[%s2 + $0x148] sm:$0xff]
  %v103 = vld [vmem:[%s2 + $0x150] sm:$0xf]
  %v104 = vld [vmem:[%s2 + $0x154] sm:$0xff]
  %v105 = vld [vmem:[%s2 + $0x15c] sm:$0xff]
  %v106 = vld [vmem:[%s2 + $0x164] sm:$0xff]
  %v107 = vld [vmem:[%s2 + $0x16c] sm:$0xff]
  %v108 = vld [vmem:[%s2 + $0x174] sm:$0xff]
  %v109 = vld [vmem:[%s2 + $0x17c] sm:$0xff]
  %v110 = vld [vmem:[%s2 + $0x184] sm:$0xff]
  %v111 = vld [vmem:[%s2 + $0x18c] sm:$0xff]
  %v112 = vld [vmem:[%s2 + $0x194] sm:$0xf]
  %v113 = vld [vmem:[%s2 + $0x198] sm:$0xff]
  %v114 = vld [vmem:[%s2 + $0x1a0] sm:$0xff]
  %v115 = vld [vmem:[%s2 + $0x1a8] sm:$0xff]
  %v116 = vld [vmem:[%s2 + $0x1b0] sm:$0xff]
  %v117 = vld [vmem:[%s2 + $0x1b8] sm:$0xff]
  %v118 = vld [vmem:[%s2 + $0x1c0] sm:$0xff]
  %v119 = vld [vmem:[%s2 + $0x1c8] sm:$0xff]
  %v120 = vld [vmem:[%s2 + $0x1d0] sm:$0xff]
  %v121 = vld [vmem:[%s2 + $0x1d8] sm:$0xf]
  %v122 = vld [vmem:[%s2 + $0x1dc] sm:$0xff]
  %v123 = vld [vmem:[%s2 + $0x1e4] sm:$0xff]
  %v124 = vld [vmem:[%s2 + $0x1ec] sm:$0xff]
  %v125 = vld [vmem:[%s2 + $0x1f4] sm:$0xff]
  %v126 = vld [vmem:[%s2 + $0x1fc] sm:$0xff]
  %v127 = vld [vmem:[%s2 + $0x204] sm:$0xff]
  %v128 = vld [vmem:[%s2 + $0x20c] sm:$0xff]
  %v129 = vld [vmem:[%s2 + $0x214] sm:$0xff]
  %v130 = vld [vmem:[%s2 + $0x21c] sm:$0xf]
  %v131 = vld [vmem:[%s2 + $0x220] sm:$0xff]
  %v132 = vld [vmem:[%s2 + $0x228] sm:$0xff]
  %v133 = vld [vmem:[%s2 + $0x230] sm:$0xff]
  %v134 = vld [vmem:[%s2 + $0x238] sm:$0xff]
  %v135 = vld [vmem:[%s2 + $0x240] sm:$0xff]
  %v136 = vld [vmem:[%s2 + $0x248] sm:$0xff]
  %v137 = vld [vmem:[%s2 + $0x250] sm:$0xff]
  %v138 = vld [vmem:[%s2 + $0x258] sm:$0xff]
  %v139 = vld [vmem:[%s2 + $0x260] sm:$0xf]
  %v140 = vld [vmem:[%s2 + $0x264] sm:$0xff]
  %v141 = vld [vmem:[%s2 + $0x26c] sm:$0xff]
  %v142 = vld [vmem:[%s2 + $0x274] sm:$0xff]
  %v143 = vld [vmem:[%s2 + $0x27c] sm:$0xff]
  %v144 = vld [vmem:[%s2 + $0x284] sm:$0xff]
  %v145 = vld [vmem:[%s2 + $0x28c] sm:$0xff]
  %v146 = vld [vmem:[%s2 + $0x294] sm:$0xff]
  %v147 = vld [vmem:[%s2 + $0x29c] sm:$0xff]
  %v148 = vld [vmem:[%s2 + $0x2a4] sm:$0xf]
  %v149 = vld [vmem:[%s2 + $0x2a8] sm:$0xff]
  %v150 = vld [vmem:[%s2 + $0x2b0] sm:$0xff]
  %v151 = vld [vmem:[%s2 + $0x2b8] sm:$0xff]
  %v152 = vld [vmem:[%s2 + $0x2c0] sm:$0xff]
  %v153 = vld [vmem:[%s2 + $0x2c8] sm:$0xff]
  %v154 = vld [vmem:[%s2 + $0x2d0] sm:$0xff]
  %v155 = vld [vmem:[%s2 + $0x2d8] sm:$0xff]
  %v156 = vld [vmem:[%s2 + $0x2e0] sm:$0xff]
  %v157 = vld [vmem:[%s2 + $0x2e8] sm:$0xf]
  %v158 = vld [vmem:[%s2 + $0x2ec] sm:$0xff]
  %v159 = vld [vmem:[%s2 + $0x2f4] sm:$0xff]
  %v160 = vld [vmem:[%s2 + $0x2fc] sm:$0xff]
  %v161 = vld [vmem:[%s2 + $0x304] sm:$0xff]
  %v162 = vld [vmem:[%s2 + $0x30c] sm:$0xff]
  %v163 = vld [vmem:[%s2 + $0x314] sm:$0xff]
  %v164 = vld [vmem:[%s2 + $0x31c] sm:$0xff]
  %v165 = vld [vmem:[%s2 + $0x324] sm:$0xff]
  %v166 = vld [vmem:[%s2 + $0x32c] sm:$0xf]
  %v167 = vld [vmem:[%s2 + $0x330] sm:$0xff]
  %v168 = vld [vmem:[%s2 + $0x338] sm:$0xff]
  %v169 = vld [vmem:[%s2 + $0x340] sm:$0xff]
  %v170 = vld [vmem:[%s2 + $0x348] sm:$0xff]
  %v171 = vld [vmem:[%s2 + $0x350] sm:$0xff]
  %v172 = vld [vmem:[%s2 + $0x358] sm:$0xff]
  %v173 = vld [vmem:[%s2 + $0x360] sm:$0xff]
  %v174 = vld [vmem:[%s2 + $0x368] sm:$0xff]
  %v175 = vld [vmem:[%s2 + $0x370] sm:$0xf]
  %v176 = vld [vmem:[%s2 + $0x374] sm:$0xff]
  %v177 = vld [vmem:[%s2 + $0x37c] sm:$0xff]
  %v178 = vld [vmem:[%s2 + $0x384] sm:$0xff]
  %v179 = vld [vmem:[%s2 + $0x38c] sm:$0xff]
  %v180 = vld [vmem:[%s2 + $0x394] sm:$0xff]
  %v181 = vld [vmem:[%s2 + $0x39c] sm:$0xff]
  %v182 = vld [vmem:[%s2 + $0x3a4] sm:$0xff]
  %v183 = vld [vmem:[%s2 + $0x3ac] sm:$0xff]
  %v184 = vld [vmem:[%s2 + $0x3b4] sm:$0xf]
  %v185 = vld [vmem:[%s2 + $0x3b8] sm:$0xff]
  %v186 = vld [vmem:[%s2 + $0x3c0] sm:$0xff]
  %v187 = vld [vmem:[%s2 + $0x3c8] sm:$0xff]
  %v188 = vld [vmem:[%s2 + $0x3d0] sm:$0xff]
  %v189 = vld [vmem:[%s2 + $0x3d8] sm:$0xff]
  %v190 = vld [vmem:[%s2 + $0x3e0] sm:$0xff]
  %v191 = vld [vmem:[%s2 + $0x3e8] sm:$0xff]
  %v192 = vld [vmem:[%s2 + $0x3f0] sm:$0xff]
  %v193 = vld [vmem:[%s2 + $0x3f8] sm:$0xf]
  %v194 = vld [vmem:[%s2 + $0x3fc] sm:$0xff]
  %v195 = vld [vmem:[%s2 + $0x404] sm:$0xff]
  %v196 = vld [vmem:[%s2 + $0x40c] sm:$0xff]
  %v197 = vld [vmem:[%s2 + $0x414] sm:$0xff]
  %v198 = vld [vmem:[%s2 + $0x41c] sm:$0xff]
  %v199 = vld [vmem:[%s2 + $0x424] sm:$0xff]
  %v200 = vld [vmem:[%s2 + $0x42c] sm:$0xff]
  %v201 = vld [vmem:[%s2 + $0x434] sm:$0xff]
  %v202 = vld [vmem:[%s2 + $0x43c] sm:$0xf]
  %v203 = vld [vmem:[%s2 + $0x440] sm:$0xff]
  %v204 = vld [vmem:[%s2 + $0x448] sm:$0xff]
  %v205 = vld [vmem:[%s2 + $0x450] sm:$0xff]
  %v206 = vld [vmem:[%s2 + $0x458] sm:$0xff]
  %v207 = vld [vmem:[%s2 + $0x460] sm:$0xff]
  %v208 = vld [vmem:[%s2 + $0x468] sm:$0xff]
  %v209 = vld [vmem:[%s2 + $0x470] sm:$0xff]
  %v210 = vld [vmem:[%s2 + $0x478] sm:$0xff]
  %v211 = vld [vmem:[%s2 + $0x480] sm:$0xf]
  %v212 = vld [vmem:[%s2 + $0x484] sm:$0xff]
  %v213 = vld [vmem:[%s2 + $0x48c] sm:$0xff]
  %v214 = vld [vmem:[%s2 + $0x494] sm:$0xff]
  %v215 = vld [vmem:[%s2 + $0x49c] sm:$0xff]
  %v216 = vld [vmem:[%s2 + $0x4a4] sm:$0xff]
  %v217 = vld [vmem:[%s2 + $0x4ac] sm:$0xff]
  %v218 = vld [vmem:[%s2 + $0x4b4] sm:$0xff]
  %v219 = vld [vmem:[%s2 + $0x4bc] sm:$0xff]
  %v220 = vld [vmem:[%s2 + $0x4c4] sm:$0xf]
  %v221 = vld [vmem:[%s2 + $0x4c8] sm:$0xff]
  %v222 = vld [vmem:[%s2 + $0x4d0] sm:$0xff]
  %v223 = vld [vmem:[%s2 + $0x4d8] sm:$0xff]
  %v224 = vld [vmem:[%s2 + $0x4e0] sm:$0xff]
  %v225 = vld [vmem:[%s2 + $0x4e8] sm:$0xff]
  %v226 = vld [vmem:[%s2 + $0x4f0] sm:$0xff]
  %v227 = vld [vmem:[%s2 + $0x4f8] sm:$0xff]
  %v228 = vld [vmem:[%s2 + $0x500] sm:$0xff]
  %v229 = vld [vmem:[%s2 + $0x508] sm:$0xf]
  %v230 = vld [vmem:[%s2 + $0x50c] sm:$0xff]
  %v231 = vld [vmem:[%s2 + $0x514] sm:$0xff]
  %v232 = vld [vmem:[%s2 + $0x51c] sm:$0xff]
  %v233 = vld [vmem:[%s2 + $0x524] sm:$0xff]
  %v234 = vld [vmem:[%s2 + $0x52c] sm:$0xff]
  %v235 = vld [vmem:[%s2 + $0x534] sm:$0xff]
  %v236 = vld [vmem:[%s2 + $0x53c] sm:$0xff]
  %v237 = vld [vmem:[%s2 + $0x544] sm:$0xff]
  %v238 = vld [vmem:[%s2 + $0x54c] sm:$0xf]
  %v239 = vld [vmem:[%s2 + $0x550] sm:$0xff]
  %v240 = vld [vmem:[%s2 + $0x558] sm:$0xff]
  %v241 = vld [vmem:[%s2 + $0x560] sm:$0xff]
  %v242 = vld [vmem:[%s2 + $0x568] sm:$0xff]
  %v243 = vld [vmem:[%s2 + $0x570] sm:$0xff]
  %v244 = vld [vmem:[%s2 + $0x578] sm:$0xff]
  %v245 = vld [vmem:[%s2 + $0x580] sm:$0xff]
  %v246 = vld [vmem:[%s2 + $0x588] sm:$0xff]
  %v247 = vld [vmem:[%s2 + $0x590] sm:$0xf]
  %v248 = vld [vmem:[%s2 + $0x594] sm:$0xff]
  %v249 = vld [vmem:[%s2 + $0x59c] sm:$0xff]
  %v250 = vld [vmem:[%s2 + $0x5a4] sm:$0xff]
  %v251 = vld [vmem:[%s2 + $0x5ac] sm:$0xff]
  %v252 = vld [vmem:[%s2 + $0x5b4] sm:$0xff]
  %v253 = vld [vmem:[%s2 + $0x5bc] sm:$0xff]
  %v254 = vld [vmem:[%s2 + $0x5c4] sm:$0xff]
  %v255 = vld [vmem:[%s2 + $0x5cc] sm:$0xff]
  %v256 = vld [vmem:[%s2 + $0x5d4] sm:$0xf]
  %v257 = vld [vmem:[%s2 + $0x5d8] sm:$0xff]
  %v258 = vld [vmem:[%s2 + $0x5e0] sm:$0xff]
  %v259 = vld [vmem:[%s2 + $0x5e8] sm:$0xff]
  %v260 = vld [vmem:[%s2 + $0x5f0] sm:$0xff]
  %v261 = vld [vmem:[%s2 + $0x5f8] sm:$0xff]
  %v262 = vld [vmem:[%s2 + $0x600] sm:$0xff]
  %v263 = vld [vmem:[%s2 + $0x608] sm:$0xff]
  %v264 = vld [vmem:[%s2 + $0x610] sm:$0xff]
  %v265 = vld [vmem:[%s2 + $0x618] sm:$0xf]
  %v266 = vld [vmem:[%s2 + $0x61c] sm:$0xff]
  %v267 = vld [vmem:[%s2 + $0x624] sm:$0xff]
  %v268 = vld [vmem:[%s2 + $0x62c] sm:$0xff]
  %v269 = vld [vmem:[%s2 + $0x634] sm:$0xff]
  %v270 = vld [vmem:[%s2 + $0x63c] sm:$0xff]
  %v271 = vld [vmem:[%s2 + $0x644] sm:$0xff]
  %v272 = vld [vmem:[%s2 + $0x64c] sm:$0xff]
  %v273 = vld [vmem:[%s2 + $0x654] sm:$0xff]
  %v274 = vld [vmem:[%s2 + $0x65c] sm:$0xf]
  %v275 = vld [vmem:[%s2 + $0x660] sm:$0xff]
  %v276 = vld [vmem:[%s2 + $0x668] sm:$0xff]
  %v277 = vld [vmem:[%s2 + $0x670] sm:$0xff]
  %v278 = vld [vmem:[%s2 + $0x678] sm:$0xff]
  %v279 = vld [vmem:[%s2 + $0x680] sm:$0xff]
  %v280 = vld [vmem:[%s2 + $0x688] sm:$0xff]
  %v281 = vld [vmem:[%s2 + $0x690] sm:$0xff]
  %v282 = vld [vmem:[%s2 + $0x698] sm:$0xff]
  %v283 = vld [vmem:[%s2 + $0x6a0] sm:$0xf]
  %v284 = vld [vmem:[%s2 + $0x6a4] sm:$0xff]
  %v285 = vld [vmem:[%s2 + $0x6ac] sm:$0xff]
  %v286 = vld [vmem:[%s2 + $0x6b4] sm:$0xff]
  %v287 = vld [vmem:[%s2 + $0x6bc] sm:$0xff]
  %v288 = vld [vmem:[%s2 + $0x6c4] sm:$0xff]
  %v289 = vld [vmem:[%s2 + $0x6cc] sm:$0xff]
  %v290 = vld [vmem:[%s2 + $0x6d4] sm:$0xff]
  %v291 = vld [vmem:[%s2 + $0x6dc] sm:$0xff]
  %v292 = vld [vmem:[%s2 + $0x6e4] sm:$0xf]
  %v293 = vld [vmem:[%s2 + $0x6e8] sm:$0xff]
  %v294 = vld [vmem:[%s2 + $0x6f0] sm:$0xff]
  %v295 = vld [vmem:[%s2 + $0x6f8] sm:$0xff]
  %v296 = vld [vmem:[%s2 + $0x700] sm:$0xff]
  %v297 = vld [vmem:[%s2 + $0x708] sm:$0xff]
  %v298 = vld [vmem:[%s2 + $0x710] sm:$0xff]
  %v299 = vld [vmem:[%s2 + $0x718] sm:$0xff]
  %v300 = vld [vmem:[%s2 + $0x720] sm:$0xff]
  %v301 = vld [vmem:[%s2 + $0x728] sm:$0xf]
  %v302 = vld [vmem:[%s2 + $0x72c] sm:$0xff]
  %v303 = vld [vmem:[%s2 + $0x734] sm:$0xff]
  %v304 = vld [vmem:[%s2 + $0x73c] sm:$0xff]
  %v305 = vld [vmem:[%s2 + $0x744] sm:$0xff]
  %v306 = vld [vmem:[%s2 + $0x74c] sm:$0xff]
  %v307 = vld [vmem:[%s2 + $0x754] sm:$0xff]
  %v308 = vld [vmem:[%s2 + $0x75c] sm:$0xff]
  %v309 = vld [vmem:[%s2 + $0x764] sm:$0xff]
  %v310 = vld [vmem:[%s2 + $0x76c] sm:$0xf]
  %v311 = vld [vmem:[%s2 + $0x770] sm:$0xff]
  %v312 = vld [vmem:[%s2 + $0x778] sm:$0xff]
  %v313 = vld [vmem:[%s2 + $0x780] sm:$0xff]
  %v314 = vld [vmem:[%s2 + $0x788] sm:$0xff]
  %v315 = vld [vmem:[%s2 + $0x790] sm:$0xff]
  %v316 = vld [vmem:[%s2 + $0x798] sm:$0xff]
  %v317 = vld [vmem:[%s2 + $0x7a0] sm:$0xff]
  %v318 = vld [vmem:[%s2 + $0x7a8] sm:$0xff]
  %v319 = vld [vmem:[%s2 + $0x7b0] sm:$0xf]
  %v320 = vld [vmem:[%s2 + $0x7b4] sm:$0xff]
  %v321 = vld [vmem:[%s2 + $0x7bc] sm:$0xff]
  %v322 = vld [vmem:[%s2 + $0x7c4] sm:$0xff]
  %v323 = vld [vmem:[%s2 + $0x7cc] sm:$0xff]
  %v324 = vld [vmem:[%s2 + $0x7d4] sm:$0xff]
  %v325 = vld [vmem:[%s2 + $0x7dc] sm:$0xff]
  %v326 = vld [vmem:[%s2 + $0x7e4] sm:$0xff]
  %v327 = vld [vmem:[%s2 + $0x7ec] sm:$0xff]
  %v328 = vld [vmem:[%s2 + $0x7f4] sm:$0xf]
  %v329 = vld [vmem:[%s2 + $0x7f8] sm:$0xff]
  %v330 = vld [vmem:[%s2 + $0x800] sm:$0xff]
  %v331 = vld [vmem:[%s2 + $0x808] sm:$0xff]
  %v332 = vld [vmem:[%s2 + $0x810] sm:$0xff]
  %v333 = vld [vmem:[%s2 + $0x818] sm:$0xff]
  %v334 = vld [vmem:[%s2 + $0x820] sm:$0xff]
  %v335 = vld [vmem:[%s2 + $0x828] sm:$0xff]
  %v336 = vld [vmem:[%s2 + $0x830] sm:$0xff]
  %v337 = vld [vmem:[%s2 + $0x838] sm:$0xf]
  %v338 = vld [vmem:[%s2 + $0x83c] sm:$0xff]
  %v339 = vld [vmem:[%s2 + $0x844] sm:$0xff]
  %v340 = vld [vmem:[%s2 + $0x84c] sm:$0xff]
  %v341 = vld [vmem:[%s2 + $0x854] sm:$0xff]
  %v342 = vld [vmem:[%s2 + $0x85c] sm:$0xff]
  %v343 = vld [vmem:[%s2 + $0x864] sm:$0xff]
  %v344 = vld [vmem:[%s2 + $0x86c] sm:$0xff]
  %v345 = vld [vmem:[%s2 + $0x874] sm:$0xff]
  %v346 = vld [vmem:[%s2 + $0x87c] sm:$0xf]
  %v347 = vld [vmem:[%s2 + $0x880] sm:$0xff]
  %v348 = vld [vmem:[%s2 + $0x888] sm:$0xff]
  %v349 = vld [vmem:[%s2 + $0x890] sm:$0xff]
  %v350 = vld [vmem:[%s2 + $0x898] sm:$0xff]
  %v351 = vld [vmem:[%s2 + $0x8a0] sm:$0xff]
  %v352 = vld [vmem:[%s2 + $0x8a8] sm:$0xff]
  %v353 = vld [vmem:[%s2 + $0x8b0] sm:$0xff]
  %v354 = vld [vmem:[%s2 + $0x8b8] sm:$0xff]
  %v355 = vld [vmem:[%s2 + $0x8c0] sm:$0xf]
  %v356 = vld [vmem:[%s2 + $0x8c4] sm:$0xff]
  %v357 = vld [vmem:[%s2 + $0x8cc] sm:$0xff]
  %v358 = vld [vmem:[%s2 + $0x8d4] sm:$0xff]
  %v359 = vld [vmem:[%s2 + $0x8dc] sm:$0xff]
  %v360 = vld [vmem:[%s2 + $0x8e4] sm:$0xff]
  %v361 = vld [vmem:[%s2 + $0x8ec] sm:$0xff]
  %v362 = vld [vmem:[%s2 + $0x8f4] sm:$0xff]
  %v363 = vld [vmem:[%s2 + $0x8fc] sm:$0xff]
  %v364 = vld [vmem:[%s2 + $0x904] sm:$0xf]
  %v365 = vld [vmem:[%s2 + $0x908] sm:$0xff]
  %v366 = vld [vmem:[%s2 + $0x910] sm:$0xff]
  %v367 = vld [vmem:[%s2 + $0x918] sm:$0xff]
  %v368 = vld [vmem:[%s2 + $0x920] sm:$0xff]
  %v369 = vld [vmem:[%s2 + $0x928] sm:$0xff]
  %v370 = vld [vmem:[%s2 + $0x930] sm:$0xff]
  %v371 = vld [vmem:[%s2 + $0x938] sm:$0xff]
  %v372 = vld [vmem:[%s2 + $0x940] sm:$0xff]
  %v373 = vld [vmem:[%s2 + $0x948] sm:$0xf]
  %v374 = vld [vmem:[%s2 + $0x94c] sm:$0xff]
  %v375 = vld [vmem:[%s2 + $0x954] sm:$0xff]
  %v376 = vld [vmem:[%s2 + $0x95c] sm:$0xff]
  %v377 = vld [vmem:[%s2 + $0x964] sm:$0xff]
  %v378 = vld [vmem:[%s2 + $0x96c] sm:$0xff]
  %v379 = vld [vmem:[%s2 + $0x974] sm:$0xff]
  %v380 = vld [vmem:[%s2 + $0x97c] sm:$0xff]
  %v381 = vld [vmem:[%s2 + $0x984] sm:$0xff]
  %v382 = vld [vmem:[%s2 + $0x98c] sm:$0xf]
  %v383 = vld [vmem:[%s2 + $0x990] sm:$0xff]
  %v384 = vld [vmem:[%s2 + $0x998] sm:$0xff]
  %v385 = vld [vmem:[%s2 + $0x9a0] sm:$0xff]
  %v386 = vld [vmem:[%s2 + $0x9a8] sm:$0xff]
  %v387 = vld [vmem:[%s2 + $0x9b0] sm:$0xff]
  %v388 = vld [vmem:[%s2 + $0x9b8] sm:$0xff]
  %v389 = vld [vmem:[%s2 + $0x9c0] sm:$0xff]
  %v390 = vld [vmem:[%s2 + $0x9c8] sm:$0xff]
  %v391 = vld [vmem:[%s2 + $0x9d0] sm:$0xf]
  %v392 = vld [vmem:[%s2 + $0x9d4] sm:$0xff]
  %v393 = vld [vmem:[%s2 + $0x9dc] sm:$0xff]
  %v394 = vld [vmem:[%s2 + $0x9e4] sm:$0xff]
  %v395 = vld [vmem:[%s2 + $0x9ec] sm:$0xff]
  %v396 = vld [vmem:[%s2 + $0x9f4] sm:$0xff]
  %v397 = vld [vmem:[%s2 + $0x9fc] sm:$0xff]
  %v398 = vld [vmem:[%s2 + $0xa04] sm:$0xff]
  %v399 = vld [vmem:[%s2 + $0xa0c] sm:$0xff]
  %v400 = vld [vmem:[%s2 + $0xa14] sm:$0xf]
  %v401 = vld [vmem:[%s2 + $0xa18] sm:$0xff]
  %v402 = vld [vmem:[%s2 + $0xa20] sm:$0xff]
  %v403 = vld [vmem:[%s2 + $0xa28] sm:$0xff]
  %v404 = vld [vmem:[%s2 + $0xa30] sm:$0xff]
  %v405 = vld [vmem:[%s2 + $0xa38] sm:$0xff]
  %v406 = vld [vmem:[%s2 + $0xa40] sm:$0xff]
  %v407 = vld [vmem:[%s2 + $0xa48] sm:$0xff]
  %v408 = vld [vmem:[%s2 + $0xa50] sm:$0xff]
  %v409 = vld [vmem:[%s2 + $0xa58] sm:$0xf]
  %v410 = vld [vmem:[%s2 + $0xa5c] sm:$0xff]
  %v411 = vld [vmem:[%s2 + $0xa64] sm:$0xff]
  %v412 = vld [vmem:[%s2 + $0xa6c] sm:$0xff]
  %v413 = vld [vmem:[%s2 + $0xa74] sm:$0xff]
  %v414 = vld [vmem:[%s2 + $0xa7c] sm:$0xff]
  %v415 = vld [vmem:[%s2 + $0xa84] sm:$0xff]
  %v416 = vld [vmem:[%s2 + $0xa8c] sm:$0xff]
  %v417 = vld [vmem:[%s2 + $0xa94] sm:$0xff]
  %v418 = vld [vmem:[%s2 + $0xa9c] sm:$0xf]
  %v419 = vld [vmem:[%s2 + $0xaa0] sm:$0xff]
  %v420 = vld [vmem:[%s2 + $0xaa8] sm:$0xff]
  %v421 = vld [vmem:[%s2 + $0xab0] sm:$0xff]
  %v422 = vld [vmem:[%s2 + $0xab8] sm:$0xff]
  %v423 = vld [vmem:[%s2 + $0xac0] sm:$0xff]
  %v424 = vld [vmem:[%s2 + $0xac8] sm:$0xff]
  %v425 = vld [vmem:[%s2 + $0xad0] sm:$0xff]
  %v426 = vld [vmem:[%s2 + $0xad8] sm:$0xff]
  %v427 = vld [vmem:[%s2 + $0xae0] sm:$0xf]
  %v428 = vld [vmem:[%s2 + $0xae4] sm:$0xff]
  %v429 = vld [vmem:[%s2 + $0xaec] sm:$0xff]
  %v430 = vld [vmem:[%s2 + $0xaf4] sm:$0xff]
  %v431 = vld [vmem:[%s2 + $0xafc] sm:$0xff]
  %v432 = vld [vmem:[%s2 + $0xb04] sm:$0xff]
  %v433 = vld [vmem:[%s2 + $0xb0c] sm:$0xff]
  %v434 = vld [vmem:[%s2 + $0xb14] sm:$0xff]
  %v435 = vld [vmem:[%s2 + $0xb1c] sm:$0xff]
  %v436 = vld [vmem:[%s2 + $0xb24] sm:$0xf]
  %v437 = vld [vmem:[%s2 + $0xb28] sm:$0xff]
  %v438 = vld [vmem:[%s2 + $0xb30] sm:$0xff]
  %v439 = vld [vmem:[%s2 + $0xb38] sm:$0xff]
  %v440 = vld [vmem:[%s2 + $0xb40] sm:$0xff]
  %v441 = vld [vmem:[%s2 + $0xb48] sm:$0xff]
  %v442 = vld [vmem:[%s2 + $0xb50] sm:$0xff]
  %v443 = vld [vmem:[%s2 + $0xb58] sm:$0xff]
  %v444 = vld [vmem:[%s2 + $0xb60] sm:$0xff]
  %v445 = vld [vmem:[%s2 + $0xb68] sm:$0xf]
  %v446 = vld [vmem:[%s2 + $0xb6c] sm:$0xff]
  %v447 = vld [vmem:[%s2 + $0xb74] sm:$0xff]
  %v448 = vld [vmem:[%s2 + $0xb7c] sm:$0xff]
  %v449 = vld [vmem:[%s2 + $0xb84] sm:$0xff]
  %v450 = vld [vmem:[%s2 + $0xb8c] sm:$0xff]
  %v451 = vld [vmem:[%s2 + $0xb94] sm:$0xff]
  %v452 = vld [vmem:[%s2 + $0xb9c] sm:$0xff]
  %v453 = vld [vmem:[%s2 + $0xba4] sm:$0xff]
  %v454 = vld [vmem:[%s2 + $0xbac] sm:$0xf]
  %v455 = vld [vmem:[%s2 + $0xbb0] sm:$0xff]
  %v456 = vld [vmem:[%s2 + $0xbb8] sm:$0xff]
  %v457 = vld [vmem:[%s2 + $0xbc0] sm:$0xff]
  %v458 = vld [vmem:[%s2 + $0xbc8] sm:$0xff]
  %v459 = vld [vmem:[%s2 + $0xbd0] sm:$0xff]
  %v460 = vld [vmem:[%s2 + $0xbd8] sm:$0xff]
  %v461 = vld [vmem:[%s2 + $0xbe0] sm:$0xff]
  %v462 = vld [vmem:[%s2 + $0xbe8] sm:$0xff]
  %v463 = vld [vmem:[%s2 + $0xbf0] sm:$0xf]
  %v464 = vld [vmem:[%s2 + $0xbf4] sm:$0xff]
  %v465 = vld [vmem:[%s2 + $0xbfc] sm:$0xff]
  %v466 = vld [vmem:[%s2 + $0xc04] sm:$0xff]
  %v467 = vld [vmem:[%s2 + $0xc0c] sm:$0xff]
  %v468 = vld [vmem:[%s2 + $0xc14] sm:$0xff]
  %v469 = vld [vmem:[%s2 + $0xc1c] sm:$0xff]
  %v470 = vld [vmem:[%s2 + $0xc24] sm:$0xff]
  %v471 = vld [vmem:[%s2 + $0xc2c] sm:$0xff]
  %v472 = vld [vmem:[%s2 + $0xc34] sm:$0xf]
  %v473 = vld [vmem:[%s2 + $0xc38] sm:$0xff]
  %v474 = vld [vmem:[%s2 + $0xc40] sm:$0xff]
  %v475 = vld [vmem:[%s2 + $0xc48] sm:$0xff]
  %v476 = vld [vmem:[%s2 + $0xc50] sm:$0xff]
  %v477 = vld [vmem:[%s2 + $0xc58] sm:$0xff]
  %v478 = vld [vmem:[%s2 + $0xc60] sm:$0xff]
  %v479 = vld [vmem:[%s2 + $0xc68] sm:$0xff]
  %v480 = vld [vmem:[%s2 + $0xc70] sm:$0xff]
  %v481 = vld [vmem:[%s2 + $0xc78] sm:$0xf]
  %v482 = vld [vmem:[%s2 + $0xc7c] sm:$0xff]
  %v483 = vld [vmem:[%s2 + $0xc84] sm:$0xff]
  %v484 = vld [vmem:[%s2 + $0xc8c] sm:$0xff]
  %v485 = vld [vmem:[%s2 + $0xc94] sm:$0xff]
  %v486 = vld [vmem:[%s2 + $0xc9c] sm:$0xff]
  %v487 = vld [vmem:[%s2 + $0xca4] sm:$0xff]
  %v488 = vld [vmem:[%s2 + $0xcac] sm:$0xff]
  %v489 = vld [vmem:[%s2 + $0xcb4] sm:$0xff]
  %v490 = vld [vmem:[%s2 + $0xcbc] sm:$0xf]
  %v491 = vld [vmem:[%s2 + $0xcc0] sm:$0xff]
  %v492 = vld [vmem:[%s2 + $0xcc8] sm:$0xff]
  %v493 = vld [vmem:[%s2 + $0xcd0] sm:$0xff]
  %v494 = vld [vmem:[%s2 + $0xcd8] sm:$0xff]
  %v495 = vld [vmem:[%s2 + $0xce0] sm:$0xff]
  %v496 = vld [vmem:[%s2 + $0xce8] sm:$0xff]
  %v497 = vld [vmem:[%s2 + $0xcf0] sm:$0xff]
  %v498 = vld [vmem:[%s2 + $0xcf8] sm:$0xff]
  %v499 = vld [vmem:[%s2 + $0xd00] sm:$0xf]
  %v500 = vld [vmem:[%s2 + $0xd04] sm:$0xff]
  %v501 = vld [vmem:[%s2 + $0xd0c] sm:$0xff]
  %v502 = vld [vmem:[%s2 + $0xd14] sm:$0xff]
  %v503 = vld [vmem:[%s2 + $0xd1c] sm:$0xff]
  %v504 = vld [vmem:[%s2 + $0xd24] sm:$0xff]
  %v505 = vld [vmem:[%s2 + $0xd2c] sm:$0xff]
  %v506 = vld [vmem:[%s2 + $0xd34] sm:$0xff]
  %v507 = vld [vmem:[%s2 + $0xd3c] sm:$0xff]
  %v508 = vld [vmem:[%s2 + $0xd44] sm:$0xf]
  %v509 = vld [vmem:[%s2 + $0xd48] sm:$0xff]
  %v510 = vld [vmem:[%s2 + $0xd50] sm:$0xff]
  %v511 = vld [vmem:[%s2 + $0xd58] sm:$0xff]
  %v512 = vld [vmem:[%s2 + $0xd60] sm:$0xff]
  %v513 = vld [vmem:[%s2 + $0xd68] sm:$0xff]
  %v514 = vld [vmem:[%s2 + $0xd70] sm:$0xff]
  %v515 = vld [vmem:[%s2 + $0xd78] sm:$0xff]
  %v516 = vld [vmem:[%s2 + $0xd80] sm:$0xff]
  %v517 = vld [vmem:[%s2 + $0xd88] sm:$0xf]
  %v518 = vld [vmem:[%s2 + $0xd8c] sm:$0xff]
  %v519 = vld [vmem:[%s2 + $0xd94] sm:$0xff]
  %v520 = vld [vmem:[%s2 + $0xd9c] sm:$0xff]
  %v521 = vld [vmem:[%s2 + $0xda4] sm:$0xff]
  %v522 = vld [vmem:[%s2 + $0xdac] sm:$0xff]
  %v523 = vld [vmem:[%s2 + $0xdb4] sm:$0xff]
  %v524 = vld [vmem:[%s2 + $0xdbc] sm:$0xff]
  %v525 = vld [vmem:[%s2 + $0xdc4] sm:$0xff]
  %v526 = vld [vmem:[%s2 + $0xdcc] sm:$0xf]
  %v527 = vld [vmem:[%s2 + $0xdd0] sm:$0xff]
  %v528 = vld [vmem:[%s2 + $0xdd8] sm:$0xff]
  %v529 = vld [vmem:[%s2 + $0xde0] sm:$0xff]
  %v530 = vld [vmem:[%s2 + $0xde8] sm:$0xff]
  %v531 = vld [vmem:[%s2 + $0xdf0] sm:$0xff]
  %v532 = vld [vmem:[%s2 + $0xdf8] sm:$0xff]
  %v533 = vld [vmem:[%s2 + $0xe00] sm:$0xff]
  %v534 = vld [vmem:[%s2 + $0xe08] sm:$0xff]
  %v535 = vld [vmem:[%s2 + $0xe10] sm:$0xf]
  %v536 = vld [vmem:[%s2 + $0xe14] sm:$0xff]
  %v537 = vld [vmem:[%s2 + $0xe1c] sm:$0xff]
  %v538 = vld [vmem:[%s2 + $0xe24] sm:$0xff]
  %v539 = vld [vmem:[%s2 + $0xe2c] sm:$0xff]
  %v540 = vld [vmem:[%s2 + $0xe34] sm:$0xff]
  %v541 = vld [vmem:[%s2 + $0xe3c] sm:$0xff]
  %v542 = vld [vmem:[%s2 + $0xe44] sm:$0xff]
  %v543 = vld [vmem:[%s2 + $0xe4c] sm:$0xff]
  %v544 = vld [vmem:[%s2 + $0xe54] sm:$0xf]
  %v545 = vld [vmem:[%s2 + $0xe58] sm:$0xff]
  %v546 = vld [vmem:[%s2 + $0xe60] sm:$0xff]
  %v547 = vld [vmem:[%s2 + $0xe68] sm:$0xff]
  %v548 = vld [vmem:[%s2 + $0xe70] sm:$0xff]
  %v549 = vld [vmem:[%s2 + $0xe78] sm:$0xff]
  %v550 = vld [vmem:[%s2 + $0xe80] sm:$0xff]
  %v551 = vld [vmem:[%s2 + $0xe88] sm:$0xff]
  %v552 = vld [vmem:[%s2 + $0xe90] sm:$0xff]
  %v553 = vld [vmem:[%s2 + $0xe98] sm:$0xf]
  %v554 = vld [vmem:[%s2 + $0xe9c] sm:$0xff]
  %v555 = vld [vmem:[%s2 + $0xea4] sm:$0xff]
  %v556 = vld [vmem:[%s2 + $0xeac] sm:$0xff]
  %v557 = vld [vmem:[%s2 + $0xeb4] sm:$0xff]
  %v558 = vld [vmem:[%s2 + $0xebc] sm:$0xff]
  %v559 = vld [vmem:[%s2 + $0xec4] sm:$0xff]
  %v560 = vld [vmem:[%s2 + $0xecc] sm:$0xff]
  %v561 = vld [vmem:[%s2 + $0xed4] sm:$0xff]
  %v562 = vld [vmem:[%s2 + $0xedc] sm:$0xf]
  %v563 = vld [vmem:[%s2 + $0xee0] sm:$0xff]
  %v564 = vld [vmem:[%s2 + $0xee8] sm:$0xff]
  %v565 = vld [vmem:[%s2 + $0xef0] sm:$0xff]
  %v566 = vld [vmem:[%s2 + $0xef8] sm:$0xff]
  %v567 = vld [vmem:[%s2 + $0xf00] sm:$0xff]
  %v568 = vld [vmem:[%s2 + $0xf08] sm:$0xff]
  %v569 = vld [vmem:[%s2 + $0xf10] sm:$0xff]
  %v570 = vld [vmem:[%s2 + $0xf18] sm:$0xff]
  %v571 = vld [vmem:[%s2 + $0xf20] sm:$0xf]
  %v572 = vld [vmem:[%s2 + $0xf24] sm:$0xff]
  %v573 = vld [vmem:[%s2 + $0xf2c] sm:$0xff]
  %v574 = vld [vmem:[%s2 + $0xf34] sm:$0xff]
  %v575 = vld [vmem:[%s2 + $0xf3c] sm:$0xff]
  %v576 = vld [vmem:[%s2 + $0xf44] sm:$0xff]
  %v577 = vld [vmem:[%s2 + $0xf4c] sm:$0xff]
  %v578 = vld [vmem:[%s2 + $0xf54] sm:$0xff]
  %v579 = vld [vmem:[%s2 + $0xf5c] sm:$0xff]
  %v580 = vld [vmem:[%s2 + $0xf64] sm:$0xf]
  %v581 = vld [vmem:[%s2 + $0xf68] sm:$0xff]
  %v582 = vld [vmem:[%s2 + $0xf70] sm:$0xff]
  %v583 = vld [vmem:[%s2 + $0xf78] sm:$0xff]
  %v584 = vld [vmem:[%s2 + $0xf80] sm:$0xff]
  %v585 = vld [vmem:[%s2 + $0xf88] sm:$0xff]
  %v586 = vld [vmem:[%s2 + $0xf90] sm:$0xff]
  %v587 = vld [vmem:[%s2 + $0xf98] sm:$0xff]
  %v588 = vld [vmem:[%s2 + $0xfa0] sm:$0xff]
  %v589 = vld [vmem:[%s2 + $0xfa8] sm:$0xf]
  %v590 = vld [vmem:[%s2 + $0xfac] sm:$0xff]
  %v591 = vld [vmem:[%s2 + $0xfb4] sm:$0xff]
  %v592 = vld [vmem:[%s2 + $0xfbc] sm:$0xff]
  %v593 = vld [vmem:[%s2 + $0xfc4] sm:$0xff]
  %v594 = vld [vmem:[%s2 + $0xfcc] sm:$0xff]
  %v595 = vld [vmem:[%s2 + $0xfd4] sm:$0xff]
  %v596 = vld [vmem:[%s2 + $0xfdc] sm:$0xff]
  %v597 = vld [vmem:[%s2 + $0xfe4] sm:$0xff]
  %v598 = vld [vmem:[%s2 + $0xfec] sm:$0xf]
  %v599 = vld [vmem:[%s2 + $0xff0] sm:$0xff]
  %v600 = vld [vmem:[%s2 + $0xff8] sm:$0xff]
  %v601 = vld [vmem:[%s2 + $0x1000] sm:$0xff]
  %v602 = vld [vmem:[%s2 + $0x1008] sm:$0xff]
  %v603 = vld [vmem:[%s2 + $0x1010] sm:$0xff]
  %v604 = vld [vmem:[%s2 + $0x1018] sm:$0xff]
  %v605 = vld [vmem:[%s2 + $0x1020] sm:$0xff]
  %v606 = vld [vmem:[%s2 + $0x1028] sm:$0xff]
  %v607 = vld [vmem:[%s2 + $0x1030] sm:$0xf]
  %v608 = vld [vmem:[%s2 + $0x1034] sm:$0xff]
  %v609 = vld [vmem:[%s2 + $0x103c] sm:$0xff]
  %v610 = vld [vmem:[%s2 + $0x1044] sm:$0xff]
  %v611 = vld [vmem:[%s2 + $0x104c] sm:$0xff]
  %v612 = vld [vmem:[%s2 + $0x1054] sm:$0xff]
  %v613 = vld [vmem:[%s2 + $0x105c] sm:$0xff]
  %v614 = vld [vmem:[%s2 + $0x1064] sm:$0xff]
  %v615 = vld [vmem:[%s2 + $0x106c] sm:$0xff]
  %v616 = vld [vmem:[%s2 + $0x1074] sm:$0xf]
  %v617 = vld [vmem:[%s2 + $0x1078] sm:$0xff]
  %v618 = vld [vmem:[%s2 + $0x1080] sm:$0xff]
  %v619 = vld [vmem:[%s2 + $0x1088] sm:$0xff]
  %v620 = vld [vmem:[%s2 + $0x1090] sm:$0xff]
  %v621 = vld [vmem:[%s2 + $0x1098] sm:$0xff]
  %v622 = vld [vmem:[%s2 + $0x10a0] sm:$0xff]
  %v623 = vld [vmem:[%s2 + $0x10a8] sm:$0xff]
  %v624 = vld [vmem:[%s2 + $0x10b0] sm:$0xff]
  %v625 = vld [vmem:[%s2 + $0x10b8] sm:$0xf]
  %v626 = vld [vmem:[%s2 + $0x10bc] sm:$0xff]
  %v627 = vld [vmem:[%s2 + $0x10c4] sm:$0xff]
  %v628 = vld [vmem:[%s2 + $0x10cc] sm:$0xff]
  %v629 = vld [vmem:[%s2 + $0x10d4] sm:$0xff]
  %v630 = vld [vmem:[%s2 + $0x10dc] sm:$0xff]
  %v631 = vld [vmem:[%s2 + $0x10e4] sm:$0xff]
  %v632 = vld [vmem:[%s2 + $0x10ec] sm:$0xff]
  %v633 = vld [vmem:[%s2 + $0x10f4] sm:$0xff]
  %v634 = vld [vmem:[%s2 + $0x10fc] sm:$0xf]
  %v635 = vld [vmem:[%s3] sm:$0xff]
  %v636 = vld [vmem:[%s3 + $0x8] sm:$0xff]
  %v637 = vld [vmem:[%s3 + $0x10] sm:$0x1]
  %v641 = vlaneseq
  %v642 = vshrl.u32 %v641, 7
  %v643 = vsub.s32 0, %v642
  %v644 = vrot.slane %v635, %v643
  %v645 = vlaneseq
  %v646 = vshrl.u32 %v645, 7
  %v647 = vsub.s32 1, %v646
  %v648 = vrot.slane %v635, %v647
  %v649 = vlaneseq
  %v650 = vshrl.u32 %v649, 7
  %v651 = vsub.s32 2, %v650
  %v652 = vrot.slane %v635, %v651
  %v653 = vlaneseq
  %v654 = vshrl.u32 %v653, 7
  %v655 = vsub.s32 3, %v654
  %v656 = vrot.slane %v635, %v655
  %v657 = vlaneseq
  %v658 = vshrl.u32 %v657, 7
  %v659 = vsub.s32 4, %v658
  %v660 = vrot.slane %v635, %v659
  %v661 = vlaneseq
  %v662 = vshrl.u32 %v661, 7
  %v663 = vsub.s32 5, %v662
  %v664 = vrot.slane %v635, %v663
  %v665 = vlaneseq
  %v666 = vshrl.u32 %v665, 7
  %v667 = vsub.s32 6, %v666
  %v668 = vrot.slane %v635, %v667
  %v669 = vlaneseq
  %v670 = vshrl.u32 %v669, 7
  %v671 = vsub.s32 7, %v670
  %v672 = vrot.slane %v635, %v671
  %v673 = vlaneseq
  %v674 = vshrl.u32 %v673, 7
  %v675 = vsub.s32 0, %v674
  %v676 = vrot.slane %v636, %v675
  %v677 = vlaneseq
  %v678 = vshrl.u32 %v677, 7
  %v679 = vsub.s32 1, %v678
  %v680 = vrot.slane %v636, %v679
  %v681 = vlaneseq
  %v682 = vshrl.u32 %v681, 7
  %v683 = vsub.s32 2, %v682
  %v684 = vrot.slane %v636, %v683
  %v685 = vlaneseq
  %v686 = vshrl.u32 %v685, 7
  %v687 = vsub.s32 3, %v686
  %v688 = vrot.slane %v636, %v687
  %v689 = vlaneseq
  %v690 = vshrl.u32 %v689, 7
  %v691 = vsub.s32 4, %v690
  %v692 = vrot.slane %v636, %v691
  %v693 = vlaneseq
  %v694 = vshrl.u32 %v693, 7
  %v695 = vsub.s32 5, %v694
  %v696 = vrot.slane %v636, %v695
  %v697 = vlaneseq
  %v698 = vshrl.u32 %v697, 7
  %v699 = vsub.s32 6, %v698
  %v700 = vrot.slane %v636, %v699
  %v701 = vlaneseq
  %v702 = vshrl.u32 %v701, 7
  %v703 = vsub.s32 7, %v702
  %v704 = vrot.slane %v636, %v703
  %v705 = vlaneseq
  %v706 = vshrl.u32 %v705, 7
  %v707 = vsub.s32 0, %v706
  %v708 = vrot.slane %v637, %v707
  %v1302 = vunpack.c.l.b16 %v59
  %v1303 = vunpack.c.h.b16 %v59
  %v1304 = vunpack.c.l.b16 %v60
  %v1305 = vunpack.c.h.b16 %v60
  %v1306 = vunpack.c.l.b16 %v61
  %v1307 = vunpack.c.h.b16 %v61
  %v1308 = vunpack.c.l.b16 %v62
  %v1309 = vunpack.c.h.b16 %v62
  %v1310 = vunpack.c.l.b16 %v63
  %v1311 = vunpack.c.h.b16 %v63
  %v1312 = vunpack.c.l.b16 %v64
  %v1313 = vunpack.c.h.b16 %v64
  %v1314 = vunpack.c.l.b16 %v65
  %v1315 = vunpack.c.h.b16 %v65
  %v1316 = vunpack.c.l.b16 %v66
  %v1317 = vunpack.c.h.b16 %v66
  %v1318 = vunpack.c.l.b16 %v67
  %v1319 = vunpack.c.l.b16 %v68
  %v1320 = vunpack.c.h.b16 %v68
  %v1321 = vunpack.c.l.b16 %v69
  %v1322 = vunpack.c.h.b16 %v69
  %v1323 = vunpack.c.l.b16 %v70
  %v1324 = vunpack.c.h.b16 %v70
  %v1325 = vunpack.c.l.b16 %v71
  %v1326 = vunpack.c.h.b16 %v71
  %v1327 = vunpack.c.l.b16 %v72
  %v1328 = vunpack.c.h.b16 %v72
  %v1329 = vunpack.c.l.b16 %v73
  %v1330 = vunpack.c.h.b16 %v73
  %v1331 = vunpack.c.l.b16 %v74
  %v1332 = vunpack.c.h.b16 %v74
  %v1333 = vunpack.c.l.b16 %v75
  %v1334 = vunpack.c.h.b16 %v75
  %v1335 = vunpack.c.l.b16 %v76
  %v1336 = vunpack.c.l.b16 %v77
  %v1337 = vunpack.c.h.b16 %v77
  %v1338 = vunpack.c.l.b16 %v78
  %v1339 = vunpack.c.h.b16 %v78
  %v1340 = vunpack.c.l.b16 %v79
  %v1341 = vunpack.c.h.b16 %v79
  %v1342 = vunpack.c.l.b16 %v80
  %v1343 = vunpack.c.h.b16 %v80
  %v1344 = vunpack.c.l.b16 %v81
  %v1345 = vunpack.c.h.b16 %v81
  %v1346 = vunpack.c.l.b16 %v82
  %v1347 = vunpack.c.h.b16 %v82
  %v1348 = vunpack.c.l.b16 %v83
  %v1349 = vunpack.c.h.b16 %v83
  %v1350 = vunpack.c.l.b16 %v84
  %v1351 = vunpack.c.h.b16 %v84
  %v1352 = vunpack.c.l.b16 %v85
  %v1353 = vunpack.c.l.b16 %v86
  %v1354 = vunpack.c.h.b16 %v86
  %v1355 = vunpack.c.l.b16 %v87
  %v1356 = vunpack.c.h.b16 %v87
  %v1357 = vunpack.c.l.b16 %v88
  %v1358 = vunpack.c.h.b16 %v88
  %v1359 = vunpack.c.l.b16 %v89
  %v1360 = vunpack.c.h.b16 %v89
  %v1361 = vunpack.c.l.b16 %v90
  %v1362 = vunpack.c.h.b16 %v90
  %v1363 = vunpack.c.l.b16 %v91
  %v1364 = vunpack.c.h.b16 %v91
  %v1365 = vunpack.c.l.b16 %v92
  %v1366 = vunpack.c.h.b16 %v92
  %v1367 = vunpack.c.l.b16 %v93
  %v1368 = vunpack.c.h.b16 %v93
  %v1369 = vunpack.c.l.b16 %v94
  %v1370 = vunpack.c.l.b16 %v95
  %v1371 = vunpack.c.h.b16 %v95
  %v1372 = vunpack.c.l.b16 %v96
  %v1373 = vunpack.c.h.b16 %v96
  %v1374 = vunpack.c.l.b16 %v97
  %v1375 = vunpack.c.h.b16 %v97
  %v1376 = vunpack.c.l.b16 %v98
  %v1377 = vunpack.c.h.b16 %v98
  %v1378 = vunpack.c.l.b16 %v99
  %v1379 = vunpack.c.h.b16 %v99
  %v1380 = vunpack.c.l.b16 %v100
  %v1381 = vunpack.c.h.b16 %v100
  %v1382 = vunpack.c.l.b16 %v101
  %v1383 = vunpack.c.h.b16 %v101
  %v1384 = vunpack.c.l.b16 %v102
  %v1385 = vunpack.c.h.b16 %v102
  %v1386 = vunpack.c.l.b16 %v103
  %v1387 = vunpack.c.l.b16 %v104
  %v1388 = vunpack.c.h.b16 %v104
  %v1389 = vunpack.c.l.b16 %v105
  %v1390 = vunpack.c.h.b16 %v105
  %v1391 = vunpack.c.l.b16 %v106
  %v1392 = vunpack.c.h.b16 %v106
  %v1393 = vunpack.c.l.b16 %v107
  %v1394 = vunpack.c.h.b16 %v107
  %v1395 = vunpack.c.l.b16 %v108
  %v1396 = vunpack.c.h.b16 %v108
  %v1397 = vunpack.c.l.b16 %v109
  %v1398 = vunpack.c.h.b16 %v109
  %v1399 = vunpack.c.l.b16 %v110
  %v1400 = vunpack.c.h.b16 %v110
  %v1401 = vunpack.c.l.b16 %v111
  %v1402 = vunpack.c.h.b16 %v111
  %v1403 = vunpack.c.l.b16 %v112
  %v1404 = vunpack.c.l.b16 %v113
  %v1405 = vunpack.c.h.b16 %v113
  %v1406 = vunpack.c.l.b16 %v114
  %v1407 = vunpack.c.h.b16 %v114
  %v1408 = vunpack.c.l.b16 %v115
  %v1409 = vunpack.c.h.b16 %v115
  %v1410 = vunpack.c.l.b16 %v116
  %v1411 = vunpack.c.h.b16 %v116
  %v1412 = vunpack.c.l.b16 %v117
  %v1413 = vunpack.c.h.b16 %v117
  %v1414 = vunpack.c.l.b16 %v118
  %v1415 = vunpack.c.h.b16 %v118
  %v1416 = vunpack.c.l.b16 %v119
  %v1417 = vunpack.c.h.b16 %v119
  %v1418 = vunpack.c.l.b16 %v120
  %v1419 = vunpack.c.h.b16 %v120
  %v1420 = vunpack.c.l.b16 %v121
  %v1421 = vunpack.c.l.b16 %v122
  %v1422 = vunpack.c.h.b16 %v122
  %v1423 = vunpack.c.l.b16 %v123
  %v1424 = vunpack.c.h.b16 %v123
  %v1425 = vunpack.c.l.b16 %v124
  %v1426 = vunpack.c.h.b16 %v124
  %v1427 = vunpack.c.l.b16 %v125
  %v1428 = vunpack.c.h.b16 %v125
  %v1429 = vunpack.c.l.b16 %v126
  %v1430 = vunpack.c.h.b16 %v126
  %v1431 = vunpack.c.l.b16 %v127
  %v1432 = vunpack.c.h.b16 %v127
  %v1433 = vunpack.c.l.b16 %v128
  %v1434 = vunpack.c.h.b16 %v128
  %v1435 = vunpack.c.l.b16 %v129
  %v1436 = vunpack.c.h.b16 %v129
  %v1437 = vunpack.c.l.b16 %v130
  %v1438 = vunpack.c.l.b16 %v131
  %v1439 = vunpack.c.h.b16 %v131
  %v1440 = vunpack.c.l.b16 %v132
  %v1441 = vunpack.c.h.b16 %v132
  %v1442 = vunpack.c.l.b16 %v133
  %v1443 = vunpack.c.h.b16 %v133
  %v1444 = vunpack.c.l.b16 %v134
  %v1445 = vunpack.c.h.b16 %v134
  %v1446 = vunpack.c.l.b16 %v135
  %v1447 = vunpack.c.h.b16 %v135
  %v1448 = vunpack.c.l.b16 %v136
  %v1449 = vunpack.c.h.b16 %v136
  %v1450 = vunpack.c.l.b16 %v137
  %v1451 = vunpack.c.h.b16 %v137
  %v1452 = vunpack.c.l.b16 %v138
  %v1453 = vunpack.c.h.b16 %v138
  %v1454 = vunpack.c.l.b16 %v139
  %v1455 = vunpack.c.l.b16 %v140
  %v1456 = vunpack.c.h.b16 %v140
  %v1457 = vunpack.c.l.b16 %v141
  %v1458 = vunpack.c.h.b16 %v141
  %v1459 = vunpack.c.l.b16 %v142
  %v1460 = vunpack.c.h.b16 %v142
  %v1461 = vunpack.c.l.b16 %v143
  %v1462 = vunpack.c.h.b16 %v143
  %v1463 = vunpack.c.l.b16 %v144
  %v1464 = vunpack.c.h.b16 %v144
  %v1465 = vunpack.c.l.b16 %v145
  %v1466 = vunpack.c.h.b16 %v145
  %v1467 = vunpack.c.l.b16 %v146
  %v1468 = vunpack.c.h.b16 %v146
  %v1469 = vunpack.c.l.b16 %v147
  %v1470 = vunpack.c.h.b16 %v147
  %v1471 = vunpack.c.l.b16 %v148
  %v1472 = vunpack.c.l.b16 %v149
  %v1473 = vunpack.c.h.b16 %v149
  %v1474 = vunpack.c.l.b16 %v150
  %v1475 = vunpack.c.h.b16 %v150
  %v1476 = vunpack.c.l.b16 %v151
  %v1477 = vunpack.c.h.b16 %v151
  %v1478 = vunpack.c.l.b16 %v152
  %v1479 = vunpack.c.h.b16 %v152
  %v1480 = vunpack.c.l.b16 %v153
  %v1481 = vunpack.c.h.b16 %v153
  %v1482 = vunpack.c.l.b16 %v154
  %v1483 = vunpack.c.h.b16 %v154
  %v1484 = vunpack.c.l.b16 %v155
  %v1485 = vunpack.c.h.b16 %v155
  %v1486 = vunpack.c.l.b16 %v156
  %v1487 = vunpack.c.h.b16 %v156
  %v1488 = vunpack.c.l.b16 %v157
  %v1489 = vunpack.c.l.b16 %v158
  %v1490 = vunpack.c.h.b16 %v158
  %v1491 = vunpack.c.l.b16 %v159
  %v1492 = vunpack.c.h.b16 %v159
  %v1493 = vunpack.c.l.b16 %v160
  %v1494 = vunpack.c.h.b16 %v160
  %v1495 = vunpack.c.l.b16 %v161
  %v1496 = vunpack.c.h.b16 %v161
  %v1497 = vunpack.c.l.b16 %v162
  %v1498 = vunpack.c.h.b16 %v162
  %v1499 = vunpack.c.l.b16 %v163
  %v1500 = vunpack.c.h.b16 %v163
  %v1501 = vunpack.c.l.b16 %v164
  %v1502 = vunpack.c.h.b16 %v164
  %v1503 = vunpack.c.l.b16 %v165
  %v1504 = vunpack.c.h.b16 %v165
  %v1505 = vunpack.c.l.b16 %v166
  %v1506 = vunpack.c.l.b16 %v167
  %v1507 = vunpack.c.h.b16 %v167
  %v1508 = vunpack.c.l.b16 %v168
  %v1509 = vunpack.c.h.b16 %v168
  %v1510 = vunpack.c.l.b16 %v169
  %v1511 = vunpack.c.h.b16 %v169
  %v1512 = vunpack.c.l.b16 %v170
  %v1513 = vunpack.c.h.b16 %v170
  %v1514 = vunpack.c.l.b16 %v171
  %v1515 = vunpack.c.h.b16 %v171
  %v1516 = vunpack.c.l.b16 %v172
  %v1517 = vunpack.c.h.b16 %v172
  %v1518 = vunpack.c.l.b16 %v173
  %v1519 = vunpack.c.h.b16 %v173
  %v1520 = vunpack.c.l.b16 %v174
  %v1521 = vunpack.c.h.b16 %v174
  %v1522 = vunpack.c.l.b16 %v175
  %v1523 = vunpack.c.l.b16 %v176
  %v1524 = vunpack.c.h.b16 %v176
  %v1525 = vunpack.c.l.b16 %v177
  %v1526 = vunpack.c.h.b16 %v177
  %v1527 = vunpack.c.l.b16 %v178
  %v1528 = vunpack.c.h.b16 %v178
  %v1529 = vunpack.c.l.b16 %v179
  %v1530 = vunpack.c.h.b16 %v179
  %v1531 = vunpack.c.l.b16 %v180
  %v1532 = vunpack.c.h.b16 %v180
  %v1533 = vunpack.c.l.b16 %v181
  %v1534 = vunpack.c.h.b16 %v181
  %v1535 = vunpack.c.l.b16 %v182
  %v1536 = vunpack.c.h.b16 %v182
  %v1537 = vunpack.c.l.b16 %v183
  %v1538 = vunpack.c.h.b16 %v183
  %v1539 = vunpack.c.l.b16 %v184
  %v1540 = vunpack.c.l.b16 %v185
  %v1541 = vunpack.c.h.b16 %v185
  %v1542 = vunpack.c.l.b16 %v186
  %v1543 = vunpack.c.h.b16 %v186
  %v1544 = vunpack.c.l.b16 %v187
  %v1545 = vunpack.c.h.b16 %v187
  %v1546 = vunpack.c.l.b16 %v188
  %v1547 = vunpack.c.h.b16 %v188
  %v1548 = vunpack.c.l.b16 %v189
  %v1549 = vunpack.c.h.b16 %v189
  %v1550 = vunpack.c.l.b16 %v190
  %v1551 = vunpack.c.h.b16 %v190
  %v1552 = vunpack.c.l.b16 %v191
  %v1553 = vunpack.c.h.b16 %v191
  %v1554 = vunpack.c.l.b16 %v192
  %v1555 = vunpack.c.h.b16 %v192
  %v1556 = vunpack.c.l.b16 %v193
  %v1557 = vunpack.c.l.b16 %v194
  %v1558 = vunpack.c.h.b16 %v194
  %v1559 = vunpack.c.l.b16 %v195
  %v1560 = vunpack.c.h.b16 %v195
  %v1561 = vunpack.c.l.b16 %v196
  %v1562 = vunpack.c.h.b16 %v196
  %v1563 = vunpack.c.l.b16 %v197
  %v1564 = vunpack.c.h.b16 %v197
  %v1565 = vunpack.c.l.b16 %v198
  %v1566 = vunpack.c.h.b16 %v198
  %v1567 = vunpack.c.l.b16 %v199
  %v1568 = vunpack.c.h.b16 %v199
  %v1569 = vunpack.c.l.b16 %v200
  %v1570 = vunpack.c.h.b16 %v200
  %v1571 = vunpack.c.l.b16 %v201
  %v1572 = vunpack.c.h.b16 %v201
  %v1573 = vunpack.c.l.b16 %v202
  %v1574 = vunpack.c.l.b16 %v203
  %v1575 = vunpack.c.h.b16 %v203
  %v1576 = vunpack.c.l.b16 %v204
  %v1577 = vunpack.c.h.b16 %v204
  %v1578 = vunpack.c.l.b16 %v205
  %v1579 = vunpack.c.h.b16 %v205
  %v1580 = vunpack.c.l.b16 %v206
  %v1581 = vunpack.c.h.b16 %v206
  %v1582 = vunpack.c.l.b16 %v207
  %v1583 = vunpack.c.h.b16 %v207
  %v1584 = vunpack.c.l.b16 %v208
  %v1585 = vunpack.c.h.b16 %v208
  %v1586 = vunpack.c.l.b16 %v209
  %v1587 = vunpack.c.h.b16 %v209
  %v1588 = vunpack.c.l.b16 %v210
  %v1589 = vunpack.c.h.b16 %v210
  %v1590 = vunpack.c.l.b16 %v211
  %v1591 = vunpack.c.l.b16 %v212
  %v1592 = vunpack.c.h.b16 %v212
  %v1593 = vunpack.c.l.b16 %v213
  %v1594 = vunpack.c.h.b16 %v213
  %v1595 = vunpack.c.l.b16 %v214
  %v1596 = vunpack.c.h.b16 %v214
  %v1597 = vunpack.c.l.b16 %v215
  %v1598 = vunpack.c.h.b16 %v215
  %v1599 = vunpack.c.l.b16 %v216
  %v1600 = vunpack.c.h.b16 %v216
  %v1601 = vunpack.c.l.b16 %v217
  %v1602 = vunpack.c.h.b16 %v217
  %v1603 = vunpack.c.l.b16 %v218
  %v1604 = vunpack.c.h.b16 %v218
  %v1605 = vunpack.c.l.b16 %v219
  %v1606 = vunpack.c.h.b16 %v219
  %v1607 = vunpack.c.l.b16 %v220
  %v1608 = vunpack.c.l.b16 %v221
  %v1609 = vunpack.c.h.b16 %v221
  %v1610 = vunpack.c.l.b16 %v222
  %v1611 = vunpack.c.h.b16 %v222
  %v1612 = vunpack.c.l.b16 %v223
  %v1613 = vunpack.c.h.b16 %v223
  %v1614 = vunpack.c.l.b16 %v224
  %v1615 = vunpack.c.h.b16 %v224
  %v1616 = vunpack.c.l.b16 %v225
  %v1617 = vunpack.c.h.b16 %v225
  %v1618 = vunpack.c.l.b16 %v226
  %v1619 = vunpack.c.h.b16 %v226
  %v1620 = vunpack.c.l.b16 %v227
  %v1621 = vunpack.c.h.b16 %v227
  %v1622 = vunpack.c.l.b16 %v228
  %v1623 = vunpack.c.h.b16 %v228
  %v1624 = vunpack.c.l.b16 %v229
  %v1625 = vunpack.c.l.b16 %v230
  %v1626 = vunpack.c.h.b16 %v230
  %v1627 = vunpack.c.l.b16 %v231
  %v1628 = vunpack.c.h.b16 %v231
  %v1629 = vunpack.c.l.b16 %v232
  %v1630 = vunpack.c.h.b16 %v232
  %v1631 = vunpack.c.l.b16 %v233
  %v1632 = vunpack.c.h.b16 %v233
  %v1633 = vunpack.c.l.b16 %v234
  %v1634 = vunpack.c.h.b16 %v234
  %v1635 = vunpack.c.l.b16 %v235
  %v1636 = vunpack.c.h.b16 %v235
  %v1637 = vunpack.c.l.b16 %v236
  %v1638 = vunpack.c.h.b16 %v236
  %v1639 = vunpack.c.l.b16 %v237
  %v1640 = vunpack.c.h.b16 %v237
  %v1641 = vunpack.c.l.b16 %v238
  %v1642 = vunpack.c.l.b16 %v239
  %v1643 = vunpack.c.h.b16 %v239
  %v1644 = vunpack.c.l.b16 %v240
  %v1645 = vunpack.c.h.b16 %v240
  %v1646 = vunpack.c.l.b16 %v241
  %v1647 = vunpack.c.h.b16 %v241
  %v1648 = vunpack.c.l.b16 %v242
  %v1649 = vunpack.c.h.b16 %v242
  %v1650 = vunpack.c.l.b16 %v243
  %v1651 = vunpack.c.h.b16 %v243
  %v1652 = vunpack.c.l.b16 %v244
  %v1653 = vunpack.c.h.b16 %v244
  %v1654 = vunpack.c.l.b16 %v245
  %v1655 = vunpack.c.h.b16 %v245
  %v1656 = vunpack.c.l.b16 %v246
  %v1657 = vunpack.c.h.b16 %v246
  %v1658 = vunpack.c.l.b16 %v247
  %v1659 = vunpack.c.l.b16 %v248
  %v1660 = vunpack.c.h.b16 %v248
  %v1661 = vunpack.c.l.b16 %v249
  %v1662 = vunpack.c.h.b16 %v249
  %v1663 = vunpack.c.l.b16 %v250
  %v1664 = vunpack.c.h.b16 %v250
  %v1665 = vunpack.c.l.b16 %v251
  %v1666 = vunpack.c.h.b16 %v251
  %v1667 = vunpack.c.l.b16 %v252
  %v1668 = vunpack.c.h.b16 %v252
  %v1669 = vunpack.c.l.b16 %v253
  %v1670 = vunpack.c.h.b16 %v253
  %v1671 = vunpack.c.l.b16 %v254
  %v1672 = vunpack.c.h.b16 %v254
  %v1673 = vunpack.c.l.b16 %v255
  %v1674 = vunpack.c.h.b16 %v255
  %v1675 = vunpack.c.l.b16 %v256
  %v1676 = vunpack.c.l.b16 %v257
  %v1677 = vunpack.c.h.b16 %v257
  %v1678 = vunpack.c.l.b16 %v258
  %v1679 = vunpack.c.h.b16 %v258
  %v1680 = vunpack.c.l.b16 %v259
  %v1681 = vunpack.c.h.b16 %v259
  %v1682 = vunpack.c.l.b16 %v260
  %v1683 = vunpack.c.h.b16 %v260
  %v1684 = vunpack.c.l.b16 %v261
  %v1685 = vunpack.c.h.b16 %v261
  %v1686 = vunpack.c.l.b16 %v262
  %v1687 = vunpack.c.h.b16 %v262
  %v1688 = vunpack.c.l.b16 %v263
  %v1689 = vunpack.c.h.b16 %v263
  %v1690 = vunpack.c.l.b16 %v264
  %v1691 = vunpack.c.h.b16 %v264
  %v1692 = vunpack.c.l.b16 %v265
  %v1693 = vunpack.c.l.b16 %v266
  %v1694 = vunpack.c.h.b16 %v266
  %v1695 = vunpack.c.l.b16 %v267
  %v1696 = vunpack.c.h.b16 %v267
  %v1697 = vunpack.c.l.b16 %v268
  %v1698 = vunpack.c.h.b16 %v268
  %v1699 = vunpack.c.l.b16 %v269
  %v1700 = vunpack.c.h.b16 %v269
  %v1701 = vunpack.c.l.b16 %v270
  %v1702 = vunpack.c.h.b16 %v270
  %v1703 = vunpack.c.l.b16 %v271
  %v1704 = vunpack.c.h.b16 %v271
  %v1705 = vunpack.c.l.b16 %v272
  %v1706 = vunpack.c.h.b16 %v272
  %v1707 = vunpack.c.l.b16 %v273
  %v1708 = vunpack.c.h.b16 %v273
  %v1709 = vunpack.c.l.b16 %v274
  %v1710 = vunpack.c.l.b16 %v275
  %v1711 = vunpack.c.h.b16 %v275
  %v1712 = vunpack.c.l.b16 %v276
  %v1713 = vunpack.c.h.b16 %v276
  %v1714 = vunpack.c.l.b16 %v277
  %v1715 = vunpack.c.h.b16 %v277
  %v1716 = vunpack.c.l.b16 %v278
  %v1717 = vunpack.c.h.b16 %v278
  %v1718 = vunpack.c.l.b16 %v279
  %v1719 = vunpack.c.h.b16 %v279
  %v1720 = vunpack.c.l.b16 %v280
  %v1721 = vunpack.c.h.b16 %v280
  %v1722 = vunpack.c.l.b16 %v281
  %v1723 = vunpack.c.h.b16 %v281
  %v1724 = vunpack.c.l.b16 %v282
  %v1725 = vunpack.c.h.b16 %v282
  %v1726 = vunpack.c.l.b16 %v283
  %v1727 = vunpack.c.l.b16 %v284
  %v1728 = vunpack.c.h.b16 %v284
  %v1729 = vunpack.c.l.b16 %v285
  %v1730 = vunpack.c.h.b16 %v285
  %v1731 = vunpack.c.l.b16 %v286
  %v1732 = vunpack.c.h.b16 %v286
  %v1733 = vunpack.c.l.b16 %v287
  %v1734 = vunpack.c.h.b16 %v287
  %v1735 = vunpack.c.l.b16 %v288
  %v1736 = vunpack.c.h.b16 %v288
  %v1737 = vunpack.c.l.b16 %v289
  %v1738 = vunpack.c.h.b16 %v289
  %v1739 = vunpack.c.l.b16 %v290
  %v1740 = vunpack.c.h.b16 %v290
  %v1741 = vunpack.c.l.b16 %v291
  %v1742 = vunpack.c.h.b16 %v291
  %v1743 = vunpack.c.l.b16 %v292
  %v1744 = vunpack.c.l.b16 %v293
  %v1745 = vunpack.c.h.b16 %v293
  %v1746 = vunpack.c.l.b16 %v294
  %v1747 = vunpack.c.h.b16 %v294
  %v1748 = vunpack.c.l.b16 %v295
  %v1749 = vunpack.c.h.b16 %v295
  %v1750 = vunpack.c.l.b16 %v296
  %v1751 = vunpack.c.h.b16 %v296
  %v1752 = vunpack.c.l.b16 %v297
  %v1753 = vunpack.c.h.b16 %v297
  %v1754 = vunpack.c.l.b16 %v298
  %v1755 = vunpack.c.h.b16 %v298
  %v1756 = vunpack.c.l.b16 %v299
  %v1757 = vunpack.c.h.b16 %v299
  %v1758 = vunpack.c.l.b16 %v300
  %v1759 = vunpack.c.h.b16 %v300
  %v1760 = vunpack.c.l.b16 %v301
  %v1761 = vunpack.c.l.b16 %v302
  %v1762 = vunpack.c.h.b16 %v302
  %v1763 = vunpack.c.l.b16 %v303
  %v1764 = vunpack.c.h.b16 %v303
  %v1765 = vunpack.c.l.b16 %v304
  %v1766 = vunpack.c.h.b16 %v304
  %v1767 = vunpack.c.l.b16 %v305
  %v1768 = vunpack.c.h.b16 %v305
  %v1769 = vunpack.c.l.b16 %v306
  %v1770 = vunpack.c.h.b16 %v306
  %v1771 = vunpack.c.l.b16 %v307
  %v1772 = vunpack.c.h.b16 %v307
  %v1773 = vunpack.c.l.b16 %v308
  %v1774 = vunpack.c.h.b16 %v308
  %v1775 = vunpack.c.l.b16 %v309
  %v1776 = vunpack.c.h.b16 %v309
  %v1777 = vunpack.c.l.b16 %v310
  %v1778 = vunpack.c.l.b16 %v311
  %v1779 = vunpack.c.h.b16 %v311
  %v1780 = vunpack.c.l.b16 %v312
  %v1781 = vunpack.c.h.b16 %v312
  %v1782 = vunpack.c.l.b16 %v313
  %v1783 = vunpack.c.h.b16 %v313
  %v1784 = vunpack.c.l.b16 %v314
  %v1785 = vunpack.c.h.b16 %v314
  %v1786 = vunpack.c.l.b16 %v315
  %v1787 = vunpack.c.h.b16 %v315
  %v1788 = vunpack.c.l.b16 %v316
  %v1789 = vunpack.c.h.b16 %v316
  %v1790 = vunpack.c.l.b16 %v317
  %v1791 = vunpack.c.h.b16 %v317
  %v1792 = vunpack.c.l.b16 %v318
  %v1793 = vunpack.c.h.b16 %v318
  %v1794 = vunpack.c.l.b16 %v319
  %v1795 = vunpack.c.l.b16 %v320
  %v1796 = vunpack.c.h.b16 %v320
  %v1797 = vunpack.c.l.b16 %v321
  %v1798 = vunpack.c.h.b16 %v321
  %v1799 = vunpack.c.l.b16 %v322
  %v1800 = vunpack.c.h.b16 %v322
  %v1801 = vunpack.c.l.b16 %v323
  %v1802 = vunpack.c.h.b16 %v323
  %v1803 = vunpack.c.l.b16 %v324
  %v1804 = vunpack.c.h.b16 %v324
  %v1805 = vunpack.c.l.b16 %v325
  %v1806 = vunpack.c.h.b16 %v325
  %v1807 = vunpack.c.l.b16 %v326
  %v1808 = vunpack.c.h.b16 %v326
  %v1809 = vunpack.c.l.b16 %v327
  %v1810 = vunpack.c.h.b16 %v327
  %v1811 = vunpack.c.l.b16 %v328
  %v1812 = vunpack.c.l.b16 %v329
  %v1813 = vunpack.c.h.b16 %v329
  %v1814 = vunpack.c.l.b16 %v330
  %v1815 = vunpack.c.h.b16 %v330
  %v1816 = vunpack.c.l.b16 %v331
  %v1817 = vunpack.c.h.b16 %v331
  %v1818 = vunpack.c.l.b16 %v332
  %v1819 = vunpack.c.h.b16 %v332
  %v1820 = vunpack.c.l.b16 %v333
  %v1821 = vunpack.c.h.b16 %v333
  %v1822 = vunpack.c.l.b16 %v334
  %v1823 = vunpack.c.h.b16 %v334
  %v1824 = vunpack.c.l.b16 %v335
  %v1825 = vunpack.c.h.b16 %v335
  %v1826 = vunpack.c.l.b16 %v336
  %v1827 = vunpack.c.h.b16 %v336
  %v1828 = vunpack.c.l.b16 %v337
  %v1829 = vunpack.c.l.b16 %v338
  %v1830 = vunpack.c.h.b16 %v338
  %v1831 = vunpack.c.l.b16 %v339
  %v1832 = vunpack.c.h.b16 %v339
  %v1833 = vunpack.c.l.b16 %v340
  %v1834 = vunpack.c.h.b16 %v340
  %v1835 = vunpack.c.l.b16 %v341
  %v1836 = vunpack.c.h.b16 %v341
  %v1837 = vunpack.c.l.b16 %v342
  %v1838 = vunpack.c.h.b16 %v342
  %v1839 = vunpack.c.l.b16 %v343
  %v1840 = vunpack.c.h.b16 %v343
  %v1841 = vunpack.c.l.b16 %v344
  %v1842 = vunpack.c.h.b16 %v344
  %v1843 = vunpack.c.l.b16 %v345
  %v1844 = vunpack.c.h.b16 %v345
  %v1845 = vunpack.c.l.b16 %v346
  %v1846 = vunpack.c.l.b16 %v347
  %v1847 = vunpack.c.h.b16 %v347
  %v1848 = vunpack.c.l.b16 %v348
  %v1849 = vunpack.c.h.b16 %v348
  %v1850 = vunpack.c.l.b16 %v349
  %v1851 = vunpack.c.h.b16 %v349
  %v1852 = vunpack.c.l.b16 %v350
  %v1853 = vunpack.c.h.b16 %v350
  %v1854 = vunpack.c.l.b16 %v351
  %v1855 = vunpack.c.h.b16 %v351
  %v1856 = vunpack.c.l.b16 %v352
  %v1857 = vunpack.c.h.b16 %v352
  %v1858 = vunpack.c.l.b16 %v353
  %v1859 = vunpack.c.h.b16 %v353
  %v1860 = vunpack.c.l.b16 %v354
  %v1861 = vunpack.c.h.b16 %v354
  %v1862 = vunpack.c.l.b16 %v355
  %v1863 = vunpack.c.l.b16 %v356
  %v1864 = vunpack.c.h.b16 %v356
  %v1865 = vunpack.c.l.b16 %v357
  %v1866 = vunpack.c.h.b16 %v357
  %v1867 = vunpack.c.l.b16 %v358
  %v1868 = vunpack.c.h.b16 %v358
  %v1869 = vunpack.c.l.b16 %v359
  %v1870 = vunpack.c.h.b16 %v359
  %v1871 = vunpack.c.l.b16 %v360
  %v1872 = vunpack.c.h.b16 %v360
  %v1873 = vunpack.c.l.b16 %v361
  %v1874 = vunpack.c.h.b16 %v361
  %v1875 = vunpack.c.l.b16 %v362
  %v1876 = vunpack.c.h.b16 %v362
  %v1877 = vunpack.c.l.b16 %v363
  %v1878 = vunpack.c.h.b16 %v363
  %v1879 = vunpack.c.l.b16 %v364
  %v1880 = vunpack.c.l.b16 %v365
  %v1881 = vunpack.c.h.b16 %v365
  %v1882 = vunpack.c.l.b16 %v366
  %v1883 = vunpack.c.h.b16 %v366
  %v1884 = vunpack.c.l.b16 %v367
  %v1885 = vunpack.c.h.b16 %v367
  %v1886 = vunpack.c.l.b16 %v368
  %v1887 = vunpack.c.h.b16 %v368
  %v1888 = vunpack.c.l.b16 %v369
  %v1889 = vunpack.c.h.b16 %v369
  %v1890 = vunpack.c.l.b16 %v370
  %v1891 = vunpack.c.h.b16 %v370
  %v1892 = vunpack.c.l.b16 %v371
  %v1893 = vunpack.c.h.b16 %v371
  %v1894 = vunpack.c.l.b16 %v372
  %v1895 = vunpack.c.h.b16 %v372
  %v1896 = vunpack.c.l.b16 %v373
  %v1897 = vunpack.c.l.b16 %v374
  %v1898 = vunpack.c.h.b16 %v374
  %v1899 = vunpack.c.l.b16 %v375
  %v1900 = vunpack.c.h.b16 %v375
  %v1901 = vunpack.c.l.b16 %v376
  %v1902 = vunpack.c.h.b16 %v376
  %v1903 = vunpack.c.l.b16 %v377
  %v1904 = vunpack.c.h.b16 %v377
  %v1905 = vunpack.c.l.b16 %v378
  %v1906 = vunpack.c.h.b16 %v378
  %v1907 = vunpack.c.l.b16 %v379
  %v1908 = vunpack.c.h.b16 %v379
  %v1909 = vunpack.c.l.b16 %v380
  %v1910 = vunpack.c.h.b16 %v380
  %v1911 = vunpack.c.l.b16 %v381
  %v1912 = vunpack.c.h.b16 %v381
  %v1913 = vunpack.c.l.b16 %v382
  %v1914 = vunpack.c.l.b16 %v383
  %v1915 = vunpack.c.h.b16 %v383
  %v1916 = vunpack.c.l.b16 %v384
  %v1917 = vunpack.c.h.b16 %v384
  %v1918 = vunpack.c.l.b16 %v385
  %v1919 = vunpack.c.h.b16 %v385
  %v1920 = vunpack.c.l.b16 %v386
  %v1921 = vunpack.c.h.b16 %v386
  %v1922 = vunpack.c.l.b16 %v387
  %v1923 = vunpack.c.h.b16 %v387
  %v1924 = vunpack.c.l.b16 %v388
  %v1925 = vunpack.c.h.b16 %v388
  %v1926 = vunpack.c.l.b16 %v389
  %v1927 = vunpack.c.h.b16 %v389
  %v1928 = vunpack.c.l.b16 %v390
  %v1929 = vunpack.c.h.b16 %v390
  %v1930 = vunpack.c.l.b16 %v391
  %v1931 = vunpack.c.l.b16 %v392
  %v1932 = vunpack.c.h.b16 %v392
  %v1933 = vunpack.c.l.b16 %v393
  %v1934 = vunpack.c.h.b16 %v393
  %v1935 = vunpack.c.l.b16 %v394
  %v1936 = vunpack.c.h.b16 %v394
  %v1937 = vunpack.c.l.b16 %v395
  %v1938 = vunpack.c.h.b16 %v395
  %v1939 = vunpack.c.l.b16 %v396
  %v1940 = vunpack.c.h.b16 %v396
  %v1941 = vunpack.c.l.b16 %v397
  %v1942 = vunpack.c.h.b16 %v397
  %v1943 = vunpack.c.l.b16 %v398
  %v1944 = vunpack.c.h.b16 %v398
  %v1945 = vunpack.c.l.b16 %v399
  %v1946 = vunpack.c.h.b16 %v399
  %v1947 = vunpack.c.l.b16 %v400
  %v1948 = vunpack.c.l.b16 %v401
  %v1949 = vunpack.c.h.b16 %v401
  %v1950 = vunpack.c.l.b16 %v402
  %v1951 = vunpack.c.h.b16 %v402
  %v1952 = vunpack.c.l.b16 %v403
  %v1953 = vunpack.c.h.b16 %v403
  %v1954 = vunpack.c.l.b16 %v404
  %v1955 = vunpack.c.h.b16 %v404
  %v1956 = vunpack.c.l.b16 %v405
  %v1957 = vunpack.c.h.b16 %v405
  %v1958 = vunpack.c.l.b16 %v406
  %v1959 = vunpack.c.h.b16 %v406
  %v1960 = vunpack.c.l.b16 %v407
  %v1961 = vunpack.c.h.b16 %v407
  %v1962 = vunpack.c.l.b16 %v408
  %v1963 = vunpack.c.h.b16 %v408
  %v1964 = vunpack.c.l.b16 %v409
  %v1965 = vunpack.c.l.b16 %v410
  %v1966 = vunpack.c.h.b16 %v410
  %v1967 = vunpack.c.l.b16 %v411
  %v1968 = vunpack.c.h.b16 %v411
  %v1969 = vunpack.c.l.b16 %v412
  %v1970 = vunpack.c.h.b16 %v412
  %v1971 = vunpack.c.l.b16 %v413
  %v1972 = vunpack.c.h.b16 %v413
  %v1973 = vunpack.c.l.b16 %v414
  %v1974 = vunpack.c.h.b16 %v414
  %v1975 = vunpack.c.l.b16 %v415
  %v1976 = vunpack.c.h.b16 %v415
  %v1977 = vunpack.c.l.b16 %v416
  %v1978 = vunpack.c.h.b16 %v416
  %v1979 = vunpack.c.l.b16 %v417
  %v1980 = vunpack.c.h.b16 %v417
  %v1981 = vunpack.c.l.b16 %v418
  %v1982 = vunpack.c.l.b16 %v419
  %v1983 = vunpack.c.h.b16 %v419
  %v1984 = vunpack.c.l.b16 %v420
  %v1985 = vunpack.c.h.b16 %v420
  %v1986 = vunpack.c.l.b16 %v421
  %v1987 = vunpack.c.h.b16 %v421
  %v1988 = vunpack.c.l.b16 %v422
  %v1989 = vunpack.c.h.b16 %v422
  %v1990 = vunpack.c.l.b16 %v423
  %v1991 = vunpack.c.h.b16 %v423
  %v1992 = vunpack.c.l.b16 %v424
  %v1993 = vunpack.c.h.b16 %v424
  %v1994 = vunpack.c.l.b16 %v425
  %v1995 = vunpack.c.h.b16 %v425
  %v1996 = vunpack.c.l.b16 %v426
  %v1997 = vunpack.c.h.b16 %v426
  %v1998 = vunpack.c.l.b16 %v427
  %v1999 = vunpack.c.l.b16 %v428
  %v2000 = vunpack.c.h.b16 %v428
  %v2001 = vunpack.c.l.b16 %v429
  %v2002 = vunpack.c.h.b16 %v429
  %v2003 = vunpack.c.l.b16 %v430
  %v2004 = vunpack.c.h.b16 %v430
  %v2005 = vunpack.c.l.b16 %v431
  %v2006 = vunpack.c.h.b16 %v431
  %v2007 = vunpack.c.l.b16 %v432
  %v2008 = vunpack.c.h.b16 %v432
  %v2009 = vunpack.c.l.b16 %v433
  %v2010 = vunpack.c.h.b16 %v433
  %v2011 = vunpack.c.l.b16 %v434
  %v2012 = vunpack.c.h.b16 %v434
  %v2013 = vunpack.c.l.b16 %v435
  %v2014 = vunpack.c.h.b16 %v435
  %v2015 = vunpack.c.l.b16 %v436
  %v2016 = vunpack.c.l.b16 %v437
  %v2017 = vunpack.c.h.b16 %v437
  %v2018 = vunpack.c.l.b16 %v438
  %v2019 = vunpack.c.h.b16 %v438
  %v2020 = vunpack.c.l.b16 %v439
  %v2021 = vunpack.c.h.b16 %v439
  %v2022 = vunpack.c.l.b16 %v440
  %v2023 = vunpack.c.h.b16 %v440
  %v2024 = vunpack.c.l.b16 %v441
  %v2025 = vunpack.c.h.b16 %v441
  %v2026 = vunpack.c.l.b16 %v442
  %v2027 = vunpack.c.h.b16 %v442
  %v2028 = vunpack.c.l.b16 %v443
  %v2029 = vunpack.c.h.b16 %v443
  %v2030 = vunpack.c.l.b16 %v444
  %v2031 = vunpack.c.h.b16 %v444
  %v2032 = vunpack.c.l.b16 %v445
  %v2033 = vunpack.c.l.b16 %v446
  %v2034 = vunpack.c.h.b16 %v446
  %v2035 = vunpack.c.l.b16 %v447
  %v2036 = vunpack.c.h.b16 %v447
  %v2037 = vunpack.c.l.b16 %v448
  %v2038 = vunpack.c.h.b16 %v448
  %v2039 = vunpack.c.l.b16 %v449
  %v2040 = vunpack.c.h.b16 %v449
  %v2041 = vunpack.c.l.b16 %v450
  %v2042 = vunpack.c.h.b16 %v450
  %v2043 = vunpack.c.l.b16 %v451
  %v2044 = vunpack.c.h.b16 %v451
  %v2045 = vunpack.c.l.b16 %v452
  %v2046 = vunpack.c.h.b16 %v452
  %v2047 = vunpack.c.l.b16 %v453
  %v2048 = vunpack.c.h.b16 %v453
  %v2049 = vunpack.c.l.b16 %v454
  %v2050 = vunpack.c.l.b16 %v455
  %v2051 = vunpack.c.h.b16 %v455
  %v2052 = vunpack.c.l.b16 %v456
  %v2053 = vunpack.c.h.b16 %v456
  %v2054 = vunpack.c.l.b16 %v457
  %v2055 = vunpack.c.h.b16 %v457
  %v2056 = vunpack.c.l.b16 %v458
  %v2057 = vunpack.c.h.b16 %v458
  %v2058 = vunpack.c.l.b16 %v459
  %v2059 = vunpack.c.h.b16 %v459
  %v2060 = vunpack.c.l.b16 %v460
  %v2061 = vunpack.c.h.b16 %v460
  %v2062 = vunpack.c.l.b16 %v461
  %v2063 = vunpack.c.h.b16 %v461
  %v2064 = vunpack.c.l.b16 %v462
  %v2065 = vunpack.c.h.b16 %v462
  %v2066 = vunpack.c.l.b16 %v463
  %v2067 = vunpack.c.l.b16 %v464
  %v2068 = vunpack.c.h.b16 %v464
  %v2069 = vunpack.c.l.b16 %v465
  %v2070 = vunpack.c.h.b16 %v465
  %v2071 = vunpack.c.l.b16 %v466
  %v2072 = vunpack.c.h.b16 %v466
  %v2073 = vunpack.c.l.b16 %v467
  %v2074 = vunpack.c.h.b16 %v467
  %v2075 = vunpack.c.l.b16 %v468
  %v2076 = vunpack.c.h.b16 %v468
  %v2077 = vunpack.c.l.b16 %v469
  %v2078 = vunpack.c.h.b16 %v469
  %v2079 = vunpack.c.l.b16 %v470
  %v2080 = vunpack.c.h.b16 %v470
  %v2081 = vunpack.c.l.b16 %v471
  %v2082 = vunpack.c.h.b16 %v471
  %v2083 = vunpack.c.l.b16 %v472
  %v2084 = vunpack.c.l.b16 %v473
  %v2085 = vunpack.c.h.b16 %v473
  %v2086 = vunpack.c.l.b16 %v474
  %v2087 = vunpack.c.h.b16 %v474
  %v2088 = vunpack.c.l.b16 %v475
  %v2089 = vunpack.c.h.b16 %v475
  %v2090 = vunpack.c.l.b16 %v476
  %v2091 = vunpack.c.h.b16 %v476
  %v2092 = vunpack.c.l.b16 %v477
  %v2093 = vunpack.c.h.b16 %v477
  %v2094 = vunpack.c.l.b16 %v478
  %v2095 = vunpack.c.h.b16 %v478
  %v2096 = vunpack.c.l.b16 %v479
  %v2097 = vunpack.c.h.b16 %v479
  %v2098 = vunpack.c.l.b16 %v480
  %v2099 = vunpack.c.h.b16 %v480
  %v2100 = vunpack.c.l.b16 %v481
  %v2101 = vunpack.c.l.b16 %v482
  %v2102 = vunpack.c.h.b16 %v482
  %v2103 = vunpack.c.l.b16 %v483
  %v2104 = vunpack.c.h.b16 %v483
  %v2105 = vunpack.c.l.b16 %v484
  %v2106 = vunpack.c.h.b16 %v484
  %v2107 = vunpack.c.l.b16 %v485
  %v2108 = vunpack.c.h.b16 %v485
  %v2109 = vunpack.c.l.b16 %v486
  %v2110 = vunpack.c.h.b16 %v486
  %v2111 = vunpack.c.l.b16 %v487
  %v2112 = vunpack.c.h.b16 %v487
  %v2113 = vunpack.c.l.b16 %v488
  %v2114 = vunpack.c.h.b16 %v488
  %v2115 = vunpack.c.l.b16 %v489
  %v2116 = vunpack.c.h.b16 %v489
  %v2117 = vunpack.c.l.b16 %v490
  %v2118 = vunpack.c.l.b16 %v491
  %v2119 = vunpack.c.h.b16 %v491
  %v2120 = vunpack.c.l.b16 %v492
  %v2121 = vunpack.c.h.b16 %v492
  %v2122 = vunpack.c.l.b16 %v493
  %v2123 = vunpack.c.h.b16 %v493
  %v2124 = vunpack.c.l.b16 %v494
  %v2125 = vunpack.c.h.b16 %v494
  %v2126 = vunpack.c.l.b16 %v495
  %v2127 = vunpack.c.h.b16 %v495
  %v2128 = vunpack.c.l.b16 %v496
  %v2129 = vunpack.c.h.b16 %v496
  %v2130 = vunpack.c.l.b16 %v497
  %v2131 = vunpack.c.h.b16 %v497
  %v2132 = vunpack.c.l.b16 %v498
  %v2133 = vunpack.c.h.b16 %v498
  %v2134 = vunpack.c.l.b16 %v499
  %v2135 = vunpack.c.l.b16 %v500
  %v2136 = vunpack.c.h.b16 %v500
  %v2137 = vunpack.c.l.b16 %v501
  %v2138 = vunpack.c.h.b16 %v501
  %v2139 = vunpack.c.l.b16 %v502
  %v2140 = vunpack.c.h.b16 %v502
  %v2141 = vunpack.c.l.b16 %v503
  %v2142 = vunpack.c.h.b16 %v503
  %v2143 = vunpack.c.l.b16 %v504
  %v2144 = vunpack.c.h.b16 %v504
  %v2145 = vunpack.c.l.b16 %v505
  %v2146 = vunpack.c.h.b16 %v505
  %v2147 = vunpack.c.l.b16 %v506
  %v2148 = vunpack.c.h.b16 %v506
  %v2149 = vunpack.c.l.b16 %v507
  %v2150 = vunpack.c.h.b16 %v507
  %v2151 = vunpack.c.l.b16 %v508
  %v2152 = vunpack.c.l.b16 %v509
  %v2153 = vunpack.c.h.b16 %v509
  %v2154 = vunpack.c.l.b16 %v510
  %v2155 = vunpack.c.h.b16 %v510
  %v2156 = vunpack.c.l.b16 %v511
  %v2157 = vunpack.c.h.b16 %v511
  %v2158 = vunpack.c.l.b16 %v512
  %v2159 = vunpack.c.h.b16 %v512
  %v2160 = vunpack.c.l.b16 %v513
  %v2161 = vunpack.c.h.b16 %v513
  %v2162 = vunpack.c.l.b16 %v514
  %v2163 = vunpack.c.h.b16 %v514
  %v2164 = vunpack.c.l.b16 %v515
  %v2165 = vunpack.c.h.b16 %v515
  %v2166 = vunpack.c.l.b16 %v516
  %v2167 = vunpack.c.h.b16 %v516
  %v2168 = vunpack.c.l.b16 %v517
  %v2169 = vunpack.c.l.b16 %v518
  %v2170 = vunpack.c.h.b16 %v518
  %v2171 = vunpack.c.l.b16 %v519
  %v2172 = vunpack.c.h.b16 %v519
  %v2173 = vunpack.c.l.b16 %v520
  %v2174 = vunpack.c.h.b16 %v520
  %v2175 = vunpack.c.l.b16 %v521
  %v2176 = vunpack.c.h.b16 %v521
  %v2177 = vunpack.c.l.b16 %v522
  %v2178 = vunpack.c.h.b16 %v522
  %v2179 = vunpack.c.l.b16 %v523
  %v2180 = vunpack.c.h.b16 %v523
  %v2181 = vunpack.c.l.b16 %v524
  %v2182 = vunpack.c.h.b16 %v524
  %v2183 = vunpack.c.l.b16 %v525
  %v2184 = vunpack.c.h.b16 %v525
  %v2185 = vunpack.c.l.b16 %v526
  %v2186 = vunpack.c.l.b16 %v527
  %v2187 = vunpack.c.h.b16 %v527
  %v2188 = vunpack.c.l.b16 %v528
  %v2189 = vunpack.c.h.b16 %v528
  %v2190 = vunpack.c.l.b16 %v529
  %v2191 = vunpack.c.h.b16 %v529
  %v2192 = vunpack.c.l.b16 %v530
  %v2193 = vunpack.c.h.b16 %v530
  %v2194 = vunpack.c.l.b16 %v531
  %v2195 = vunpack.c.h.b16 %v531
  %v2196 = vunpack.c.l.b16 %v532
  %v2197 = vunpack.c.h.b16 %v532
  %v2198 = vunpack.c.l.b16 %v533
  %v2199 = vunpack.c.h.b16 %v533
  %v2200 = vunpack.c.l.b16 %v534
  %v2201 = vunpack.c.h.b16 %v534
  %v2202 = vunpack.c.l.b16 %v535
  %v2203 = vunpack.c.l.b16 %v536
  %v2204 = vunpack.c.h.b16 %v536
  %v2205 = vunpack.c.l.b16 %v537
  %v2206 = vunpack.c.h.b16 %v537
  %v2207 = vunpack.c.l.b16 %v538
  %v2208 = vunpack.c.h.b16 %v538
  %v2209 = vunpack.c.l.b16 %v539
  %v2210 = vunpack.c.h.b16 %v539
  %v2211 = vunpack.c.l.b16 %v540
  %v2212 = vunpack.c.h.b16 %v540
  %v2213 = vunpack.c.l.b16 %v541
  %v2214 = vunpack.c.h.b16 %v541
  %v2215 = vunpack.c.l.b16 %v542
  %v2216 = vunpack.c.h.b16 %v542
  %v2217 = vunpack.c.l.b16 %v543
  %v2218 = vunpack.c.h.b16 %v543
  %v2219 = vunpack.c.l.b16 %v544
  %v2220 = vunpack.c.l.b16 %v545
  %v2221 = vunpack.c.h.b16 %v545
  %v2222 = vunpack.c.l.b16 %v546
  %v2223 = vunpack.c.h.b16 %v546
  %v2224 = vunpack.c.l.b16 %v547
  %v2225 = vunpack.c.h.b16 %v547
  %v2226 = vunpack.c.l.b16 %v548
  %v2227 = vunpack.c.h.b16 %v548
  %v2228 = vunpack.c.l.b16 %v549
  %v2229 = vunpack.c.h.b16 %v549
  %v2230 = vunpack.c.l.b16 %v550
  %v2231 = vunpack.c.h.b16 %v550
  %v2232 = vunpack.c.l.b16 %v551
  %v2233 = vunpack.c.h.b16 %v551
  %v2234 = vunpack.c.l.b16 %v552
  %v2235 = vunpack.c.h.b16 %v552
  %v2236 = vunpack.c.l.b16 %v553
  %v2237 = vunpack.c.l.b16 %v554
  %v2238 = vunpack.c.h.b16 %v554
  %v2239 = vunpack.c.l.b16 %v555
  %v2240 = vunpack.c.h.b16 %v555
  %v2241 = vunpack.c.l.b16 %v556
  %v2242 = vunpack.c.h.b16 %v556
  %v2243 = vunpack.c.l.b16 %v557
  %v2244 = vunpack.c.h.b16 %v557
  %v2245 = vunpack.c.l.b16 %v558
  %v2246 = vunpack.c.h.b16 %v558
  %v2247 = vunpack.c.l.b16 %v559
  %v2248 = vunpack.c.h.b16 %v559
  %v2249 = vunpack.c.l.b16 %v560
  %v2250 = vunpack.c.h.b16 %v560
  %v2251 = vunpack.c.l.b16 %v561
  %v2252 = vunpack.c.h.b16 %v561
  %v2253 = vunpack.c.l.b16 %v562
  %v2254 = vunpack.c.l.b16 %v563
  %v2255 = vunpack.c.h.b16 %v563
  %v2256 = vunpack.c.l.b16 %v564
  %v2257 = vunpack.c.h.b16 %v564
  %v2258 = vunpack.c.l.b16 %v565
  %v2259 = vunpack.c.h.b16 %v565
  %v2260 = vunpack.c.l.b16 %v566
  %v2261 = vunpack.c.h.b16 %v566
  %v2262 = vunpack.c.l.b16 %v567
  %v2263 = vunpack.c.h.b16 %v567
  %v2264 = vunpack.c.l.b16 %v568
  %v2265 = vunpack.c.h.b16 %v568
  %v2266 = vunpack.c.l.b16 %v569
  %v2267 = vunpack.c.h.b16 %v569
  %v2268 = vunpack.c.l.b16 %v570
  %v2269 = vunpack.c.h.b16 %v570
  %v2270 = vunpack.c.l.b16 %v571
  %v2271 = vunpack.c.l.b16 %v572
  %v2272 = vunpack.c.h.b16 %v572
  %v2273 = vunpack.c.l.b16 %v573
  %v2274 = vunpack.c.h.b16 %v573
  %v2275 = vunpack.c.l.b16 %v574
  %v2276 = vunpack.c.h.b16 %v574
  %v2277 = vunpack.c.l.b16 %v575
  %v2278 = vunpack.c.h.b16 %v575
  %v2279 = vunpack.c.l.b16 %v576
  %v2280 = vunpack.c.h.b16 %v576
  %v2281 = vunpack.c.l.b16 %v577
  %v2282 = vunpack.c.h.b16 %v577
  %v2283 = vunpack.c.l.b16 %v578
  %v2284 = vunpack.c.h.b16 %v578
  %v2285 = vunpack.c.l.b16 %v579
  %v2286 = vunpack.c.h.b16 %v579
  %v2287 = vunpack.c.l.b16 %v580
  %v2288 = vunpack.c.l.b16 %v581
  %v2289 = vunpack.c.h.b16 %v581
  %v2290 = vunpack.c.l.b16 %v582
  %v2291 = vunpack.c.h.b16 %v582
  %v2292 = vunpack.c.l.b16 %v583
  %v2293 = vunpack.c.h.b16 %v583
  %v2294 = vunpack.c.l.b16 %v584
  %v2295 = vunpack.c.h.b16 %v584
  %v2296 = vunpack.c.l.b16 %v585
  %v2297 = vunpack.c.h.b16 %v585
  %v2298 = vunpack.c.l.b16 %v586
  %v2299 = vunpack.c.h.b16 %v586
  %v2300 = vunpack.c.l.b16 %v587
  %v2301 = vunpack.c.h.b16 %v587
  %v2302 = vunpack.c.l.b16 %v588
  %v2303 = vunpack.c.h.b16 %v588
  %v2304 = vunpack.c.l.b16 %v589
  %v2305 = vunpack.c.l.b16 %v590
  %v2306 = vunpack.c.h.b16 %v590
  %v2307 = vunpack.c.l.b16 %v591
  %v2308 = vunpack.c.h.b16 %v591
  %v2309 = vunpack.c.l.b16 %v592
  %v2310 = vunpack.c.h.b16 %v592
  %v2311 = vunpack.c.l.b16 %v593
  %v2312 = vunpack.c.h.b16 %v593
  %v2313 = vunpack.c.l.b16 %v594
  %v2314 = vunpack.c.h.b16 %v594
  %v2315 = vunpack.c.l.b16 %v595
  %v2316 = vunpack.c.h.b16 %v595
  %v2317 = vunpack.c.l.b16 %v596
  %v2318 = vunpack.c.h.b16 %v596
  %v2319 = vunpack.c.l.b16 %v597
  %v2320 = vunpack.c.h.b16 %v597
  %v2321 = vunpack.c.l.b16 %v598
  %v2322 = vunpack.c.l.b16 %v599
  %v2323 = vunpack.c.h.b16 %v599
  %v2324 = vunpack.c.l.b16 %v600
  %v2325 = vunpack.c.h.b16 %v600
  %v2326 = vunpack.c.l.b16 %v601
  %v2327 = vunpack.c.h.b16 %v601
  %v2328 = vunpack.c.l.b16 %v602
  %v2329 = vunpack.c.h.b16 %v602
  %v2330 = vunpack.c.l.b16 %v603
  %v2331 = vunpack.c.h.b16 %v603
  %v2332 = vunpack.c.l.b16 %v604
  %v2333 = vunpack.c.h.b16 %v604
  %v2334 = vunpack.c.l.b16 %v605
  %v2335 = vunpack.c.h.b16 %v605
  %v2336 = vunpack.c.l.b16 %v606
  %v2337 = vunpack.c.h.b16 %v606
  %v2338 = vunpack.c.l.b16 %v607
  %v2339 = vunpack.c.l.b16 %v608
  %v2340 = vunpack.c.h.b16 %v608
  %v2341 = vunpack.c.l.b16 %v609
  %v2342 = vunpack.c.h.b16 %v609
  %v2343 = vunpack.c.l.b16 %v610
  %v2344 = vunpack.c.h.b16 %v610
  %v2345 = vunpack.c.l.b16 %v611
  %v2346 = vunpack.c.h.b16 %v611
  %v2347 = vunpack.c.l.b16 %v612
  %v2348 = vunpack.c.h.b16 %v612
  %v2349 = vunpack.c.l.b16 %v613
  %v2350 = vunpack.c.h.b16 %v613
  %v2351 = vunpack.c.l.b16 %v614
  %v2352 = vunpack.c.h.b16 %v614
  %v2353 = vunpack.c.l.b16 %v615
  %v2354 = vunpack.c.h.b16 %v615
  %v2355 = vunpack.c.l.b16 %v616
  %v2356 = vunpack.c.l.b16 %v617
  %v2357 = vunpack.c.h.b16 %v617
  %v2358 = vunpack.c.l.b16 %v618
  %v2359 = vunpack.c.h.b16 %v618
  %v2360 = vunpack.c.l.b16 %v619
  %v2361 = vunpack.c.h.b16 %v619
  %v2362 = vunpack.c.l.b16 %v620
  %v2363 = vunpack.c.h.b16 %v620
  %v2364 = vunpack.c.l.b16 %v621
  %v2365 = vunpack.c.h.b16 %v621
  %v2366 = vunpack.c.l.b16 %v622
  %v2367 = vunpack.c.h.b16 %v622
  %v2368 = vunpack.c.l.b16 %v623
  %v2369 = vunpack.c.h.b16 %v623
  %v2370 = vunpack.c.l.b16 %v624
  %v2371 = vunpack.c.h.b16 %v624
  %v2372 = vunpack.c.l.b16 %v625
  %v2373 = vunpack.c.l.b16 %v626
  %v2374 = vunpack.c.h.b16 %v626
  %v2375 = vunpack.c.l.b16 %v627
  %v2376 = vunpack.c.h.b16 %v627
  %v2377 = vunpack.c.l.b16 %v628
  %v2378 = vunpack.c.h.b16 %v628
  %v2379 = vunpack.c.l.b16 %v629
  %v2380 = vunpack.c.h.b16 %v629
  %v2381 = vunpack.c.l.b16 %v630
  %v2382 = vunpack.c.h.b16 %v630
  %v2383 = vunpack.c.l.b16 %v631
  %v2384 = vunpack.c.h.b16 %v631
  %v2385 = vunpack.c.l.b16 %v632
  %v2386 = vunpack.c.h.b16 %v632
  %v2387 = vunpack.c.l.b16 %v633
  %v2388 = vunpack.c.h.b16 %v633
  %v2389 = vunpack.c.l.b16 %v634
  %v2390 = vpack.c.b16 %v1319, %v1302
  %v2391 = vpack.c.b16 %v1320, %v1303
  %v2392 = vpack.c.b16 %v1321, %v1304
  %v2393 = vpack.c.b16 %v1322, %v1305
  %v2394 = vpack.c.b16 %v1323, %v1306
  %v2395 = vpack.c.b16 %v1324, %v1307
  %v2396 = vpack.c.b16 %v1325, %v1308
  %v2397 = vpack.c.b16 %v1326, %v1309
  %v2398 = vpack.c.b16 %v1327, %v1310
  %v2399 = vpack.c.b16 %v1328, %v1311
  %v2400 = vpack.c.b16 %v1329, %v1312
  %v2401 = vpack.c.b16 %v1330, %v1313
  %v2402 = vpack.c.b16 %v1331, %v1314
  %v2403 = vpack.c.b16 %v1332, %v1315
  %v2404 = vpack.c.b16 %v1333, %v1316
  %v2405 = vpack.c.b16 %v1334, %v1317
  %v2406 = vpack.c.b16 %v1335, %v1318
  %v2407 = vpack.c.b16 %v1353, %v1336
  %v2408 = vpack.c.b16 %v1354, %v1337
  %v2409 = vpack.c.b16 %v1355, %v1338
  %v2410 = vpack.c.b16 %v1356, %v1339
  %v2411 = vpack.c.b16 %v1357, %v1340
  %v2412 = vpack.c.b16 %v1358, %v1341
  %v2413 = vpack.c.b16 %v1359, %v1342
  %v2414 = vpack.c.b16 %v1360, %v1343
  %v2415 = vpack.c.b16 %v1361, %v1344
  %v2416 = vpack.c.b16 %v1362, %v1345
  %v2417 = vpack.c.b16 %v1363, %v1346
  %v2418 = vpack.c.b16 %v1364, %v1347
  %v2419 = vpack.c.b16 %v1365, %v1348
  %v2420 = vpack.c.b16 %v1366, %v1349
  %v2421 = vpack.c.b16 %v1367, %v1350
  %v2422 = vpack.c.b16 %v1368, %v1351
  %v2423 = vpack.c.b16 %v1369, %v1352
  %v2424 = vpack.c.b16 %v1387, %v1370
  %v2425 = vpack.c.b16 %v1388, %v1371
  %v2426 = vpack.c.b16 %v1389, %v1372
  %v2427 = vpack.c.b16 %v1390, %v1373
  %v2428 = vpack.c.b16 %v1391, %v1374
  %v2429 = vpack.c.b16 %v1392, %v1375
  %v2430 = vpack.c.b16 %v1393, %v1376
  %v2431 = vpack.c.b16 %v1394, %v1377
  %v2432 = vpack.c.b16 %v1395, %v1378
  %v2433 = vpack.c.b16 %v1396, %v1379
  %v2434 = vpack.c.b16 %v1397, %v1380
  %v2435 = vpack.c.b16 %v1398, %v1381
  %v2436 = vpack.c.b16 %v1399, %v1382
  %v2437 = vpack.c.b16 %v1400, %v1383
  %v2438 = vpack.c.b16 %v1401, %v1384
  %v2439 = vpack.c.b16 %v1402, %v1385
  %v2440 = vpack.c.b16 %v1403, %v1386
  %v2441 = vpack.c.b16 %v1421, %v1404
  %v2442 = vpack.c.b16 %v1422, %v1405
  %v2443 = vpack.c.b16 %v1423, %v1406
  %v2444 = vpack.c.b16 %v1424, %v1407
  %v2445 = vpack.c.b16 %v1425, %v1408
  %v2446 = vpack.c.b16 %v1426, %v1409
  %v2447 = vpack.c.b16 %v1427, %v1410
  %v2448 = vpack.c.b16 %v1428, %v1411
  %v2449 = vpack.c.b16 %v1429, %v1412
  %v2450 = vpack.c.b16 %v1430, %v1413
  %v2451 = vpack.c.b16 %v1431, %v1414
  %v2452 = vpack.c.b16 %v1432, %v1415
  %v2453 = vpack.c.b16 %v1433, %v1416
  %v2454 = vpack.c.b16 %v1434, %v1417
  %v2455 = vpack.c.b16 %v1435, %v1418
  %v2456 = vpack.c.b16 %v1436, %v1419
  %v2457 = vpack.c.b16 %v1437, %v1420
  %v2458 = vpack.c.b16 %v1455, %v1438
  %v2459 = vpack.c.b16 %v1456, %v1439
  %v2460 = vpack.c.b16 %v1457, %v1440
  %v2461 = vpack.c.b16 %v1458, %v1441
  %v2462 = vpack.c.b16 %v1459, %v1442
  %v2463 = vpack.c.b16 %v1460, %v1443
  %v2464 = vpack.c.b16 %v1461, %v1444
  %v2465 = vpack.c.b16 %v1462, %v1445
  %v2466 = vpack.c.b16 %v1463, %v1446
  %v2467 = vpack.c.b16 %v1464, %v1447
  %v2468 = vpack.c.b16 %v1465, %v1448
  %v2469 = vpack.c.b16 %v1466, %v1449
  %v2470 = vpack.c.b16 %v1467, %v1450
  %v2471 = vpack.c.b16 %v1468, %v1451
  %v2472 = vpack.c.b16 %v1469, %v1452
  %v2473 = vpack.c.b16 %v1470, %v1453
  %v2474 = vpack.c.b16 %v1471, %v1454
  %v2475 = vpack.c.b16 %v1489, %v1472
  %v2476 = vpack.c.b16 %v1490, %v1473
  %v2477 = vpack.c.b16 %v1491, %v1474
  %v2478 = vpack.c.b16 %v1492, %v1475
  %v2479 = vpack.c.b16 %v1493, %v1476
  %v2480 = vpack.c.b16 %v1494, %v1477
  %v2481 = vpack.c.b16 %v1495, %v1478
  %v2482 = vpack.c.b16 %v1496, %v1479
  %v2483 = vpack.c.b16 %v1497, %v1480
  %v2484 = vpack.c.b16 %v1498, %v1481
  %v2485 = vpack.c.b16 %v1499, %v1482
  %v2486 = vpack.c.b16 %v1500, %v1483
  %v2487 = vpack.c.b16 %v1501, %v1484
  %v2488 = vpack.c.b16 %v1502, %v1485
  %v2489 = vpack.c.b16 %v1503, %v1486
  %v2490 = vpack.c.b16 %v1504, %v1487
  %v2491 = vpack.c.b16 %v1505, %v1488
  %v2492 = vpack.c.b16 %v1523, %v1506
  %v2493 = vpack.c.b16 %v1524, %v1507
  %v2494 = vpack.c.b16 %v1525, %v1508
  %v2495 = vpack.c.b16 %v1526, %v1509
  %v2496 = vpack.c.b16 %v1527, %v1510
  %v2497 = vpack.c.b16 %v1528, %v1511
  %v2498 = vpack.c.b16 %v1529, %v1512
  %v2499 = vpack.c.b16 %v1530, %v1513
  %v2500 = vpack.c.b16 %v1531, %v1514
  %v2501 = vpack.c.b16 %v1532, %v1515
  %v2502 = vpack.c.b16 %v1533, %v1516
  %v2503 = vpack.c.b16 %v1534, %v1517
  %v2504 = vpack.c.b16 %v1535, %v1518
  %v2505 = vpack.c.b16 %v1536, %v1519
  %v2506 = vpack.c.b16 %v1537, %v1520
  %v2507 = vpack.c.b16 %v1538, %v1521
  %v2508 = vpack.c.b16 %v1539, %v1522
  %v2509 = vpack.c.b16 %v1557, %v1540
  %v2510 = vpack.c.b16 %v1558, %v1541
  %v2511 = vpack.c.b16 %v1559, %v1542
  %v2512 = vpack.c.b16 %v1560, %v1543
  %v2513 = vpack.c.b16 %v1561, %v1544
  %v2514 = vpack.c.b16 %v1562, %v1545
  %v2515 = vpack.c.b16 %v1563, %v1546
  %v2516 = vpack.c.b16 %v1564, %v1547
  %v2517 = vpack.c.b16 %v1565, %v1548
  %v2518 = vpack.c.b16 %v1566, %v1549
  %v2519 = vpack.c.b16 %v1567, %v1550
  %v2520 = vpack.c.b16 %v1568, %v1551
  %v2521 = vpack.c.b16 %v1569, %v1552
  %v2522 = vpack.c.b16 %v1570, %v1553
  %v2523 = vpack.c.b16 %v1571, %v1554
  %v2524 = vpack.c.b16 %v1572, %v1555
  %v2525 = vpack.c.b16 %v1573, %v1556
  %v2526 = vpack.c.b16 %v1591, %v1574
  %v2527 = vpack.c.b16 %v1592, %v1575
  %v2528 = vpack.c.b16 %v1593, %v1576
  %v2529 = vpack.c.b16 %v1594, %v1577
  %v2530 = vpack.c.b16 %v1595, %v1578
  %v2531 = vpack.c.b16 %v1596, %v1579
  %v2532 = vpack.c.b16 %v1597, %v1580
  %v2533 = vpack.c.b16 %v1598, %v1581
  %v2534 = vpack.c.b16 %v1599, %v1582
  %v2535 = vpack.c.b16 %v1600, %v1583
  %v2536 = vpack.c.b16 %v1601, %v1584
  %v2537 = vpack.c.b16 %v1602, %v1585
  %v2538 = vpack.c.b16 %v1603, %v1586
  %v2539 = vpack.c.b16 %v1604, %v1587
  %v2540 = vpack.c.b16 %v1605, %v1588
  %v2541 = vpack.c.b16 %v1606, %v1589
  %v2542 = vpack.c.b16 %v1607, %v1590
  %v2543 = vpack.c.b16 %v1625, %v1608
  %v2544 = vpack.c.b16 %v1626, %v1609
  %v2545 = vpack.c.b16 %v1627, %v1610
  %v2546 = vpack.c.b16 %v1628, %v1611
  %v2547 = vpack.c.b16 %v1629, %v1612
  %v2548 = vpack.c.b16 %v1630, %v1613
  %v2549 = vpack.c.b16 %v1631, %v1614
  %v2550 = vpack.c.b16 %v1632, %v1615
  %v2551 = vpack.c.b16 %v1633, %v1616
  %v2552 = vpack.c.b16 %v1634, %v1617
  %v2553 = vpack.c.b16 %v1635, %v1618
  %v2554 = vpack.c.b16 %v1636, %v1619
  %v2555 = vpack.c.b16 %v1637, %v1620
  %v2556 = vpack.c.b16 %v1638, %v1621
  %v2557 = vpack.c.b16 %v1639, %v1622
  %v2558 = vpack.c.b16 %v1640, %v1623
  %v2559 = vpack.c.b16 %v1641, %v1624
  %v2560 = vpack.c.b16 %v1659, %v1642
  %v2561 = vpack.c.b16 %v1660, %v1643
  %v2562 = vpack.c.b16 %v1661, %v1644
  %v2563 = vpack.c.b16 %v1662, %v1645
  %v2564 = vpack.c.b16 %v1663, %v1646
  %v2565 = vpack.c.b16 %v1664, %v1647
  %v2566 = vpack.c.b16 %v1665, %v1648
  %v2567 = vpack.c.b16 %v1666, %v1649
  %v2568 = vpack.c.b16 %v1667, %v1650
  %v2569 = vpack.c.b16 %v1668, %v1651
  %v2570 = vpack.c.b16 %v1669, %v1652
  %v2571 = vpack.c.b16 %v1670, %v1653
  %v2572 = vpack.c.b16 %v1671, %v1654
  %v2573 = vpack.c.b16 %v1672, %v1655
  %v2574 = vpack.c.b16 %v1673, %v1656
  %v2575 = vpack.c.b16 %v1674, %v1657
  %v2576 = vpack.c.b16 %v1675, %v1658
  %v2577 = vpack.c.b16 %v1693, %v1676
  %v2578 = vpack.c.b16 %v1694, %v1677
  %v2579 = vpack.c.b16 %v1695, %v1678
  %v2580 = vpack.c.b16 %v1696, %v1679
  %v2581 = vpack.c.b16 %v1697, %v1680
  %v2582 = vpack.c.b16 %v1698, %v1681
  %v2583 = vpack.c.b16 %v1699, %v1682
  %v2584 = vpack.c.b16 %v1700, %v1683
  %v2585 = vpack.c.b16 %v1701, %v1684
  %v2586 = vpack.c.b16 %v1702, %v1685
  %v2587 = vpack.c.b16 %v1703, %v1686
  %v2588 = vpack.c.b16 %v1704, %v1687
  %v2589 = vpack.c.b16 %v1705, %v1688
  %v2590 = vpack.c.b16 %v1706, %v1689
  %v2591 = vpack.c.b16 %v1707, %v1690
  %v2592 = vpack.c.b16 %v1708, %v1691
  %v2593 = vpack.c.b16 %v1709, %v1692
  %v2594 = vpack.c.b16 %v1727, %v1710
  %v2595 = vpack.c.b16 %v1728, %v1711
  %v2596 = vpack.c.b16 %v1729, %v1712
  %v2597 = vpack.c.b16 %v1730, %v1713
  %v2598 = vpack.c.b16 %v1731, %v1714
  %v2599 = vpack.c.b16 %v1732, %v1715
  %v2600 = vpack.c.b16 %v1733, %v1716
  %v2601 = vpack.c.b16 %v1734, %v1717
  %v2602 = vpack.c.b16 %v1735, %v1718
  %v2603 = vpack.c.b16 %v1736, %v1719
  %v2604 = vpack.c.b16 %v1737, %v1720
  %v2605 = vpack.c.b16 %v1738, %v1721
  %v2606 = vpack.c.b16 %v1739, %v1722
  %v2607 = vpack.c.b16 %v1740, %v1723
  %v2608 = vpack.c.b16 %v1741, %v1724
  %v2609 = vpack.c.b16 %v1742, %v1725
  %v2610 = vpack.c.b16 %v1743, %v1726
  %v2611 = vpack.c.b16 %v1761, %v1744
  %v2612 = vpack.c.b16 %v1762, %v1745
  %v2613 = vpack.c.b16 %v1763, %v1746
  %v2614 = vpack.c.b16 %v1764, %v1747
  %v2615 = vpack.c.b16 %v1765, %v1748
  %v2616 = vpack.c.b16 %v1766, %v1749
  %v2617 = vpack.c.b16 %v1767, %v1750
  %v2618 = vpack.c.b16 %v1768, %v1751
  %v2619 = vpack.c.b16 %v1769, %v1752
  %v2620 = vpack.c.b16 %v1770, %v1753
  %v2621 = vpack.c.b16 %v1771, %v1754
  %v2622 = vpack.c.b16 %v1772, %v1755
  %v2623 = vpack.c.b16 %v1773, %v1756
  %v2624 = vpack.c.b16 %v1774, %v1757
  %v2625 = vpack.c.b16 %v1775, %v1758
  %v2626 = vpack.c.b16 %v1776, %v1759
  %v2627 = vpack.c.b16 %v1777, %v1760
  %v2628 = vpack.c.b16 %v1795, %v1778
  %v2629 = vpack.c.b16 %v1796, %v1779
  %v2630 = vpack.c.b16 %v1797, %v1780
  %v2631 = vpack.c.b16 %v1798, %v1781
  %v2632 = vpack.c.b16 %v1799, %v1782
  %v2633 = vpack.c.b16 %v1800, %v1783
  %v2634 = vpack.c.b16 %v1801, %v1784
  %v2635 = vpack.c.b16 %v1802, %v1785
  %v2636 = vpack.c.b16 %v1803, %v1786
  %v2637 = vpack.c.b16 %v1804, %v1787
  %v2638 = vpack.c.b16 %v1805, %v1788
  %v2639 = vpack.c.b16 %v1806, %v1789
  %v2640 = vpack.c.b16 %v1807, %v1790
  %v2641 = vpack.c.b16 %v1808, %v1791
  %v2642 = vpack.c.b16 %v1809, %v1792
  %v2643 = vpack.c.b16 %v1810, %v1793
  %v2644 = vpack.c.b16 %v1811, %v1794
  %v2645 = vpack.c.b16 %v1829, %v1812
  %v2646 = vpack.c.b16 %v1830, %v1813
  %v2647 = vpack.c.b16 %v1831, %v1814
  %v2648 = vpack.c.b16 %v1832, %v1815
  %v2649 = vpack.c.b16 %v1833, %v1816
  %v2650 = vpack.c.b16 %v1834, %v1817
  %v2651 = vpack.c.b16 %v1835, %v1818
  %v2652 = vpack.c.b16 %v1836, %v1819
  %v2653 = vpack.c.b16 %v1837, %v1820
  %v2654 = vpack.c.b16 %v1838, %v1821
  %v2655 = vpack.c.b16 %v1839, %v1822
  %v2656 = vpack.c.b16 %v1840, %v1823
  %v2657 = vpack.c.b16 %v1841, %v1824
  %v2658 = vpack.c.b16 %v1842, %v1825
  %v2659 = vpack.c.b16 %v1843, %v1826
  %v2660 = vpack.c.b16 %v1844, %v1827
  %v2661 = vpack.c.b16 %v1845, %v1828
  %v2662 = vpack.c.b16 %v1863, %v1846
  %v2663 = vpack.c.b16 %v1864, %v1847
  %v2664 = vpack.c.b16 %v1865, %v1848
  %v2665 = vpack.c.b16 %v1866, %v1849
  %v2666 = vpack.c.b16 %v1867, %v1850
  %v2667 = vpack.c.b16 %v1868, %v1851
  %v2668 = vpack.c.b16 %v1869, %v1852
  %v2669 = vpack.c.b16 %v1870, %v1853
  %v2670 = vpack.c.b16 %v1871, %v1854
  %v2671 = vpack.c.b16 %v1872, %v1855
  %v2672 = vpack.c.b16 %v1873, %v1856
  %v2673 = vpack.c.b16 %v1874, %v1857
  %v2674 = vpack.c.b16 %v1875, %v1858
  %v2675 = vpack.c.b16 %v1876, %v1859
  %v2676 = vpack.c.b16 %v1877, %v1860
  %v2677 = vpack.c.b16 %v1878, %v1861
  %v2678 = vpack.c.b16 %v1879, %v1862
  %v2679 = vpack.c.b16 %v1897, %v1880
  %v2680 = vpack.c.b16 %v1898, %v1881
  %v2681 = vpack.c.b16 %v1899, %v1882
  %v2682 = vpack.c.b16 %v1900, %v1883
  %v2683 = vpack.c.b16 %v1901, %v1884
  %v2684 = vpack.c.b16 %v1902, %v1885
  %v2685 = vpack.c.b16 %v1903, %v1886
  %v2686 = vpack.c.b16 %v1904, %v1887
  %v2687 = vpack.c.b16 %v1905, %v1888
  %v2688 = vpack.c.b16 %v1906, %v1889
  %v2689 = vpack.c.b16 %v1907, %v1890
  %v2690 = vpack.c.b16 %v1908, %v1891
  %v2691 = vpack.c.b16 %v1909, %v1892
  %v2692 = vpack.c.b16 %v1910, %v1893
  %v2693 = vpack.c.b16 %v1911, %v1894
  %v2694 = vpack.c.b16 %v1912, %v1895
  %v2695 = vpack.c.b16 %v1913, %v1896
  %v2696 = vpack.c.b16 %v1931, %v1914
  %v2697 = vpack.c.b16 %v1932, %v1915
  %v2698 = vpack.c.b16 %v1933, %v1916
  %v2699 = vpack.c.b16 %v1934, %v1917
  %v2700 = vpack.c.b16 %v1935, %v1918
  %v2701 = vpack.c.b16 %v1936, %v1919
  %v2702 = vpack.c.b16 %v1937, %v1920
  %v2703 = vpack.c.b16 %v1938, %v1921
  %v2704 = vpack.c.b16 %v1939, %v1922
  %v2705 = vpack.c.b16 %v1940, %v1923
  %v2706 = vpack.c.b16 %v1941, %v1924
  %v2707 = vpack.c.b16 %v1942, %v1925
  %v2708 = vpack.c.b16 %v1943, %v1926
  %v2709 = vpack.c.b16 %v1944, %v1927
  %v2710 = vpack.c.b16 %v1945, %v1928
  %v2711 = vpack.c.b16 %v1946, %v1929
  %v2712 = vpack.c.b16 %v1947, %v1930
  %v2713 = vpack.c.b16 %v1965, %v1948
  %v2714 = vpack.c.b16 %v1966, %v1949
  %v2715 = vpack.c.b16 %v1967, %v1950
  %v2716 = vpack.c.b16 %v1968, %v1951
  %v2717 = vpack.c.b16 %v1969, %v1952
  %v2718 = vpack.c.b16 %v1970, %v1953
  %v2719 = vpack.c.b16 %v1971, %v1954
  %v2720 = vpack.c.b16 %v1972, %v1955
  %v2721 = vpack.c.b16 %v1973, %v1956
  %v2722 = vpack.c.b16 %v1974, %v1957
  %v2723 = vpack.c.b16 %v1975, %v1958
  %v2724 = vpack.c.b16 %v1976, %v1959
  %v2725 = vpack.c.b16 %v1977, %v1960
  %v2726 = vpack.c.b16 %v1978, %v1961
  %v2727 = vpack.c.b16 %v1979, %v1962
  %v2728 = vpack.c.b16 %v1980, %v1963
  %v2729 = vpack.c.b16 %v1981, %v1964
  %v2730 = vpack.c.b16 %v1999, %v1982
  %v2731 = vpack.c.b16 %v2000, %v1983
  %v2732 = vpack.c.b16 %v2001, %v1984
  %v2733 = vpack.c.b16 %v2002, %v1985
  %v2734 = vpack.c.b16 %v2003, %v1986
  %v2735 = vpack.c.b16 %v2004, %v1987
  %v2736 = vpack.c.b16 %v2005, %v1988
  %v2737 = vpack.c.b16 %v2006, %v1989
  %v2738 = vpack.c.b16 %v2007, %v1990
  %v2739 = vpack.c.b16 %v2008, %v1991
  %v2740 = vpack.c.b16 %v2009, %v1992
  %v2741 = vpack.c.b16 %v2010, %v1993
  %v2742 = vpack.c.b16 %v2011, %v1994
  %v2743 = vpack.c.b16 %v2012, %v1995
  %v2744 = vpack.c.b16 %v2013, %v1996
  %v2745 = vpack.c.b16 %v2014, %v1997
  %v2746 = vpack.c.b16 %v2015, %v1998
  %v2747 = vpack.c.b16 %v2033, %v2016
  %v2748 = vpack.c.b16 %v2034, %v2017
  %v2749 = vpack.c.b16 %v2035, %v2018
  %v2750 = vpack.c.b16 %v2036, %v2019
  %v2751 = vpack.c.b16 %v2037, %v2020
  %v2752 = vpack.c.b16 %v2038, %v2021
  %v2753 = vpack.c.b16 %v2039, %v2022
  %v2754 = vpack.c.b16 %v2040, %v2023
  %v2755 = vpack.c.b16 %v2041, %v2024
  %v2756 = vpack.c.b16 %v2042, %v2025
  %v2757 = vpack.c.b16 %v2043, %v2026
  %v2758 = vpack.c.b16 %v2044, %v2027
  %v2759 = vpack.c.b16 %v2045, %v2028
  %v2760 = vpack.c.b16 %v2046, %v2029
  %v2761 = vpack.c.b16 %v2047, %v2030
  %v2762 = vpack.c.b16 %v2048, %v2031
  %v2763 = vpack.c.b16 %v2049, %v2032
  %v2764 = vpack.c.b16 %v2067, %v2050
  %v2765 = vpack.c.b16 %v2068, %v2051
  %v2766 = vpack.c.b16 %v2069, %v2052
  %v2767 = vpack.c.b16 %v2070, %v2053
  %v2768 = vpack.c.b16 %v2071, %v2054
  %v2769 = vpack.c.b16 %v2072, %v2055
  %v2770 = vpack.c.b16 %v2073, %v2056
  %v2771 = vpack.c.b16 %v2074, %v2057
  %v2772 = vpack.c.b16 %v2075, %v2058
  %v2773 = vpack.c.b16 %v2076, %v2059
  %v2774 = vpack.c.b16 %v2077, %v2060
  %v2775 = vpack.c.b16 %v2078, %v2061
  %v2776 = vpack.c.b16 %v2079, %v2062
  %v2777 = vpack.c.b16 %v2080, %v2063
  %v2778 = vpack.c.b16 %v2081, %v2064
  %v2779 = vpack.c.b16 %v2082, %v2065
  %v2780 = vpack.c.b16 %v2083, %v2066
  %v2781 = vpack.c.b16 %v2101, %v2084
  %v2782 = vpack.c.b16 %v2102, %v2085
  %v2783 = vpack.c.b16 %v2103, %v2086
  %v2784 = vpack.c.b16 %v2104, %v2087
  %v2785 = vpack.c.b16 %v2105, %v2088
  %v2786 = vpack.c.b16 %v2106, %v2089
  %v2787 = vpack.c.b16 %v2107, %v2090
  %v2788 = vpack.c.b16 %v2108, %v2091
  %v2789 = vpack.c.b16 %v2109, %v2092
  %v2790 = vpack.c.b16 %v2110, %v2093
  %v2791 = vpack.c.b16 %v2111, %v2094
  %v2792 = vpack.c.b16 %v2112, %v2095
  %v2793 = vpack.c.b16 %v2113, %v2096
  %v2794 = vpack.c.b16 %v2114, %v2097
  %v2795 = vpack.c.b16 %v2115, %v2098
  %v2796 = vpack.c.b16 %v2116, %v2099
  %v2797 = vpack.c.b16 %v2117, %v2100
  %v2798 = vpack.c.b16 %v2135, %v2118
  %v2799 = vpack.c.b16 %v2136, %v2119
  %v2800 = vpack.c.b16 %v2137, %v2120
  %v2801 = vpack.c.b16 %v2138, %v2121
  %v2802 = vpack.c.b16 %v2139, %v2122
  %v2803 = vpack.c.b16 %v2140, %v2123
  %v2804 = vpack.c.b16 %v2141, %v2124
  %v2805 = vpack.c.b16 %v2142, %v2125
  %v2806 = vpack.c.b16 %v2143, %v2126
  %v2807 = vpack.c.b16 %v2144, %v2127
  %v2808 = vpack.c.b16 %v2145, %v2128
  %v2809 = vpack.c.b16 %v2146, %v2129
  %v2810 = vpack.c.b16 %v2147, %v2130
  %v2811 = vpack.c.b16 %v2148, %v2131
  %v2812 = vpack.c.b16 %v2149, %v2132
  %v2813 = vpack.c.b16 %v2150, %v2133
  %v2814 = vpack.c.b16 %v2151, %v2134
  %v2815 = vpack.c.b16 %v2169, %v2152
  %v2816 = vpack.c.b16 %v2170, %v2153
  %v2817 = vpack.c.b16 %v2171, %v2154
  %v2818 = vpack.c.b16 %v2172, %v2155
  %v2819 = vpack.c.b16 %v2173, %v2156
  %v2820 = vpack.c.b16 %v2174, %v2157
  %v2821 = vpack.c.b16 %v2175, %v2158
  %v2822 = vpack.c.b16 %v2176, %v2159
  %v2823 = vpack.c.b16 %v2177, %v2160
  %v2824 = vpack.c.b16 %v2178, %v2161
  %v2825 = vpack.c.b16 %v2179, %v2162
  %v2826 = vpack.c.b16 %v2180, %v2163
  %v2827 = vpack.c.b16 %v2181, %v2164
  %v2828 = vpack.c.b16 %v2182, %v2165
  %v2829 = vpack.c.b16 %v2183, %v2166
  %v2830 = vpack.c.b16 %v2184, %v2167
  %v2831 = vpack.c.b16 %v2185, %v2168
  %v2832 = vpack.c.b16 %v2203, %v2186
  %v2833 = vpack.c.b16 %v2204, %v2187
  %v2834 = vpack.c.b16 %v2205, %v2188
  %v2835 = vpack.c.b16 %v2206, %v2189
  %v2836 = vpack.c.b16 %v2207, %v2190
  %v2837 = vpack.c.b16 %v2208, %v2191
  %v2838 = vpack.c.b16 %v2209, %v2192
  %v2839 = vpack.c.b16 %v2210, %v2193
  %v2840 = vpack.c.b16 %v2211, %v2194
  %v2841 = vpack.c.b16 %v2212, %v2195
  %v2842 = vpack.c.b16 %v2213, %v2196
  %v2843 = vpack.c.b16 %v2214, %v2197
  %v2844 = vpack.c.b16 %v2215, %v2198
  %v2845 = vpack.c.b16 %v2216, %v2199
  %v2846 = vpack.c.b16 %v2217, %v2200
  %v2847 = vpack.c.b16 %v2218, %v2201
  %v2848 = vpack.c.b16 %v2219, %v2202
  %v2849 = vpack.c.b16 %v2237, %v2220
  %v2850 = vpack.c.b16 %v2238, %v2221
  %v2851 = vpack.c.b16 %v2239, %v2222
  %v2852 = vpack.c.b16 %v2240, %v2223
  %v2853 = vpack.c.b16 %v2241, %v2224
  %v2854 = vpack.c.b16 %v2242, %v2225
  %v2855 = vpack.c.b16 %v2243, %v2226
  %v2856 = vpack.c.b16 %v2244, %v2227
  %v2857 = vpack.c.b16 %v2245, %v2228
  %v2858 = vpack.c.b16 %v2246, %v2229
  %v2859 = vpack.c.b16 %v2247, %v2230
  %v2860 = vpack.c.b16 %v2248, %v2231
  %v2861 = vpack.c.b16 %v2249, %v2232
  %v2862 = vpack.c.b16 %v2250, %v2233
  %v2863 = vpack.c.b16 %v2251, %v2234
  %v2864 = vpack.c.b16 %v2252, %v2235
  %v2865 = vpack.c.b16 %v2253, %v2236
  %v2866 = vpack.c.b16 %v2271, %v2254
  %v2867 = vpack.c.b16 %v2272, %v2255
  %v2868 = vpack.c.b16 %v2273, %v2256
  %v2869 = vpack.c.b16 %v2274, %v2257
  %v2870 = vpack.c.b16 %v2275, %v2258
  %v2871 = vpack.c.b16 %v2276, %v2259
  %v2872 = vpack.c.b16 %v2277, %v2260
  %v2873 = vpack.c.b16 %v2278, %v2261
  %v2874 = vpack.c.b16 %v2279, %v2262
  %v2875 = vpack.c.b16 %v2280, %v2263
  %v2876 = vpack.c.b16 %v2281, %v2264
  %v2877 = vpack.c.b16 %v2282, %v2265
  %v2878 = vpack.c.b16 %v2283, %v2266
  %v2879 = vpack.c.b16 %v2284, %v2267
  %v2880 = vpack.c.b16 %v2285, %v2268
  %v2881 = vpack.c.b16 %v2286, %v2269
  %v2882 = vpack.c.b16 %v2287, %v2270
  %v2883 = vpack.c.b16 %v2305, %v2288
  %v2884 = vpack.c.b16 %v2306, %v2289
  %v2885 = vpack.c.b16 %v2307, %v2290
  %v2886 = vpack.c.b16 %v2308, %v2291
  %v2887 = vpack.c.b16 %v2309, %v2292
  %v2888 = vpack.c.b16 %v2310, %v2293
  %v2889 = vpack.c.b16 %v2311, %v2294
  %v2890 = vpack.c.b16 %v2312, %v2295
  %v2891 = vpack.c.b16 %v2313, %v2296
  %v2892 = vpack.c.b16 %v2314, %v2297
  %v2893 = vpack.c.b16 %v2315, %v2298
  %v2894 = vpack.c.b16 %v2316, %v2299
  %v2895 = vpack.c.b16 %v2317, %v2300
  %v2896 = vpack.c.b16 %v2318, %v2301
  %v2897 = vpack.c.b16 %v2319, %v2302
  %v2898 = vpack.c.b16 %v2320, %v2303
  %v2899 = vpack.c.b16 %v2321, %v2304
  %v2900 = vpack.c.b16 %v2339, %v2322
  %v2901 = vpack.c.b16 %v2340, %v2323
  %v2902 = vpack.c.b16 %v2341, %v2324
  %v2903 = vpack.c.b16 %v2342, %v2325
  %v2904 = vpack.c.b16 %v2343, %v2326
  %v2905 = vpack.c.b16 %v2344, %v2327
  %v2906 = vpack.c.b16 %v2345, %v2328
  %v2907 = vpack.c.b16 %v2346, %v2329
  %v2908 = vpack.c.b16 %v2347, %v2330
  %v2909 = vpack.c.b16 %v2348, %v2331
  %v2910 = vpack.c.b16 %v2349, %v2332
  %v2911 = vpack.c.b16 %v2350, %v2333
  %v2912 = vpack.c.b16 %v2351, %v2334
  %v2913 = vpack.c.b16 %v2352, %v2335
  %v2914 = vpack.c.b16 %v2353, %v2336
  %v2915 = vpack.c.b16 %v2354, %v2337
  %v2916 = vpack.c.b16 %v2355, %v2338
  %v2917 = vpack.c.b16 %v2373, %v2356
  %v2918 = vpack.c.b16 %v2374, %v2357
  %v2919 = vpack.c.b16 %v2375, %v2358
  %v2920 = vpack.c.b16 %v2376, %v2359
  %v2921 = vpack.c.b16 %v2377, %v2360
  %v2922 = vpack.c.b16 %v2378, %v2361
  %v2923 = vpack.c.b16 %v2379, %v2362
  %v2924 = vpack.c.b16 %v2380, %v2363
  %v2925 = vpack.c.b16 %v2381, %v2364
  %v2926 = vpack.c.b16 %v2382, %v2365
  %v2927 = vpack.c.b16 %v2383, %v2366
  %v2928 = vpack.c.b16 %v2384, %v2367
  %v2929 = vpack.c.b16 %v2385, %v2368
  %v2930 = vpack.c.b16 %v2386, %v2369
  %v2931 = vpack.c.b16 %v2387, %v2370
  %v2932 = vpack.c.b16 %v2388, %v2371
  %v2933 = vpack.c.b16 %v2389, %v2372
  %3478 = vmatprep.subr.bf16.mxu0 %v2391
  %3479 = vmatpush1.bf16.msra.mxu0 %v2390
  %3480 = vmatprep.subr.bf16.mxu0 %v2408
  %3481 = vmatpush1.bf16.msra.mxu0 %v2407
  %3482 = vmatprep.subr.bf16.mxu0 %v2425
  %3483 = vmatpush1.bf16.msra.mxu0 %v2424
  %3484 = vmatprep.subr.bf16.mxu0 %v2442
  %3485 = vmatpush1.bf16.msra.mxu0 %v2441
  %3486 = vmatprep.subr.bf16.mxu0 %v2459
  %3487 = vmatpush1.bf16.msra.mxu0 %v2458
  %3488 = vmatprep.subr.bf16.mxu0 %v2476
  %3489 = vmatpush1.bf16.msra.mxu0 %v2475
  %3490 = vmatprep.subr.bf16.mxu0 %v2493
  %3491 = vmatpush1.bf16.msra.mxu0 %v2492
  %3492 = vmatprep.subr.bf16.mxu0 %v2510
  %3493 = vmatpush1.bf16.msra.mxu0 %v2509
  %3494 = vmatprep.subr.bf16.mxu0 %v2527
  %3495 = vmatpush1.bf16.msra.mxu0 %v2526
  %3496 = vmatprep.subr.bf16.mxu0 %v2544
  %3497 = vmatpush1.bf16.msra.mxu0 %v2543
  %3498 = vmatprep.subr.bf16.mxu0 %v2561
  %3499 = vmatpush1.bf16.msra.mxu0 %v2560
  %3500 = vmatprep.subr.bf16.mxu0 %v2578
  %3501 = vmatpush1.bf16.msra.mxu0 %v2577
  %3502 = vmatprep.subr.bf16.mxu0 %v2595
  %3503 = vmatpush1.bf16.msra.mxu0 %v2594
  %3504 = vmatprep.subr.bf16.mxu0 %v2612
  %3505 = vmatpush1.bf16.msra.mxu0 %v2611
  %3506 = vmatprep.subr.bf16.mxu0 %v2629
  %3507 = vmatpush1.bf16.msra.mxu0 %v2628
  %3508 = vmatprep.subr.bf16.mxu0 %v2646
  %3509 = vmatpush1.bf16.msra.mxu0 %v2645
  %3510 = vmatprep.mubr.bf16.mxu0 %v56
  %3511 = vmatmul.mubr.bf16.gmra.mrb[0].mxu0 %v55
  %v3512 = vpop.f32.mrb[0].mxu0
  %v3513 = vadd.f32 %v644, %v3512
  %v3514 = vpop.f32.mrb[0].mxu0
  %v3515 = vadd.f32 %v648, %v3514
  %v3516 = vpop.f32.mrb[0].mxu0
  %v3517 = vpop.f32.mrb[0].mxu0
  %3518 = vdwg.mxu0
  %3519 = vmatprep.subr.bf16.mxu0 %v2663
  %3520 = vmatpush1.bf16.msra.mxu0 %v2662
  %3521 = vmatprep.subr.bf16.mxu0 %v2680
  %3522 = vmatpush1.bf16.msra.mxu0 %v2679
  %3523 = vmatprep.subr.bf16.mxu0 %v2697
  %3524 = vmatpush1.bf16.msra.mxu0 %v2696
  %3525 = vmatprep.subr.bf16.mxu0 %v2714
  %3526 = vmatpush1.bf16.msra.mxu0 %v2713
  %3527 = vmatprep.subr.bf16.mxu0 %v2731
  %3528 = vmatpush1.bf16.msra.mxu0 %v2730
  %3529 = vmatprep.subr.bf16.mxu0 %v2748
  %3530 = vmatpush1.bf16.msra.mxu0 %v2747
  %3531 = vmatprep.subr.bf16.mxu0 %v2765
  %3532 = vmatpush1.bf16.msra.mxu0 %v2764
  %3533 = vmatprep.subr.bf16.mxu0 %v2782
  %3534 = vmatpush1.bf16.msra.mxu0 %v2781
  %3535 = vmatprep.subr.bf16.mxu0 %v2799
  %3536 = vmatpush1.bf16.msra.mxu0 %v2798
  %3537 = vmatprep.subr.bf16.mxu0 %v2816
  %3538 = vmatpush1.bf16.msra.mxu0 %v2815
  %3539 = vmatprep.subr.bf16.mxu0 %v2833
  %3540 = vmatpush1.bf16.msra.mxu0 %v2832
  %3541 = vmatprep.subr.bf16.mxu0 %v2850
  %3542 = vmatpush1.bf16.msra.mxu0 %v2849
  %3543 = vmatprep.subr.bf16.mxu0 %v2867
  %3544 = vmatpush1.bf16.msra.mxu0 %v2866
  %3545 = vmatprep.subr.bf16.mxu0 %v2884
  %3546 = vmatpush1.bf16.msra.mxu0 %v2883
  %3547 = vmatprep.subr.bf16.mxu0 %v2901
  %3548 = vmatpush1.bf16.msra.mxu0 %v2900
  %3549 = vmatprep.subr.bf16.mxu0 %v2918
  %3550 = vmatpush1.bf16.msra.mxu0 %v2917
  %3551 = vmatprep.mubr.bf16.mxu0 %v58
  %3552 = vmatmul.mubr.bf16.gmra.mrb[0].mxu0 %v57
  %v3553 = vpop.f32.mrb[0].mxu0
  %v3554 = vadd.f32 %v3513, %v3553
  %v3555 = vpop.f32.mrb[0].mxu0
  %v3556 = vadd.f32 %v3515, %v3555
  %v3557 = vpop.f32.mrb[0].mxu0
  %v3558 = vpop.f32.mrb[0].mxu0
  %3559 = vdwg.mxu0
  %3560 = vmatprep.subr.bf16.mxu0 %v2393
  %3561 = vmatpush1.bf16.msra.mxu0 %v2392
  %3562 = vmatprep.subr.bf16.mxu0 %v2410
  %3563 = vmatpush1.bf16.msra.mxu0 %v2409
  %3564 = vmatprep.subr.bf16.mxu0 %v2427
  %3565 = vmatpush1.bf16.msra.mxu0 %v2426
  %3566 = vmatprep.subr.bf16.mxu0 %v2444
  %3567 = vmatpush1.bf16.msra.mxu0 %v2443
  %3568 = vmatprep.subr.bf16.mxu0 %v2461
  %3569 = vmatpush1.bf16.msra.mxu0 %v2460
  %3570 = vmatprep.subr.bf16.mxu0 %v2478
  %3571 = vmatpush1.bf16.msra.mxu0 %v2477
  %3572 = vmatprep.subr.bf16.mxu0 %v2495
  %3573 = vmatpush1.bf16.msra.mxu0 %v2494
  %3574 = vmatprep.subr.bf16.mxu0 %v2512
  %3575 = vmatpush1.bf16.msra.mxu0 %v2511
  %3576 = vmatprep.subr.bf16.mxu0 %v2529
  %3577 = vmatpush1.bf16.msra.mxu0 %v2528
  %3578 = vmatprep.subr.bf16.mxu0 %v2546
  %3579 = vmatpush1.bf16.msra.mxu0 %v2545
  %3580 = vmatprep.subr.bf16.mxu0 %v2563
  %3581 = vmatpush1.bf16.msra.mxu0 %v2562
  %3582 = vmatprep.subr.bf16.mxu0 %v2580
  %3583 = vmatpush1.bf16.msra.mxu0 %v2579
  %3584 = vmatprep.subr.bf16.mxu0 %v2597
  %3585 = vmatpush1.bf16.msra.mxu0 %v2596
  %3586 = vmatprep.subr.bf16.mxu0 %v2614
  %3587 = vmatpush1.bf16.msra.mxu0 %v2613
  %3588 = vmatprep.subr.bf16.mxu0 %v2631
  %3589 = vmatpush1.bf16.msra.mxu0 %v2630
  %3590 = vmatprep.subr.bf16.mxu0 %v2648
  %3591 = vmatpush1.bf16.msra.mxu0 %v2647
  %3592 = vmatprep.mubr.bf16.mxu0 %v56
  %3593 = vmatmul.mubr.bf16.gmra.mrb[0].mxu0 %v55
  %v3594 = vpop.f32.mrb[0].mxu0
  %v3595 = vadd.f32 %v652, %v3594
  %v3596 = vpop.f32.mrb[0].mxu0
  %v3597 = vadd.f32 %v656, %v3596
  %v3598 = vpop.f32.mrb[0].mxu0
  %v3599 = vpop.f32.mrb[0].mxu0
  %3600 = vdwg.mxu0
  %3601 = vmatprep.subr.bf16.mxu0 %v2665
  %3602 = vmatpush1.bf16.msra.mxu0 %v2664
  %3603 = vmatprep.subr.bf16.mxu0 %v2682
  %3604 = vmatpush1.bf16.msra.mxu0 %v2681
  %3605 = vmatprep.subr.bf16.mxu0 %v2699
  %3606 = vmatpush1.bf16.msra.mxu0 %v2698
  %3607 = vmatprep.subr.bf16.mxu0 %v2716
  %3608 = vmatpush1.bf16.msra.mxu0 %v2715
  %3609 = vmatprep.subr.bf16.mxu0 %v2733
  %3610 = vmatpush1.bf16.msra.mxu0 %v2732
  %3611 = vmatprep.subr.bf16.mxu0 %v2750
  %3612 = vmatpush1.bf16.msra.mxu0 %v2749
  %3613 = vmatprep.subr.bf16.mxu0 %v2767
  %3614 = vmatpush1.bf16.msra.mxu0 %v2766
  %3615 = vmatprep.subr.bf16.mxu0 %v2784
  %3616 = vmatpush1.bf16.msra.mxu0 %v2783
  %3617 = vmatprep.subr.bf16.mxu0 %v2801
  %3618 = vmatpush1.bf16.msra.mxu0 %v2800
  %3619 = vmatprep.subr.bf16.mxu0 %v2818
  %3620 = vmatpush1.bf16.msra.mxu0 %v2817
  %3621 = vmatprep.subr.bf16.mxu0 %v2835
  %3622 = vmatpush1.bf16.msra.mxu0 %v2834
  %3623 = vmatprep.subr.bf16.mxu0 %v2852
  %3624 = vmatpush1.bf16.msra.mxu0 %v2851
  %3625 = vmatprep.subr.bf16.mxu0 %v2869
  %3626 = vmatpush1.bf16.msra.mxu0 %v2868
  %3627 = vmatprep.subr.bf16.mxu0 %v2886
  %3628 = vmatpush1.bf16.msra.mxu0 %v2885
  %3629 = vmatprep.subr.bf16.mxu0 %v2903
  %3630 = vmatpush1.bf16.msra.mxu0 %v2902
  %3631 = vmatprep.subr.bf16.mxu0 %v2920
  %3632 = vmatpush1.bf16.msra.mxu0 %v2919
  %3633 = vmatprep.mubr.bf16.mxu0 %v58
  %3634 = vmatmul.mubr.bf16.gmra.mrb[0].mxu0 %v57
  %v3635 = vpop.f32.mrb[0].mxu0
  %v3636 = vadd.f32 %v3595, %v3635
  %v3637 = vpop.f32.mrb[0].mxu0
  %v3638 = vadd.f32 %v3597, %v3637
  %v3639 = vpop.f32.mrb[0].mxu0
  %v3640 = vpop.f32.mrb[0].mxu0
  %3641 = vdwg.mxu0
  %3642 = vmatprep.subr.bf16.mxu0 %v2395
  %3643 = vmatpush1.bf16.msra.mxu0 %v2394
  %3644 = vmatprep.subr.bf16.mxu0 %v2412
  %3645 = vmatpush1.bf16.msra.mxu0 %v2411
  %3646 = vmatprep.subr.bf16.mxu0 %v2429
  %3647 = vmatpush1.bf16.msra.mxu0 %v2428
  %3648 = vmatprep.subr.bf16.mxu0 %v2446
  %3649 = vmatpush1.bf16.msra.mxu0 %v2445
  %3650 = vmatprep.subr.bf16.mxu0 %v2463
  %3651 = vmatpush1.bf16.msra.mxu0 %v2462
  %3652 = vmatprep.subr.bf16.mxu0 %v2480
  %3653 = vmatpush1.bf16.msra.mxu0 %v2479
  %3654 = vmatprep.subr.bf16.mxu0 %v2497
  %3655 = vmatpush1.bf16.msra.mxu0 %v2496
  %3656 = vmatprep.subr.bf16.mxu0 %v2514
  %3657 = vmatpush1.bf16.msra.mxu0 %v2513
  %3658 = vmatprep.subr.bf16.mxu0 %v2531
  %3659 = vmatpush1.bf16.msra.mxu0 %v2530
  %3660 = vmatprep.subr.bf16.mxu0 %v2548
  %3661 = vmatpush1.bf16.msra.mxu0 %v2547
  %3662 = vmatprep.subr.bf16.mxu0 %v2565
  %3663 = vmatpush1.bf16.msra.mxu0 %v2564
  %3664 = vmatprep.subr.bf16.mxu0 %v2582
  %3665 = vmatpush1.bf16.msra.mxu0 %v2581
  %3666 = vmatprep.subr.bf16.mxu0 %v2599
  %3667 = vmatpush1.bf16.msra.mxu0 %v2598
  %3668 = vmatprep.subr.bf16.mxu0 %v2616
  %3669 = vmatpush1.bf16.msra.mxu0 %v2615
  %3670 = vmatprep.subr.bf16.mxu0 %v2633
  %3671 = vmatpush1.bf16.msra.mxu0 %v2632
  %3672 = vmatprep.subr.bf16.mxu0 %v2650
  %3673 = vmatpush1.bf16.msra.mxu0 %v2649
  %3674 = vmatprep.mubr.bf16.mxu0 %v56
  %3675 = vmatmul.mubr.bf16.gmra.mrb[0].mxu0 %v55
  %v3676 = vpop.f32.mrb[0].mxu0
  %v3677 = vadd.f32 %v660, %v3676
  %v3678 = vpop.f32.mrb[0].mxu0
  %v3679 = vadd.f32 %v664, %v3678
  %v3680 = vpop.f32.mrb[0].mxu0
  %v3681 = vpop.f32.mrb[0].mxu0
  %3682 = vdwg.mxu0
  %3683 = vmatprep.subr.bf16.mxu0 %v2667
  %3684 = vmatpush1.bf16.msra.mxu0 %v2666
  %3685 = vmatprep.subr.bf16.mxu0 %v2684
  %3686 = vmatpush1.bf16.msra.mxu0 %v2683
  %3687 = vmatprep.subr.bf16.mxu0 %v2701
  %3688 = vmatpush1.bf16.msra.mxu0 %v2700
  %3689 = vmatprep.subr.bf16.mxu0 %v2718
  %3690 = vmatpush1.bf16.msra.mxu0 %v2717
  %3691 = vmatprep.subr.bf16.mxu0 %v2735
  %3692 = vmatpush1.bf16.msra.mxu0 %v2734
  %3693 = vmatprep.subr.bf16.mxu0 %v2752
  %3694 = vmatpush1.bf16.msra.mxu0 %v2751
  %3695 = vmatprep.subr.bf16.mxu0 %v2769
  %3696 = vmatpush1.bf16.msra.mxu0 %v2768
  %3697 = vmatprep.subr.bf16.mxu0 %v2786
  %3698 = vmatpush1.bf16.msra.mxu0 %v2785
  %3699 = vmatprep.subr.bf16.mxu0 %v2803
  %3700 = vmatpush1.bf16.msra.mxu0 %v2802
  %3701 = vmatprep.subr.bf16.mxu0 %v2820
  %3702 = vmatpush1.bf16.msra.mxu0 %v2819
  %3703 = vmatprep.subr.bf16.mxu0 %v2837
  %3704 = vmatpush1.bf16.msra.mxu0 %v2836
  %3705 = vmatprep.subr.bf16.mxu0 %v2854
  %3706 = vmatpush1.bf16.msra.mxu0 %v2853
  %3707 = vmatprep.subr.bf16.mxu0 %v2871
  %3708 = vmatpush1.bf16.msra.mxu0 %v2870
  %3709 = vmatprep.subr.bf16.mxu0 %v2888
  %3710 = vmatpush1.bf16.msra.mxu0 %v2887
  %3711 = vmatprep.subr.bf16.mxu0 %v2905
  %3712 = vmatpush1.bf16.msra.mxu0 %v2904
  %3713 = vmatprep.subr.bf16.mxu0 %v2922
  %3714 = vmatpush1.bf16.msra.mxu0 %v2921
  %3715 = vmatprep.mubr.bf16.mxu0 %v58
  %3716 = vmatmul.mubr.bf16.gmra.mrb[0].mxu0 %v57
  %v3717 = vpop.f32.mrb[0].mxu0
  %v3718 = vadd.f32 %v3677, %v3717
  %v3719 = vpop.f32.mrb[0].mxu0
  %v3720 = vadd.f32 %v3679, %v3719
  %v3721 = vpop.f32.mrb[0].mxu0
  %v3722 = vpop.f32.mrb[0].mxu0
  %3723 = vdwg.mxu0
  %3724 = vmatprep.subr.bf16.mxu0 %v2397
  %3725 = vmatpush1.bf16.msra.mxu0 %v2396
  %3726 = vmatprep.subr.bf16.mxu0 %v2414
  %3727 = vmatpush1.bf16.msra.mxu0 %v2413
  %3728 = vmatprep.subr.bf16.mxu0 %v2431
  %3729 = vmatpush1.bf16.msra.mxu0 %v2430
  %3730 = vmatprep.subr.bf16.mxu0 %v2448
  %3731 = vmatpush1.bf16.msra.mxu0 %v2447
  %3732 = vmatprep.subr.bf16.mxu0 %v2465
  %3733 = vmatpush1.bf16.msra.mxu0 %v2464
  %3734 = vmatprep.subr.bf16.mxu0 %v2482
  %3735 = vmatpush1.bf16.msra.mxu0 %v2481
  %3736 = vmatprep.subr.bf16.mxu0 %v2499
  %3737 = vmatpush1.bf16.msra.mxu0 %v2498
  %3738 = vmatprep.subr.bf16.mxu0 %v2516
  %3739 = vmatpush1.bf16.msra.mxu0 %v2515
  %3740 = vmatprep.subr.bf16.mxu0 %v2533
  %3741 = vmatpush1.bf16.msra.mxu0 %v2532
  %3742 = vmatprep.subr.bf16.mxu0 %v2550
  %3743 = vmatpush1.bf16.msra.mxu0 %v2549
  %3744 = vmatprep.subr.bf16.mxu0 %v2567
  %3745 = vmatpush1.bf16.msra.mxu0 %v2566
  %3746 = vmatprep.subr.bf16.mxu0 %v2584
  %3747 = vmatpush1.bf16.msra.mxu0 %v2583
  %3748 = vmatprep.subr.bf16.mxu0 %v2601
  %3749 = vmatpush1.bf16.msra.mxu0 %v2600
  %3750 = vmatprep.subr.bf16.mxu0 %v2618
  %3751 = vmatpush1.bf16.msra.mxu0 %v2617
  %3752 = vmatprep.subr.bf16.mxu0 %v2635
  %3753 = vmatpush1.bf16.msra.mxu0 %v2634
  %3754 = vmatprep.subr.bf16.mxu0 %v2652
  %3755 = vmatpush1.bf16.msra.mxu0 %v2651
  %3756 = vmatprep.mubr.bf16.mxu0 %v56
  %3757 = vmatmul.mubr.bf16.gmra.mrb[0].mxu0 %v55
  %v3758 = vpop.f32.mrb[0].mxu0
  %v3759 = vadd.f32 %v668, %v3758
  %v3760 = vpop.f32.mrb[0].mxu0
  %v3761 = vadd.f32 %v672, %v3760
  %v3762 = vpop.f32.mrb[0].mxu0
  %v3763 = vpop.f32.mrb[0].mxu0
  %3764 = vdwg.mxu0
  %3765 = vmatprep.subr.bf16.mxu0 %v2669
  %3766 = vmatpush1.bf16.msra.mxu0 %v2668
  %3767 = vmatprep.subr.bf16.mxu0 %v2686
  %3768 = vmatpush1.bf16.msra.mxu0 %v2685
  %3769 = vmatprep.subr.bf16.mxu0 %v2703
  %3770 = vmatpush1.bf16.msra.mxu0 %v2702
  %3771 = vmatprep.subr.bf16.mxu0 %v2720
  %3772 = vmatpush1.bf16.msra.mxu0 %v2719
  %3773 = vmatprep.subr.bf16.mxu0 %v2737
  %3774 = vmatpush1.bf16.msra.mxu0 %v2736
  %3775 = vmatprep.subr.bf16.mxu0 %v2754
  %3776 = vmatpush1.bf16.msra.mxu0 %v2753
  %3777 = vmatprep.subr.bf16.mxu0 %v2771
  %3778 = vmatpush1.bf16.msra.mxu0 %v2770
  %3779 = vmatprep.subr.bf16.mxu0 %v2788
  %3780 = vmatpush1.bf16.msra.mxu0 %v2787
  %3781 = vmatprep.subr.bf16.mxu0 %v2805
  %3782 = vmatpush1.bf16.msra.mxu0 %v2804
  %3783 = vmatprep.subr.bf16.mxu0 %v2822
  %3784 = vmatpush1.bf16.msra.mxu0 %v2821
  %3785 = vmatprep.subr.bf16.mxu0 %v2839
  %3786 = vmatpush1.bf16.msra.mxu0 %v2838
  %3787 = vmatprep.subr.bf16.mxu0 %v2856
  %3788 = vmatpush1.bf16.msra.mxu0 %v2855
  %3789 = vmatprep.subr.bf16.mxu0 %v2873
  %3790 = vmatpush1.bf16.msra.mxu0 %v2872
  %3791 = vmatprep.subr.bf16.mxu0 %v2890
  %3792 = vmatpush1.bf16.msra.mxu0 %v2889
  %3793 = vmatprep.subr.bf16.mxu0 %v2907
  %3794 = vmatpush1.bf16.msra.mxu0 %v2906
  %3795 = vmatprep.subr.bf16.mxu0 %v2924
  %3796 = vmatpush1.bf16.msra.mxu0 %v2923
  %3797 = vmatprep.mubr.bf16.mxu0 %v58
  %3798 = vmatmul.mubr.bf16.gmra.mrb[0].mxu0 %v57
  %v3799 = vpop.f32.mrb[0].mxu0
  %v3800 = vadd.f32 %v3759, %v3799
  %v3801 = vpop.f32.mrb[0].mxu0
  %v3802 = vadd.f32 %v3761, %v3801
  %v3803 = vpop.f32.mrb[0].mxu0
  %v3804 = vpop.f32.mrb[0].mxu0
  %3805 = vdwg.mxu0
  %3806 = vmatprep.subr.bf16.mxu0 %v2399
  %3807 = vmatpush1.bf16.msra.mxu0 %v2398
  %3808 = vmatprep.subr.bf16.mxu0 %v2416
  %3809 = vmatpush1.bf16.msra.mxu0 %v2415
  %3810 = vmatprep.subr.bf16.mxu0 %v2433
  %3811 = vmatpush1.bf16.msra.mxu0 %v2432
  %3812 = vmatprep.subr.bf16.mxu0 %v2450
  %3813 = vmatpush1.bf16.msra.mxu0 %v2449
  %3814 = vmatprep.subr.bf16.mxu0 %v2467
  %3815 = vmatpush1.bf16.msra.mxu0 %v2466
  %3816 = vmatprep.subr.bf16.mxu0 %v2484
  %3817 = vmatpush1.bf16.msra.mxu0 %v2483
  %3818 = vmatprep.subr.bf16.mxu0 %v2501
  %3819 = vmatpush1.bf16.msra.mxu0 %v2500
  %3820 = vmatprep.subr.bf16.mxu0 %v2518
  %3821 = vmatpush1.bf16.msra.mxu0 %v2517
  %3822 = vmatprep.subr.bf16.mxu0 %v2535
  %3823 = vmatpush1.bf16.msra.mxu0 %v2534
  %3824 = vmatprep.subr.bf16.mxu0 %v2552
  %3825 = vmatpush1.bf16.msra.mxu0 %v2551
  %3826 = vmatprep.subr.bf16.mxu0 %v2569
  %3827 = vmatpush1.bf16.msra.mxu0 %v2568
  %3828 = vmatprep.subr.bf16.mxu0 %v2586
  %3829 = vmatpush1.bf16.msra.mxu0 %v2585
  %3830 = vmatprep.subr.bf16.mxu0 %v2603
  %3831 = vmatpush1.bf16.msra.mxu0 %v2602
  %3832 = vmatprep.subr.bf16.mxu0 %v2620
  %3833 = vmatpush1.bf16.msra.mxu0 %v2619
  %3834 = vmatprep.subr.bf16.mxu0 %v2637
  %3835 = vmatpush1.bf16.msra.mxu0 %v2636
  %3836 = vmatprep.subr.bf16.mxu0 %v2654
  %3837 = vmatpush1.bf16.msra.mxu0 %v2653
  %3838 = vmatprep.mubr.bf16.mxu0 %v56
  %3839 = vmatmul.mubr.bf16.gmra.mrb[0].mxu0 %v55
  %v3840 = vpop.f32.mrb[0].mxu0
  %v3841 = vadd.f32 %v676, %v3840
  %v3842 = vpop.f32.mrb[0].mxu0
  %v3843 = vadd.f32 %v680, %v3842
  %v3844 = vpop.f32.mrb[0].mxu0
  %v3845 = vpop.f32.mrb[0].mxu0
  %3846 = vdwg.mxu0
  %3847 = vmatprep.subr.bf16.mxu0 %v2671
  %3848 = vmatpush1.bf16.msra.mxu0 %v2670
  %3849 = vmatprep.subr.bf16.mxu0 %v2688
  %3850 = vmatpush1.bf16.msra.mxu0 %v2687
  %3851 = vmatprep.subr.bf16.mxu0 %v2705
  %3852 = vmatpush1.bf16.msra.mxu0 %v2704
  %3853 = vmatprep.subr.bf16.mxu0 %v2722
  %3854 = vmatpush1.bf16.msra.mxu0 %v2721
  %3855 = vmatprep.subr.bf16.mxu0 %v2739
  %3856 = vmatpush1.bf16.msra.mxu0 %v2738
  %3857 = vmatprep.subr.bf16.mxu0 %v2756
  %3858 = vmatpush1.bf16.msra.mxu0 %v2755
  %3859 = vmatprep.subr.bf16.mxu0 %v2773
  %3860 = vmatpush1.bf16.msra.mxu0 %v2772
  %3861 = vmatprep.subr.bf16.mxu0 %v2790
  %3862 = vmatpush1.bf16.msra.mxu0 %v2789
  %3863 = vmatprep.subr.bf16.mxu0 %v2807
  %3864 = vmatpush1.bf16.msra.mxu0 %v2806
  %3865 = vmatprep.subr.bf16.mxu0 %v2824
  %3866 = vmatpush1.bf16.msra.mxu0 %v2823
  %3867 = vmatprep.subr.bf16.mxu0 %v2841
  %3868 = vmatpush1.bf16.msra.mxu0 %v2840
  %3869 = vmatprep.subr.bf16.mxu0 %v2858
  %3870 = vmatpush1.bf16.msra.mxu0 %v2857
  %3871 = vmatprep.subr.bf16.mxu0 %v2875
  %3872 = vmatpush1.bf16.msra.mxu0 %v2874
  %3873 = vmatprep.subr.bf16.mxu0 %v2892
  %3874 = vmatpush1.bf16.msra.mxu0 %v2891
  %3875 = vmatprep.subr.bf16.mxu0 %v2909
  %3876 = vmatpush1.bf16.msra.mxu0 %v2908
  %3877 = vmatprep.subr.bf16.mxu0 %v2926
  %3878 = vmatpush1.bf16.msra.mxu0 %v2925
  %3879 = vmatprep.mubr.bf16.mxu0 %v58
  %3880 = vmatmul.mubr.bf16.gmra.mrb[0].mxu0 %v57
  %v3881 = vpop.f32.mrb[0].mxu0
  %v3882 = vadd.f32 %v3841, %v3881
  %v3883 = vpop.f32.mrb[0].mxu0
  %v3884 = vadd.f32 %v3843, %v3883
  %v3885 = vpop.f32.mrb[0].mxu0
  %v3886 = vpop.f32.mrb[0].mxu0
  %3887 = vdwg.mxu0
  %3888 = vmatprep.subr.bf16.mxu0 %v2401
  %3889 = vmatpush1.bf16.msra.mxu0 %v2400
  %3890 = vmatprep.subr.bf16.mxu0 %v2418
  %3891 = vmatpush1.bf16.msra.mxu0 %v2417
  %3892 = vmatprep.subr.bf16.mxu0 %v2435
  %3893 = vmatpush1.bf16.msra.mxu0 %v2434
  %3894 = vmatprep.subr.bf16.mxu0 %v2452
  %3895 = vmatpush1.bf16.msra.mxu0 %v2451
  %3896 = vmatprep.subr.bf16.mxu0 %v2469
  %3897 = vmatpush1.bf16.msra.mxu0 %v2468
  %3898 = vmatprep.subr.bf16.mxu0 %v2486
  %3899 = vmatpush1.bf16.msra.mxu0 %v2485
  %3900 = vmatprep.subr.bf16.mxu0 %v2503
  %3901 = vmatpush1.bf16.msra.mxu0 %v2502
  %3902 = vmatprep.subr.bf16.mxu0 %v2520
  %3903 = vmatpush1.bf16.msra.mxu0 %v2519
  %3904 = vmatprep.subr.bf16.mxu0 %v2537
  %3905 = vmatpush1.bf16.msra.mxu0 %v2536
  %3906 = vmatprep.subr.bf16.mxu0 %v2554
  %3907 = vmatpush1.bf16.msra.mxu0 %v2553
  %3908 = vmatprep.subr.bf16.mxu0 %v2571
  %3909 = vmatpush1.bf16.msra.mxu0 %v2570
  %3910 = vmatprep.subr.bf16.mxu0 %v2588
  %3911 = vmatpush1.bf16.msra.mxu0 %v2587
  %3912 = vmatprep.subr.bf16.mxu0 %v2605
  %3913 = vmatpush1.bf16.msra.mxu0 %v2604
  %3914 = vmatprep.subr.bf16.mxu0 %v2622
  %3915 = vmatpush1.bf16.msra.mxu0 %v2621
  %3916 = vmatprep.subr.bf16.mxu0 %v2639
  %3917 = vmatpush1.bf16.msra.mxu0 %v2638
  %3918 = vmatprep.subr.bf16.mxu0 %v2656
  %3919 = vmatpush1.bf16.msra.mxu0 %v2655
  %3920 = vmatprep.mubr.bf16.mxu0 %v56
  %3921 = vmatmul.mubr.bf16.gmra.mrb[0].mxu0 %v55
  %v3922 = vpop.f32.mrb[0].mxu0
  %v3923 = vadd.f32 %v684, %v3922
  %v3924 = vpop.f32.mrb[0].mxu0
  %v3925 = vadd.f32 %v688, %v3924
  %v3926 = vpop.f32.mrb[0].mxu0
  %v3927 = vpop.f32.mrb[0].mxu0
  %3928 = vdwg.mxu0
  %3929 = vmatprep.subr.bf16.mxu0 %v2673
  %3930 = vmatpush1.bf16.msra.mxu0 %v2672
  %3931 = vmatprep.subr.bf16.mxu0 %v2690
  %3932 = vmatpush1.bf16.msra.mxu0 %v2689
  %3933 = vmatprep.subr.bf16.mxu0 %v2707
  %3934 = vmatpush1.bf16.msra.mxu0 %v2706
  %3935 = vmatprep.subr.bf16.mxu0 %v2724
  %3936 = vmatpush1.bf16.msra.mxu0 %v2723
  %3937 = vmatprep.subr.bf16.mxu0 %v2741
  %3938 = vmatpush1.bf16.msra.mxu0 %v2740
  %3939 = vmatprep.subr.bf16.mxu0 %v2758
  %3940 = vmatpush1.bf16.msra.mxu0 %v2757
  %3941 = vmatprep.subr.bf16.mxu0 %v2775
  %3942 = vmatpush1.bf16.msra.mxu0 %v2774
  %3943 = vmatprep.subr.bf16.mxu0 %v2792
  %3944 = vmatpush1.bf16.msra.mxu0 %v2791
  %3945 = vmatprep.subr.bf16.mxu0 %v2809
  %3946 = vmatpush1.bf16.msra.mxu0 %v2808
  %3947 = vmatprep.subr.bf16.mxu0 %v2826
  %3948 = vmatpush1.bf16.msra.mxu0 %v2825
  %3949 = vmatprep.subr.bf16.mxu0 %v2843
  %3950 = vmatpush1.bf16.msra.mxu0 %v2842
  %3951 = vmatprep.subr.bf16.mxu0 %v2860
  %3952 = vmatpush1.bf16.msra.mxu0 %v2859
  %3953 = vmatprep.subr.bf16.mxu0 %v2877
  %3954 = vmatpush1.bf16.msra.mxu0 %v2876
  %3955 = vmatprep.subr.bf16.mxu0 %v2894
  %3956 = vmatpush1.bf16.msra.mxu0 %v2893
  %3957 = vmatprep.subr.bf16.mxu0 %v2911
  %3958 = vmatpush1.bf16.msra.mxu0 %v2910
  %3959 = vmatprep.subr.bf16.mxu0 %v2928
  %3960 = vmatpush1.bf16.msra.mxu0 %v2927
  %3961 = vmatprep.mubr.bf16.mxu0 %v58
  %3962 = vmatmul.mubr.bf16.gmra.mrb[0].mxu0 %v57
  %v3963 = vpop.f32.mrb[0].mxu0
  %v3964 = vadd.f32 %v3923, %v3963
  %v3965 = vpop.f32.mrb[0].mxu0
  %v3966 = vadd.f32 %v3925, %v3965
  %v3967 = vpop.f32.mrb[0].mxu0
  %v3968 = vpop.f32.mrb[0].mxu0
  %3969 = vdwg.mxu0
  %3970 = vmatprep.subr.bf16.mxu0 %v2403
  %3971 = vmatpush1.bf16.msra.mxu0 %v2402
  %3972 = vmatprep.subr.bf16.mxu0 %v2420
  %3973 = vmatpush1.bf16.msra.mxu0 %v2419
  %3974 = vmatprep.subr.bf16.mxu0 %v2437
  %3975 = vmatpush1.bf16.msra.mxu0 %v2436
  %3976 = vmatprep.subr.bf16.mxu0 %v2454
  %3977 = vmatpush1.bf16.msra.mxu0 %v2453
  %3978 = vmatprep.subr.bf16.mxu0 %v2471
  %3979 = vmatpush1.bf16.msra.mxu0 %v2470
  %3980 = vmatprep.subr.bf16.mxu0 %v2488
  %3981 = vmatpush1.bf16.msra.mxu0 %v2487
  %3982 = vmatprep.subr.bf16.mxu0 %v2505
  %3983 = vmatpush1.bf16.msra.mxu0 %v2504
  %3984 = vmatprep.subr.bf16.mxu0 %v2522
  %3985 = vmatpush1.bf16.msra.mxu0 %v2521
  %3986 = vmatprep.subr.bf16.mxu0 %v2539
  %3987 = vmatpush1.bf16.msra.mxu0 %v2538
  %3988 = vmatprep.subr.bf16.mxu0 %v2556
  %3989 = vmatpush1.bf16.msra.mxu0 %v2555
  %3990 = vmatprep.subr.bf16.mxu0 %v2573
  %3991 = vmatpush1.bf16.msra.mxu0 %v2572
  %3992 = vmatprep.subr.bf16.mxu0 %v2590
  %3993 = vmatpush1.bf16.msra.mxu0 %v2589
  %3994 = vmatprep.subr.bf16.mxu0 %v2607
  %3995 = vmatpush1.bf16.msra.mxu0 %v2606
  %3996 = vmatprep.subr.bf16.mxu0 %v2624
  %3997 = vmatpush1.bf16.msra.mxu0 %v2623
  %3998 = vmatprep.subr.bf16.mxu0 %v2641
  %3999 = vmatpush1.bf16.msra.mxu0 %v2640
  %4000 = vmatprep.subr.bf16.mxu0 %v2658
  %4001 = vmatpush1.bf16.msra.mxu0 %v2657
  %4002 = vmatprep.mubr.bf16.mxu0 %v56
  %4003 = vmatmul.mubr.bf16.gmra.mrb[0].mxu0 %v55
  %v4004 = vpop.f32.mrb[0].mxu0
  %v4005 = vadd.f32 %v692, %v4004
  %v4006 = vpop.f32.mrb[0].mxu0
  %v4007 = vadd.f32 %v696, %v4006
  %v4008 = vpop.f32.mrb[0].mxu0
  %v4009 = vpop.f32.mrb[0].mxu0
  %4010 = vdwg.mxu0
  %4011 = vmatprep.subr.bf16.mxu0 %v2675
  %4012 = vmatpush1.bf16.msra.mxu0 %v2674
  %4013 = vmatprep.subr.bf16.mxu0 %v2692
  %4014 = vmatpush1.bf16.msra.mxu0 %v2691
  %4015 = vmatprep.subr.bf16.mxu0 %v2709
  %4016 = vmatpush1.bf16.msra.mxu0 %v2708
  %4017 = vmatprep.subr.bf16.mxu0 %v2726
  %4018 = vmatpush1.bf16.msra.mxu0 %v2725
  %4019 = vmatprep.subr.bf16.mxu0 %v2743
  %4020 = vmatpush1.bf16.msra.mxu0 %v2742
  %4021 = vmatprep.subr.bf16.mxu0 %v2760
  %4022 = vmatpush1.bf16.msra.mxu0 %v2759
  %4023 = vmatprep.subr.bf16.mxu0 %v2777
  %4024 = vmatpush1.bf16.msra.mxu0 %v2776
  %4025 = vmatprep.subr.bf16.mxu0 %v2794
  %4026 = vmatpush1.bf16.msra.mxu0 %v2793
  %4027 = vmatprep.subr.bf16.mxu0 %v2811
  %4028 = vmatpush1.bf16.msra.mxu0 %v2810
  %4029 = vmatprep.subr.bf16.mxu0 %v2828
  %4030 = vmatpush1.bf16.msra.mxu0 %v2827
  %4031 = vmatprep.subr.bf16.mxu0 %v2845
  %4032 = vmatpush1.bf16.msra.mxu0 %v2844
  %4033 = vmatprep.subr.bf16.mxu0 %v2862
  %4034 = vmatpush1.bf16.msra.mxu0 %v2861
  %4035 = vmatprep.subr.bf16.mxu0 %v2879
  %4036 = vmatpush1.bf16.msra.mxu0 %v2878
  %4037 = vmatprep.subr.bf16.mxu0 %v2896
  %4038 = vmatpush1.bf16.msra.mxu0 %v2895
  %4039 = vmatprep.subr.bf16.mxu0 %v2913
  %4040 = vmatpush1.bf16.msra.mxu0 %v2912
  %4041 = vmatprep.subr.bf16.mxu0 %v2930
  %4042 = vmatpush1.bf16.msra.mxu0 %v2929
  %4043 = vmatprep.mubr.bf16.mxu0 %v58
  %4044 = vmatmul.mubr.bf16.gmra.mrb[0].mxu0 %v57
  %v4045 = vpop.f32.mrb[0].mxu0
  %v4046 = vadd.f32 %v4005, %v4045
  %v4047 = vpop.f32.mrb[0].mxu0
  %v4048 = vadd.f32 %v4007, %v4047
  %v4049 = vpop.f32.mrb[0].mxu0
  %v4050 = vpop.f32.mrb[0].mxu0
  %4051 = vdwg.mxu0
  %4052 = vmatprep.subr.bf16.mxu0 %v2405
  %4053 = vmatpush1.bf16.msra.mxu0 %v2404
  %4054 = vmatprep.subr.bf16.mxu0 %v2422
  %4055 = vmatpush1.bf16.msra.mxu0 %v2421
  %4056 = vmatprep.subr.bf16.mxu0 %v2439
  %4057 = vmatpush1.bf16.msra.mxu0 %v2438
  %4058 = vmatprep.subr.bf16.mxu0 %v2456
  %4059 = vmatpush1.bf16.msra.mxu0 %v2455
  %4060 = vmatprep.subr.bf16.mxu0 %v2473
  %4061 = vmatpush1.bf16.msra.mxu0 %v2472
  %4062 = vmatprep.subr.bf16.mxu0 %v2490
  %4063 = vmatpush1.bf16.msra.mxu0 %v2489
  %4064 = vmatprep.subr.bf16.mxu0 %v2507
  %4065 = vmatpush1.bf16.msra.mxu0 %v2506
  %4066 = vmatprep.subr.bf16.mxu0 %v2524
  %4067 = vmatpush1.bf16.msra.mxu0 %v2523
  %4068 = vmatprep.subr.bf16.mxu0 %v2541
  %4069 = vmatpush1.bf16.msra.mxu0 %v2540
  %4070 = vmatprep.subr.bf16.mxu0 %v2558
  %4071 = vmatpush1.bf16.msra.mxu0 %v2557
  %4072 = vmatprep.subr.bf16.mxu0 %v2575
  %4073 = vmatpush1.bf16.msra.mxu0 %v2574
  %4074 = vmatprep.subr.bf16.mxu0 %v2592
  %4075 = vmatpush1.bf16.msra.mxu0 %v2591
  %4076 = vmatprep.subr.bf16.mxu0 %v2609
  %4077 = vmatpush1.bf16.msra.mxu0 %v2608
  %4078 = vmatprep.subr.bf16.mxu0 %v2626
  %4079 = vmatpush1.bf16.msra.mxu0 %v2625
  %4080 = vmatprep.subr.bf16.mxu0 %v2643
  %4081 = vmatpush1.bf16.msra.mxu0 %v2642
  %4082 = vmatprep.subr.bf16.mxu0 %v2660
  %4083 = vmatpush1.bf16.msra.mxu0 %v2659
  %4084 = vmatprep.mubr.bf16.mxu0 %v56
  %4085 = vmatmul.mubr.bf16.gmra.mrb[0].mxu0 %v55
  %v4086 = vpop.f32.mrb[0].mxu0
  %v4087 = vadd.f32 %v700, %v4086
  %v4088 = vpop.f32.mrb[0].mxu0
  %v4089 = vadd.f32 %v704, %v4088
  %v4090 = vpop.f32.mrb[0].mxu0
  %v4091 = vpop.f32.mrb[0].mxu0
  %4092 = vdwg.mxu0
  %4093 = vmatprep.subr.bf16.mxu0 %v2677
  %4094 = vmatpush1.bf16.msra.mxu0 %v2676
  %4095 = vmatprep.subr.bf16.mxu0 %v2694
  %4096 = vmatpush1.bf16.msra.mxu0 %v2693
  %4097 = vmatprep.subr.bf16.mxu0 %v2711
  %4098 = vmatpush1.bf16.msra.mxu0 %v2710
  %4099 = vmatprep.subr.bf16.mxu0 %v2728
  %4100 = vmatpush1.bf16.msra.mxu0 %v2727
  %4101 = vmatprep.subr.bf16.mxu0 %v2745
  %4102 = vmatpush1.bf16.msra.mxu0 %v2744
  %4103 = vmatprep.subr.bf16.mxu0 %v2762
  %4104 = vmatpush1.bf16.msra.mxu0 %v2761
  %4105 = vmatprep.subr.bf16.mxu0 %v2779
  %4106 = vmatpush1.bf16.msra.mxu0 %v2778
  %4107 = vmatprep.subr.bf16.mxu0 %v2796
  %4108 = vmatpush1.bf16.msra.mxu0 %v2795
  %4109 = vmatprep.subr.bf16.mxu0 %v2813
  %4110 = vmatpush1.bf16.msra.mxu0 %v2812
  %4111 = vmatprep.subr.bf16.mxu0 %v2830
  %4112 = vmatpush1.bf16.msra.mxu0 %v2829
  %4113 = vmatprep.subr.bf16.mxu0 %v2847
  %4114 = vmatpush1.bf16.msra.mxu0 %v2846
  %4115 = vmatprep.subr.bf16.mxu0 %v2864
  %4116 = vmatpush1.bf16.msra.mxu0 %v2863
  %4117 = vmatprep.subr.bf16.mxu0 %v2881
  %4118 = vmatpush1.bf16.msra.mxu0 %v2880
  %4119 = vmatprep.subr.bf16.mxu0 %v2898
  %4120 = vmatpush1.bf16.msra.mxu0 %v2897
  %4121 = vmatprep.subr.bf16.mxu0 %v2915
  %4122 = vmatpush1.bf16.msra.mxu0 %v2914
  %4123 = vmatprep.subr.bf16.mxu0 %v2932
  %4124 = vmatpush1.bf16.msra.mxu0 %v2931
  %4125 = vmatprep.mubr.bf16.mxu0 %v58
  %4126 = vmatmul.mubr.bf16.gmra.mrb[0].mxu0 %v57
  %v4127 = vpop.f32.mrb[0].mxu0
  %v4128 = vadd.f32 %v4087, %v4127
  %v4129 = vpop.f32.mrb[0].mxu0
  %v4130 = vadd.f32 %v4089, %v4129
  %v4131 = vpop.f32.mrb[0].mxu0
  %v4132 = vpop.f32.mrb[0].mxu0
  %4133 = vdwg.mxu0
  %4134 = vmatprep.subr.bf16.mxu0 0
  %4135 = vmatpush1.bf16.msra.mxu0 %v2406
  %4136 = vmatprep.subr.bf16.mxu0 0
  %4137 = vmatpush1.bf16.msra.mxu0 %v2423
  %4138 = vmatprep.subr.bf16.mxu0 0
  %4139 = vmatpush1.bf16.msra.mxu0 %v2440
  %4140 = vmatprep.subr.bf16.mxu0 0
  %4141 = vmatpush1.bf16.msra.mxu0 %v2457
  %4142 = vmatprep.subr.bf16.mxu0 0
  %4143 = vmatpush1.bf16.msra.mxu0 %v2474
  %4144 = vmatprep.subr.bf16.mxu0 0
  %4145 = vmatpush1.bf16.msra.mxu0 %v2491
  %4146 = vmatprep.subr.bf16.mxu0 0
  %4147 = vmatpush1.bf16.msra.mxu0 %v2508
  %4148 = vmatprep.subr.bf16.mxu0 0
  %4149 = vmatpush1.bf16.msra.mxu0 %v2525
  %4150 = vmatprep.subr.bf16.mxu0 0
  %4151 = vmatpush1.bf16.msra.mxu0 %v2542
  %4152 = vmatprep.subr.bf16.mxu0 0
  %4153 = vmatpush1.bf16.msra.mxu0 %v2559
  %4154 = vmatprep.subr.bf16.mxu0 0
  %4155 = vmatpush1.bf16.msra.mxu0 %v2576
  %4156 = vmatprep.subr.bf16.mxu0 0
  %4157 = vmatpush1.bf16.msra.mxu0 %v2593
  %4158 = vmatprep.subr.bf16.mxu0 0
  %4159 = vmatpush1.bf16.msra.mxu0 %v2610
  %4160 = vmatprep.subr.bf16.mxu0 0
  %4161 = vmatpush1.bf16.msra.mxu0 %v2627
  %4162 = vmatprep.subr.bf16.mxu0 0
  %4163 = vmatpush1.bf16.msra.mxu0 %v2644
  %4164 = vmatprep.subr.bf16.mxu0 0
  %4165 = vmatpush1.bf16.msra.mxu0 %v2661
  %4166 = vmatprep.mubr.bf16.mxu0 %v56
  %4167 = vmatmul.mubr.bf16.gmra.mrb[0].mxu0 %v55
  %v4168 = vpop.f32.mrb[0].mxu0
  %v4169 = vadd.f32 %v708, %v4168
  %v4170 = vpop.f32.mrb[0].mxu0
  %v4171 = vpop.f32.mrb[0].mxu0
  %v4172 = vpop.f32.mrb[0].mxu0
  %4173 = vdwg.mxu0
  %4174 = vmatprep.subr.bf16.mxu0 0
  %4175 = vmatpush1.bf16.msra.mxu0 %v2678
  %4176 = vmatprep.subr.bf16.mxu0 0
  %4177 = vmatpush1.bf16.msra.mxu0 %v2695
  %4178 = vmatprep.subr.bf16.mxu0 0
  %4179 = vmatpush1.bf16.msra.mxu0 %v2712
  %4180 = vmatprep.subr.bf16.mxu0 0
  %4181 = vmatpush1.bf16.msra.mxu0 %v2729
  %4182 = vmatprep.subr.bf16.mxu0 0
  %4183 = vmatpush1.bf16.msra.mxu0 %v2746
  %4184 = vmatprep.subr.bf16.mxu0 0
  %4185 = vmatpush1.bf16.msra.mxu0 %v2763
  %4186 = vmatprep.subr.bf16.mxu0 0
  %4187 = vmatpush1.bf16.msra.mxu0 %v2780
  %4188 = vmatprep.subr.bf16.mxu0 0
  %4189 = vmatpush1.bf16.msra.mxu0 %v2797
  %4190 = vmatprep.subr.bf16.mxu0 0
  %4191 = vmatpush1.bf16.msra.mxu0 %v2814
  %4192 = vmatprep.subr.bf16.mxu0 0
  %4193 = vmatpush1.bf16.msra.mxu0 %v2831
  %4194 = vmatprep.subr.bf16.mxu0 0
  %4195 = vmatpush1.bf16.msra.mxu0 %v2848
  %4196 = vmatprep.subr.bf16.mxu0 0
  %4197 = vmatpush1.bf16.msra.mxu0 %v2865
  %4198 = vmatprep.subr.bf16.mxu0 0
  %4199 = vmatpush1.bf16.msra.mxu0 %v2882
  %4200 = vmatprep.subr.bf16.mxu0 0
  %4201 = vmatpush1.bf16.msra.mxu0 %v2899
  %4202 = vmatprep.subr.bf16.mxu0 0
  %4203 = vmatpush1.bf16.msra.mxu0 %v2916
  %4204 = vmatprep.subr.bf16.mxu0 0
  %4205 = vmatpush1.bf16.msra.mxu0 %v2933
  %4206 = vmatprep.mubr.bf16.mxu0 %v58
  %4207 = vmatmul.mubr.bf16.gmra.mrb[0].mxu0 %v57
  %v4208 = vpop.f32.mrb[0].mxu0
  %v4209 = vadd.f32 %v4169, %v4208
  %v4210 = vpop.f32.mrb[0].mxu0
  %v4211 = vpop.f32.mrb[0].mxu0
  %v4212 = vpop.f32.mrb[0].mxu0
  %4213 = vdwg.mxu0
  %v4229 = vcombine.low %v3636, %v3638
  %v4230 = vcombine.low %v3718, %v3720
  %v4232 = vunpack.c.l.s4 1983009808
  %v4233 = vunpack.c.0.s8 %v4232
  %v4234 = vlaneseq
  %v4235 = vshrl.u32 %v4234, 7
  %v4236 = vsub.s32 %v4233, %v4235
  %v4237 = vrot.slane %v4229, %v4236
  %v4239 = vunpack.c.l.s4 1983009808
  %v4240 = vunpack.c.0.s8 %v4239
  %v4241 = vlaneseq
  %v4242 = vshrl.u32 %v4241, 7
  %v4243 = vsub.s32 %v4240, %v4242
  %v4244 = vrot.slane %v4230, %v4243
  %v4245 = vcombine.low %v4237, %v4244
  %v4246 = vcombine.low %v3800, %v3802
  %v4247 = vcombine.low %v3882, %v3884
  %v4249 = vunpack.c.l.s4 1983009808
  %v4250 = vunpack.c.0.s8 %v4249
  %v4251 = vlaneseq
  %v4252 = vshrl.u32 %v4251, 7
  %v4253 = vsub.s32 %v4250, %v4252
  %v4254 = vrot.slane %v4246, %v4253
  %v4256 = vunpack.c.l.s4 1983009808
  %v4257 = vunpack.c.0.s8 %v4256
  %v4258 = vlaneseq
  %v4259 = vshrl.u32 %v4258, 7
  %v4260 = vsub.s32 %v4257, %v4259
  %v4261 = vrot.slane %v4247, %v4260
  %v4262 = vcombine.low %v4254, %v4261
  %v4263 = vcombine.low %v3964, %v3966
  %v4264 = vcombine.low %v4046, %v4048
  %v4266 = vunpack.c.l.s4 1983009808
  %v4267 = vunpack.c.0.s8 %v4266
  %v4268 = vlaneseq
  %v4269 = vshrl.u32 %v4268, 7
  %v4270 = vsub.s32 %v4267, %v4269
  %v4271 = vrot.slane %v4263, %v4270
  %v4273 = vunpack.c.l.s4 1983009808
  %v4274 = vunpack.c.0.s8 %v4273
  %v4275 = vlaneseq
  %v4276 = vshrl.u32 %v4275, 7
  %v4277 = vsub.s32 %v4274, %v4276
  %v4278 = vrot.slane %v4264, %v4277
  %v4279 = vcombine.low %v4271, %v4278
  %v4280 = vcombine.low %v4128, %v4130
  %v4282 = vunpack.c.l.s4 1983009808
  %v4283 = vunpack.c.0.s8 %v4282
  %v4284 = vlaneseq
  %v4285 = vshrl.u32 %v4284, 7
  %v4286 = vsub.s32 %v4283, %v4285
  %v4287 = vrot.slane %v4280, %v4286
  %v4289 = vunpack.c.l.s4 1983009808
  %v4290 = vunpack.c.0.s8 %v4289
  %v4291 = vlaneseq
  %v4292 = vshrl.u32 %v4291, 7
  %v4293 = vsub.s32 %v4290, %v4292
  %v4294 = vrot.slane %v4209, %v4293
  %v4295 = vcombine.low %v4287, %v4294
  %4300 = vst [vmem:[%s9] sm:$0xff] %v4245
  %4301 = vst [vmem:[%s9 + $0x8] sm:$0xff] %v4262
  %4302 = vst [vmem:[%s9 + $0x10] sm:$0xff] %v4279
  %4303 = vst [vmem:[%s9 + $0x18] sm:$0x3f] %v4295
  %v4306 = vunpack.c.l.s4 1966171168
  %v4307 = vunpack.c.0.s8 %v4306
  %v4308 = vlaneseq
  %v4309 = vshrl.u32 %v4308, 7
  %v4310 = vsub.s32 %v4307, %v4309
  %v4311 = vrot.slane %v3554, %v4310
  %v4312 = vcombine.high %v4311, %v4311
  %v4314 = vunpack.c.l.s4 1966171168
  %v4315 = vunpack.c.0.s8 %v4314
  %v4316 = vlaneseq
  %v4317 = vshrl.u32 %v4316, 7
  %v4318 = vsub.s32 %v4315, %v4317
  %v4319 = vrot.slane %v4311, %v4318
  %v4321 = vunpack.c.l.s4 1966171168
  %v4322 = vunpack.c.0.s8 %v4321
  %v4323 = vlaneseq
  %v4324 = vshrl.u32 %v4323, 7
  %v4325 = vsub.s32 %v4322, %v4324
  %v4326 = vrot.slane %v4312, %v4325
  %v4331 = vunpack.c.l.s4 1966171168
  %v4332 = vunpack.c.0.s8 %v4331
  %v4333 = vlaneseq
  %v4334 = vshrl.u32 %v4333, 7
  %v4335 = vsub.s32 %v4332, %v4334
  %v4336 = vrot.slane %v3556, %v4335
  %v4337 = vcombine.high %v4336, %v4336
  %v4339 = vunpack.c.l.s4 1966171168
  %v4340 = vunpack.c.0.s8 %v4339
  %v4341 = vlaneseq
  %v4342 = vshrl.u32 %v4341, 7
  %v4343 = vsub.s32 %v4340, %v4342
  %v4344 = vrot.slane %v4336, %v4343
  %v4346 = vunpack.c.l.s4 1966171168
  %v4347 = vunpack.c.0.s8 %v4346
  %v4348 = vlaneseq
  %v4349 = vshrl.u32 %v4348, 7
  %v4350 = vsub.s32 %v4347, %v4349
  %v4351 = vrot.slane %v4337, %v4350
  %v4354 = vld [vmem:[%s0] sm:$0xff]
  %v4355 = vld [vmem:[%s0 + $0x8] sm:$0xff]
  %v4356 = vld [vmem:[%s0 + $0x10] sm:$0xff]
  %v4357 = vld [vmem:[%s0 + $0x18] sm:$0xff]
  %vm4358 = vcmask 523264
  %v4359 = vsel %vm4358, %v4354, 0.0
  %v4360 = vsel %vm4358, %v4355, 0.0
  %v4361 = vadd.f32 %v4359, %v4360
  %v4362 = vrot.slane %v4361, 4
  %v4363 = vadd.f32 %v4361, %v4362
  %v4364 = vrot.slane %v4363, 2
  %v4365 = vadd.f32 %v4363, %v4364
  %v4366 = vrot.slane %v4365, 1
  %v4367 = vadd.f32 %v4365, %v4366
  %v4368 = vsel %vm4358, %v4356, 0.0
  %v4369 = vsel %vm4358, %v4357, 0.0
  %v4370 = vadd.f32 %v4368, %v4369
  %v4371 = vrot.slane %v4370, 4
  %v4372 = vadd.f32 %v4370, %v4371
  %v4373 = vrot.slane %v4372, 2
  %v4374 = vadd.f32 %v4372, %v4373
  %v4375 = vrot.slane %v4374, 1
  %v4376 = vadd.f32 %v4374, %v4375
  %v4377 = vrcp.pop 16.0
  %v4378 = vmul.f32 %v4367, %v4377
  %v4379 = vmul.f32 %v4376, %v4377
  %v4380 = vsub.f32 %v4354, %v4378
  %v4381 = vsub.f32 %v4355, %v4378
  %v4382 = vsub.f32 %v4356, %v4379
  %v4383 = vsub.f32 %v4357, %v4379
  %v4384 = vmul.f32 %v4380, %v4380
  %v4385 = vmul.f32 %v4381, %v4381
  %v4386 = vmul.f32 %v4382, %v4382
  %v4387 = vmul.f32 %v4383, %v4383
  %v4388 = vsel %vm4358, %v4384, 0.0
  %v4389 = vsel %vm4358, %v4385, 0.0
  %v4390 = vadd.f32 %v4388, %v4389
  %v4391 = vrot.slane %v4390, 4
  %v4392 = vadd.f32 %v4390, %v4391
  %v4393 = vrot.slane %v4392, 2
  %v4394 = vadd.f32 %v4392, %v4393
  %v4395 = vrot.slane %v4394, 1
  %v4396 = vadd.f32 %v4394, %v4395
  %v4397 = vsel %vm4358, %v4386, 0.0
  %v4398 = vsel %vm4358, %v4387, 0.0
  %v4399 = vadd.f32 %v4397, %v4398
  %v4400 = vrot.slane %v4399, 4
  %v4401 = vadd.f32 %v4399, %v4400
  %v4402 = vrot.slane %v4401, 2
  %v4403 = vadd.f32 %v4401, %v4402
  %v4404 = vrot.slane %v4403, 1
  %v4405 = vadd.f32 %v4403, %v4404
  %v4406 = vmul.f32 %v4396, %v4377
  %v4407 = vmul.f32 %v4405, %v4377
  %v4408 = vadd.f32 %v4319, 1.0
  %v4409 = vadd.f32 %v4326, 1.0
  %v4410 = vadd.f32 %v4406, 1e-05
  %v4411 = vadd.f32 %v4407, 1e-05
  %v4412 = vrsqrt.pop %v4410
  %v4413 = vrsqrt.pop %v4411
  %v4414 = vmul.f32 %v4380, %v4412
  %v4415 = vmul.f32 %v4381, %v4412
  %v4416 = vmul.f32 %v4382, %v4413
  %v4417 = vmul.f32 %v4383, %v4413
  %v4420 = vlaneseq
  %v4421 = vshrl.u32 %v4420, 7
  %v4422 = vsub.s32 0, %v4421
  %v4423 = vrot.slane %v4408, %v4422
  %v4424 = vlaneseq
  %v4425 = vshrl.u32 %v4424, 7
  %v4426 = vsub.s32 0, %v4425
  %v4427 = vrot.slane %v4409, %v4426
  %v4430 = vmul.f32 %v4423, %v4414
  %v4431 = vmul.f32 %v4423, %v4415
  %v4432 = vmul.f32 %v4427, %v4416
  %v4433 = vmul.f32 %v4427, %v4417
  %v4434 = vlaneseq
  %v4435 = vshrl.u32 %v4434, 7
  %v4436 = vsub.s32 0, %v4435
  %v4437 = vrot.slane %v4319, %v4436
  %v4438 = vlaneseq
  %v4439 = vshrl.u32 %v4438, 7
  %v4440 = vsub.s32 0, %v4439
  %v4441 = vrot.slane %v4326, %v4440
  %4442 = vrot.lane.b32.xlu0 %v4437, 64
  %v4443 = vpop.permute.xlu0 %4442
  %4444 = vrot.lane.b32.xlu0 %v4441, 64
  %v4445 = vpop.permute.xlu0 %4444
  %v4448 = vadd.f32 %v4430, %v4443
  %v4449 = vadd.f32 %v4431, %v4443
  %v4450 = vadd.f32 %v4432, %v4445
  %v4451 = vadd.f32 %v4433, %v4445
  %vm4452 = vcmp.ge.f32.partialorder %v4448, 0.0
  %vm4453 = vcmp.ge.f32.partialorder %v4449, 0.0
  %vm4454 = vcmp.ge.f32.partialorder %v4450, 0.0
  %vm4455 = vcmp.ge.f32.partialorder %v4451, 0.0
  %v4456 = vmul.f32 %v4448, 0.2
  %v4457 = vmul.f32 %v4449, 0.2
  %v4458 = vmul.f32 %v4450, 0.2
  %v4459 = vmul.f32 %v4451, 0.2
  %v4460 = vsel %vm4452, %v4448, %v4456
  %v4461 = vsel %vm4453, %v4449, %v4457
  %v4462 = vsel %vm4454, %v4450, %v4458
  %v4463 = vsel %vm4455, %v4451, %v4459
  %v4464 = vld [vmem:[%s5] sm:$0x1]
  %vm4469 = vcmask 1040384
  %v4470 = vrot.slane %v4460, 7
  %v4471 = vrot.slane %v4461, 7
  %v4472 = vsel %vm4469, %v4470, %v4471
  %v4473 = vrot.slane %v4462, 7
  %v4474 = vrot.slane %v4463, 7
  %v4475 = vsel %vm4469, %v4473, %v4474
  %v4480 = vsel %vm4469, 0.0, %v4470
  %v4481 = vsel %vm4469, 0.0, %v4473
  %vm4482 = vcmask 1046528
  %v4483 = vrot.slane %v4460, 1
  %v4484 = vrot.slane %v4461, 1
  %v4485 = vsel %vm4482, %v4483, %v4484
  %v4486 = vrot.slane %v4462, 1
  %v4487 = vrot.slane %v4463, 1
  %v4488 = vsel %vm4482, %v4486, %v4487
  %v4493 = vsel %vm4482, %v4484, 0.0
  %v4494 = vsel %vm4482, %v4487, 0.0
  %v4495 = vpack.c.bf16 %v4472, %v4480
  %v4496 = vpack.c.bf16 %v4475, %v4481
  %v4497 = vld [vmem:[%s4] sm:$0xf]
  %v4498 = vld [vmem:[%s4 + $0x4] sm:$0xf]
  %v4499 = vld [vmem:[%s4 + $0x8] sm:$0xf]
  %v4500 = vld [vmem:[%s4 + $0xc] sm:$0xf]
  %v4501 = vld [vmem:[%s4 + $0x10] sm:$0xf]
  %v4502 = vld [vmem:[%s4 + $0x14] sm:$0xf]
  %v4503 = vld [vmem:[%s4 + $0x18] sm:$0xf]
  %v4504 = vld [vmem:[%s4 + $0x1c] sm:$0xf]
  %v4505 = vpack.c.bf16 %v4461, %v4460
  %v4506 = vpack.c.bf16 %v4463, %v4462
  %s4507 = scalar_lea.vmem %s4, 32
  %v4508 = vld [vmem:[%s4507] sm:$0xf]
  %v4509 = vld [vmem:[%s4507 + $0x4] sm:$0xf]
  %v4510 = vld [vmem:[%s4507 + $0x8] sm:$0xf]
  %v4511 = vld [vmem:[%s4507 + $0xc] sm:$0xf]
  %v4512 = vld [vmem:[%s4507 + $0x10] sm:$0xf]
  %v4513 = vld [vmem:[%s4507 + $0x14] sm:$0xf]
  %v4514 = vld [vmem:[%s4507 + $0x18] sm:$0xf]
  %v4515 = vld [vmem:[%s4507 + $0x1c] sm:$0xf]
  %v4524 = vunpack.c.l.b16 %v4508
  %v4525 = vunpack.c.l.b16 %v4509
  %v4526 = vunpack.c.l.b16 %v4510
  %v4527 = vunpack.c.l.b16 %v4511
  %v4528 = vunpack.c.l.b16 %v4512
  %v4529 = vunpack.c.l.b16 %v4513
  %v4530 = vunpack.c.l.b16 %v4514
  %v4531 = vunpack.c.l.b16 %v4515
  %v4532 = vpack.c.b16 %v4525, %v4524
  %v4533 = vpack.c.b16 %v4527, %v4526
  %v4534 = vpack.c.b16 %v4529, %v4528
  %v4535 = vpack.c.b16 %v4531, %v4530
  %v4541 = vsel %vm4358, %v4505, 0
  %v4544 = vsel %vm4358, %v4506, 0
  %4546 = vmatprep.subr.bf16.mxu0 0
  %4547 = vmatpush1.bf16.msra.mxu0 %v4532
  %4548 = vmatprep.subr.bf16.mxu0 0
  %4549 = vmatpush1.bf16.msra.mxu0 %v4533
  %4550 = vmatprep.subr.bf16.mxu0 0
  %4551 = vmatpush1.bf16.msra.mxu0 %v4534
  %4552 = vmatprep.subr.bf16.mxu0 0
  %4553 = vmatpush1.bf16.msra.mxu0 %v4535
  %4554 = vmatprep.subr.bf16.mxu0 0
  %4555 = vmatpush1.bf16.msra.mxu0 0
  %4556 = vmatprep.subr.bf16.mxu0 0
  %4557 = vmatpush1.bf16.msra.mxu0 0
  %4558 = vmatprep.subr.bf16.mxu0 0
  %4559 = vmatpush1.bf16.msra.mxu0 0
  %4560 = vmatprep.subr.bf16.mxu0 0
  %4561 = vmatpush1.bf16.msra.mxu0 0
  %4562 = vmatprep.subr.bf16.mxu0 0
  %4563 = vmatpush1.bf16.msra.mxu0 0
  %4564 = vmatprep.subr.bf16.mxu0 0
  %4565 = vmatpush1.bf16.msra.mxu0 0
  %4566 = vmatprep.subr.bf16.mxu0 0
  %4567 = vmatpush1.bf16.msra.mxu0 0
  %4568 = vmatprep.subr.bf16.mxu0 0
  %4569 = vmatpush1.bf16.msra.mxu0 0
  %4570 = vmatprep.subr.bf16.mxu0 0
  %4571 = vmatpush1.bf16.msra.mxu0 0
  %4572 = vmatprep.subr.bf16.mxu0 0
  %4573 = vmatpush1.bf16.msra.mxu0 0
  %4574 = vmatprep.subr.bf16.mxu0 0
  %4575 = vmatpush1.bf16.msra.mxu0 0
  %4576 = vmatprep.subr.bf16.mxu0 0
  %4577 = vmatpush1.bf16.msra.mxu0 0
  %4578 = vmatprep.mubr.bf16.mxu0 0
  %4579 = vmatmul.mubr.bf16.gmra.mrb[0].mxu0 %v4541
  %v4580 = vpop.f32.mrb[0].mxu0
  %v4581 = vadd.f32 0.0, %v4580
  %v4582 = vpop.f32.mrb[0].mxu0
  %v4583 = vpop.f32.mrb[0].mxu0
  %v4584 = vadd.f32 0.0, %v4583
  %v4585 = vpop.f32.mrb[0].mxu0
  %4586 = vmatprep.mubr.bf16.mxu0 0
  %4587 = vmatmul.mubr.bf16.gmra.mrb[0].mxu0 %v4544
  %v4588 = vpop.f32.mrb[0].mxu0
  %v4589 = vadd.f32 0.0, %v4588
  %v4590 = vpop.f32.mrb[0].mxu0
  %v4591 = vpop.f32.mrb[0].mxu0
  %v4592 = vadd.f32 0.0, %v4591
  %v4593 = vpop.f32.mrb[0].mxu0
  %4594 = vdwg.mxu0
  %v4603 = vunpack.c.l.b16 %v4497
  %v4604 = vunpack.c.l.b16 %v4498
  %v4605 = vunpack.c.l.b16 %v4499
  %v4606 = vunpack.c.l.b16 %v4500
  %v4607 = vunpack.c.l.b16 %v4501
  %v4608 = vunpack.c.l.b16 %v4502
  %v4609 = vunpack.c.l.b16 %v4503
  %v4610 = vunpack.c.l.b16 %v4504
  %v4611 = vpack.c.b16 %v4604, %v4603
  %v4612 = vpack.c.b16 %v4606, %v4605
  %v4613 = vpack.c.b16 %v4608, %v4607
  %v4614 = vpack.c.b16 %v4610, %v4609
  %v4620 = vsel %vm4358, %v4495, 0
  %v4623 = vsel %vm4358, %v4496, 0
  %4625 = vmatprep.subr.bf16.mxu0 0
  %4626 = vmatpush1.bf16.msra.mxu0 %v4611
  %4627 = vmatprep.subr.bf16.mxu0 0
  %4628 = vmatpush1.bf16.msra.mxu0 %v4612
  %4629 = vmatprep.subr.bf16.mxu0 0
  %4630 = vmatpush1.bf16.msra.mxu0 %v4613
  %4631 = vmatprep.subr.bf16.mxu0 0
  %4632 = vmatpush1.bf16.msra.mxu0 %v4614
  %4633 = vmatprep.subr.bf16.mxu0 0
  %4634 = vmatpush1.bf16.msra.mxu0 0
  %4635 = vmatprep.subr.bf16.mxu0 0
  %4636 = vmatpush1.bf16.msra.mxu0 0
  %4637 = vmatprep.subr.bf16.mxu0 0
  %4638 = vmatpush1.bf16.msra.mxu0 0
  %4639 = vmatprep.subr.bf16.mxu0 0
  %4640 = vmatpush1.bf16.msra.mxu0 0
  %4641 = vmatprep.subr.bf16.mxu0 0
  %4642 = vmatpush1.bf16.msra.mxu0 0
  %4643 = vmatprep.subr.bf16.mxu0 0
  %4644 = vmatpush1.bf16.msra.mxu0 0
  %4645 = vmatprep.subr.bf16.mxu0 0
  %4646 = vmatpush1.bf16.msra.mxu0 0
  %4647 = vmatprep.subr.bf16.mxu0 0
  %4648 = vmatpush1.bf16.msra.mxu0 0
  %4649 = vmatprep.subr.bf16.mxu0 0
  %4650 = vmatpush1.bf16.msra.mxu0 0
  %4651 = vmatprep.subr.bf16.mxu0 0
  %4652 = vmatpush1.bf16.msra.mxu0 0
  %4653 = vmatprep.subr.bf16.mxu0 0
  %4654 = vmatpush1.bf16.msra.mxu0 0
  %4655 = vmatprep.subr.bf16.mxu0 0
  %4656 = vmatpush1.bf16.msra.mxu0 0
  %4657 = vmatprep.mubr.bf16.mxu0 0
  %4658 = vmatmul.mubr.bf16.gmra.mrb[0].mxu0 %v4620
  %v4659 = vpop.f32.mrb[0].mxu0
  %v4660 = vadd.f32 %v4581, %v4659
  %v4661 = vpop.f32.mrb[0].mxu0
  %v4662 = vpop.f32.mrb[0].mxu0
  %v4663 = vadd.f32 %v4584, %v4662
  %v4664 = vpop.f32.mrb[0].mxu0
  %4665 = vmatprep.mubr.bf16.mxu0 0
  %4666 = vmatmul.mubr.bf16.gmra.mrb[0].mxu0 %v4623
  %v4667 = vpop.f32.mrb[0].mxu0
  %v4668 = vadd.f32 %v4589, %v4667
  %v4669 = vpop.f32.mrb[0].mxu0
  %v4670 = vpop.f32.mrb[0].mxu0
  %v4671 = vadd.f32 %v4592, %v4670
  %v4672 = vpop.f32.mrb[0].mxu0
  %4673 = vdwg.mxu0
  %v4674 = vpack.c.bf16 %v4493, %v4485
  %v4675 = vpack.c.bf16 %v4494, %v4488
  %s4676 = scalar_lea.vmem %s4, 64
  %v4677 = vld [vmem:[%s4676] sm:$0xf]
  %v4678 = vld [vmem:[%s4676 + $0x4] sm:$0xf]
  %v4679 = vld [vmem:[%s4676 + $0x8] sm:$0xf]
  %v4680 = vld [vmem:[%s4676 + $0xc] sm:$0xf]
  %v4681 = vld [vmem:[%s4676 + $0x10] sm:$0xf]
  %v4682 = vld [vmem:[%s4676 + $0x14] sm:$0xf]
  %v4683 = vld [vmem:[%s4676 + $0x18] sm:$0xf]
  %v4684 = vld [vmem:[%s4676 + $0x1c] sm:$0xf]
  %v4693 = vunpack.c.l.b16 %v4677
  %v4694 = vunpack.c.l.b16 %v4678
  %v4695 = vunpack.c.l.b16 %v4679
  %v4696 = vunpack.c.l.b16 %v4680
  %v4697 = vunpack.c.l.b16 %v4681
  %v4698 = vunpack.c.l.b16 %v4682
  %v4699 = vunpack.c.l.b16 %v4683
  %v4700 = vunpack.c.l.b16 %v4684
  %v4701 = vpack.c.b16 %v4694, %v4693
  %v4702 = vpack.c.b16 %v4696, %v4695
  %v4703 = vpack.c.b16 %v4698, %v4697
  %v4704 = vpack.c.b16 %v4700, %v4699
  %v4710 = vsel %vm4358, %v4674, 0
  %v4713 = vsel %vm4358, %v4675, 0
  %4715 = vmatprep.subr.bf16.mxu0 0
  %4716 = vmatpush1.bf16.msra.mxu0 %v4701
  %4717 = vmatprep.subr.bf16.mxu0 0
  %4718 = vmatpush1.bf16.msra.mxu0 %v4702
  %4719 = vmatprep.subr.bf16.mxu0 0
  %4720 = vmatpush1.bf16.msra.mxu0 %v4703
  %4721 = vmatprep.subr.bf16.mxu0 0
  %4722 = vmatpush1.bf16.msra.mxu0 %v4704
  %4723 = vmatprep.subr.bf16.mxu0 0
  %4724 = vmatpush1.bf16.msra.mxu0 0
  %4725 = vmatprep.subr.bf16.mxu0 0
  %4726 = vmatpush1.bf16.msra.mxu0 0
  %4727 = vmatprep.subr.bf16.mxu0 0
  %4728 = vmatpush1.bf16.msra.mxu0 0
  %4729 = vmatprep.subr.bf16.mxu0 0
  %4730 = vmatpush1.bf16.msra.mxu0 0
  %4731 = vmatprep.subr.bf16.mxu0 0
  %4732 = vmatpush1.bf16.msra.mxu0 0
  %4733 = vmatprep.subr.bf16.mxu0 0
  %4734 = vmatpush1.bf16.msra.mxu0 0
  %4735 = vmatprep.subr.bf16.mxu0 0
  %4736 = vmatpush1.bf16.msra.mxu0 0
  %4737 = vmatprep.subr.bf16.mxu0 0
  %4738 = vmatpush1.bf16.msra.mxu0 0
  %4739 = vmatprep.subr.bf16.mxu0 0
  %4740 = vmatpush1.bf16.msra.mxu0 0
  %4741 = vmatprep.subr.bf16.mxu0 0
  %4742 = vmatpush1.bf16.msra.mxu0 0
  %4743 = vmatprep.subr.bf16.mxu0 0
  %4744 = vmatpush1.bf16.msra.mxu0 0
  %4745 = vmatprep.subr.bf16.mxu0 0
  %4746 = vmatpush1.bf16.msra.mxu0 0
  %4747 = vmatprep.mubr.bf16.mxu0 0
  %4748 = vmatmul.mubr.bf16.gmra.mrb[0].mxu0 %v4710
  %v4749 = vpop.f32.mrb[0].mxu0
  %v4750 = vadd.f32 0.0, %v4749
  %v4751 = vpop.f32.mrb[0].mxu0
  %v4752 = vpop.f32.mrb[0].mxu0
  %v4753 = vadd.f32 0.0, %v4752
  %v4754 = vpop.f32.mrb[0].mxu0
  %4755 = vmatprep.mubr.bf16.mxu0 0
  %4756 = vmatmul.mubr.bf16.gmra.mrb[0].mxu0 %v4713
  %v4757 = vpop.f32.mrb[0].mxu0
  %v4758 = vadd.f32 0.0, %v4757
  %v4759 = vpop.f32.mrb[0].mxu0
  %v4760 = vpop.f32.mrb[0].mxu0
  %v4761 = vadd.f32 0.0, %v4760
  %v4762 = vpop.f32.mrb[0].mxu0
  %4763 = vdwg.mxu0
  %v4764 = vadd.f32 %v4660, %v4750
  %v4765 = vadd.f32 %v4663, %v4753
  %v4766 = vadd.f32 %v4668, %v4758
  %v4767 = vadd.f32 %v4671, %v4761
  %v4769 = vlaneseq
  %v4770 = vshrl.u32 %v4769, 7
  %v4771 = vsub.s32 0, %v4770
  %v4772 = vrot.slane %v4464, %v4771
  %v4774 = vadd.f32 %v4764, %v4772
  %v4775 = vadd.f32 %v4765, %v4772
  %v4776 = vadd.f32 %v4766, %v4772
  %v4777 = vadd.f32 %v4767, %v4772
  %v4778 = vsel %vm4358, %v4774, 0.0
  %v4779 = vsel %vm4358, %v4775, 0.0
  %v4780 = vadd.f32 %v4778, %v4779
  %v4781 = vrot.slane %v4780, 4
  %v4782 = vadd.f32 %v4780, %v4781
  %v4783 = vrot.slane %v4782, 2
  %v4784 = vadd.f32 %v4782, %v4783
  %v4785 = vrot.slane %v4784, 1
  %v4786 = vadd.f32 %v4784, %v4785
  %v4787 = vsel %vm4358, %v4776, 0.0
  %v4788 = vsel %vm4358, %v4777, 0.0
  %v4789 = vadd.f32 %v4787, %v4788
  %v4790 = vrot.slane %v4789, 4
  %v4791 = vadd.f32 %v4789, %v4790
  %v4792 = vrot.slane %v4791, 2
  %v4793 = vadd.f32 %v4791, %v4792
  %v4794 = vrot.slane %v4793, 1
  %v4795 = vadd.f32 %v4793, %v4794
  %v4796 = vmul.f32 %v4786, %v4377
  %v4797 = vmul.f32 %v4795, %v4377
  %v4798 = vsub.f32 %v4774, %v4796
  %v4799 = vsub.f32 %v4775, %v4796
  %v4800 = vsub.f32 %v4776, %v4797
  %v4801 = vsub.f32 %v4777, %v4797
  %v4802 = vmul.f32 %v4798, %v4798
  %v4803 = vmul.f32 %v4799, %v4799
  %v4804 = vmul.f32 %v4800, %v4800
  %v4805 = vmul.f32 %v4801, %v4801
  %v4806 = vsel %vm4358, %v4802, 0.0
  %v4807 = vsel %vm4358, %v4803, 0.0
  %v4808 = vadd.f32 %v4806, %v4807
  %v4809 = vrot.slane %v4808, 4
  %v4810 = vadd.f32 %v4808, %v4809
  %v4811 = vrot.slane %v4810, 2
  %v4812 = vadd.f32 %v4810, %v4811
  %v4813 = vrot.slane %v4812, 1
  %v4814 = vadd.f32 %v4812, %v4813
  %v4815 = vsel %vm4358, %v4804, 0.0
  %v4816 = vsel %vm4358, %v4805, 0.0
  %v4817 = vadd.f32 %v4815, %v4816
  %v4818 = vrot.slane %v4817, 4
  %v4819 = vadd.f32 %v4817, %v4818
  %v4820 = vrot.slane %v4819, 2
  %v4821 = vadd.f32 %v4819, %v4820
  %v4822 = vrot.slane %v4821, 1
  %v4823 = vadd.f32 %v4821, %v4822
  %v4824 = vmul.f32 %v4814, %v4377
  %v4825 = vmul.f32 %v4823, %v4377
  %v4826 = vadd.f32 %v4344, 1.0
  %v4827 = vadd.f32 %v4351, 1.0
  %v4828 = vadd.f32 %v4824, 1e-05
  %v4829 = vadd.f32 %v4825, 1e-05
  %v4830 = vrsqrt.pop %v4828
  %v4831 = vrsqrt.pop %v4829
  %v4832 = vmul.f32 %v4798, %v4830
  %v4833 = vmul.f32 %v4799, %v4830
  %v4834 = vmul.f32 %v4800, %v4831
  %v4835 = vmul.f32 %v4801, %v4831
  %v4838 = vlaneseq
  %v4839 = vshrl.u32 %v4838, 7
  %v4840 = vsub.s32 0, %v4839
  %v4841 = vrot.slane %v4826, %v4840
  %v4842 = vlaneseq
  %v4843 = vshrl.u32 %v4842, 7
  %v4844 = vsub.s32 0, %v4843
  %v4845 = vrot.slane %v4827, %v4844
  %v4848 = vmul.f32 %v4841, %v4832
  %v4849 = vmul.f32 %v4841, %v4833
  %v4850 = vmul.f32 %v4845, %v4834
  %v4851 = vmul.f32 %v4845, %v4835
  %v4852 = vlaneseq
  %v4853 = vshrl.u32 %v4852, 7
  %v4854 = vsub.s32 0, %v4853
  %v4855 = vrot.slane %v4344, %v4854
  %v4856 = vlaneseq
  %v4857 = vshrl.u32 %v4856, 7
  %v4858 = vsub.s32 0, %v4857
  %v4859 = vrot.slane %v4351, %v4858
  %4860 = vrot.lane.b32.xlu0 %v4855, 64
  %v4861 = vpop.permute.xlu0 %4860
  %4862 = vrot.lane.b32.xlu0 %v4859, 64
  %v4863 = vpop.permute.xlu0 %4862
  %v4866 = vadd.f32 %v4848, %v4861
  %v4867 = vadd.f32 %v4849, %v4861
  %v4868 = vadd.f32 %v4850, %v4863
  %v4869 = vadd.f32 %v4851, %v4863
  %vm4870 = vcmp.ge.f32.partialorder %v4866, 0.0
  %vm4871 = vcmp.ge.f32.partialorder %v4867, 0.0
  %vm4872 = vcmp.ge.f32.partialorder %v4868, 0.0
  %vm4873 = vcmp.ge.f32.partialorder %v4869, 0.0
  %v4874 = vmul.f32 %v4866, 0.2
  %v4875 = vmul.f32 %v4867, 0.2
  %v4876 = vmul.f32 %v4868, 0.2
  %v4877 = vmul.f32 %v4869, 0.2
  %v4878 = vsel %vm4870, %v4866, %v4874
  %v4879 = vsel %vm4871, %v4867, %v4875
  %v4880 = vsel %vm4872, %v4868, %v4876
  %v4881 = vsel %vm4873, %v4869, %v4877
  %v4882 = vld [vmem:[%s7] sm:$0x1]
  %v4887 = vrot.slane %v4878, 7
  %v4888 = vrot.slane %v4879, 7
  %v4889 = vsel %vm4469, %v4887, %v4888
  %v4890 = vrot.slane %v4880, 7
  %v4891 = vrot.slane %v4881, 7
  %v4892 = vsel %vm4469, %v4890, %v4891
  %v4897 = vsel %vm4469, 0.0, %v4887
  %v4898 = vsel %vm4469, 0.0, %v4890
  %v4899 = vrot.slane %v4878, 1
  %v4900 = vrot.slane %v4879, 1
  %v4901 = vsel %vm4482, %v4899, %v4900
  %v4902 = vrot.slane %v4880, 1
  %v4903 = vrot.slane %v4881, 1
  %v4904 = vsel %vm4482, %v4902, %v4903
  %v4909 = vsel %vm4482, %v4900, 0.0
  %v4910 = vsel %vm4482, %v4903, 0.0
  %v4911 = vpack.c.bf16 %v4889, %v4897
  %v4912 = vpack.c.bf16 %v4892, %v4898
  %v4913 = vld [vmem:[%s6] sm:$0xf]
  %v4914 = vld [vmem:[%s6 + $0x4] sm:$0xf]
  %v4915 = vld [vmem:[%s6 + $0x8] sm:$0xf]
  %v4916 = vld [vmem:[%s6 + $0xc] sm:$0xf]
  %v4917 = vld [vmem:[%s6 + $0x10] sm:$0xf]
  %v4918 = vld [vmem:[%s6 + $0x14] sm:$0xf]
  %v4919 = vld [vmem:[%s6 + $0x18] sm:$0xf]
  %v4920 = vld [vmem:[%s6 + $0x1c] sm:$0xf]
  %v4921 = vpack.c.bf16 %v4879, %v4878
  %v4922 = vpack.c.bf16 %v4881, %v4880
  %s4923 = scalar_lea.vmem %s6, 32
  %v4924 = vld [vmem:[%s4923] sm:$0xf]
  %v4925 = vld [vmem:[%s4923 + $0x4] sm:$0xf]
  %v4926 = vld [vmem:[%s4923 + $0x8] sm:$0xf]
  %v4927 = vld [vmem:[%s4923 + $0xc] sm:$0xf]
  %v4928 = vld [vmem:[%s4923 + $0x10] sm:$0xf]
  %v4929 = vld [vmem:[%s4923 + $0x14] sm:$0xf]
  %v4930 = vld [vmem:[%s4923 + $0x18] sm:$0xf]
  %v4931 = vld [vmem:[%s4923 + $0x1c] sm:$0xf]
  %v4940 = vunpack.c.l.b16 %v4924
  %v4941 = vunpack.c.l.b16 %v4925
  %v4942 = vunpack.c.l.b16 %v4926
  %v4943 = vunpack.c.l.b16 %v4927
  %v4944 = vunpack.c.l.b16 %v4928
  %v4945 = vunpack.c.l.b16 %v4929
  %v4946 = vunpack.c.l.b16 %v4930
  %v4947 = vunpack.c.l.b16 %v4931
  %v4948 = vpack.c.b16 %v4941, %v4940
  %v4949 = vpack.c.b16 %v4943, %v4942
  %v4950 = vpack.c.b16 %v4945, %v4944
  %v4951 = vpack.c.b16 %v4947, %v4946
  %v4957 = vsel %vm4358, %v4921, 0
  %v4960 = vsel %vm4358, %v4922, 0
  %4962 = vmatprep.subr.bf16.mxu0 0
  %4963 = vmatpush1.bf16.msra.mxu0 %v4948
  %4964 = vmatprep.subr.bf16.mxu0 0
  %4965 = vmatpush1.bf16.msra.mxu0 %v4949
  %4966 = vmatprep.subr.bf16.mxu0 0
  %4967 = vmatpush1.bf16.msra.mxu0 %v4950
  %4968 = vmatprep.subr.bf16.mxu0 0
  %4969 = vmatpush1.bf16.msra.mxu0 %v4951
  %4970 = vmatprep.subr.bf16.mxu0 0
  %4971 = vmatpush1.bf16.msra.mxu0 0
  %4972 = vmatprep.subr.bf16.mxu0 0
  %4973 = vmatpush1.bf16.msra.mxu0 0
  %4974 = vmatprep.subr.bf16.mxu0 0
  %4975 = vmatpush1.bf16.msra.mxu0 0
  %4976 = vmatprep.subr.bf16.mxu0 0
  %4977 = vmatpush1.bf16.msra.mxu0 0
  %4978 = vmatprep.subr.bf16.mxu0 0
  %4979 = vmatpush1.bf16.msra.mxu0 0
  %4980 = vmatprep.subr.bf16.mxu0 0
  %4981 = vmatpush1.bf16.msra.mxu0 0
  %4982 = vmatprep.subr.bf16.mxu0 0
  %4983 = vmatpush1.bf16.msra.mxu0 0
  %4984 = vmatprep.subr.bf16.mxu0 0
  %4985 = vmatpush1.bf16.msra.mxu0 0
  %4986 = vmatprep.subr.bf16.mxu0 0
  %4987 = vmatpush1.bf16.msra.mxu0 0
  %4988 = vmatprep.subr.bf16.mxu0 0
  %4989 = vmatpush1.bf16.msra.mxu0 0
  %4990 = vmatprep.subr.bf16.mxu0 0
  %4991 = vmatpush1.bf16.msra.mxu0 0
  %4992 = vmatprep.subr.bf16.mxu0 0
  %4993 = vmatpush1.bf16.msra.mxu0 0
  %4994 = vmatprep.mubr.bf16.mxu0 0
  %4995 = vmatmul.mubr.bf16.gmra.mrb[0].mxu0 %v4957
  %v4996 = vpop.f32.mrb[0].mxu0
  %v4997 = vadd.f32 0.0, %v4996
  %v4998 = vpop.f32.mrb[0].mxu0
  %v4999 = vpop.f32.mrb[0].mxu0
  %v5000 = vadd.f32 0.0, %v4999
  %v5001 = vpop.f32.mrb[0].mxu0
  %5002 = vmatprep.mubr.bf16.mxu0 0
  %5003 = vmatmul.mubr.bf16.gmra.mrb[0].mxu0 %v4960
  %v5004 = vpop.f32.mrb[0].mxu0
  %v5005 = vadd.f32 0.0, %v5004
  %v5006 = vpop.f32.mrb[0].mxu0
  %v5007 = vpop.f32.mrb[0].mxu0
  %v5008 = vadd.f32 0.0, %v5007
  %v5009 = vpop.f32.mrb[0].mxu0
  %5010 = vdwg.mxu0
  %v5019 = vunpack.c.l.b16 %v4913
  %v5020 = vunpack.c.l.b16 %v4914
  %v5021 = vunpack.c.l.b16 %v4915
  %v5022 = vunpack.c.l.b16 %v4916
  %v5023 = vunpack.c.l.b16 %v4917
  %v5024 = vunpack.c.l.b16 %v4918
  %v5025 = vunpack.c.l.b16 %v4919
  %v5026 = vunpack.c.l.b16 %v4920
  %v5027 = vpack.c.b16 %v5020, %v5019
  %v5028 = vpack.c.b16 %v5022, %v5021
  %v5029 = vpack.c.b16 %v5024, %v5023
  %v5030 = vpack.c.b16 %v5026, %v5025
  %v5036 = vsel %vm4358, %v4911, 0
  %v5039 = vsel %vm4358, %v4912, 0
  %5041 = vmatprep.subr.bf16.mxu0 0
  %5042 = vmatpush1.bf16.msra.mxu0 %v5027
  %5043 = vmatprep.subr.bf16.mxu0 0
  %5044 = vmatpush1.bf16.msra.mxu0 %v5028
  %5045 = vmatprep.subr.bf16.mxu0 0
  %5046 = vmatpush1.bf16.msra.mxu0 %v5029
  %5047 = vmatprep.subr.bf16.mxu0 0
  %5048 = vmatpush1.bf16.msra.mxu0 %v5030
  %5049 = vmatprep.subr.bf16.mxu0 0
  %5050 = vmatpush1.bf16.msra.mxu0 0
  %5051 = vmatprep.subr.bf16.mxu0 0
  %5052 = vmatpush1.bf16.msra.mxu0 0
  %5053 = vmatprep.subr.bf16.mxu0 0
  %5054 = vmatpush1.bf16.msra.mxu0 0
  %5055 = vmatprep.subr.bf16.mxu0 0
  %5056 = vmatpush1.bf16.msra.mxu0 0
  %5057 = vmatprep.subr.bf16.mxu0 0
  %5058 = vmatpush1.bf16.msra.mxu0 0
  %5059 = vmatprep.subr.bf16.mxu0 0
  %5060 = vmatpush1.bf16.msra.mxu0 0
  %5061 = vmatprep.subr.bf16.mxu0 0
  %5062 = vmatpush1.bf16.msra.mxu0 0
  %5063 = vmatprep.subr.bf16.mxu0 0
  %5064 = vmatpush1.bf16.msra.mxu0 0
  %5065 = vmatprep.subr.bf16.mxu0 0
  %5066 = vmatpush1.bf16.msra.mxu0 0
  %5067 = vmatprep.subr.bf16.mxu0 0
  %5068 = vmatpush1.bf16.msra.mxu0 0
  %5069 = vmatprep.subr.bf16.mxu0 0
  %5070 = vmatpush1.bf16.msra.mxu0 0
  %5071 = vmatprep.subr.bf16.mxu0 0
  %5072 = vmatpush1.bf16.msra.mxu0 0
  %5073 = vmatprep.mubr.bf16.mxu0 0
  %5074 = vmatmul.mubr.bf16.gmra.mrb[0].mxu0 %v5036
  %v5075 = vpop.f32.mrb[0].mxu0
  %v5076 = vadd.f32 %v4997, %v5075
  %v5077 = vpop.f32.mrb[0].mxu0
  %v5078 = vpop.f32.mrb[0].mxu0
  %v5079 = vadd.f32 %v5000, %v5078
  %v5080 = vpop.f32.mrb[0].mxu0
  %5081 = vmatprep.mubr.bf16.mxu0 0
  %5082 = vmatmul.mubr.bf16.gmra.mrb[0].mxu0 %v5039
  %v5083 = vpop.f32.mrb[0].mxu0
  %v5084 = vadd.f32 %v5005, %v5083
  %v5085 = vpop.f32.mrb[0].mxu0
  %v5086 = vpop.f32.mrb[0].mxu0
  %v5087 = vadd.f32 %v5008, %v5086
  %v5088 = vpop.f32.mrb[0].mxu0
  %5089 = vdwg.mxu0
  %v5090 = vpack.c.bf16 %v4909, %v4901
  %v5091 = vpack.c.bf16 %v4910, %v4904
  %s5092 = scalar_lea.vmem %s6, 64
  %v5093 = vld [vmem:[%s5092] sm:$0xf]
  %v5094 = vld [vmem:[%s5092 + $0x4] sm:$0xf]
  %v5095 = vld [vmem:[%s5092 + $0x8] sm:$0xf]
  %v5096 = vld [vmem:[%s5092 + $0xc] sm:$0xf]
  %v5097 = vld [vmem:[%s5092 + $0x10] sm:$0xf]
  %v5098 = vld [vmem:[%s5092 + $0x14] sm:$0xf]
  %v5099 = vld [vmem:[%s5092 + $0x18] sm:$0xf]
  %v5100 = vld [vmem:[%s5092 + $0x1c] sm:$0xf]
  %v5109 = vunpack.c.l.b16 %v5093
  %v5110 = vunpack.c.l.b16 %v5094
  %v5111 = vunpack.c.l.b16 %v5095
  %v5112 = vunpack.c.l.b16 %v5096
  %v5113 = vunpack.c.l.b16 %v5097
  %v5114 = vunpack.c.l.b16 %v5098
  %v5115 = vunpack.c.l.b16 %v5099
  %v5116 = vunpack.c.l.b16 %v5100
  %v5117 = vpack.c.b16 %v5110, %v5109
  %v5118 = vpack.c.b16 %v5112, %v5111
  %v5119 = vpack.c.b16 %v5114, %v5113
  %v5120 = vpack.c.b16 %v5116, %v5115
  %v5126 = vsel %vm4358, %v5090, 0
  %v5129 = vsel %vm4358, %v5091, 0
  %5131 = vmatprep.subr.bf16.mxu0 0
  %5132 = vmatpush1.bf16.msra.mxu0 %v5117
  %5133 = vmatprep.subr.bf16.mxu0 0
  %5134 = vmatpush1.bf16.msra.mxu0 %v5118
  %5135 = vmatprep.subr.bf16.mxu0 0
  %5136 = vmatpush1.bf16.msra.mxu0 %v5119
  %5137 = vmatprep.subr.bf16.mxu0 0
  %5138 = vmatpush1.bf16.msra.mxu0 %v5120
  %5139 = vmatprep.subr.bf16.mxu0 0
  %5140 = vmatpush1.bf16.msra.mxu0 0
  %5141 = vmatprep.subr.bf16.mxu0 0
  %5142 = vmatpush1.bf16.msra.mxu0 0
  %5143 = vmatprep.subr.bf16.mxu0 0
  %5144 = vmatpush1.bf16.msra.mxu0 0
  %5145 = vmatprep.subr.bf16.mxu0 0
  %5146 = vmatpush1.bf16.msra.mxu0 0
  %5147 = vmatprep.subr.bf16.mxu0 0
  %5148 = vmatpush1.bf16.msra.mxu0 0
  %5149 = vmatprep.subr.bf16.mxu0 0
  %5150 = vmatpush1.bf16.msra.mxu0 0
  %5151 = vmatprep.subr.bf16.mxu0 0
  %5152 = vmatpush1.bf16.msra.mxu0 0
  %5153 = vmatprep.subr.bf16.mxu0 0
  %5154 = vmatpush1.bf16.msra.mxu0 0
  %5155 = vmatprep.subr.bf16.mxu0 0
  %5156 = vmatpush1.bf16.msra.mxu0 0
  %5157 = vmatprep.subr.bf16.mxu0 0
  %5158 = vmatpush1.bf16.msra.mxu0 0
  %5159 = vmatprep.subr.bf16.mxu0 0
  %5160 = vmatpush1.bf16.msra.mxu0 0
  %5161 = vmatprep.subr.bf16.mxu0 0
  %5162 = vmatpush1.bf16.msra.mxu0 0
  %5163 = vmatprep.mubr.bf16.mxu0 0
  %5164 = vmatmul.mubr.bf16.gmra.mrb[0].mxu0 %v5126
  %v5165 = vpop.f32.mrb[0].mxu0
  %v5166 = vadd.f32 0.0, %v5165
  %v5167 = vpop.f32.mrb[0].mxu0
  %v5168 = vpop.f32.mrb[0].mxu0
  %v5169 = vadd.f32 0.0, %v5168
  %v5170 = vpop.f32.mrb[0].mxu0
  %5171 = vmatprep.mubr.bf16.mxu0 0
  %5172 = vmatmul.mubr.bf16.gmra.mrb[0].mxu0 %v5129
  %v5173 = vpop.f32.mrb[0].mxu0
  %v5174 = vadd.f32 0.0, %v5173
  %v5175 = vpop.f32.mrb[0].mxu0
  %v5176 = vpop.f32.mrb[0].mxu0
  %v5177 = vadd.f32 0.0, %v5176
  %v5178 = vpop.f32.mrb[0].mxu0
  %5179 = vdwg.mxu0
  %v5180 = vadd.f32 %v5076, %v5166
  %v5181 = vadd.f32 %v5079, %v5169
  %v5182 = vadd.f32 %v5084, %v5174
  %v5183 = vadd.f32 %v5087, %v5177
  %v5185 = vlaneseq
  %v5186 = vshrl.u32 %v5185, 7
  %v5187 = vsub.s32 0, %v5186
  %v5188 = vrot.slane %v4882, %v5187
  %v5190 = vadd.f32 %v5180, %v5188
  %v5191 = vadd.f32 %v5181, %v5188
  %v5192 = vadd.f32 %v5182, %v5188
  %v5193 = vadd.f32 %v5183, %v5188
  %v5194 = vadd.f32 %v5190, %v4354
  %v5195 = vadd.f32 %v5191, %v4355
  %v5196 = vadd.f32 %v5192, %v4356
  %v5197 = vadd.f32 %v5193, %v4357
  %v5198 = vmul.f32 %v5194, 0.70710677
  %v5199 = vmul.f32 %v5195, 0.70710677
  %v5200 = vmul.f32 %v5196, 0.70710677
  %v5201 = vmul.f32 %v5197, 0.70710677
  %5202 = vst.msk [vmem:[%s8] sm:$0xff] %vm4358, %v5198
  %5203 = vst.msk [vmem:[%s8 + $0x8] sm:$0xff] %vm4358, %v5199
  %5204 = vst.msk [vmem:[%s8 + $0x10] sm:$0xff] %vm4358, %v5200
  %5205 = vst.msk [vmem:[%s8 + $0x18] sm:$0xff] %vm4358, %v5201
  // Predicated region
  $region34: #{_lambda_.3} parent=0 // pred_check
    _
  $region35: #{_lambda_.3} parent=0 // pred_check_branch
    %5207 = sbr.rel (0) target = $region37
  $region36: #{_lambda_.3} parent=0 // pred_region
    _
  $region37: #{_lambda_.3} parent=0 // pred_fallthru
    _
  // Predicated region
  $region38: #{_lambda_.3} parent=0 // pred_check
    _
  $region39: #{_lambda_.3} parent=0 // pred_check_branch
    %5209 = sbr.rel (0) target = $region41
  $region40: #{_lambda_.3} parent=0 // pred_region
    _
  $region41: #{_lambda_.3} parent=0 // pred_fallthru
    _
  // Predicated region
  $region42: #{_lambda_.3} parent=0 // pred_check
    _
  $region43: #{_lambda_.3} parent=0 // pred_check_branch
    %5211 = sbr.rel (0) target = $region45
  $region44: #{_lambda_.3} parent=0 // pred_region
    _
  $region45: #{_lambda_.3} parent=0 // pred_fallthru
    _
  // Predicated region
  $region46: #{_lambda_.3} parent=0 // pred_check
    _
  $region47: #{_lambda_.3} parent=0 // pred_check_branch
    %5213 = sbr.rel (0) target = $region49
  $region48: #{_lambda_.3} parent=0 // pred_region
    _
  $region49: #{_lambda_.3} parent=0 // pred_fallthru
    _

</llo_original>
